<compile_context>
chip_gen: v5e
topology: v5e:2x2
jax: 0.10.0
libtpu: 0.0.40
codegen_flags: <defaults>
</compile_context>

<pallas_src>
import math

import jax
import jax.numpy as jnp
from jax.experimental import pallas as pl
from jax.experimental.pallas import tpu as pltpu

# ----------------------- model config (small shapes) -----------------------
IN_CHANNELS = 3
HIDDEN = 64
DEPTH = 2
NUM_HEADS = 4
MLP_RATIO = 4.0
LEARN_SIGMA = True
PRED_HORIZON = 1            # K
FREQ_EMB = 256              # TimestepEmbedder frequency_embedding_size
CENTER_SCENE = True         # model_cfg.center_scene
EPS = 1e-6

OUT_CHANNELS = 3 * PRED_HORIZON * (2 if LEARN_SIGMA else 1)
MLP_HIDDEN = int(HIDDEN * MLP_RATIO)
HEAD_DIM = HIDDEN // NUM_HEADS
FLOW_CH = IN_CHANNELS * PRED_HORIZON

# kernel-input order for the packed weights (after scene, flow, tf)
PACKED_KEYS = [
    "ws", "wf", "be",
    "t_w1", "t_b1", "t_w2", "t_b2",
    "w_ada", "b_ada", "w_qkv", "b_qkv", "w_proj", "b_proj",
    "w_fc1", "b_fc1", "w_fc2", "b_fc2",
    "w_ada_f", "b_ada_f", "w_lin", "b_lin",
]


# ------------------------------ kernel helpers ------------------------------
def _layernorm(v):
    # nn.LayerNorm(..., elementwise_affine=False, eps=1e-6) over last dim (f32)
    mu = jnp.mean(v, axis=-1, keepdims=True)
    var = jnp.mean(jnp.square(v - mu), axis=-1, keepdims=True)
    return (v - mu) * jax.lax.rsqrt(var + EPS)


def _silu(v):
    return v * jax.nn.sigmoid(v)


# ------------------------------ fused kernel --------------------------------
# One grid step == one batch element.  Tokens for this batch stay resident in
# vregs/VMEM for the whole network; weights are shared (constant block index).
def fused_dit_kernel(scene_ref, flow_ref, tf_ref,
                     ws_ref, wf_ref, be_ref,
                     tw1_ref, tb1_ref, tw2_ref, tb2_ref,
                     wada_ref, bada_ref, wqkv_ref, bqkv_ref,
                     wproj_ref, bproj_ref,
                     wfc1_ref, bfc1_ref, wfc2_ref, bfc2_ref,
                     wadaf_ref, badaf_ref, wlin_ref, blin_ref,
                     out_ref):
    f32 = jnp.float32
    bf16 = jnp.bfloat16
    H = HIDDEN
    HD = HEAD_DIM

    # ---------------- embedders (1x1 Conv1d == per-point linear) ----------------
    scene = scene_ref[0]                                   # (N, 3) f32
    flow = flow_ref[0]                                     # (N, 3K) f32
    if CENTER_SCENE:
        scene = scene - jnp.mean(scene, axis=0, keepdims=True)   # per-batch centering

    # ws/wf are zero-padded to full H so scene feats land in lanes [0, H/2) and flow
    # feats in [H/2, H): the torch.cat happens "inside" the matmuls (no lane concat).
    x = (jnp.dot(scene.astype(bf16), ws_ref[...], preferred_element_type=f32)
         + jnp.dot(flow.astype(bf16), wf_ref[...], preferred_element_type=f32)
         + be_ref[...])                                    # (N, H) f32

    # ---------------- TimestepEmbedder MLP: Linear -> SiLU -> Linear ------------
    tf = tf_ref[0]                                         # (1, FREQ_EMB) f32
    th = jnp.dot(tf.astype(bf16), tw1_ref[...], preferred_element_type=f32) + tb1_ref[...]
    th = _silu(th)
    c = jnp.dot(th.astype(bf16), tw2_ref[...], preferred_element_type=f32) + tb2_ref[...]
    sc = _silu(c).astype(bf16)                             # (1, H) adaLN input

    att_scale = 1.0 / math.sqrt(HD)

    # ------------------------------- DiT blocks ---------------------------------
    for l in range(DEPTH):
        # All 6 adaLN chunks in ONE tiny (1,H)x(H,6H) matmul; chunks are lane slices.
        mod = jnp.dot(sc, wada_ref[l], preferred_element_type=f32) + bada_ref[l]   # (1, 6H)
        shift_msa = mod[:, 0 * H:1 * H]
        scale_msa = mod[:, 1 * H:2 * H]
        gate_msa = mod[:, 2 * H:3 * H]
        shift_mlp = mod[:, 3 * H:4 * H]
        scale_mlp = mod[:, 4 * H:5 * H]
        gate_mlp = mod[:, 5 * H:6 * H]

        # ---- attention branch (per-batch, no mask) ----
        xm = (_layernorm(x) * (1.0 + scale_msa) + shift_msa).astype(bf16)   # (N, H)

        # fused QKV: one (N,H)x(H,3H) matmul; heads are static lane slices
        qkv = jnp.dot(xm, wqkv_ref[l], preferred_element_type=f32) + bqkv_ref[l]    # (N, 3H)

        heads = []
        for h in range(NUM_HEADS):
            q_h = qkv[:, 0 * H + h * HD: 0 * H + (h + 1) * HD].astype(bf16)   # (N, HD)
            k_h = qkv[:, 1 * H + h * HD: 1 * H + (h + 1) * HD].astype(bf16)
            v_h = qkv[:, 2 * H + h * HD: 2 * H + (h + 1) * HD].astype(bf16)

            s = jax.lax.dot_general(q_h, k_h, (((1,), (1,)), ((), ())),
                                    preferred_element_type=f32) * att_scale   # (N, N)
            s = s - jnp.max(s, axis=-1, keepdims=True)
            p = jnp.exp(s)
            p = p * pl.reciprocal(jnp.sum(p, axis=-1, keepdims=True), approx=True)
            heads.append(jnp.dot(p.astype(bf16), v_h, preferred_element_type=f32))  # (N, HD)

        # fused output projection on the lane-concatenated heads: one (N,H)x(H,H) matmul
        attn = jnp.concatenate(heads, axis=-1).astype(bf16)                    # (N, H)
        attn = jnp.dot(attn, wproj_ref[l], preferred_element_type=f32) + bproj_ref[l]
        x = x + gate_msa * attn

        # ---- MLP branch ----
        xm2 = (_layernorm(x) * (1.0 + scale_mlp) + shift_mlp).astype(bf16)
        h1 = jnp.dot(xm2, wfc1_ref[l], preferred_element_type=f32) + bfc1_ref[l]
        h1 = jax.nn.gelu(h1, approximate=True)             # GELU(approximate='tanh'), f32
        h2 = jnp.dot(h1.astype(bf16), wfc2_ref[l], preferred_element_type=f32) + bfc2_ref[l]
        x = x + gate_mlp * h2

    # ------------------------------- final layer --------------------------------
    modf = jnp.dot(sc, wadaf_ref[...], preferred_element_type=f32) + badaf_ref[...]  # (1, 2H)
    shift_f = modf[:, 0:H]
    scale_f = modf[:, H:2 * H]
    xm_f = (_layernorm(x) * (1.0 + scale_f) + shift_f).astype(bf16)

    # transposed final linear -> (OUT, N): stores are length-N (lane-dense) rows
    out_t = jax.lax.dot_general(wlin_ref[...], xm_f, (((0,), (1,)), ((), ())),
                                preferred_element_type=f32) + blin_ref[...]          # (OUT, N)
    out_ref[0] = out_t


# ------------------------------- parameters ----------------------------------
def init_params(key):
    """Deterministic parameters in (in, out)-transposed PyTorch layout."""
    keys = iter(jax.random.split(key, 64))

    def w(shape, std=0.02):
        return jax.random.normal(next(keys), shape, jnp.float32) * std

    params = {
        # Conv1d(k=1) weights stored transposed: (in_ch, out_ch); biases as (1, out_ch)
        "ws": w((IN_CHANNELS, HIDDEN // 2)),
        "bs": w((1, HIDDEN // 2)),
        "wf": w((FLOW_CH, HIDDEN // 2)),
        "bf": w((1, HIDDEN // 2)),
        # TimestepEmbedder MLP (Linear weights stored as (in, out))
        "t_w1": w((FREQ_EMB, HIDDEN)),
        "t_b1": w((1, HIDDEN)),
        "t_w2": w((HIDDEN, HIDDEN)),
        "t_b2": w((1, HIDDEN)),
        "final": {
            "w_ada_f": w((HIDDEN, 2 * HIDDEN)),
            "b_ada_f": w((1, 2 * HIDDEN)),
            "w_lin": w((HIDDEN, OUT_CHANNELS)),
            "b_lin": w((1, OUT_CHANNELS)),
        },
        "blocks": [],
    }
    for _ in range(DEPTH):
        params["blocks"].append({
            "w_ada": w((HIDDEN, 6 * HIDDEN)),
            "b_ada": w((1, 6 * HIDDEN)),
            "w_qkv": w((HIDDEN, 3 * HIDDEN)),
            "b_qkv": w((1, 3 * HIDDEN)),
            "w_proj": w((HIDDEN, HIDDEN)),
            "b_proj": w((1, HIDDEN)),
            "w_fc1": w((HIDDEN, MLP_HIDDEN)),
            "b_fc1": w((1, MLP_HIDDEN)),
            "w_fc2": w((MLP_HIDDEN, HIDDEN)),
            "b_fc2": w((1, HIDDEN)),
        })
    return params


def pack_params(p):
    """One-time repack: stack per-block weights on a leading (layer) axis, fold the
    embedder concat into zero-padded weights, and cast MXU-side weights to bf16
    (biases stay f32 for f32 VPU adds).  adaLN / qkv weights stay lane-packed so the
    kernel does ONE matmul per layer and selects chunks/heads with static lane slices."""
    H, D = HIDDEN, DEPTH
    bf16 = jnp.bfloat16

    def stack(name):
        return jnp.stack([blk[name] for blk in p["blocks"]], axis=0)

    # embedders: block-diagonal padding so scene -> lanes [0, H/2), flow -> [H/2, H)
    ws_pad = jnp.concatenate([p["ws"], jnp.zeros((IN_CHANNELS, H // 2), jnp.float32)],
                             axis=1).astype(bf16)
    wf_pad = jnp.concatenate([jnp.zeros((FLOW_CH, H // 2), jnp.float32), p["wf"]],
                             axis=1).astype(bf16)
    be = jnp.concatenate([p["bs"], p["bf"]], axis=1)

    fin = p["final"]
    return {
        "ws": ws_pad, "wf": wf_pad, "be": be,
        "t_w1": p["t_w1"].astype(bf16), "t_b1": p["t_b1"],
        "t_w2": p["t_w2"].astype(bf16), "t_b2": p["t_b2"],
        "w_ada": stack("w_ada").astype(bf16),          # (D, H, 6H)
        "b_ada": stack("b_ada"),                       # (D, 1, 6H)
        "w_qkv": stack("w_qkv").astype(bf16),          # (D, H, 3H)  lanes = [q|k|v] x heads
        "b_qkv": stack("b_qkv"),                       # (D, 1, 3H)
        "w_proj": stack("w_proj").astype(bf16),        # (D, H, H)   rows ordered [head, dim]
        "b_proj": stack("b_proj"),                     # (D, 1, H)
        "w_fc1": stack("w_fc1").astype(bf16),          # (D, H, 4H)
        "b_fc1": stack("b_fc1"),                       # (D, 1, 4H)
        "w_fc2": stack("w_fc2").astype(bf16),          # (D, 4H, H)
        "b_fc2": stack("b_fc2"),                       # (D, 1, H)
        "w_ada_f": fin["w_ada_f"].astype(bf16),        # (H, 2H)  lanes = [shift | scale]
        "b_ada_f": fin["b_ada_f"],                     # (1, 2H)
        "w_lin": fin["w_lin"].astype(bf16),            # (H, OUT)
        "b_lin": fin["b_lin"].T,                       # (OUT, 1) for (OUT, N) layout
    }


# ------------------------------- full forward --------------------------------
@jax.jit
def scene_flow_dit_forward(x_bcn, t, scene_bcn, packed):
    # x_bcn: (B, 3*K, N) noised flow; scene_bcn: (B, 3, N); t: (B,)
    B, _, N = x_bcn.shape

    # layout glue: NCW -> (B, N, C) point-token layout
    scene_tok = jnp.transpose(scene_bcn, (0, 2, 1))            # (B, N, 3)
    flow_tok = jnp.transpose(x_bcn, (0, 2, 1))                 # (B, N, 3K)

    # sinusoidal timestep frequency embedding (tiny; done in XLA glue)
    half = FREQ_EMB // 2
    freqs = jnp.exp(-math.log(10000.0) * jnp.arange(half, dtype=jnp.float32) / half)
    args = t.astype(jnp.float32)[:, None] * freqs[None, :]
    tf = jnp.concatenate([jnp.cos(args), jnp.sin(args)], axis=-1)[:, None, :]  # (B,1,FREQ)

    weights = [packed[k] for k in PACKED_KEYS]
    # weights: full-array VMEM blocks, constant block index -> DMA'd once, shared by all steps
    w_specs = [pl.BlockSpec(w.shape, (lambda b, nd=w.ndim: (0,) * nd)) for w in weights]
    in_specs = [
        pl.BlockSpec((1, N, IN_CHANNELS), lambda b: (b, 0, 0)),
        pl.BlockSpec((1, N, FLOW_CH), lambda b: (b, 0, 0)),
        pl.BlockSpec((1, 1, FREQ_EMB), lambda b: (b, 0, 0)),
    ] + w_specs

    return pl.pallas_call(
        fused_dit_kernel,
        out_shape=jax.ShapeDtypeStruct((B, OUT_CHANNELS, N), jnp.float32),
        grid=(B,),
        in_specs=in_specs,
        out_specs=pl.BlockSpec((1, OUT_CHANNELS, N), lambda b: (b, 0, 0)),
        compiler_params=pltpu.CompilerParams(dimension_semantics=("parallel",)),
    )(scene_tok, flow_tok, tf, *weights)


if __name__ == "__main__":
    key = jax.random.PRNGKey(0)
    kp, kx, ks, kt = jax.random.split(key, 4)
    params = init_params(kp)
    packed = pack_params(params)

    B, N = 2, 64
    x = jax.random.normal(kx, (B, FLOW_CH, N), jnp.float32)
    scene = jax.random.normal(ks, (B, IN_CHANNELS, N), jnp.float32)
    t = jax.random.randint(kt, (B,), 0, 1000).astype(jnp.float32)

    out = scene_flow_dit_forward(x, t, scene, packed)
    out = jax.block_until_ready(out)
    assert out.shape == (B, OUT_CHANNELS, N), out.shape
    assert bool(jnp.all(jnp.isfinite(out)))
    print("KERNEL_OK")
</pallas_src>

<mosaic_0001>
module attributes {stable_mosaic.version = 11 : i64} {
  func.func @fused_dit_kernel(%arg0: i32, %arg1: memref<1x64x3xf32, #tpu.memory_space<vmem>>, %arg2: memref<1x64x3xf32, #tpu.memory_space<vmem>>, %arg3: memref<1x1x256xf32, #tpu.memory_space<vmem>>, %arg4: memref<3x64xbf16, #tpu.memory_space<vmem>>, %arg5: memref<3x64xbf16, #tpu.memory_space<vmem>>, %arg6: memref<1x64xf32, #tpu.memory_space<vmem>>, %arg7: memref<256x64xbf16, #tpu.memory_space<vmem>>, %arg8: memref<1x64xf32, #tpu.memory_space<vmem>>, %arg9: memref<64x64xbf16, #tpu.memory_space<vmem>>, %arg10: memref<1x64xf32, #tpu.memory_space<vmem>>, %arg11: memref<2x64x384xbf16, #tpu.memory_space<vmem>>, %arg12: memref<2x1x384xf32, #tpu.memory_space<vmem>>, %arg13: memref<2x64x192xbf16, #tpu.memory_space<vmem>>, %arg14: memref<2x1x192xf32, #tpu.memory_space<vmem>>, %arg15: memref<2x64x64xbf16, #tpu.memory_space<vmem>>, %arg16: memref<2x1x64xf32, #tpu.memory_space<vmem>>, %arg17: memref<2x64x256xbf16, #tpu.memory_space<vmem>>, %arg18: memref<2x1x256xf32, #tpu.memory_space<vmem>>, %arg19: memref<2x256x64xbf16, #tpu.memory_space<vmem>>, %arg20: memref<2x1x64xf32, #tpu.memory_space<vmem>>, %arg21: memref<64x128xbf16, #tpu.memory_space<vmem>>, %arg22: memref<1x128xf32, #tpu.memory_space<vmem>>, %arg23: memref<64x6xbf16, #tpu.memory_space<vmem>>, %arg24: memref<6x1xf32, #tpu.memory_space<vmem>>, %arg25: memref<1x6x64xf32, #tpu.memory_space<vmem>>) attributes {dimension_semantics = [#tpu.dimension_semantics<parallel>], iteration_bounds = array<i64: 2>, scalar_prefetch = 0 : i64, scratch_operands = 0 : i64, tpu.core_type = #tpu.core_type<tc>, window_params = [{transform_indices = @transform_0, window_bounds = array<i64: 1, 64, 3>}, {transform_indices = @transform_1, window_bounds = array<i64: 1, 64, 3>}, {transform_indices = @transform_2, window_bounds = array<i64: 1, 1, 256>}, {pipeline_mode = #tpu.pipeline_mode<synchronous>, transform_indices = @transform_3, window_bounds = array<i64: 3, 64>}, {pipeline_mode = #tpu.pipeline_mode<synchronous>, transform_indices = @transform_4, window_bounds = array<i64: 3, 64>}, {pipeline_mode = #tpu.pipeline_mode<synchronous>, transform_indices = @transform_5, window_bounds = array<i64: 1, 64>}, {pipeline_mode = #tpu.pipeline_mode<synchronous>, transform_indices = @transform_6, window_bounds = array<i64: 256, 64>}, {pipeline_mode = #tpu.pipeline_mode<synchronous>, transform_indices = @transform_7, window_bounds = array<i64: 1, 64>}, {pipeline_mode = #tpu.pipeline_mode<synchronous>, transform_indices = @transform_8, window_bounds = array<i64: 64, 64>}, {pipeline_mode = #tpu.pipeline_mode<synchronous>, transform_indices = @transform_9, window_bounds = array<i64: 1, 64>}, {pipeline_mode = #tpu.pipeline_mode<synchronous>, transform_indices = @transform_10, window_bounds = array<i64: 2, 64, 384>}, {pipeline_mode = #tpu.pipeline_mode<synchronous>, transform_indices = @transform_11, window_bounds = array<i64: 2, 1, 384>}, {pipeline_mode = #tpu.pipeline_mode<synchronous>, transform_indices = @transform_12, window_bounds = array<i64: 2, 64, 192>}, {pipeline_mode = #tpu.pipeline_mode<synchronous>, transform_indices = @transform_13, window_bounds = array<i64: 2, 1, 192>}, {pipeline_mode = #tpu.pipeline_mode<synchronous>, transform_indices = @transform_14, window_bounds = array<i64: 2, 64, 64>}, {pipeline_mode = #tpu.pipeline_mode<synchronous>, transform_indices = @transform_15, window_bounds = array<i64: 2, 1, 64>}, {pipeline_mode = #tpu.pipeline_mode<synchronous>, transform_indices = @transform_16, window_bounds = array<i64: 2, 64, 256>}, {pipeline_mode = #tpu.pipeline_mode<synchronous>, transform_indices = @transform_17, window_bounds = array<i64: 2, 1, 256>}, {pipeline_mode = #tpu.pipeline_mode<synchronous>, transform_indices = @transform_18, window_bounds = array<i64: 2, 256, 64>}, {pipeline_mode = #tpu.pipeline_mode<synchronous>, transform_indices = @transform_19, window_bounds = array<i64: 2, 1, 64>}, {pipeline_mode = #tpu.pipeline_mode<synchronous>, transform_indices = @transform_20, window_bounds = array<i64: 64, 128>}, {pipeline_mode = #tpu.pipeline_mode<synchronous>, transform_indices = @transform_21, window_bounds = array<i64: 1, 128>}, {pipeline_mode = #tpu.pipeline_mode<synchronous>, transform_indices = @transform_22, window_bounds = array<i64: 64, 6>}, {pipeline_mode = #tpu.pipeline_mode<synchronous>, transform_indices = @transform_23, window_bounds = array<i64: 6, 1>}, {transform_indices = @transform_24, window_bounds = array<i64: 1, 6, 64>}]} {
    %c0 = arith.constant 0 : index
    %c0_0 = arith.constant 0 : index
    %c0_1 = arith.constant 0 : index
    %0 = vector.load %arg1[%c0, %c0_0, %c0_1] : memref<1x64x3xf32, #tpu.memory_space<vmem>>, vector<1x64x3xf32>
    %1 = vector.shape_cast %0 : vector<1x64x3xf32> to vector<64x3xf32>
    %c0_2 = arith.constant 0 : index
    %c0_3 = arith.constant 0 : index
    %c0_4 = arith.constant 0 : index
    %2 = vector.load %arg2[%c0_2, %c0_3, %c0_4] : memref<1x64x3xf32, #tpu.memory_space<vmem>>, vector<1x64x3xf32>
    %3 = vector.shape_cast %2 : vector<1x64x3xf32> to vector<64x3xf32>
    %cst = arith.constant dense<0.000000e+00> : vector<3xf32>
    %4 = vector.multi_reduction <add>, %1, %cst [0] : vector<64x3xf32> to vector<3xf32>
    %5 = vector.shape_cast %4 : vector<3xf32> to vector<1x3xf32>
    %cst_5 = arith.constant 6.400000e+01 : f32
    %6 = vector.broadcast %cst_5 : f32 to vector<1x3xf32>
    %7 = arith.divf %5, %6 : vector<1x3xf32>
    %8 = vector.broadcast %7 : vector<1x3xf32> to vector<64x3xf32>
    %9 = arith.subf %1, %8 : vector<64x3xf32>
    %10 = arith.truncf %9 : vector<64x3xf32> to vector<64x3xbf16>
    %c0_6 = arith.constant 0 : index
    %c0_7 = arith.constant 0 : index
    %11 = vector.load %arg4[%c0_6, %c0_7] : memref<3x64xbf16, #tpu.memory_space<vmem>>, vector<3x64xbf16>
    %cst_8 = arith.constant dense<0.000000e+00> : vector<64x64xf32>
    %12 = tpu.matmul %10, %11, %cst_8 {dimension_numbers = #tpu.dot_dimension_numbers<[1], [0], [0], [1], [0, 0, 1, 1], [], []>} : vector<64x3xbf16>, vector<3x64xbf16>, vector<64x64xf32> -> vector<64x64xf32>
    %13 = arith.truncf %3 : vector<64x3xf32> to vector<64x3xbf16>
    %c0_9 = arith.constant 0 : index
    %c0_10 = arith.constant 0 : index
    %14 = vector.load %arg5[%c0_9, %c0_10] : memref<3x64xbf16, #tpu.memory_space<vmem>>, vector<3x64xbf16>
    %cst_11 = arith.constant dense<0.000000e+00> : vector<64x64xf32>
    %15 = tpu.matmul %13, %14, %cst_11 {dimension_numbers = #tpu.dot_dimension_numbers<[1], [0], [0], [1], [0, 0, 1, 1], [], []>} : vector<64x3xbf16>, vector<3x64xbf16>, vector<64x64xf32> -> vector<64x64xf32>
    %16 = arith.addf %12, %15 : vector<64x64xf32>
    %c0_12 = arith.constant 0 : index
    %c0_13 = arith.constant 0 : index
    %17 = vector.load %arg6[%c0_12, %c0_13] : memref<1x64xf32, #tpu.memory_space<vmem>>, vector<1x64xf32>
    %18 = vector.broadcast %17 : vector<1x64xf32> to vector<64x64xf32>
    %19 = arith.addf %16, %18 : vector<64x64xf32>
    %c0_14 = arith.constant 0 : index
    %c0_15 = arith.constant 0 : index
    %c0_16 = arith.constant 0 : index
    %20 = vector.load %arg3[%c0_14, %c0_15, %c0_16] : memref<1x1x256xf32, #tpu.memory_space<vmem>>, vector<1x1x256xf32>
    %21 = vector.shape_cast %20 : vector<1x1x256xf32> to vector<1x256xf32>
    %22 = arith.truncf %21 : vector<1x256xf32> to vector<1x256xbf16>
    %c0_17 = arith.constant 0 : index
    %c0_18 = arith.constant 0 : index
    %23 = vector.load %arg7[%c0_17, %c0_18] : memref<256x64xbf16, #tpu.memory_space<vmem>>, vector<256x64xbf16>
    %cst_19 = arith.constant dense<0.000000e+00> : vector<1x64xf32>
    %24 = tpu.matmul %22, %23, %cst_19 {dimension_numbers = #tpu.dot_dimension_numbers<[1], [0], [0], [1], [0, 0, 1, 1], [], []>} : vector<1x256xbf16>, vector<256x64xbf16>, vector<1x64xf32> -> vector<1x64xf32>
    %c0_20 = arith.constant 0 : index
    %c0_21 = arith.constant 0 : index
    %25 = vector.load %arg8[%c0_20, %c0_21] : memref<1x64xf32, #tpu.memory_space<vmem>>, vector<1x64xf32>
    %26 = arith.addf %24, %25 : vector<1x64xf32>
    %27 = arith.negf %26 : vector<1x64xf32>
    %28 = math.exp %27 : vector<1x64xf32>
    %cst_22 = arith.constant 1.000000e+00 : f32
    %29 = vector.broadcast %cst_22 : f32 to vector<1x64xf32>
    %30 = arith.addf %29, %28 : vector<1x64xf32>
    %31 = arith.divf %29, %30 : vector<1x64xf32>
    %32 = arith.mulf %26, %31 : vector<1x64xf32>
    %33 = arith.truncf %32 : vector<1x64xf32> to vector<1x64xbf16>
    %c0_23 = arith.constant 0 : index
    %c0_24 = arith.constant 0 : index
    %34 = vector.load %arg9[%c0_23, %c0_24] : memref<64x64xbf16, #tpu.memory_space<vmem>>, vector<64x64xbf16>
    %cst_25 = arith.constant dense<0.000000e+00> : vector<1x64xf32>
    %35 = tpu.matmul %33, %34, %cst_25 {dimension_numbers = #tpu.dot_dimension_numbers<[1], [0], [0], [1], [0, 0, 1, 1], [], []>} : vector<1x64xbf16>, vector<64x64xbf16>, vector<1x64xf32> -> vector<1x64xf32>
    %c0_26 = arith.constant 0 : index
    %c0_27 = arith.constant 0 : index
    %36 = vector.load %arg10[%c0_26, %c0_27] : memref<1x64xf32, #tpu.memory_space<vmem>>, vector<1x64xf32>
    %37 = arith.addf %35, %36 : vector<1x64xf32>
    %38 = arith.negf %37 : vector<1x64xf32>
    %39 = math.exp %38 : vector<1x64xf32>
    %cst_28 = arith.constant 1.000000e+00 : f32
    %40 = vector.broadcast %cst_28 : f32 to vector<1x64xf32>
    %41 = arith.addf %40, %39 : vector<1x64xf32>
    %42 = arith.divf %40, %41 : vector<1x64xf32>
    %43 = arith.mulf %37, %42 : vector<1x64xf32>
    %44 = arith.truncf %43 : vector<1x64xf32> to vector<1x64xbf16>
    %c0_29 = arith.constant 0 : index
    %c0_30 = arith.constant 0 : index
    %c0_31 = arith.constant 0 : index
    %45 = vector.load %arg11[%c0_29, %c0_30, %c0_31] : memref<2x64x384xbf16, #tpu.memory_space<vmem>>, vector<1x64x384xbf16>
    %46 = vector.shape_cast %45 : vector<1x64x384xbf16> to vector<64x384xbf16>
    %cst_32 = arith.constant dense<0.000000e+00> : vector<1x384xf32>
    %47 = tpu.matmul %44, %46, %cst_32 {dimension_numbers = #tpu.dot_dimension_numbers<[1], [0], [0], [1], [0, 0, 1, 1], [], []>} : vector<1x64xbf16>, vector<64x384xbf16>, vector<1x384xf32> -> vector<1x384xf32>
    %c0_33 = arith.constant 0 : index
    %c0_34 = arith.constant 0 : index
    %c0_35 = arith.constant 0 : index
    %48 = vector.load %arg12[%c0_33, %c0_34, %c0_35] : memref<2x1x384xf32, #tpu.memory_space<vmem>>, vector<1x1x384xf32>
    %49 = vector.shape_cast %48 : vector<1x1x384xf32> to vector<1x384xf32>
    %50 = arith.addf %47, %49 : vector<1x384xf32>
    %51 = vector.extract_strided_slice %50 {offsets = [0, 0], sizes = [1, 64], strides = [1, 1]} : vector<1x384xf32> to vector<1x64xf32>
    %52 = vector.extract_strided_slice %50 {offsets = [0, 64], sizes = [1, 64], strides = [1, 1]} : vector<1x384xf32> to vector<1x64xf32>
    %53 = vector.extract_strided_slice %50 {offsets = [0, 128], sizes = [1, 64], strides = [1, 1]} : vector<1x384xf32> to vector<1x64xf32>
    %54 = vector.extract_strided_slice %50 {offsets = [0, 192], sizes = [1, 64], strides = [1, 1]} : vector<1x384xf32> to vector<1x64xf32>
    %55 = vector.extract_strided_slice %50 {offsets = [0, 256], sizes = [1, 64], strides = [1, 1]} : vector<1x384xf32> to vector<1x64xf32>
    %56 = vector.extract_strided_slice %50 {offsets = [0, 320], sizes = [1, 64], strides = [1, 1]} : vector<1x384xf32> to vector<1x64xf32>
    %cst_36 = arith.constant dense<0.000000e+00> : vector<64xf32>
    %57 = vector.multi_reduction <add>, %19, %cst_36 [1] : vector<64x64xf32> to vector<64xf32>
    %58 = vector.shape_cast %57 : vector<64xf32> to vector<64x1xf32>
    %cst_37 = arith.constant 6.400000e+01 : f32
    %59 = vector.broadcast %cst_37 : f32 to vector<64x1xf32>
    %60 = arith.divf %58, %59 : vector<64x1xf32>
    %61 = vector.broadcast %60 : vector<64x1xf32> to vector<64x64xf32>
    %62 = arith.subf %19, %61 : vector<64x64xf32>
    %63 = arith.mulf %62, %62 : vector<64x64xf32>
    %cst_38 = arith.constant dense<0.000000e+00> : vector<64xf32>
    %64 = vector.multi_reduction <add>, %63, %cst_38 [1] : vector<64x64xf32> to vector<64xf32>
    %65 = vector.shape_cast %64 : vector<64xf32> to vector<64x1xf32>
    %cst_39 = arith.constant 6.400000e+01 : f32
    %66 = vector.broadcast %cst_39 : f32 to vector<64x1xf32>
    %67 = arith.divf %65, %66 : vector<64x1xf32>
    %68 = vector.broadcast %60 : vector<64x1xf32> to vector<64x64xf32>
    %69 = arith.subf %19, %68 : vector<64x64xf32>
    %cst_40 = arith.constant 9.99999997E-7 : f32
    %70 = vector.broadcast %cst_40 : f32 to vector<64x1xf32>
    %71 = arith.addf %67, %70 : vector<64x1xf32>
    %72 = math.rsqrt %71 : vector<64x1xf32>
    %73 = vector.broadcast %72 : vector<64x1xf32> to vector<64x64xf32>
    %74 = arith.mulf %69, %73 : vector<64x64xf32>
    %cst_41 = arith.constant 1.000000e+00 : f32
    %75 = vector.broadcast %cst_41 : f32 to vector<1x64xf32>
    %76 = arith.addf %75, %52 : vector<1x64xf32>
    %77 = vector.broadcast %76 : vector<1x64xf32> to vector<64x64xf32>
    %78 = arith.mulf %74, %77 : vector<64x64xf32>
    %79 = vector.broadcast %51 : vector<1x64xf32> to vector<64x64xf32>
    %80 = arith.addf %78, %79 : vector<64x64xf32>
    %81 = arith.truncf %80 : vector<64x64xf32> to vector<64x64xbf16>
    %c0_42 = arith.constant 0 : index
    %c0_43 = arith.constant 0 : index
    %c0_44 = arith.constant 0 : index
    %82 = vector.load %arg13[%c0_42, %c0_43, %c0_44] : memref<2x64x192xbf16, #tpu.memory_space<vmem>>, vector<1x64x192xbf16>
    %83 = vector.shape_cast %82 : vector<1x64x192xbf16> to vector<64x192xbf16>
    %cst_45 = arith.constant dense<0.000000e+00> : vector<64x192xf32>
    %84 = tpu.matmul %81, %83, %cst_45 {dimension_numbers = #tpu.dot_dimension_numbers<[1], [0], [0], [1], [0, 0, 1, 1], [], []>} : vector<64x64xbf16>, vector<64x192xbf16>, vector<64x192xf32> -> vector<64x192xf32>
    %c0_46 = arith.constant 0 : index
    %c0_47 = arith.constant 0 : index
    %c0_48 = arith.constant 0 : index
    %85 = vector.load %arg14[%c0_46, %c0_47, %c0_48] : memref<2x1x192xf32, #tpu.memory_space<vmem>>, vector<1x1x192xf32>
    %86 = vector.shape_cast %85 : vector<1x1x192xf32> to vector<1x192xf32>
    %87 = vector.broadcast %86 : vector<1x192xf32> to vector<64x192xf32>
    %88 = arith.addf %84, %87 : vector<64x192xf32>
    %89 = vector.extract_strided_slice %88 {offsets = [0, 0], sizes = [64, 16], strides = [1, 1]} : vector<64x192xf32> to vector<64x16xf32>
    %90 = arith.truncf %89 : vector<64x16xf32> to vector<64x16xbf16>
    %91 = vector.extract_strided_slice %88 {offsets = [0, 64], sizes = [64, 16], strides = [1, 1]} : vector<64x192xf32> to vector<64x16xf32>
    %92 = arith.truncf %91 : vector<64x16xf32> to vector<64x16xbf16>
    %93 = vector.extract_strided_slice %88 {offsets = [0, 128], sizes = [64, 16], strides = [1, 1]} : vector<64x192xf32> to vector<64x16xf32>
    %94 = arith.truncf %93 : vector<64x16xf32> to vector<64x16xbf16>
    %cst_49 = arith.constant dense<0.000000e+00> : vector<64x64xf32>
    %95 = tpu.matmul %90, %92, %cst_49 {dimension_numbers = #tpu.dot_dimension_numbers<[1], [1], [0], [0], [0, 0, 1, 0], [], []>} : vector<64x16xbf16>, vector<64x16xbf16>, vector<64x64xf32> -> vector<64x64xf32>
    %cst_50 = arith.constant 2.500000e-01 : f32
    %96 = vector.broadcast %cst_50 : f32 to vector<64x64xf32>
    %97 = arith.mulf %95, %96 : vector<64x64xf32>
    %cst_51 = arith.constant dense<0xFF800000> : vector<64xf32>
    %98 = vector.multi_reduction <maximumf>, %97, %cst_51 [1] : vector<64x64xf32> to vector<64xf32>
    %99 = vector.shape_cast %98 : vector<64xf32> to vector<64x1xf32>
    %100 = vector.broadcast %99 : vector<64x1xf32> to vector<64x64xf32>
    %101 = arith.subf %97, %100 : vector<64x64xf32>
    %102 = math.exp %101 : vector<64x64xf32>
    %cst_52 = arith.constant dense<0.000000e+00> : vector<64xf32>
    %103 = vector.multi_reduction <add>, %102, %cst_52 [1] : vector<64x64xf32> to vector<64xf32>
    %104 = vector.shape_cast %103 : vector<64xf32> to vector<64x1xf32>
    %105 = tpu.reciprocal %104 {approx = true} : vector<64x1xf32> -> vector<64x1xf32>
    %106 = vector.broadcast %105 : vector<64x1xf32> to vector<64x64xf32>
    %107 = arith.mulf %102, %106 : vector<64x64xf32>
    %108 = arith.truncf %107 : vector<64x64xf32> to vector<64x64xbf16>
    %cst_53 = arith.constant dense<0.000000e+00> : vector<64x16xf32>
    %109 = tpu.matmul %108, %94, %cst_53 {dimension_numbers = #tpu.dot_dimension_numbers<[1], [0], [0], [1], [0, 0, 1, 1], [], []>} : vector<64x64xbf16>, vector<64x16xbf16>, vector<64x16xf32> -> vector<64x16xf32>
    %110 = vector.extract_strided_slice %88 {offsets = [0, 16], sizes = [64, 16], strides = [1, 1]} : vector<64x192xf32> to vector<64x16xf32>
    %111 = arith.truncf %110 : vector<64x16xf32> to vector<64x16xbf16>
    %112 = vector.extract_strided_slice %88 {offsets = [0, 80], sizes = [64, 16], strides = [1, 1]} : vector<64x192xf32> to vector<64x16xf32>
    %113 = arith.truncf %112 : vector<64x16xf32> to vector<64x16xbf16>
    %114 = vector.extract_strided_slice %88 {offsets = [0, 144], sizes = [64, 16], strides = [1, 1]} : vector<64x192xf32> to vector<64x16xf32>
    %115 = arith.truncf %114 : vector<64x16xf32> to vector<64x16xbf16>
    %cst_54 = arith.constant dense<0.000000e+00> : vector<64x64xf32>
    %116 = tpu.matmul %111, %113, %cst_54 {dimension_numbers = #tpu.dot_dimension_numbers<[1], [1], [0], [0], [0, 0, 1, 0], [], []>} : vector<64x16xbf16>, vector<64x16xbf16>, vector<64x64xf32> -> vector<64x64xf32>
    %cst_55 = arith.constant 2.500000e-01 : f32
    %117 = vector.broadcast %cst_55 : f32 to vector<64x64xf32>
    %118 = arith.mulf %116, %117 : vector<64x64xf32>
    %cst_56 = arith.constant dense<0xFF800000> : vector<64xf32>
    %119 = vector.multi_reduction <maximumf>, %118, %cst_56 [1] : vector<64x64xf32> to vector<64xf32>
    %120 = vector.shape_cast %119 : vector<64xf32> to vector<64x1xf32>
    %121 = vector.broadcast %120 : vector<64x1xf32> to vector<64x64xf32>
    %122 = arith.subf %118, %121 : vector<64x64xf32>
    %123 = math.exp %122 : vector<64x64xf32>
    %cst_57 = arith.constant dense<0.000000e+00> : vector<64xf32>
    %124 = vector.multi_reduction <add>, %123, %cst_57 [1] : vector<64x64xf32> to vector<64xf32>
    %125 = vector.shape_cast %124 : vector<64xf32> to vector<64x1xf32>
    %126 = tpu.reciprocal %125 {approx = true} : vector<64x1xf32> -> vector<64x1xf32>
    %127 = vector.broadcast %126 : vector<64x1xf32> to vector<64x64xf32>
    %128 = arith.mulf %123, %127 : vector<64x64xf32>
    %129 = arith.truncf %128 : vector<64x64xf32> to vector<64x64xbf16>
    %cst_58 = arith.constant dense<0.000000e+00> : vector<64x16xf32>
    %130 = tpu.matmul %129, %115, %cst_58 {dimension_numbers = #tpu.dot_dimension_numbers<[1], [0], [0], [1], [0, 0, 1, 1], [], []>} : vector<64x64xbf16>, vector<64x16xbf16>, vector<64x16xf32> -> vector<64x16xf32>
    %131 = vector.extract_strided_slice %88 {offsets = [0, 32], sizes = [64, 16], strides = [1, 1]} : vector<64x192xf32> to vector<64x16xf32>
    %132 = arith.truncf %131 : vector<64x16xf32> to vector<64x16xbf16>
    %133 = vector.extract_strided_slice %88 {offsets = [0, 96], sizes = [64, 16], strides = [1, 1]} : vector<64x192xf32> to vector<64x16xf32>
    %134 = arith.truncf %133 : vector<64x16xf32> to vector<64x16xbf16>
    %135 = vector.extract_strided_slice %88 {offsets = [0, 160], sizes = [64, 16], strides = [1, 1]} : vector<64x192xf32> to vector<64x16xf32>
    %136 = arith.truncf %135 : vector<64x16xf32> to vector<64x16xbf16>
    %cst_59 = arith.constant dense<0.000000e+00> : vector<64x64xf32>
    %137 = tpu.matmul %132, %134, %cst_59 {dimension_numbers = #tpu.dot_dimension_numbers<[1], [1], [0], [0], [0, 0, 1, 0], [], []>} : vector<64x16xbf16>, vector<64x16xbf16>, vector<64x64xf32> -> vector<64x64xf32>
    %cst_60 = arith.constant 2.500000e-01 : f32
    %138 = vector.broadcast %cst_60 : f32 to vector<64x64xf32>
    %139 = arith.mulf %137, %138 : vector<64x64xf32>
    %cst_61 = arith.constant dense<0xFF800000> : vector<64xf32>
    %140 = vector.multi_reduction <maximumf>, %139, %cst_61 [1] : vector<64x64xf32> to vector<64xf32>
    %141 = vector.shape_cast %140 : vector<64xf32> to vector<64x1xf32>
    %142 = vector.broadcast %141 : vector<64x1xf32> to vector<64x64xf32>
    %143 = arith.subf %139, %142 : vector<64x64xf32>
    %144 = math.exp %143 : vector<64x64xf32>
    %cst_62 = arith.constant dense<0.000000e+00> : vector<64xf32>
    %145 = vector.multi_reduction <add>, %144, %cst_62 [1] : vector<64x64xf32> to vector<64xf32>
    %146 = vector.shape_cast %145 : vector<64xf32> to vector<64x1xf32>
    %147 = tpu.reciprocal %146 {approx = true} : vector<64x1xf32> -> vector<64x1xf32>
    %148 = vector.broadcast %147 : vector<64x1xf32> to vector<64x64xf32>
    %149 = arith.mulf %144, %148 : vector<64x64xf32>
    %150 = arith.truncf %149 : vector<64x64xf32> to vector<64x64xbf16>
    %cst_63 = arith.constant dense<0.000000e+00> : vector<64x16xf32>
    %151 = tpu.matmul %150, %136, %cst_63 {dimension_numbers = #tpu.dot_dimension_numbers<[1], [0], [0], [1], [0, 0, 1, 1], [], []>} : vector<64x64xbf16>, vector<64x16xbf16>, vector<64x16xf32> -> vector<64x16xf32>
    %152 = vector.extract_strided_slice %88 {offsets = [0, 48], sizes = [64, 16], strides = [1, 1]} : vector<64x192xf32> to vector<64x16xf32>
    %153 = arith.truncf %152 : vector<64x16xf32> to vector<64x16xbf16>
    %154 = vector.extract_strided_slice %88 {offsets = [0, 112], sizes = [64, 16], strides = [1, 1]} : vector<64x192xf32> to vector<64x16xf32>
    %155 = arith.truncf %154 : vector<64x16xf32> to vector<64x16xbf16>
    %156 = vector.extract_strided_slice %88 {offsets = [0, 176], sizes = [64, 16], strides = [1, 1]} : vector<64x192xf32> to vector<64x16xf32>
    %157 = arith.truncf %156 : vector<64x16xf32> to vector<64x16xbf16>
    %cst_64 = arith.constant dense<0.000000e+00> : vector<64x64xf32>
    %158 = tpu.matmul %153, %155, %cst_64 {dimension_numbers = #tpu.dot_dimension_numbers<[1], [1], [0], [0], [0, 0, 1, 0], [], []>} : vector<64x16xbf16>, vector<64x16xbf16>, vector<64x64xf32> -> vector<64x64xf32>
    %cst_65 = arith.constant 2.500000e-01 : f32
    %159 = vector.broadcast %cst_65 : f32 to vector<64x64xf32>
    %160 = arith.mulf %158, %159 : vector<64x64xf32>
    %cst_66 = arith.constant dense<0xFF800000> : vector<64xf32>
    %161 = vector.multi_reduction <maximumf>, %160, %cst_66 [1] : vector<64x64xf32> to vector<64xf32>
    %162 = vector.shape_cast %161 : vector<64xf32> to vector<64x1xf32>
    %163 = vector.broadcast %162 : vector<64x1xf32> to vector<64x64xf32>
    %164 = arith.subf %160, %163 : vector<64x64xf32>
    %165 = math.exp %164 : vector<64x64xf32>
    %cst_67 = arith.constant dense<0.000000e+00> : vector<64xf32>
    %166 = vector.multi_reduction <add>, %165, %cst_67 [1] : vector<64x64xf32> to vector<64xf32>
    %167 = vector.shape_cast %166 : vector<64xf32> to vector<64x1xf32>
    %168 = tpu.reciprocal %167 {approx = true} : vector<64x1xf32> -> vector<64x1xf32>
    %169 = vector.broadcast %168 : vector<64x1xf32> to vector<64x64xf32>
    %170 = arith.mulf %165, %169 : vector<64x64xf32>
    %171 = arith.truncf %170 : vector<64x64xf32> to vector<64x64xbf16>
    %cst_68 = arith.constant dense<0.000000e+00> : vector<64x16xf32>
    %172 = tpu.matmul %171, %157, %cst_68 {dimension_numbers = #tpu.dot_dimension_numbers<[1], [0], [0], [1], [0, 0, 1, 1], [], []>} : vector<64x64xbf16>, vector<64x16xbf16>, vector<64x16xf32> -> vector<64x16xf32>
    %173 = tpu.concatenate %109, %130, %151, %172 in 1 : vector<64x16xf32>, vector<64x16xf32>, vector<64x16xf32>, vector<64x16xf32> -> vector<64x64xf32>
    %174 = arith.truncf %173 : vector<64x64xf32> to vector<64x64xbf16>
    %c0_69 = arith.constant 0 : index
    %c0_70 = arith.constant 0 : index
    %c0_71 = arith.constant 0 : index
    %175 = vector.load %arg15[%c0_69, %c0_70, %c0_71] : memref<2x64x64xbf16, #tpu.memory_space<vmem>>, vector<1x64x64xbf16>
    %176 = vector.shape_cast %175 : vector<1x64x64xbf16> to vector<64x64xbf16>
    %cst_72 = arith.constant dense<0.000000e+00> : vector<64x64xf32>
    %177 = tpu.matmul %174, %176, %cst_72 {dimension_numbers = #tpu.dot_dimension_numbers<[1], [0], [0], [1], [0, 0, 1, 1], [], []>} : vector<64x64xbf16>, vector<64x64xbf16>, vector<64x64xf32> -> vector<64x64xf32>
    %c0_73 = arith.constant 0 : index
    %c0_74 = arith.constant 0 : index
    %c0_75 = arith.constant 0 : index
    %178 = vector.load %arg16[%c0_73, %c0_74, %c0_75] : memref<2x1x64xf32, #tpu.memory_space<vmem>>, vector<1x1x64xf32>
    %179 = vector.shape_cast %178 : vector<1x1x64xf32> to vector<1x64xf32>
    %180 = vector.broadcast %179 : vector<1x64xf32> to vector<64x64xf32>
    %181 = arith.addf %177, %180 : vector<64x64xf32>
    %182 = vector.broadcast %53 : vector<1x64xf32> to vector<64x64xf32>
    %183 = arith.mulf %182, %181 : vector<64x64xf32>
    %184 = arith.addf %19, %183 : vector<64x64xf32>
    %cst_76 = arith.constant dense<0.000000e+00> : vector<64xf32>
    %185 = vector.multi_reduction <add>, %184, %cst_76 [1] : vector<64x64xf32> to vector<64xf32>
    %186 = vector.shape_cast %185 : vector<64xf32> to vector<64x1xf32>
    %cst_77 = arith.constant 6.400000e+01 : f32
    %187 = vector.broadcast %cst_77 : f32 to vector<64x1xf32>
    %188 = arith.divf %186, %187 : vector<64x1xf32>
    %189 = vector.broadcast %188 : vector<64x1xf32> to vector<64x64xf32>
    %190 = arith.subf %184, %189 : vector<64x64xf32>
    %191 = arith.mulf %190, %190 : vector<64x64xf32>
    %cst_78 = arith.constant dense<0.000000e+00> : vector<64xf32>
    %192 = vector.multi_reduction <add>, %191, %cst_78 [1] : vector<64x64xf32> to vector<64xf32>
    %193 = vector.shape_cast %192 : vector<64xf32> to vector<64x1xf32>
    %cst_79 = arith.constant 6.400000e+01 : f32
    %194 = vector.broadcast %cst_79 : f32 to vector<64x1xf32>
    %195 = arith.divf %193, %194 : vector<64x1xf32>
    %196 = vector.broadcast %188 : vector<64x1xf32> to vector<64x64xf32>
    %197 = arith.subf %184, %196 : vector<64x64xf32>
    %cst_80 = arith.constant 9.99999997E-7 : f32
    %198 = vector.broadcast %cst_80 : f32 to vector<64x1xf32>
    %199 = arith.addf %195, %198 : vector<64x1xf32>
    %200 = math.rsqrt %199 : vector<64x1xf32>
    %201 = vector.broadcast %200 : vector<64x1xf32> to vector<64x64xf32>
    %202 = arith.mulf %197, %201 : vector<64x64xf32>
    %cst_81 = arith.constant 1.000000e+00 : f32
    %203 = vector.broadcast %cst_81 : f32 to vector<1x64xf32>
    %204 = arith.addf %203, %55 : vector<1x64xf32>
    %205 = vector.broadcast %204 : vector<1x64xf32> to vector<64x64xf32>
    %206 = arith.mulf %202, %205 : vector<64x64xf32>
    %207 = vector.broadcast %54 : vector<1x64xf32> to vector<64x64xf32>
    %208 = arith.addf %206, %207 : vector<64x64xf32>
    %209 = arith.truncf %208 : vector<64x64xf32> to vector<64x64xbf16>
    %c0_82 = arith.constant 0 : index
    %c0_83 = arith.constant 0 : index
    %c0_84 = arith.constant 0 : index
    %210 = vector.load %arg17[%c0_82, %c0_83, %c0_84] : memref<2x64x256xbf16, #tpu.memory_space<vmem>>, vector<1x64x256xbf16>
    %211 = vector.shape_cast %210 : vector<1x64x256xbf16> to vector<64x256xbf16>
    %cst_85 = arith.constant dense<0.000000e+00> : vector<64x256xf32>
    %212 = tpu.matmul %209, %211, %cst_85 {dimension_numbers = #tpu.dot_dimension_numbers<[1], [0], [0], [1], [0, 0, 1, 1], [], []>} : vector<64x64xbf16>, vector<64x256xbf16>, vector<64x256xf32> -> vector<64x256xf32>
    %c0_86 = arith.constant 0 : index
    %c0_87 = arith.constant 0 : index
    %c0_88 = arith.constant 0 : index
    %213 = vector.load %arg18[%c0_86, %c0_87, %c0_88] : memref<2x1x256xf32, #tpu.memory_space<vmem>>, vector<1x1x256xf32>
    %214 = vector.shape_cast %213 : vector<1x1x256xf32> to vector<1x256xf32>
    %215 = vector.broadcast %214 : vector<1x256xf32> to vector<64x256xf32>
    %216 = arith.addf %212, %215 : vector<64x256xf32>
    %217 = arith.mulf %216, %216 : vector<64x256xf32>
    %218 = arith.mulf %216, %217 : vector<64x256xf32>
    %cst_89 = arith.constant 4.471500e-02 : f32
    %219 = vector.broadcast %cst_89 : f32 to vector<64x256xf32>
    %220 = arith.mulf %219, %218 : vector<64x256xf32>
    %221 = arith.addf %216, %220 : vector<64x256xf32>
    %cst_90 = arith.constant 0.797884583 : f32
    %222 = vector.broadcast %cst_90 : f32 to vector<64x256xf32>
    %223 = arith.mulf %222, %221 : vector<64x256xf32>
    %224 = math.tanh %223 : vector<64x256xf32>
    %cst_91 = arith.constant 1.000000e+00 : f32
    %225 = vector.broadcast %cst_91 : f32 to vector<64x256xf32>
    %226 = arith.addf %225, %224 : vector<64x256xf32>
    %cst_92 = arith.constant 5.000000e-01 : f32
    %227 = vector.broadcast %cst_92 : f32 to vector<64x256xf32>
    %228 = arith.mulf %227, %226 : vector<64x256xf32>
    %229 = arith.mulf %216, %228 : vector<64x256xf32>
    %230 = arith.truncf %229 : vector<64x256xf32> to vector<64x256xbf16>
    %c0_93 = arith.constant 0 : index
    %c0_94 = arith.constant 0 : index
    %c0_95 = arith.constant 0 : index
    %231 = vector.load %arg19[%c0_93, %c0_94, %c0_95] : memref<2x256x64xbf16, #tpu.memory_space<vmem>>, vector<1x256x64xbf16>
    %232 = vector.shape_cast %231 : vector<1x256x64xbf16> to vector<256x64xbf16>
    %cst_96 = arith.constant dense<0.000000e+00> : vector<64x64xf32>
    %233 = tpu.matmul %230, %232, %cst_96 {dimension_numbers = #tpu.dot_dimension_numbers<[1], [0], [0], [1], [0, 0, 1, 1], [], []>} : vector<64x256xbf16>, vector<256x64xbf16>, vector<64x64xf32> -> vector<64x64xf32>
    %c0_97 = arith.constant 0 : index
    %c0_98 = arith.constant 0 : index
    %c0_99 = arith.constant 0 : index
    %234 = vector.load %arg20[%c0_97, %c0_98, %c0_99] : memref<2x1x64xf32, #tpu.memory_space<vmem>>, vector<1x1x64xf32>
    %235 = vector.shape_cast %234 : vector<1x1x64xf32> to vector<1x64xf32>
    %236 = vector.broadcast %235 : vector<1x64xf32> to vector<64x64xf32>
    %237 = arith.addf %233, %236 : vector<64x64xf32>
    %238 = vector.broadcast %56 : vector<1x64xf32> to vector<64x64xf32>
    %239 = arith.mulf %238, %237 : vector<64x64xf32>
    %240 = arith.addf %184, %239 : vector<64x64xf32>
    %c1 = arith.constant 1 : index
    %c0_100 = arith.constant 0 : index
    %c0_101 = arith.constant 0 : index
    %241 = vector.load %arg11[%c1, %c0_100, %c0_101] : memref<2x64x384xbf16, #tpu.memory_space<vmem>>, vector<1x64x384xbf16>
    %242 = vector.shape_cast %241 : vector<1x64x384xbf16> to vector<64x384xbf16>
    %cst_102 = arith.constant dense<0.000000e+00> : vector<1x384xf32>
    %243 = tpu.matmul %44, %242, %cst_102 {dimension_numbers = #tpu.dot_dimension_numbers<[1], [0], [0], [1], [0, 0, 1, 1], [], []>} : vector<1x64xbf16>, vector<64x384xbf16>, vector<1x384xf32> -> vector<1x384xf32>
    %c1_103 = arith.constant 1 : index
    %c0_104 = arith.constant 0 : index
    %c0_105 = arith.constant 0 : index
    %244 = vector.load %arg12[%c1_103, %c0_104, %c0_105] : memref<2x1x384xf32, #tpu.memory_space<vmem>>, vector<1x1x384xf32>
    %245 = vector.shape_cast %244 : vector<1x1x384xf32> to vector<1x384xf32>
    %246 = arith.addf %243, %245 : vector<1x384xf32>
    %247 = vector.extract_strided_slice %246 {offsets = [0, 0], sizes = [1, 64], strides = [1, 1]} : vector<1x384xf32> to vector<1x64xf32>
    %248 = vector.extract_strided_slice %246 {offsets = [0, 64], sizes = [1, 64], strides = [1, 1]} : vector<1x384xf32> to vector<1x64xf32>
    %249 = vector.extract_strided_slice %246 {offsets = [0, 128], sizes = [1, 64], strides = [1, 1]} : vector<1x384xf32> to vector<1x64xf32>
    %250 = vector.extract_strided_slice %246 {offsets = [0, 192], sizes = [1, 64], strides = [1, 1]} : vector<1x384xf32> to vector<1x64xf32>
    %251 = vector.extract_strided_slice %246 {offsets = [0, 256], sizes = [1, 64], strides = [1, 1]} : vector<1x384xf32> to vector<1x64xf32>
    %252 = vector.extract_strided_slice %246 {offsets = [0, 320], sizes = [1, 64], strides = [1, 1]} : vector<1x384xf32> to vector<1x64xf32>
    %cst_106 = arith.constant dense<0.000000e+00> : vector<64xf32>
    %253 = vector.multi_reduction <add>, %240, %cst_106 [1] : vector<64x64xf32> to vector<64xf32>
    %254 = vector.shape_cast %253 : vector<64xf32> to vector<64x1xf32>
    %cst_107 = arith.constant 6.400000e+01 : f32
    %255 = vector.broadcast %cst_107 : f32 to vector<64x1xf32>
    %256 = arith.divf %254, %255 : vector<64x1xf32>
    %257 = vector.broadcast %256 : vector<64x1xf32> to vector<64x64xf32>
    %258 = arith.subf %240, %257 : vector<64x64xf32>
    %259 = arith.mulf %258, %258 : vector<64x64xf32>
    %cst_108 = arith.constant dense<0.000000e+00> : vector<64xf32>
    %260 = vector.multi_reduction <add>, %259, %cst_108 [1] : vector<64x64xf32> to vector<64xf32>
    %261 = vector.shape_cast %260 : vector<64xf32> to vector<64x1xf32>
    %cst_109 = arith.constant 6.400000e+01 : f32
    %262 = vector.broadcast %cst_109 : f32 to vector<64x1xf32>
    %263 = arith.divf %261, %262 : vector<64x1xf32>
    %264 = vector.broadcast %256 : vector<64x1xf32> to vector<64x64xf32>
    %265 = arith.subf %240, %264 : vector<64x64xf32>
    %cst_110 = arith.constant 9.99999997E-7 : f32
    %266 = vector.broadcast %cst_110 : f32 to vector<64x1xf32>
    %267 = arith.addf %263, %266 : vector<64x1xf32>
    %268 = math.rsqrt %267 : vector<64x1xf32>
    %269 = vector.broadcast %268 : vector<64x1xf32> to vector<64x64xf32>
    %270 = arith.mulf %265, %269 : vector<64x64xf32>
    %cst_111 = arith.constant 1.000000e+00 : f32
    %271 = vector.broadcast %cst_111 : f32 to vector<1x64xf32>
    %272 = arith.addf %271, %248 : vector<1x64xf32>
    %273 = vector.broadcast %272 : vector<1x64xf32> to vector<64x64xf32>
    %274 = arith.mulf %270, %273 : vector<64x64xf32>
    %275 = vector.broadcast %247 : vector<1x64xf32> to vector<64x64xf32>
    %276 = arith.addf %274, %275 : vector<64x64xf32>
    %277 = arith.truncf %276 : vector<64x64xf32> to vector<64x64xbf16>
    %c1_112 = arith.constant 1 : index
    %c0_113 = arith.constant 0 : index
    %c0_114 = arith.constant 0 : index
    %278 = vector.load %arg13[%c1_112, %c0_113, %c0_114] : memref<2x64x192xbf16, #tpu.memory_space<vmem>>, vector<1x64x192xbf16>
    %279 = vector.shape_cast %278 : vector<1x64x192xbf16> to vector<64x192xbf16>
    %cst_115 = arith.constant dense<0.000000e+00> : vector<64x192xf32>
    %280 = tpu.matmul %277, %279, %cst_115 {dimension_numbers = #tpu.dot_dimension_numbers<[1], [0], [0], [1], [0, 0, 1, 1], [], []>} : vector<64x64xbf16>, vector<64x192xbf16>, vector<64x192xf32> -> vector<64x192xf32>
    %c1_116 = arith.constant 1 : index
    %c0_117 = arith.constant 0 : index
    %c0_118 = arith.constant 0 : index
    %281 = vector.load %arg14[%c1_116, %c0_117, %c0_118] : memref<2x1x192xf32, #tpu.memory_space<vmem>>, vector<1x1x192xf32>
    %282 = vector.shape_cast %281 : vector<1x1x192xf32> to vector<1x192xf32>
    %283 = vector.broadcast %282 : vector<1x192xf32> to vector<64x192xf32>
    %284 = arith.addf %280, %283 : vector<64x192xf32>
    %285 = vector.extract_strided_slice %284 {offsets = [0, 0], sizes = [64, 16], strides = [1, 1]} : vector<64x192xf32> to vector<64x16xf32>
    %286 = arith.truncf %285 : vector<64x16xf32> to vector<64x16xbf16>
    %287 = vector.extract_strided_slice %284 {offsets = [0, 64], sizes = [64, 16], strides = [1, 1]} : vector<64x192xf32> to vector<64x16xf32>
    %288 = arith.truncf %287 : vector<64x16xf32> to vector<64x16xbf16>
    %289 = vector.extract_strided_slice %284 {offsets = [0, 128], sizes = [64, 16], strides = [1, 1]} : vector<64x192xf32> to vector<64x16xf32>
    %290 = arith.truncf %289 : vector<64x16xf32> to vector<64x16xbf16>
    %cst_119 = arith.constant dense<0.000000e+00> : vector<64x64xf32>
    %291 = tpu.matmul %286, %288, %cst_119 {dimension_numbers = #tpu.dot_dimension_numbers<[1], [1], [0], [0], [0, 0, 1, 0], [], []>} : vector<64x16xbf16>, vector<64x16xbf16>, vector<64x64xf32> -> vector<64x64xf32>
    %cst_120 = arith.constant 2.500000e-01 : f32
    %292 = vector.broadcast %cst_120 : f32 to vector<64x64xf32>
    %293 = arith.mulf %291, %292 : vector<64x64xf32>
    %cst_121 = arith.constant dense<0xFF800000> : vector<64xf32>
    %294 = vector.multi_reduction <maximumf>, %293, %cst_121 [1] : vector<64x64xf32> to vector<64xf32>
    %295 = vector.shape_cast %294 : vector<64xf32> to vector<64x1xf32>
    %296 = vector.broadcast %295 : vector<64x1xf32> to vector<64x64xf32>
    %297 = arith.subf %293, %296 : vector<64x64xf32>
    %298 = math.exp %297 : vector<64x64xf32>
    %cst_122 = arith.constant dense<0.000000e+00> : vector<64xf32>
    %299 = vector.multi_reduction <add>, %298, %cst_122 [1] : vector<64x64xf32> to vector<64xf32>
    %300 = vector.shape_cast %299 : vector<64xf32> to vector<64x1xf32>
    %301 = tpu.reciprocal %300 {approx = true} : vector<64x1xf32> -> vector<64x1xf32>
    %302 = vector.broadcast %301 : vector<64x1xf32> to vector<64x64xf32>
    %303 = arith.mulf %298, %302 : vector<64x64xf32>
    %304 = arith.truncf %303 : vector<64x64xf32> to vector<64x64xbf16>
    %cst_123 = arith.constant dense<0.000000e+00> : vector<64x16xf32>
    %305 = tpu.matmul %304, %290, %cst_123 {dimension_numbers = #tpu.dot_dimension_numbers<[1], [0], [0], [1], [0, 0, 1, 1], [], []>} : vector<64x64xbf16>, vector<64x16xbf16>, vector<64x16xf32> -> vector<64x16xf32>
    %306 = vector.extract_strided_slice %284 {offsets = [0, 16], sizes = [64, 16], strides = [1, 1]} : vector<64x192xf32> to vector<64x16xf32>
    %307 = arith.truncf %306 : vector<64x16xf32> to vector<64x16xbf16>
    %308 = vector.extract_strided_slice %284 {offsets = [0, 80], sizes = [64, 16], strides = [1, 1]} : vector<64x192xf32> to vector<64x16xf32>
    %309 = arith.truncf %308 : vector<64x16xf32> to vector<64x16xbf16>
    %310 = vector.extract_strided_slice %284 {offsets = [0, 144], sizes = [64, 16], strides = [1, 1]} : vector<64x192xf32> to vector<64x16xf32>
    %311 = arith.truncf %310 : vector<64x16xf32> to vector<64x16xbf16>
    %cst_124 = arith.constant dense<0.000000e+00> : vector<64x64xf32>
    %312 = tpu.matmul %307, %309, %cst_124 {dimension_numbers = #tpu.dot_dimension_numbers<[1], [1], [0], [0], [0, 0, 1, 0], [], []>} : vector<64x16xbf16>, vector<64x16xbf16>, vector<64x64xf32> -> vector<64x64xf32>
    %cst_125 = arith.constant 2.500000e-01 : f32
    %313 = vector.broadcast %cst_125 : f32 to vector<64x64xf32>
    %314 = arith.mulf %312, %313 : vector<64x64xf32>
    %cst_126 = arith.constant dense<0xFF800000> : vector<64xf32>
    %315 = vector.multi_reduction <maximumf>, %314, %cst_126 [1] : vector<64x64xf32> to vector<64xf32>
    %316 = vector.shape_cast %315 : vector<64xf32> to vector<64x1xf32>
    %317 = vector.broadcast %316 : vector<64x1xf32> to vector<64x64xf32>
    %318 = arith.subf %314, %317 : vector<64x64xf32>
    %319 = math.exp %318 : vector<64x64xf32>
    %cst_127 = arith.constant dense<0.000000e+00> : vector<64xf32>
    %320 = vector.multi_reduction <add>, %319, %cst_127 [1] : vector<64x64xf32> to vector<64xf32>
    %321 = vector.shape_cast %320 : vector<64xf32> to vector<64x1xf32>
    %322 = tpu.reciprocal %321 {approx = true} : vector<64x1xf32> -> vector<64x1xf32>
    %323 = vector.broadcast %322 : vector<64x1xf32> to vector<64x64xf32>
    %324 = arith.mulf %319, %323 : vector<64x64xf32>
    %325 = arith.truncf %324 : vector<64x64xf32> to vector<64x64xbf16>
    %cst_128 = arith.constant dense<0.000000e+00> : vector<64x16xf32>
    %326 = tpu.matmul %325, %311, %cst_128 {dimension_numbers = #tpu.dot_dimension_numbers<[1], [0], [0], [1], [0, 0, 1, 1], [], []>} : vector<64x64xbf16>, vector<64x16xbf16>, vector<64x16xf32> -> vector<64x16xf32>
    %327 = vector.extract_strided_slice %284 {offsets = [0, 32], sizes = [64, 16], strides = [1, 1]} : vector<64x192xf32> to vector<64x16xf32>
    %328 = arith.truncf %327 : vector<64x16xf32> to vector<64x16xbf16>
    %329 = vector.extract_strided_slice %284 {offsets = [0, 96], sizes = [64, 16], strides = [1, 1]} : vector<64x192xf32> to vector<64x16xf32>
    %330 = arith.truncf %329 : vector<64x16xf32> to vector<64x16xbf16>
    %331 = vector.extract_strided_slice %284 {offsets = [0, 160], sizes = [64, 16], strides = [1, 1]} : vector<64x192xf32> to vector<64x16xf32>
    %332 = arith.truncf %331 : vector<64x16xf32> to vector<64x16xbf16>
    %cst_129 = arith.constant dense<0.000000e+00> : vector<64x64xf32>
    %333 = tpu.matmul %328, %330, %cst_129 {dimension_numbers = #tpu.dot_dimension_numbers<[1], [1], [0], [0], [0, 0, 1, 0], [], []>} : vector<64x16xbf16>, vector<64x16xbf16>, vector<64x64xf32> -> vector<64x64xf32>
    %cst_130 = arith.constant 2.500000e-01 : f32
    %334 = vector.broadcast %cst_130 : f32 to vector<64x64xf32>
    %335 = arith.mulf %333, %334 : vector<64x64xf32>
    %cst_131 = arith.constant dense<0xFF800000> : vector<64xf32>
    %336 = vector.multi_reduction <maximumf>, %335, %cst_131 [1] : vector<64x64xf32> to vector<64xf32>
    %337 = vector.shape_cast %336 : vector<64xf32> to vector<64x1xf32>
    %338 = vector.broadcast %337 : vector<64x1xf32> to vector<64x64xf32>
    %339 = arith.subf %335, %338 : vector<64x64xf32>
    %340 = math.exp %339 : vector<64x64xf32>
    %cst_132 = arith.constant dense<0.000000e+00> : vector<64xf32>
    %341 = vector.multi_reduction <add>, %340, %cst_132 [1] : vector<64x64xf32> to vector<64xf32>
    %342 = vector.shape_cast %341 : vector<64xf32> to vector<64x1xf32>
    %343 = tpu.reciprocal %342 {approx = true} : vector<64x1xf32> -> vector<64x1xf32>
    %344 = vector.broadcast %343 : vector<64x1xf32> to vector<64x64xf32>
    %345 = arith.mulf %340, %344 : vector<64x64xf32>
    %346 = arith.truncf %345 : vector<64x64xf32> to vector<64x64xbf16>
    %cst_133 = arith.constant dense<0.000000e+00> : vector<64x16xf32>
    %347 = tpu.matmul %346, %332, %cst_133 {dimension_numbers = #tpu.dot_dimension_numbers<[1], [0], [0], [1], [0, 0, 1, 1], [], []>} : vector<64x64xbf16>, vector<64x16xbf16>, vector<64x16xf32> -> vector<64x16xf32>
    %348 = vector.extract_strided_slice %284 {offsets = [0, 48], sizes = [64, 16], strides = [1, 1]} : vector<64x192xf32> to vector<64x16xf32>
    %349 = arith.truncf %348 : vector<64x16xf32> to vector<64x16xbf16>
    %350 = vector.extract_strided_slice %284 {offsets = [0, 112], sizes = [64, 16], strides = [1, 1]} : vector<64x192xf32> to vector<64x16xf32>
    %351 = arith.truncf %350 : vector<64x16xf32> to vector<64x16xbf16>
    %352 = vector.extract_strided_slice %284 {offsets = [0, 176], sizes = [64, 16], strides = [1, 1]} : vector<64x192xf32> to vector<64x16xf32>
    %353 = arith.truncf %352 : vector<64x16xf32> to vector<64x16xbf16>
    %cst_134 = arith.constant dense<0.000000e+00> : vector<64x64xf32>
    %354 = tpu.matmul %349, %351, %cst_134 {dimension_numbers = #tpu.dot_dimension_numbers<[1], [1], [0], [0], [0, 0, 1, 0], [], []>} : vector<64x16xbf16>, vector<64x16xbf16>, vector<64x64xf32> -> vector<64x64xf32>
    %cst_135 = arith.constant 2.500000e-01 : f32
    %355 = vector.broadcast %cst_135 : f32 to vector<64x64xf32>
    %356 = arith.mulf %354, %355 : vector<64x64xf32>
    %cst_136 = arith.constant dense<0xFF800000> : vector<64xf32>
    %357 = vector.multi_reduction <maximumf>, %356, %cst_136 [1] : vector<64x64xf32> to vector<64xf32>
    %358 = vector.shape_cast %357 : vector<64xf32> to vector<64x1xf32>
    %359 = vector.broadcast %358 : vector<64x1xf32> to vector<64x64xf32>
    %360 = arith.subf %356, %359 : vector<64x64xf32>
    %361 = math.exp %360 : vector<64x64xf32>
    %cst_137 = arith.constant dense<0.000000e+00> : vector<64xf32>
    %362 = vector.multi_reduction <add>, %361, %cst_137 [1] : vector<64x64xf32> to vector<64xf32>
    %363 = vector.shape_cast %362 : vector<64xf32> to vector<64x1xf32>
    %364 = tpu.reciprocal %363 {approx = true} : vector<64x1xf32> -> vector<64x1xf32>
    %365 = vector.broadcast %364 : vector<64x1xf32> to vector<64x64xf32>
    %366 = arith.mulf %361, %365 : vector<64x64xf32>
    %367 = arith.truncf %366 : vector<64x64xf32> to vector<64x64xbf16>
    %cst_138 = arith.constant dense<0.000000e+00> : vector<64x16xf32>
    %368 = tpu.matmul %367, %353, %cst_138 {dimension_numbers = #tpu.dot_dimension_numbers<[1], [0], [0], [1], [0, 0, 1, 1], [], []>} : vector<64x64xbf16>, vector<64x16xbf16>, vector<64x16xf32> -> vector<64x16xf32>
    %369 = tpu.concatenate %305, %326, %347, %368 in 1 : vector<64x16xf32>, vector<64x16xf32>, vector<64x16xf32>, vector<64x16xf32> -> vector<64x64xf32>
    %370 = arith.truncf %369 : vector<64x64xf32> to vector<64x64xbf16>
    %c1_139 = arith.constant 1 : index
    %c0_140 = arith.constant 0 : index
    %c0_141 = arith.constant 0 : index
    %371 = vector.load %arg15[%c1_139, %c0_140, %c0_141] : memref<2x64x64xbf16, #tpu.memory_space<vmem>>, vector<1x64x64xbf16>
    %372 = vector.shape_cast %371 : vector<1x64x64xbf16> to vector<64x64xbf16>
    %cst_142 = arith.constant dense<0.000000e+00> : vector<64x64xf32>
    %373 = tpu.matmul %370, %372, %cst_142 {dimension_numbers = #tpu.dot_dimension_numbers<[1], [0], [0], [1], [0, 0, 1, 1], [], []>} : vector<64x64xbf16>, vector<64x64xbf16>, vector<64x64xf32> -> vector<64x64xf32>
    %c1_143 = arith.constant 1 : index
    %c0_144 = arith.constant 0 : index
    %c0_145 = arith.constant 0 : index
    %374 = vector.load %arg16[%c1_143, %c0_144, %c0_145] : memref<2x1x64xf32, #tpu.memory_space<vmem>>, vector<1x1x64xf32>
    %375 = vector.shape_cast %374 : vector<1x1x64xf32> to vector<1x64xf32>
    %376 = vector.broadcast %375 : vector<1x64xf32> to vector<64x64xf32>
    %377 = arith.addf %373, %376 : vector<64x64xf32>
    %378 = vector.broadcast %249 : vector<1x64xf32> to vector<64x64xf32>
    %379 = arith.mulf %378, %377 : vector<64x64xf32>
    %380 = arith.addf %240, %379 : vector<64x64xf32>
    %cst_146 = arith.constant dense<0.000000e+00> : vector<64xf32>
    %381 = vector.multi_reduction <add>, %380, %cst_146 [1] : vector<64x64xf32> to vector<64xf32>
    %382 = vector.shape_cast %381 : vector<64xf32> to vector<64x1xf32>
    %cst_147 = arith.constant 6.400000e+01 : f32
    %383 = vector.broadcast %cst_147 : f32 to vector<64x1xf32>
    %384 = arith.divf %382, %383 : vector<64x1xf32>
    %385 = vector.broadcast %384 : vector<64x1xf32> to vector<64x64xf32>
    %386 = arith.subf %380, %385 : vector<64x64xf32>
    %387 = arith.mulf %386, %386 : vector<64x64xf32>
    %cst_148 = arith.constant dense<0.000000e+00> : vector<64xf32>
    %388 = vector.multi_reduction <add>, %387, %cst_148 [1] : vector<64x64xf32> to vector<64xf32>
    %389 = vector.shape_cast %388 : vector<64xf32> to vector<64x1xf32>
    %cst_149 = arith.constant 6.400000e+01 : f32
    %390 = vector.broadcast %cst_149 : f32 to vector<64x1xf32>
    %391 = arith.divf %389, %390 : vector<64x1xf32>
    %392 = vector.broadcast %384 : vector<64x1xf32> to vector<64x64xf32>
    %393 = arith.subf %380, %392 : vector<64x64xf32>
    %cst_150 = arith.constant 9.99999997E-7 : f32
    %394 = vector.broadcast %cst_150 : f32 to vector<64x1xf32>
    %395 = arith.addf %391, %394 : vector<64x1xf32>
    %396 = math.rsqrt %395 : vector<64x1xf32>
    %397 = vector.broadcast %396 : vector<64x1xf32> to vector<64x64xf32>
    %398 = arith.mulf %393, %397 : vector<64x64xf32>
    %cst_151 = arith.constant 1.000000e+00 : f32
    %399 = vector.broadcast %cst_151 : f32 to vector<1x64xf32>
    %400 = arith.addf %399, %251 : vector<1x64xf32>
    %401 = vector.broadcast %400 : vector<1x64xf32> to vector<64x64xf32>
    %402 = arith.mulf %398, %401 : vector<64x64xf32>
    %403 = vector.broadcast %250 : vector<1x64xf32> to vector<64x64xf32>
    %404 = arith.addf %402, %403 : vector<64x64xf32>
    %405 = arith.truncf %404 : vector<64x64xf32> to vector<64x64xbf16>
    %c1_152 = arith.constant 1 : index
    %c0_153 = arith.constant 0 : index
    %c0_154 = arith.constant 0 : index
    %406 = vector.load %arg17[%c1_152, %c0_153, %c0_154] : memref<2x64x256xbf16, #tpu.memory_space<vmem>>, vector<1x64x256xbf16>
    %407 = vector.shape_cast %406 : vector<1x64x256xbf16> to vector<64x256xbf16>
    %cst_155 = arith.constant dense<0.000000e+00> : vector<64x256xf32>
    %408 = tpu.matmul %405, %407, %cst_155 {dimension_numbers = #tpu.dot_dimension_numbers<[1], [0], [0], [1], [0, 0, 1, 1], [], []>} : vector<64x64xbf16>, vector<64x256xbf16>, vector<64x256xf32> -> vector<64x256xf32>
    %c1_156 = arith.constant 1 : index
    %c0_157 = arith.constant 0 : index
    %c0_158 = arith.constant 0 : index
    %409 = vector.load %arg18[%c1_156, %c0_157, %c0_158] : memref<2x1x256xf32, #tpu.memory_space<vmem>>, vector<1x1x256xf32>
    %410 = vector.shape_cast %409 : vector<1x1x256xf32> to vector<1x256xf32>
    %411 = vector.broadcast %410 : vector<1x256xf32> to vector<64x256xf32>
    %412 = arith.addf %408, %411 : vector<64x256xf32>
    %413 = arith.mulf %412, %412 : vector<64x256xf32>
    %414 = arith.mulf %412, %413 : vector<64x256xf32>
    %cst_159 = arith.constant 4.471500e-02 : f32
    %415 = vector.broadcast %cst_159 : f32 to vector<64x256xf32>
    %416 = arith.mulf %415, %414 : vector<64x256xf32>
    %417 = arith.addf %412, %416 : vector<64x256xf32>
    %cst_160 = arith.constant 0.797884583 : f32
    %418 = vector.broadcast %cst_160 : f32 to vector<64x256xf32>
    %419 = arith.mulf %418, %417 : vector<64x256xf32>
    %420 = math.tanh %419 : vector<64x256xf32>
    %cst_161 = arith.constant 1.000000e+00 : f32
    %421 = vector.broadcast %cst_161 : f32 to vector<64x256xf32>
    %422 = arith.addf %421, %420 : vector<64x256xf32>
    %cst_162 = arith.constant 5.000000e-01 : f32
    %423 = vector.broadcast %cst_162 : f32 to vector<64x256xf32>
    %424 = arith.mulf %423, %422 : vector<64x256xf32>
    %425 = arith.mulf %412, %424 : vector<64x256xf32>
    %426 = arith.truncf %425 : vector<64x256xf32> to vector<64x256xbf16>
    %c1_163 = arith.constant 1 : index
    %c0_164 = arith.constant 0 : index
    %c0_165 = arith.constant 0 : index
    %427 = vector.load %arg19[%c1_163, %c0_164, %c0_165] : memref<2x256x64xbf16, #tpu.memory_space<vmem>>, vector<1x256x64xbf16>
    %428 = vector.shape_cast %427 : vector<1x256x64xbf16> to vector<256x64xbf16>
    %cst_166 = arith.constant dense<0.000000e+00> : vector<64x64xf32>
    %429 = tpu.matmul %426, %428, %cst_166 {dimension_numbers = #tpu.dot_dimension_numbers<[1], [0], [0], [1], [0, 0, 1, 1], [], []>} : vector<64x256xbf16>, vector<256x64xbf16>, vector<64x64xf32> -> vector<64x64xf32>
    %c1_167 = arith.constant 1 : index
    %c0_168 = arith.constant 0 : index
    %c0_169 = arith.constant 0 : index
    %430 = vector.load %arg20[%c1_167, %c0_168, %c0_169] : memref<2x1x64xf32, #tpu.memory_space<vmem>>, vector<1x1x64xf32>
    %431 = vector.shape_cast %430 : vector<1x1x64xf32> to vector<1x64xf32>
    %432 = vector.broadcast %431 : vector<1x64xf32> to vector<64x64xf32>
    %433 = arith.addf %429, %432 : vector<64x64xf32>
    %434 = vector.broadcast %252 : vector<1x64xf32> to vector<64x64xf32>
    %435 = arith.mulf %434, %433 : vector<64x64xf32>
    %436 = arith.addf %380, %435 : vector<64x64xf32>
    %c0_170 = arith.constant 0 : index
    %c0_171 = arith.constant 0 : index
    %437 = vector.load %arg21[%c0_170, %c0_171] : memref<64x128xbf16, #tpu.memory_space<vmem>>, vector<64x128xbf16>
    %cst_172 = arith.constant dense<0.000000e+00> : vector<1x128xf32>
    %438 = tpu.matmul %44, %437, %cst_172 {dimension_numbers = #tpu.dot_dimension_numbers<[1], [0], [0], [1], [0, 0, 1, 1], [], []>} : vector<1x64xbf16>, vector<64x128xbf16>, vector<1x128xf32> -> vector<1x128xf32>
    %c0_173 = arith.constant 0 : index
    %c0_174 = arith.constant 0 : index
    %439 = vector.load %arg22[%c0_173, %c0_174] : memref<1x128xf32, #tpu.memory_space<vmem>>, vector<1x128xf32>
    %440 = arith.addf %438, %439 : vector<1x128xf32>
    %441 = vector.extract_strided_slice %440 {offsets = [0, 0], sizes = [1, 64], strides = [1, 1]} : vector<1x128xf32> to vector<1x64xf32>
    %442 = vector.extract_strided_slice %440 {offsets = [0, 64], sizes = [1, 64], strides = [1, 1]} : vector<1x128xf32> to vector<1x64xf32>
    %cst_175 = arith.constant dense<0.000000e+00> : vector<64xf32>
    %443 = vector.multi_reduction <add>, %436, %cst_175 [1] : vector<64x64xf32> to vector<64xf32>
    %444 = vector.shape_cast %443 : vector<64xf32> to vector<64x1xf32>
    %cst_176 = arith.constant 6.400000e+01 : f32
    %445 = vector.broadcast %cst_176 : f32 to vector<64x1xf32>
    %446 = arith.divf %444, %445 : vector<64x1xf32>
    %447 = vector.broadcast %446 : vector<64x1xf32> to vector<64x64xf32>
    %448 = arith.subf %436, %447 : vector<64x64xf32>
    %449 = arith.mulf %448, %448 : vector<64x64xf32>
    %cst_177 = arith.constant dense<0.000000e+00> : vector<64xf32>
    %450 = vector.multi_reduction <add>, %449, %cst_177 [1] : vector<64x64xf32> to vector<64xf32>
    %451 = vector.shape_cast %450 : vector<64xf32> to vector<64x1xf32>
    %cst_178 = arith.constant 6.400000e+01 : f32
    %452 = vector.broadcast %cst_178 : f32 to vector<64x1xf32>
    %453 = arith.divf %451, %452 : vector<64x1xf32>
    %454 = vector.broadcast %446 : vector<64x1xf32> to vector<64x64xf32>
    %455 = arith.subf %436, %454 : vector<64x64xf32>
    %cst_179 = arith.constant 9.99999997E-7 : f32
    %456 = vector.broadcast %cst_179 : f32 to vector<64x1xf32>
    %457 = arith.addf %453, %456 : vector<64x1xf32>
    %458 = math.rsqrt %457 : vector<64x1xf32>
    %459 = vector.broadcast %458 : vector<64x1xf32> to vector<64x64xf32>
    %460 = arith.mulf %455, %459 : vector<64x64xf32>
    %cst_180 = arith.constant 1.000000e+00 : f32
    %461 = vector.broadcast %cst_180 : f32 to vector<1x64xf32>
    %462 = arith.addf %461, %442 : vector<1x64xf32>
    %463 = vector.broadcast %462 : vector<1x64xf32> to vector<64x64xf32>
    %464 = arith.mulf %460, %463 : vector<64x64xf32>
    %465 = vector.broadcast %441 : vector<1x64xf32> to vector<64x64xf32>
    %466 = arith.addf %464, %465 : vector<64x64xf32>
    %467 = arith.truncf %466 : vector<64x64xf32> to vector<64x64xbf16>
    %c0_181 = arith.constant 0 : index
    %c0_182 = arith.constant 0 : index
    %468 = vector.load %arg23[%c0_181, %c0_182] : memref<64x6xbf16, #tpu.memory_space<vmem>>, vector<64x6xbf16>
    %cst_183 = arith.constant dense<0.000000e+00> : vector<6x64xf32>
    %469 = tpu.matmul %468, %467, %cst_183 {dimension_numbers = #tpu.dot_dimension_numbers<[0], [1], [1], [0], [0, 1, 1, 0], [], []>} : vector<64x6xbf16>, vector<64x64xbf16>, vector<6x64xf32> -> vector<6x64xf32>
    %c0_184 = arith.constant 0 : index
    %c0_185 = arith.constant 0 : index
    %470 = vector.load %arg24[%c0_184, %c0_185] : memref<6x1xf32, #tpu.memory_space<vmem>>, vector<6x1xf32>
    %471 = vector.broadcast %470 : vector<6x1xf32> to vector<6x64xf32>
    %472 = arith.addf %469, %471 : vector<6x64xf32>
    %c0_186 = arith.constant 0 : index
    %c0_187 = arith.constant 0 : index
    %c0_188 = arith.constant 0 : index
    %473 = vector.load %arg25[%c0_186, %c0_187, %c0_188] : memref<1x6x64xf32, #tpu.memory_space<vmem>>, vector<1x6x64xf32>
    %474 = vector.shape_cast %473 : vector<1x6x64xf32> to vector<6x64xf32>
    %475 = vector.shape_cast %472 : vector<6x64xf32> to vector<1x6x64xf32>
    tpu.vector_store %arg25[%c0_186, %c0_187, %c0_188], %475 {strides = array<i32>} : memref<1x6x64xf32, #tpu.memory_space<vmem>>, vector<1x6x64xf32>,
    return
  }
  func.func @transform_0(%arg0: i32) -> (i32, i32, i32) {
    %c0_i32 = arith.constant 0 : i32
    %c0_i32_0 = arith.constant 0 : i32
    %c0_i32_1 = arith.constant 0 : i32
    return %arg0, %c0_i32, %c0_i32_0 : i32, i32, i32
  }
  func.func @transform_1(%arg0: i32) -> (i32, i32, i32) {
    %c0_i32 = arith.constant 0 : i32
    %c0_i32_0 = arith.constant 0 : i32
    %c0_i32_1 = arith.constant 0 : i32
    return %arg0, %c0_i32, %c0_i32_0 : i32, i32, i32
  }
  func.func @transform_2(%arg0: i32) -> (i32, i32, i32) {
    %c0_i32 = arith.constant 0 : i32
    %c0_i32_0 = arith.constant 0 : i32
    %c0_i32_1 = arith.constant 0 : i32
    return %arg0, %c0_i32, %c0_i32_0 : i32, i32, i32
  }
  func.func @transform_3(%arg0: i32) -> (i32, i32) {
    %c0_i32 = arith.constant 0 : i32
    %c0_i32_0 = arith.constant 0 : i32
    %c0_i32_1 = arith.constant 0 : i32
    return %c0_i32, %c0_i32_0 : i32, i32
  }
  func.func @transform_4(%arg0: i32) -> (i32, i32) {
    %c0_i32 = arith.constant 0 : i32
    %c0_i32_0 = arith.constant 0 : i32
    %c0_i32_1 = arith.constant 0 : i32
    return %c0_i32, %c0_i32_0 : i32, i32
  }
  func.func @transform_5(%arg0: i32) -> (i32, i32) {
    %c0_i32 = arith.constant 0 : i32
    %c0_i32_0 = arith.constant 0 : i32
    %c0_i32_1 = arith.constant 0 : i32
    return %c0_i32, %c0_i32_0 : i32, i32
  }
  func.func @transform_6(%arg0: i32) -> (i32, i32) {
    %c0_i32 = arith.constant 0 : i32
    %c0_i32_0 = arith.constant 0 : i32
    %c0_i32_1 = arith.constant 0 : i32
    return %c0_i32, %c0_i32_0 : i32, i32
  }
  func.func @transform_7(%arg0: i32) -> (i32, i32) {
    %c0_i32 = arith.constant 0 : i32
    %c0_i32_0 = arith.constant 0 : i32
    %c0_i32_1 = arith.constant 0 : i32
    return %c0_i32, %c0_i32_0 : i32, i32
  }
  func.func @transform_8(%arg0: i32) -> (i32, i32) {
    %c0_i32 = arith.constant 0 : i32
    %c0_i32_0 = arith.constant 0 : i32
    %c0_i32_1 = arith.constant 0 : i32
    return %c0_i32, %c0_i32_0 : i32, i32
  }
  func.func @transform_9(%arg0: i32) -> (i32, i32) {
    %c0_i32 = arith.constant 0 : i32
    %c0_i32_0 = arith.constant 0 : i32
    %c0_i32_1 = arith.constant 0 : i32
    return %c0_i32, %c0_i32_0 : i32, i32
  }
  func.func @transform_10(%arg0: i32) -> (i32, i32, i32) {
    %c0_i32 = arith.constant 0 : i32
    %c0_i32_0 = arith.constant 0 : i32
    %c0_i32_1 = arith.constant 0 : i32
    %c0_i32_2 = arith.constant 0 : i32
    return %c0_i32, %c0_i32_0, %c0_i32_1 : i32, i32, i32
  }
  func.func @transform_11(%arg0: i32) -> (i32, i32, i32) {
    %c0_i32 = arith.constant 0 : i32
    %c0_i32_0 = arith.constant 0 : i32
    %c0_i32_1 = arith.constant 0 : i32
    %c0_i32_2 = arith.constant 0 : i32
    return %c0_i32, %c0_i32_0, %c0_i32_1 : i32, i32, i32
  }
  func.func @transform_12(%arg0: i32) -> (i32, i32, i32) {
    %c0_i32 = arith.constant 0 : i32
    %c0_i32_0 = arith.constant 0 : i32
    %c0_i32_1 = arith.constant 0 : i32
    %c0_i32_2 = arith.constant 0 : i32
    return %c0_i32, %c0_i32_0, %c0_i32_1 : i32, i32, i32
  }
  func.func @transform_13(%arg0: i32) -> (i32, i32, i32) {
    %c0_i32 = arith.constant 0 : i32
    %c0_i32_0 = arith.constant 0 : i32
    %c0_i32_1 = arith.constant 0 : i32
    %c0_i32_2 = arith.constant 0 : i32
    return %c0_i32, %c0_i32_0, %c0_i32_1 : i32, i32, i32
  }
  func.func @transform_14(%arg0: i32) -> (i32, i32, i32) {
    %c0_i32 = arith.constant 0 : i32
    %c0_i32_0 = arith.constant 0 : i32
    %c0_i32_1 = arith.constant 0 : i32
    %c0_i32_2 = arith.constant 0 : i32
    return %c0_i32, %c0_i32_0, %c0_i32_1 : i32, i32, i32
  }
  func.func @transform_15(%arg0: i32) -> (i32, i32, i32) {
    %c0_i32 = arith.constant 0 : i32
    %c0_i32_0 = arith.constant 0 : i32
    %c0_i32_1 = arith.constant 0 : i32
    %c0_i32_2 = arith.constant 0 : i32
    return %c0_i32, %c0_i32_0, %c0_i32_1 : i32, i32, i32
  }
  func.func @transform_16(%arg0: i32) -> (i32, i32, i32) {
    %c0_i32 = arith.constant 0 : i32
    %c0_i32_0 = arith.constant 0 : i32
    %c0_i32_1 = arith.constant 0 : i32
    %c0_i32_2 = arith.constant 0 : i32
    return %c0_i32, %c0_i32_0, %c0_i32_1 : i32, i32, i32
  }
  func.func @transform_17(%arg0: i32) -> (i32, i32, i32) {
    %c0_i32 = arith.constant 0 : i32
    %c0_i32_0 = arith.constant 0 : i32
    %c0_i32_1 = arith.constant 0 : i32
    %c0_i32_2 = arith.constant 0 : i32
    return %c0_i32, %c0_i32_0, %c0_i32_1 : i32, i32, i32
  }
  func.func @transform_18(%arg0: i32) -> (i32, i32, i32) {
    %c0_i32 = arith.constant 0 : i32
    %c0_i32_0 = arith.constant 0 : i32
    %c0_i32_1 = arith.constant 0 : i32
    %c0_i32_2 = arith.constant 0 : i32
    return %c0_i32, %c0_i32_0, %c0_i32_1 : i32, i32, i32
  }
  func.func @transform_19(%arg0: i32) -> (i32, i32, i32) {
    %c0_i32 = arith.constant 0 : i32
    %c0_i32_0 = arith.constant 0 : i32
    %c0_i32_1 = arith.constant 0 : i32
    %c0_i32_2 = arith.constant 0 : i32
    return %c0_i32, %c0_i32_0, %c0_i32_1 : i32, i32, i32
  }
  func.func @transform_20(%arg0: i32) -> (i32, i32) {
    %c0_i32 = arith.constant 0 : i32
    %c0_i32_0 = arith.constant 0 : i32
    %c0_i32_1 = arith.constant 0 : i32
    return %c0_i32, %c0_i32_0 : i32, i32
  }
  func.func @transform_21(%arg0: i32) -> (i32, i32) {
    %c0_i32 = arith.constant 0 : i32
    %c0_i32_0 = arith.constant 0 : i32
    %c0_i32_1 = arith.constant 0 : i32
    return %c0_i32, %c0_i32_0 : i32, i32
  }
  func.func @transform_22(%arg0: i32) -> (i32, i32) {
    %c0_i32 = arith.constant 0 : i32
    %c0_i32_0 = arith.constant 0 : i32
    %c0_i32_1 = arith.constant 0 : i32
    return %c0_i32, %c0_i32_0 : i32, i32
  }
  func.func @transform_23(%arg0: i32) -> (i32, i32) {
    %c0_i32 = arith.constant 0 : i32
    %c0_i32_0 = arith.constant 0 : i32
    %c0_i32_1 = arith.constant 0 : i32
    return %c0_i32, %c0_i32_0 : i32, i32
  }
  func.func @transform_24(%arg0: i32) -> (i32, i32, i32) {
    %c0_i32 = arith.constant 0 : i32
    %c0_i32_0 = arith.constant 0 : i32
    %c0_i32_1 = arith.constant 0 : i32
    return %arg0, %c0_i32, %c0_i32_0 : i32, i32, i32
  }
}

</mosaic_0001>

<llo_original>
// kernel: scene_flow_dit_forward.1
$region0: #{scene_flow_dit_forward.1}
  #allocation0 [shape = 'u32[]', space=smem, size = 0x4, offset = 0x4, fixed_abs, tag = 'smem constant byte address 0x4 - core index']
  #allocation1 [shape = 'u32[72,128]{1,0:T(1,128)}', space=vmem, size = 0x9000, scoped, tag = 'internal scratch']
  %s0 = inlined_call_operand.vmem [shape: f32[2,64,3], index: 0, kind: input, shape index: {}]
  %s1 = inlined_call_operand.vmem [shape: f32[2,64,3], index: 1, kind: input, shape index: {}]
  %s2 = inlined_call_operand.vmem [shape: f32[2,1,256], index: 2, kind: input, shape index: {}]
  %s3 = inlined_call_operand.vmem [shape: bf16[3,64], index: 3, kind: input, shape index: {}]
  %s4 = inlined_call_operand.vmem [shape: bf16[3,64], index: 4, kind: input, shape index: {}]
  %s5 = inlined_call_operand.vmem [shape: f32[1,64], index: 5, kind: input, shape index: {}]
  %s6 = inlined_call_operand.vmem [shape: bf16[256,64], index: 6, kind: input, shape index: {}]
  %s7 = inlined_call_operand.vmem [shape: f32[1,64], index: 7, kind: input, shape index: {}]
  %s8 = inlined_call_operand.vmem [shape: bf16[64,64], index: 8, kind: input, shape index: {}]
  %s9 = inlined_call_operand.vmem [shape: f32[1,64], index: 9, kind: input, shape index: {}]
  %s10 = inlined_call_operand.vmem [shape: bf16[2,64,384], index: 10, kind: input, shape index: {}]
  %s11 = inlined_call_operand.vmem [shape: f32[2,1,384], index: 11, kind: input, shape index: {}]
  %s12 = inlined_call_operand.vmem [shape: bf16[2,64,192], index: 12, kind: input, shape index: {}]
  %s13 = inlined_call_operand.vmem [shape: f32[2,1,192], index: 13, kind: input, shape index: {}]
  %s14 = inlined_call_operand.vmem [shape: bf16[2,64,64], index: 14, kind: input, shape index: {}]
  %s15 = inlined_call_operand.vmem [shape: f32[2,1,64], index: 15, kind: input, shape index: {}]
  %s16 = inlined_call_operand.vmem [shape: bf16[2,64,256], index: 16, kind: input, shape index: {}]
  %s17 = inlined_call_operand.vmem [shape: f32[2,1,256], index: 17, kind: input, shape index: {}]
  %s18 = inlined_call_operand.vmem [shape: bf16[2,256,64], index: 18, kind: input, shape index: {}]
  %s19 = inlined_call_operand.vmem [shape: f32[2,1,64], index: 19, kind: input, shape index: {}]
  %s20 = inlined_call_operand.vmem [shape: bf16[64,128], index: 20, kind: input, shape index: {}]
  %s21 = inlined_call_operand.vmem [shape: f32[1,128], index: 21, kind: input, shape index: {}]
  %s22 = inlined_call_operand.vmem [shape: bf16[64,6], index: 22, kind: input, shape index: {}]
  %s23 = inlined_call_operand.vmem [shape: f32[6,1], index: 23, kind: input, shape index: {}]
  %s24 = inlined_call_operand.vmem [shape: f32[2,6,64], index: 24, kind: output, shape index: {}]
  %s25 = sld [smem:[#allocation0]]
  $region129: #{scene_flow_dit_forward.1} parent=0
    _
  %s27 = ssub.s32 1, %s25
  %s28 = scalar_select 0, %s27, %s25
  loop: start=0, step=1, limit=4
  $region2: #{scene_flow_dit_forward.1} parent=0 // loop_pre_header
    _
  $region3: #{scene_flow_dit_forward.1} parent=0 // loop_header
    %s30 = sphi 0, %s34
    %p31 = scmp.ge.s32.totalorder %s30, 4
    %s40 = sphi 0, %s42
    %s43 = sphi 0, %s40
    %s44 = sphi 0, %s43
    %s60 = sphi 0, %s44
    %s66 = sphi 0, %s68
    %s69 = sphi 0, %s66
    %s70 = sphi 0, %s69
    %s86 = sphi 0, %s70
    %s92 = sphi 0, %s94
    %s95 = sphi 0, %s92
    %s96 = sphi 0, %s95
    %s112 = sphi 0, %s96
    %s116 = sphi 0, %s116
    %s118 = sphi 0, %s116
    %s119 = sphi 0, %s118
    %s133 = sphi 0, %s119
    %s137 = sphi 0, %s137
    %s139 = sphi 0, %s137
    %s140 = sphi 0, %s139
    %s154 = sphi 0, %s140
    %s158 = sphi 0, %s158
    %s160 = sphi 0, %s158
    %s161 = sphi 0, %s160
    %s175 = sphi 0, %s161
    %s179 = sphi 0, %s179
    %s181 = sphi 0, %s179
    %s182 = sphi 0, %s181
    %s196 = sphi 0, %s182
    %s200 = sphi 0, %s200
    %s202 = sphi 0, %s200
    %s203 = sphi 0, %s202
    %s217 = sphi 0, %s203
    %s221 = sphi 0, %s221
    %s223 = sphi 0, %s221
    %s224 = sphi 0, %s223
    %s238 = sphi 0, %s224
    %s242 = sphi 0, %s242
    %s244 = sphi 0, %s242
    %s245 = sphi 0, %s244
    %s259 = sphi 0, %s245
    %s263 = sphi 0, %s263
    %s265 = sphi 0, %s263
    %s266 = sphi 0, %s265
    %s280 = sphi 0, %s266
    %s284 = sphi 0, %s284
    %s286 = sphi 0, %s284
    %s287 = sphi 0, %s286
    %s301 = sphi 0, %s287
    %s305 = sphi 0, %s305
    %s307 = sphi 0, %s305
    %s308 = sphi 0, %s307
    %s322 = sphi 0, %s308
    %s326 = sphi 0, %s326
    %s328 = sphi 0, %s326
    %s329 = sphi 0, %s328
    %s343 = sphi 0, %s329
    %s347 = sphi 0, %s347
    %s349 = sphi 0, %s347
    %s350 = sphi 0, %s349
    %s364 = sphi 0, %s350
    %s368 = sphi 0, %s368
    %s370 = sphi 0, %s368
    %s371 = sphi 0, %s370
    %s385 = sphi 0, %s371
    %s389 = sphi 0, %s389
    %s391 = sphi 0, %s389
    %s392 = sphi 0, %s391
    %s406 = sphi 0, %s392
    %s410 = sphi 0, %s410
    %s412 = sphi 0, %s410
    %s413 = sphi 0, %s412
    %s427 = sphi 0, %s413
    %s431 = sphi 0, %s431
    %s433 = sphi 0, %s431
    %s434 = sphi 0, %s433
    %s448 = sphi 0, %s434
    %s452 = sphi 0, %s452
    %s454 = sphi 0, %s452
    %s455 = sphi 0, %s454
    %s469 = sphi 0, %s455
    %s473 = sphi 0, %s473
    %s475 = sphi 0, %s473
    %s476 = sphi 0, %s475
    %s490 = sphi 0, %s476
    %s494 = sphi 0, %s494
    %s496 = sphi 0, %s494
    %s497 = sphi 0, %s496
    %s511 = sphi 0, %s497
    %s515 = sphi 0, %s515
    %s517 = sphi 0, %s515
    %s518 = sphi 0, %s517
    %s532 = sphi 0, %s518
    %s536 = sphi 0, %s536
    %s538 = sphi 0, %s536
    %s539 = sphi 0, %s538
    %s553 = sphi 0, %s539
    %s559 = sphi 0, %s561
    %s562 = sphi 0, %s559
    %s563 = sphi 0, %s562
    %s579 = sphi 0, %s563
  $region4: #{scene_flow_dit_forward.1} parent=0 // loop_header_branch
    %33 = sbr.rel (%p31) target = $region8
  $region5: #{scene_flow_dit_forward.1} parent=0 // loop_body
    %s35 = ssub.s32 %s30, 1
    %s36 = ssub.s32 %s30, 2
    %s37 = sadd.s32 %s30, 1
    %s38 = ssub.s32 %s30, %s37
    %p39 = scmp.eq.s32.totalorder %s38, 0
    %s41 = sadd.s32 %s40, 1
    %s42 = scalar_select %p39, %s40, %s41
    %p45 = pneg %p39
    %p46 = scmp.eq.s32.totalorder %s30, 1
    %p47 = por %p45, %p46
    %p48 = scmp.ne.s32.totalorder %s40, %s43
    %p49 = scmp.eq.s32.totalorder %s30, 0
    %p50 = por %p48, %p49
    %p51 = scmp.ne.s32.totalorder %s40, %s43
    %p52 = scmp.eq.s32.totalorder %s35, 1
    %p53 = por %p51, %p52
    %p54 = scmp.ne.s32.totalorder %s43, %s44
    %p55 = scmp.eq.s32.totalorder %s35, 0
    %p56 = por %p54, %p55
    %p57 = scmp.ne.s32.totalorder %s43, %s44
    %p58 = scmp.eq.s32.totalorder %s36, 1
    %p59 = por %p57, %p58
    %p61 = scmp.ne.s32.totalorder %s44, %s60
    %p62 = scmp.eq.s32.totalorder %s36, 0
    %p63 = por %p61, %p62
    %s64 = ssub.s32 %s30, %s37
    %p65 = scmp.eq.s32.totalorder %s64, 0
    %s67 = sadd.s32 %s66, 1
    %s68 = scalar_select %p65, %s66, %s67
    %p71 = pneg %p65
    %p72 = scmp.eq.s32.totalorder %s30, 1
    %p73 = por %p71, %p72
    %p74 = scmp.ne.s32.totalorder %s66, %s69
    %p75 = scmp.eq.s32.totalorder %s30, 0
    %p76 = por %p74, %p75
    %p77 = scmp.ne.s32.totalorder %s66, %s69
    %p78 = scmp.eq.s32.totalorder %s35, 1
    %p79 = por %p77, %p78
    %p80 = scmp.ne.s32.totalorder %s69, %s70
    %p81 = scmp.eq.s32.totalorder %s35, 0
    %p82 = por %p80, %p81
    %p83 = scmp.ne.s32.totalorder %s69, %s70
    %p84 = scmp.eq.s32.totalorder %s36, 1
    %p85 = por %p83, %p84
    %p87 = scmp.ne.s32.totalorder %s70, %s86
    %p88 = scmp.eq.s32.totalorder %s36, 0
    %p89 = por %p87, %p88
    %s90 = ssub.s32 %s30, %s37
    %p91 = scmp.eq.s32.totalorder %s90, 0
    %s93 = sadd.s32 %s92, 1
    %s94 = scalar_select %p91, %s92, %s93
    %p97 = pneg %p91
    %p98 = scmp.eq.s32.totalorder %s30, 1
    %p99 = por %p97, %p98
    %p100 = scmp.ne.s32.totalorder %s92, %s95
    %p101 = scmp.eq.s32.totalorder %s30, 0
    %p102 = por %p100, %p101
    %p103 = scmp.ne.s32.totalorder %s92, %s95
    %p104 = scmp.eq.s32.totalorder %s35, 1
    %p105 = por %p103, %p104
    %p106 = scmp.ne.s32.totalorder %s95, %s96
    %p107 = scmp.eq.s32.totalorder %s35, 0
    %p108 = por %p106, %p107
    %p109 = scmp.ne.s32.totalorder %s95, %s96
    %p110 = scmp.eq.s32.totalorder %s36, 1
    %p111 = por %p109, %p110
    %p113 = scmp.ne.s32.totalorder %s96, %s112
    %p114 = scmp.eq.s32.totalorder %s36, 0
    %p115 = por %p113, %p114
    %s117 = sadd.s32 %s116, 1
    %p120 = scmp.eq.s32.totalorder %s30, 1
    %p121 = scmp.ne.s32.totalorder %s116, %s118
    %p122 = scmp.eq.s32.totalorder %s30, 0
    %p123 = por %p121, %p122
    %p124 = scmp.ne.s32.totalorder %s116, %s118
    %p125 = scmp.eq.s32.totalorder %s35, 1
    %p126 = por %p124, %p125
    %p127 = scmp.ne.s32.totalorder %s118, %s119
    %p128 = scmp.eq.s32.totalorder %s35, 0
    %p129 = por %p127, %p128
    %p130 = scmp.ne.s32.totalorder %s118, %s119
    %p131 = scmp.eq.s32.totalorder %s36, 1
    %p132 = por %p130, %p131
    %p134 = scmp.ne.s32.totalorder %s119, %s133
    %p135 = scmp.eq.s32.totalorder %s36, 0
    %p136 = por %p134, %p135
    %s138 = sadd.s32 %s137, 1
    %p141 = scmp.eq.s32.totalorder %s30, 1
    %p142 = scmp.ne.s32.totalorder %s137, %s139
    %p143 = scmp.eq.s32.totalorder %s30, 0
    %p144 = por %p142, %p143
    %p145 = scmp.ne.s32.totalorder %s137, %s139
    %p146 = scmp.eq.s32.totalorder %s35, 1
    %p147 = por %p145, %p146
    %p148 = scmp.ne.s32.totalorder %s139, %s140
    %p149 = scmp.eq.s32.totalorder %s35, 0
    %p150 = por %p148, %p149
    %p151 = scmp.ne.s32.totalorder %s139, %s140
    %p152 = scmp.eq.s32.totalorder %s36, 1
    %p153 = por %p151, %p152
    %p155 = scmp.ne.s32.totalorder %s140, %s154
    %p156 = scmp.eq.s32.totalorder %s36, 0
    %p157 = por %p155, %p156
    %s159 = sadd.s32 %s158, 1
    %p162 = scmp.eq.s32.totalorder %s30, 1
    %p163 = scmp.ne.s32.totalorder %s158, %s160
    %p164 = scmp.eq.s32.totalorder %s30, 0
    %p165 = por %p163, %p164
    %p166 = scmp.ne.s32.totalorder %s158, %s160
    %p167 = scmp.eq.s32.totalorder %s35, 1
    %p168 = por %p166, %p167
    %p169 = scmp.ne.s32.totalorder %s160, %s161
    %p170 = scmp.eq.s32.totalorder %s35, 0
    %p171 = por %p169, %p170
    %p172 = scmp.ne.s32.totalorder %s160, %s161
    %p173 = scmp.eq.s32.totalorder %s36, 1
    %p174 = por %p172, %p173
    %p176 = scmp.ne.s32.totalorder %s161, %s175
    %p177 = scmp.eq.s32.totalorder %s36, 0
    %p178 = por %p176, %p177
    %s180 = sadd.s32 %s179, 1
    %p183 = scmp.eq.s32.totalorder %s30, 1
    %p184 = scmp.ne.s32.totalorder %s179, %s181
    %p185 = scmp.eq.s32.totalorder %s30, 0
    %p186 = por %p184, %p185
    %p187 = scmp.ne.s32.totalorder %s179, %s181
    %p188 = scmp.eq.s32.totalorder %s35, 1
    %p189 = por %p187, %p188
    %p190 = scmp.ne.s32.totalorder %s181, %s182
    %p191 = scmp.eq.s32.totalorder %s35, 0
    %p192 = por %p190, %p191
    %p193 = scmp.ne.s32.totalorder %s181, %s182
    %p194 = scmp.eq.s32.totalorder %s36, 1
    %p195 = por %p193, %p194
    %p197 = scmp.ne.s32.totalorder %s182, %s196
    %p198 = scmp.eq.s32.totalorder %s36, 0
    %p199 = por %p197, %p198
    %s201 = sadd.s32 %s200, 1
    %p204 = scmp.eq.s32.totalorder %s30, 1
    %p205 = scmp.ne.s32.totalorder %s200, %s202
    %p206 = scmp.eq.s32.totalorder %s30, 0
    %p207 = por %p205, %p206
    %p208 = scmp.ne.s32.totalorder %s200, %s202
    %p209 = scmp.eq.s32.totalorder %s35, 1
    %p210 = por %p208, %p209
    %p211 = scmp.ne.s32.totalorder %s202, %s203
    %p212 = scmp.eq.s32.totalorder %s35, 0
    %p213 = por %p211, %p212
    %p214 = scmp.ne.s32.totalorder %s202, %s203
    %p215 = scmp.eq.s32.totalorder %s36, 1
    %p216 = por %p214, %p215
    %p218 = scmp.ne.s32.totalorder %s203, %s217
    %p219 = scmp.eq.s32.totalorder %s36, 0
    %p220 = por %p218, %p219
    %s222 = sadd.s32 %s221, 1
    %p225 = scmp.eq.s32.totalorder %s30, 1
    %p226 = scmp.ne.s32.totalorder %s221, %s223
    %p227 = scmp.eq.s32.totalorder %s30, 0
    %p228 = por %p226, %p227
    %p229 = scmp.ne.s32.totalorder %s221, %s223
    %p230 = scmp.eq.s32.totalorder %s35, 1
    %p231 = por %p229, %p230
    %p232 = scmp.ne.s32.totalorder %s223, %s224
    %p233 = scmp.eq.s32.totalorder %s35, 0
    %p234 = por %p232, %p233
    %p235 = scmp.ne.s32.totalorder %s223, %s224
    %p236 = scmp.eq.s32.totalorder %s36, 1
    %p237 = por %p235, %p236
    %p239 = scmp.ne.s32.totalorder %s224, %s238
    %p240 = scmp.eq.s32.totalorder %s36, 0
    %p241 = por %p239, %p240
    %s243 = sadd.s32 %s242, 1
    %p246 = scmp.eq.s32.totalorder %s30, 1
    %p247 = scmp.ne.s32.totalorder %s242, %s244
    %p248 = scmp.eq.s32.totalorder %s30, 0
    %p249 = por %p247, %p248
    %p250 = scmp.ne.s32.totalorder %s242, %s244
    %p251 = scmp.eq.s32.totalorder %s35, 1
    %p252 = por %p250, %p251
    %p253 = scmp.ne.s32.totalorder %s244, %s245
    %p254 = scmp.eq.s32.totalorder %s35, 0
    %p255 = por %p253, %p254
    %p256 = scmp.ne.s32.totalorder %s244, %s245
    %p257 = scmp.eq.s32.totalorder %s36, 1
    %p258 = por %p256, %p257
    %p260 = scmp.ne.s32.totalorder %s245, %s259
    %p261 = scmp.eq.s32.totalorder %s36, 0
    %p262 = por %p260, %p261
    %s264 = sadd.s32 %s263, 1
    %p267 = scmp.eq.s32.totalorder %s30, 1
    %p268 = scmp.ne.s32.totalorder %s263, %s265
    %p269 = scmp.eq.s32.totalorder %s30, 0
    %p270 = por %p268, %p269
    %p271 = scmp.ne.s32.totalorder %s263, %s265
    %p272 = scmp.eq.s32.totalorder %s35, 1
    %p273 = por %p271, %p272
    %p274 = scmp.ne.s32.totalorder %s265, %s266
    %p275 = scmp.eq.s32.totalorder %s35, 0
    %p276 = por %p274, %p275
    %p277 = scmp.ne.s32.totalorder %s265, %s266
    %p278 = scmp.eq.s32.totalorder %s36, 1
    %p279 = por %p277, %p278
    %p281 = scmp.ne.s32.totalorder %s266, %s280
    %p282 = scmp.eq.s32.totalorder %s36, 0
    %p283 = por %p281, %p282
    %s285 = sadd.s32 %s284, 1
    %p288 = scmp.eq.s32.totalorder %s30, 1
    %p289 = scmp.ne.s32.totalorder %s284, %s286
    %p290 = scmp.eq.s32.totalorder %s30, 0
    %p291 = por %p289, %p290
    %p292 = scmp.ne.s32.totalorder %s284, %s286
    %p293 = scmp.eq.s32.totalorder %s35, 1
    %p294 = por %p292, %p293
    %p295 = scmp.ne.s32.totalorder %s286, %s287
    %p296 = scmp.eq.s32.totalorder %s35, 0
    %p297 = por %p295, %p296
    %p298 = scmp.ne.s32.totalorder %s286, %s287
    %p299 = scmp.eq.s32.totalorder %s36, 1
    %p300 = por %p298, %p299
    %p302 = scmp.ne.s32.totalorder %s287, %s301
    %p303 = scmp.eq.s32.totalorder %s36, 0
    %p304 = por %p302, %p303
    %s306 = sadd.s32 %s305, 1
    %p309 = scmp.eq.s32.totalorder %s30, 1
    %p310 = scmp.ne.s32.totalorder %s305, %s307
    %p311 = scmp.eq.s32.totalorder %s30, 0
    %p312 = por %p310, %p311
    %p313 = scmp.ne.s32.totalorder %s305, %s307
    %p314 = scmp.eq.s32.totalorder %s35, 1
    %p315 = por %p313, %p314
    %p316 = scmp.ne.s32.totalorder %s307, %s308
    %p317 = scmp.eq.s32.totalorder %s35, 0
    %p318 = por %p316, %p317
    %p319 = scmp.ne.s32.totalorder %s307, %s308
    %p320 = scmp.eq.s32.totalorder %s36, 1
    %p321 = por %p319, %p320
    %p323 = scmp.ne.s32.totalorder %s308, %s322
    %p324 = scmp.eq.s32.totalorder %s36, 0
    %p325 = por %p323, %p324
    %s327 = sadd.s32 %s326, 1
    %p330 = scmp.eq.s32.totalorder %s30, 1
    %p331 = scmp.ne.s32.totalorder %s326, %s328
    %p332 = scmp.eq.s32.totalorder %s30, 0
    %p333 = por %p331, %p332
    %p334 = scmp.ne.s32.totalorder %s326, %s328
    %p335 = scmp.eq.s32.totalorder %s35, 1
    %p336 = por %p334, %p335
    %p337 = scmp.ne.s32.totalorder %s328, %s329
    %p338 = scmp.eq.s32.totalorder %s35, 0
    %p339 = por %p337, %p338
    %p340 = scmp.ne.s32.totalorder %s328, %s329
    %p341 = scmp.eq.s32.totalorder %s36, 1
    %p342 = por %p340, %p341
    %p344 = scmp.ne.s32.totalorder %s329, %s343
    %p345 = scmp.eq.s32.totalorder %s36, 0
    %p346 = por %p344, %p345
    %s348 = sadd.s32 %s347, 1
    %p351 = scmp.eq.s32.totalorder %s30, 1
    %p352 = scmp.ne.s32.totalorder %s347, %s349
    %p353 = scmp.eq.s32.totalorder %s30, 0
    %p354 = por %p352, %p353
    %p355 = scmp.ne.s32.totalorder %s347, %s349
    %p356 = scmp.eq.s32.totalorder %s35, 1
    %p357 = por %p355, %p356
    %p358 = scmp.ne.s32.totalorder %s349, %s350
    %p359 = scmp.eq.s32.totalorder %s35, 0
    %p360 = por %p358, %p359
    %p361 = scmp.ne.s32.totalorder %s349, %s350
    %p362 = scmp.eq.s32.totalorder %s36, 1
    %p363 = por %p361, %p362
    %p365 = scmp.ne.s32.totalorder %s350, %s364
    %p366 = scmp.eq.s32.totalorder %s36, 0
    %p367 = por %p365, %p366
    %s369 = sadd.s32 %s368, 1
    %p372 = scmp.eq.s32.totalorder %s30, 1
    %p373 = scmp.ne.s32.totalorder %s368, %s370
    %p374 = scmp.eq.s32.totalorder %s30, 0
    %p375 = por %p373, %p374
    %p376 = scmp.ne.s32.totalorder %s368, %s370
    %p377 = scmp.eq.s32.totalorder %s35, 1
    %p378 = por %p376, %p377
    %p379 = scmp.ne.s32.totalorder %s370, %s371
    %p380 = scmp.eq.s32.totalorder %s35, 0
    %p381 = por %p379, %p380
    %p382 = scmp.ne.s32.totalorder %s370, %s371
    %p383 = scmp.eq.s32.totalorder %s36, 1
    %p384 = por %p382, %p383
    %p386 = scmp.ne.s32.totalorder %s371, %s385
    %p387 = scmp.eq.s32.totalorder %s36, 0
    %p388 = por %p386, %p387
    %s390 = sadd.s32 %s389, 1
    %p393 = scmp.eq.s32.totalorder %s30, 1
    %p394 = scmp.ne.s32.totalorder %s389, %s391
    %p395 = scmp.eq.s32.totalorder %s30, 0
    %p396 = por %p394, %p395
    %p397 = scmp.ne.s32.totalorder %s389, %s391
    %p398 = scmp.eq.s32.totalorder %s35, 1
    %p399 = por %p397, %p398
    %p400 = scmp.ne.s32.totalorder %s391, %s392
    %p401 = scmp.eq.s32.totalorder %s35, 0
    %p402 = por %p400, %p401
    %p403 = scmp.ne.s32.totalorder %s391, %s392
    %p404 = scmp.eq.s32.totalorder %s36, 1
    %p405 = por %p403, %p404
    %p407 = scmp.ne.s32.totalorder %s392, %s406
    %p408 = scmp.eq.s32.totalorder %s36, 0
    %p409 = por %p407, %p408
    %s411 = sadd.s32 %s410, 1
    %p414 = scmp.eq.s32.totalorder %s30, 1
    %p415 = scmp.ne.s32.totalorder %s410, %s412
    %p416 = scmp.eq.s32.totalorder %s30, 0
    %p417 = por %p415, %p416
    %p418 = scmp.ne.s32.totalorder %s410, %s412
    %p419 = scmp.eq.s32.totalorder %s35, 1
    %p420 = por %p418, %p419
    %p421 = scmp.ne.s32.totalorder %s412, %s413
    %p422 = scmp.eq.s32.totalorder %s35, 0
    %p423 = por %p421, %p422
    %p424 = scmp.ne.s32.totalorder %s412, %s413
    %p425 = scmp.eq.s32.totalorder %s36, 1
    %p426 = por %p424, %p425
    %p428 = scmp.ne.s32.totalorder %s413, %s427
    %p429 = scmp.eq.s32.totalorder %s36, 0
    %p430 = por %p428, %p429
    %s432 = sadd.s32 %s431, 1
    %p435 = scmp.eq.s32.totalorder %s30, 1
    %p436 = scmp.ne.s32.totalorder %s431, %s433
    %p437 = scmp.eq.s32.totalorder %s30, 0
    %p438 = por %p436, %p437
    %p439 = scmp.ne.s32.totalorder %s431, %s433
    %p440 = scmp.eq.s32.totalorder %s35, 1
    %p441 = por %p439, %p440
    %p442 = scmp.ne.s32.totalorder %s433, %s434
    %p443 = scmp.eq.s32.totalorder %s35, 0
    %p444 = por %p442, %p443
    %p445 = scmp.ne.s32.totalorder %s433, %s434
    %p446 = scmp.eq.s32.totalorder %s36, 1
    %p447 = por %p445, %p446
    %p449 = scmp.ne.s32.totalorder %s434, %s448
    %p450 = scmp.eq.s32.totalorder %s36, 0
    %p451 = por %p449, %p450
    %s453 = sadd.s32 %s452, 1
    %p456 = scmp.eq.s32.totalorder %s30, 1
    %p457 = scmp.ne.s32.totalorder %s452, %s454
    %p458 = scmp.eq.s32.totalorder %s30, 0
    %p459 = por %p457, %p458
    %p460 = scmp.ne.s32.totalorder %s452, %s454
    %p461 = scmp.eq.s32.totalorder %s35, 1
    %p462 = por %p460, %p461
    %p463 = scmp.ne.s32.totalorder %s454, %s455
    %p464 = scmp.eq.s32.totalorder %s35, 0
    %p465 = por %p463, %p464
    %p466 = scmp.ne.s32.totalorder %s454, %s455
    %p467 = scmp.eq.s32.totalorder %s36, 1
    %p468 = por %p466, %p467
    %p470 = scmp.ne.s32.totalorder %s455, %s469
    %p471 = scmp.eq.s32.totalorder %s36, 0
    %p472 = por %p470, %p471
    %s474 = sadd.s32 %s473, 1
    %p477 = scmp.eq.s32.totalorder %s30, 1
    %p478 = scmp.ne.s32.totalorder %s473, %s475
    %p479 = scmp.eq.s32.totalorder %s30, 0
    %p480 = por %p478, %p479
    %p481 = scmp.ne.s32.totalorder %s473, %s475
    %p482 = scmp.eq.s32.totalorder %s35, 1
    %p483 = por %p481, %p482
    %p484 = scmp.ne.s32.totalorder %s475, %s476
    %p485 = scmp.eq.s32.totalorder %s35, 0
    %p486 = por %p484, %p485
    %p487 = scmp.ne.s32.totalorder %s475, %s476
    %p488 = scmp.eq.s32.totalorder %s36, 1
    %p489 = por %p487, %p488
    %p491 = scmp.ne.s32.totalorder %s476, %s490
    %p492 = scmp.eq.s32.totalorder %s36, 0
    %p493 = por %p491, %p492
    %s495 = sadd.s32 %s494, 1
    %p498 = scmp.eq.s32.totalorder %s30, 1
    %p499 = scmp.ne.s32.totalorder %s494, %s496
    %p500 = scmp.eq.s32.totalorder %s30, 0
    %p501 = por %p499, %p500
    %p502 = scmp.ne.s32.totalorder %s494, %s496
    %p503 = scmp.eq.s32.totalorder %s35, 1
    %p504 = por %p502, %p503
    %p505 = scmp.ne.s32.totalorder %s496, %s497
    %p506 = scmp.eq.s32.totalorder %s35, 0
    %p507 = por %p505, %p506
    %p508 = scmp.ne.s32.totalorder %s496, %s497
    %p509 = scmp.eq.s32.totalorder %s36, 1
    %p510 = por %p508, %p509
    %p512 = scmp.ne.s32.totalorder %s497, %s511
    %p513 = scmp.eq.s32.totalorder %s36, 0
    %p514 = por %p512, %p513
    %s516 = sadd.s32 %s515, 1
    %p519 = scmp.eq.s32.totalorder %s30, 1
    %p520 = scmp.ne.s32.totalorder %s515, %s517
    %p521 = scmp.eq.s32.totalorder %s30, 0
    %p522 = por %p520, %p521
    %p523 = scmp.ne.s32.totalorder %s515, %s517
    %p524 = scmp.eq.s32.totalorder %s35, 1
    %p525 = por %p523, %p524
    %p526 = scmp.ne.s32.totalorder %s517, %s518
    %p527 = scmp.eq.s32.totalorder %s35, 0
    %p528 = por %p526, %p527
    %p529 = scmp.ne.s32.totalorder %s517, %s518
    %p530 = scmp.eq.s32.totalorder %s36, 1
    %p531 = por %p529, %p530
    %p533 = scmp.ne.s32.totalorder %s518, %s532
    %p534 = scmp.eq.s32.totalorder %s36, 0
    %p535 = por %p533, %p534
    %s537 = sadd.s32 %s536, 1
    %p540 = scmp.eq.s32.totalorder %s30, 1
    %p541 = scmp.ne.s32.totalorder %s536, %s538
    %p542 = scmp.eq.s32.totalorder %s30, 0
    %p543 = por %p541, %p542
    %p544 = scmp.ne.s32.totalorder %s536, %s538
    %p545 = scmp.eq.s32.totalorder %s35, 1
    %p546 = por %p544, %p545
    %p547 = scmp.ne.s32.totalorder %s538, %s539
    %p548 = scmp.eq.s32.totalorder %s35, 0
    %p549 = por %p547, %p548
    %p550 = scmp.ne.s32.totalorder %s538, %s539
    %p551 = scmp.eq.s32.totalorder %s36, 1
    %p552 = por %p550, %p551
    %p554 = scmp.ne.s32.totalorder %s539, %s553
    %p555 = scmp.eq.s32.totalorder %s36, 0
    %p556 = por %p554, %p555
    %s557 = ssub.s32 %s30, %s37
    %p558 = scmp.eq.s32.totalorder %s557, 0
    %s560 = sadd.s32 %s559, 1
    %s561 = scalar_select %p558, %s559, %s560
    %p564 = pneg %p558
    %p565 = scmp.eq.s32.totalorder %s30, 1
    %p566 = por %p564, %p565
    %p567 = scmp.ne.s32.totalorder %s559, %s562
    %p568 = scmp.eq.s32.totalorder %s30, 0
    %p569 = por %p567, %p568
    %p570 = scmp.ne.s32.totalorder %s559, %s562
    %p571 = scmp.eq.s32.totalorder %s35, 1
    %p572 = por %p570, %p571
    %p573 = scmp.ne.s32.totalorder %s562, %s563
    %p574 = scmp.eq.s32.totalorder %s35, 0
    %p575 = por %p573, %p574
    %p576 = scmp.ne.s32.totalorder %s562, %s563
    %p577 = scmp.eq.s32.totalorder %s36, 1
    %p578 = por %p576, %p577
    %p580 = scmp.ne.s32.totalorder %s563, %s579
    %p581 = scmp.eq.s32.totalorder %s36, 0
    %p582 = por %p580, %p581
    %p583 = scmp.le.s32.totalorder 1, %s30
    %p584 = scmp.lt.s32.totalorder %s30, 3
    %p585 = pnand %p583, %p584
    %p586 = pneg %p585
    // Predicated region
    $region9: #{scene_flow_dit_forward.1} parent=5 // pred_check
      _
    $region10: #{scene_flow_dit_forward.1} parent=5 // pred_check_branch
      %588 = sbr.rel (%p585) target = $region12
    $region11: #{scene_flow_dit_forward.1} parent=5 // pred_region
      %s589 = ssub.s32 %s30, 1
      // Predicated region
      $region13: #{scene_flow_dit_forward.1} parent=11 // pred_check
        %p590 = pneg %p129
      $region14: #{scene_flow_dit_forward.1} parent=11 // pred_check_branch
        %592 = sbr.rel (%p590) target = $region16
      $region15: #{scene_flow_dit_forward.1} parent=11 // pred_region
        _
      $region16: #{scene_flow_dit_forward.1} parent=11 // pred_fallthru
        _
      // Predicated region
      $region17: #{scene_flow_dit_forward.1} parent=11 // pred_check
        %p593 = pneg %p150
      $region18: #{scene_flow_dit_forward.1} parent=11 // pred_check_branch
        %595 = sbr.rel (%p593) target = $region20
      $region19: #{scene_flow_dit_forward.1} parent=11 // pred_region
        _
      $region20: #{scene_flow_dit_forward.1} parent=11 // pred_fallthru
        _
      // Predicated region
      $region21: #{scene_flow_dit_forward.1} parent=11 // pred_check
        %p596 = pneg %p171
      $region22: #{scene_flow_dit_forward.1} parent=11 // pred_check_branch
        %598 = sbr.rel (%p596) target = $region24
      $region23: #{scene_flow_dit_forward.1} parent=11 // pred_region
        _
      $region24: #{scene_flow_dit_forward.1} parent=11 // pred_fallthru
        _
      // Predicated region
      $region25: #{scene_flow_dit_forward.1} parent=11 // pred_check
        %p599 = pneg %p192
      $region26: #{scene_flow_dit_forward.1} parent=11 // pred_check_branch
        %601 = sbr.rel (%p599) target = $region28
      $region27: #{scene_flow_dit_forward.1} parent=11 // pred_region
        _
      $region28: #{scene_flow_dit_forward.1} parent=11 // pred_fallthru
        _
      // Predicated region
      $region29: #{scene_flow_dit_forward.1} parent=11 // pred_check
        %p602 = pneg %p213
      $region30: #{scene_flow_dit_forward.1} parent=11 // pred_check_branch
        %604 = sbr.rel (%p602) target = $region32
      $region31: #{scene_flow_dit_forward.1} parent=11 // pred_region
        _
      $region32: #{scene_flow_dit_forward.1} parent=11 // pred_fallthru
        _
      // Predicated region
      $region33: #{scene_flow_dit_forward.1} parent=11 // pred_check
        %p605 = pneg %p234
      $region34: #{scene_flow_dit_forward.1} parent=11 // pred_check_branch
        %607 = sbr.rel (%p605) target = $region36
      $region35: #{scene_flow_dit_forward.1} parent=11 // pred_region
        _
      $region36: #{scene_flow_dit_forward.1} parent=11 // pred_fallthru
        _
      // Predicated region
      $region37: #{scene_flow_dit_forward.1} parent=11 // pred_check
        %p608 = pneg %p255
      $region38: #{scene_flow_dit_forward.1} parent=11 // pred_check_branch
        %610 = sbr.rel (%p608) target = $region40
      $region39: #{scene_flow_dit_forward.1} parent=11 // pred_region
        _
      $region40: #{scene_flow_dit_forward.1} parent=11 // pred_fallthru
        _
      // Predicated region
      $region41: #{scene_flow_dit_forward.1} parent=11 // pred_check
        %p611 = pneg %p276
      $region42: #{scene_flow_dit_forward.1} parent=11 // pred_check_branch
        %613 = sbr.rel (%p611) target = $region44
      $region43: #{scene_flow_dit_forward.1} parent=11 // pred_region
        _
      $region44: #{scene_flow_dit_forward.1} parent=11 // pred_fallthru
        _
      // Predicated region
      $region45: #{scene_flow_dit_forward.1} parent=11 // pred_check
        %p614 = pneg %p297
      $region46: #{scene_flow_dit_forward.1} parent=11 // pred_check_branch
        %616 = sbr.rel (%p614) target = $region48
      $region47: #{scene_flow_dit_forward.1} parent=11 // pred_region
        _
      $region48: #{scene_flow_dit_forward.1} parent=11 // pred_fallthru
        _
      // Predicated region
      $region49: #{scene_flow_dit_forward.1} parent=11 // pred_check
        %p617 = pneg %p318
      $region50: #{scene_flow_dit_forward.1} parent=11 // pred_check_branch
        %619 = sbr.rel (%p617) target = $region52
      $region51: #{scene_flow_dit_forward.1} parent=11 // pred_region
        _
      $region52: #{scene_flow_dit_forward.1} parent=11 // pred_fallthru
        _
      // Predicated region
      $region53: #{scene_flow_dit_forward.1} parent=11 // pred_check
        %p620 = pneg %p339
      $region54: #{scene_flow_dit_forward.1} parent=11 // pred_check_branch
        %622 = sbr.rel (%p620) target = $region56
      $region55: #{scene_flow_dit_forward.1} parent=11 // pred_region
        _
      $region56: #{scene_flow_dit_forward.1} parent=11 // pred_fallthru
        _
      // Predicated region
      $region57: #{scene_flow_dit_forward.1} parent=11 // pred_check
        %p623 = pneg %p360
      $region58: #{scene_flow_dit_forward.1} parent=11 // pred_check_branch
        %625 = sbr.rel (%p623) target = $region60
      $region59: #{scene_flow_dit_forward.1} parent=11 // pred_region
        _
      $region60: #{scene_flow_dit_forward.1} parent=11 // pred_fallthru
        _
      // Predicated region
      $region61: #{scene_flow_dit_forward.1} parent=11 // pred_check
        %p626 = pneg %p381
      $region62: #{scene_flow_dit_forward.1} parent=11 // pred_check_branch
        %628 = sbr.rel (%p626) target = $region64
      $region63: #{scene_flow_dit_forward.1} parent=11 // pred_region
        _
      $region64: #{scene_flow_dit_forward.1} parent=11 // pred_fallthru
        _
      // Predicated region
      $region65: #{scene_flow_dit_forward.1} parent=11 // pred_check
        %p629 = pneg %p402
      $region66: #{scene_flow_dit_forward.1} parent=11 // pred_check_branch
        %631 = sbr.rel (%p629) target = $region68
      $region67: #{scene_flow_dit_forward.1} parent=11 // pred_region
        _
      $region68: #{scene_flow_dit_forward.1} parent=11 // pred_fallthru
        _
      // Predicated region
      $region69: #{scene_flow_dit_forward.1} parent=11 // pred_check
        %p632 = pneg %p423
      $region70: #{scene_flow_dit_forward.1} parent=11 // pred_check_branch
        %634 = sbr.rel (%p632) target = $region72
      $region71: #{scene_flow_dit_forward.1} parent=11 // pred_region
        _
      $region72: #{scene_flow_dit_forward.1} parent=11 // pred_fallthru
        _
      // Predicated region
      $region73: #{scene_flow_dit_forward.1} parent=11 // pred_check
        %p635 = pneg %p444
      $region74: #{scene_flow_dit_forward.1} parent=11 // pred_check_branch
        %637 = sbr.rel (%p635) target = $region76
      $region75: #{scene_flow_dit_forward.1} parent=11 // pred_region
        _
      $region76: #{scene_flow_dit_forward.1} parent=11 // pred_fallthru
        _
      // Predicated region
      $region77: #{scene_flow_dit_forward.1} parent=11 // pred_check
        %p638 = pneg %p465
      $region78: #{scene_flow_dit_forward.1} parent=11 // pred_check_branch
        %640 = sbr.rel (%p638) target = $region80
      $region79: #{scene_flow_dit_forward.1} parent=11 // pred_region
        _
      $region80: #{scene_flow_dit_forward.1} parent=11 // pred_fallthru
        _
      // Predicated region
      $region81: #{scene_flow_dit_forward.1} parent=11 // pred_check
        %p641 = pneg %p486
      $region82: #{scene_flow_dit_forward.1} parent=11 // pred_check_branch
        %643 = sbr.rel (%p641) target = $region84
      $region83: #{scene_flow_dit_forward.1} parent=11 // pred_region
        _
      $region84: #{scene_flow_dit_forward.1} parent=11 // pred_fallthru
        _
      // Predicated region
      $region85: #{scene_flow_dit_forward.1} parent=11 // pred_check
        %p644 = pneg %p507
      $region86: #{scene_flow_dit_forward.1} parent=11 // pred_check_branch
        %646 = sbr.rel (%p644) target = $region88
      $region87: #{scene_flow_dit_forward.1} parent=11 // pred_region
        _
      $region88: #{scene_flow_dit_forward.1} parent=11 // pred_fallthru
        _
      // Predicated region
      $region89: #{scene_flow_dit_forward.1} parent=11 // pred_check
        %p647 = pneg %p528
      $region90: #{scene_flow_dit_forward.1} parent=11 // pred_check_branch
        %649 = sbr.rel (%p647) target = $region92
      $region91: #{scene_flow_dit_forward.1} parent=11 // pred_region
        _
      $region92: #{scene_flow_dit_forward.1} parent=11 // pred_fallthru
        _
      // Predicated region
      $region93: #{scene_flow_dit_forward.1} parent=11 // pred_check
        %p650 = pneg %p549
      $region94: #{scene_flow_dit_forward.1} parent=11 // pred_check_branch
        %652 = sbr.rel (%p650) target = $region96
      $region95: #{scene_flow_dit_forward.1} parent=11 // pred_region
        _
      $region96: #{scene_flow_dit_forward.1} parent=11 // pred_fallthru
        _
    $region12: #{scene_flow_dit_forward.1} parent=5 // pred_fallthru
      _
    %p653 = scmp.lt.s32.totalorder %s30, 2
    // Predicated region
    $region97: #{scene_flow_dit_forward.1} parent=5 // pred_check
      %p654 = pneg %p653
    $region98: #{scene_flow_dit_forward.1} parent=5 // pred_check_branch
      %656 = sbr.rel (%p654) target = $region100
    $region99: #{scene_flow_dit_forward.1} parent=5 // pred_region
      // Predicated region
      $region101: #{scene_flow_dit_forward.1} parent=99 // pred_check
        %p657 = pneg %p50
      $region102: #{scene_flow_dit_forward.1} parent=99 // pred_check_branch
        %659 = sbr.rel (%p657) target = $region104
      $region103: #{scene_flow_dit_forward.1} parent=99 // pred_region
        %p660 = scmp.lt.s32.totalorder %s30, 1
        %s661 = scalar_select %p660, %s30, 1
        %s662 = smul.addr %s661, 8
        %s663 = smul.addr %s662, 8
        %s664 = scalar_lea.vmem %s0, %s663
      $region104: #{scene_flow_dit_forward.1} parent=99 // pred_fallthru
        _
      // Predicated region
      $region105: #{scene_flow_dit_forward.1} parent=99 // pred_check
        %p665 = pneg %p76
      $region106: #{scene_flow_dit_forward.1} parent=99 // pred_check_branch
        %667 = sbr.rel (%p665) target = $region108
      $region107: #{scene_flow_dit_forward.1} parent=99 // pred_region
        %p668 = scmp.lt.s32.totalorder %s30, 1
        %s669 = scalar_select %p668, %s30, 1
        %s670 = smul.addr %s669, 8
        %s671 = smul.addr %s670, 8
        %s672 = scalar_lea.vmem %s1, %s671
      $region108: #{scene_flow_dit_forward.1} parent=99 // pred_fallthru
        _
      // Predicated region
      $region109: #{scene_flow_dit_forward.1} parent=99 // pred_check
        %p673 = pneg %p102
      $region110: #{scene_flow_dit_forward.1} parent=99 // pred_check_branch
        %675 = sbr.rel (%p673) target = $region112
      $region111: #{scene_flow_dit_forward.1} parent=99 // pred_region
        %p676 = scmp.lt.s32.totalorder %s30, 1
        %s677 = scalar_select %p676, %s30, 1
        %s678 = smul.addr %s677, 2
        %s679 = scalar_lea.vmem %s2, %s678
      $region112: #{scene_flow_dit_forward.1} parent=99 // pred_fallthru
        _
    $region100: #{scene_flow_dit_forward.1} parent=5 // pred_fallthru
      _
    %p680 = scmp.le.s32.totalorder 1, %s30
    %p681 = scmp.lt.s32.totalorder %s30, 3
    %p682 = pnand %p680, %p681
    %p683 = pneg %p682
    // Predicated region
    $region113: #{scene_flow_dit_forward.1} parent=5 // pred_check
      _
    $region114: #{scene_flow_dit_forward.1} parent=5 // pred_check_branch
      %685 = sbr.rel (%p682) target = $region116
    $region115: #{scene_flow_dit_forward.1} parent=5 // pred_region
      %s686 = ssub.s32 %s30, 1
      %p687 = scmp.lt.s32.totalorder %s35, 1
      %s688 = scalar_select %p687, %s35, 1
      %s689 = smul.addr %s688, 8
      %s690 = smul.addr %s689, 8
      %s691 = scalar_lea.vmem %s0, %s690
      %p692 = pneg %p56
      %p693 = pneg %p53
      %p694 = scmp.lt.s32.totalorder %s35, 1
      %s695 = scalar_select %p694, %s35, 1
      %s696 = smul.addr %s695, 8
      %s697 = smul.addr %s696, 8
      %s698 = scalar_lea.vmem %s1, %s697
      %p699 = pneg %p82
      %p700 = pneg %p79
      %p701 = scmp.lt.s32.totalorder %s35, 1
      %s702 = scalar_select %p701, %s35, 1
      %s703 = smul.addr %s702, 2
      %s704 = scalar_lea.vmem %s2, %s703
      %p705 = pneg %p108
      %p706 = pneg %p105
      %p707 = pneg %p129
      %p708 = pneg %p126
      %p709 = pneg %p150
      %p710 = pneg %p147
      %p711 = pneg %p171
      %p712 = pneg %p168
      %p713 = pneg %p192
      %p714 = pneg %p189
      %p715 = pneg %p213
      %p716 = pneg %p210
      %p717 = pneg %p234
      %p718 = pneg %p231
      %p719 = pneg %p255
      %p720 = pneg %p252
      %p721 = pneg %p276
      %p722 = pneg %p273
      %p723 = pneg %p297
      %p724 = pneg %p294
      %p725 = pneg %p318
      %p726 = pneg %p315
      %p727 = pneg %p339
      %p728 = pneg %p336
      %p729 = pneg %p360
      %p730 = pneg %p357
      %p731 = pneg %p381
      %p732 = pneg %p378
      %p733 = pneg %p402
      %p734 = pneg %p399
      %p735 = pneg %p423
      %p736 = pneg %p420
      %p737 = pneg %p444
      %p738 = pneg %p441
      %p739 = pneg %p465
      %p740 = pneg %p462
      %p741 = pneg %p486
      %p742 = pneg %p483
      %p743 = pneg %p507
      %p744 = pneg %p504
      %p745 = pneg %p528
      %p746 = pneg %p525
      %p747 = pneg %p549
      %p748 = pneg %p546
      %p749 = pneg %p575
      %p750 = pneg %p572
      %p751 = scmp.lt.s32.totalorder %s35, 1
      %s752 = scalar_select %p751, %s35, 1
      %s753 = smul.addr %s752, 8
      %s754 = scalar_lea.vmem %s24, %s753
      %p755 = scmp.lt.s32.totalorder %s35, 1
      %s756 = scalar_select %p755, %s35, 1
      %s757 = smul.addr %s756, 8
      %s758 = smul.addr %s757, 8
      %s759 = scalar_lea.vmem %s0, %s758
      %p760 = scmp.lt.s32.totalorder %s35, 1
      %s761 = scalar_select %p760, %s35, 1
      %s762 = smul.addr %s761, 8
      %s763 = smul.addr %s762, 8
      %s764 = scalar_lea.vmem %s1, %s763
      %p765 = scmp.lt.s32.totalorder %s35, 1
      %s766 = scalar_select %p765, %s35, 1
      %s767 = smul.addr %s766, 2
      %s768 = scalar_lea.vmem %s2, %s767
      %p769 = scmp.lt.s32.totalorder %s35, 1
      %s770 = scalar_select %p769, %s35, 1
      %s771 = smul.addr %s770, 8
      %s772 = scalar_lea.vmem %s24, %s771
      %v774 = vld [vmem:[%s759] sm:$0xff]
      %v775 = vld [vmem:[%s759 + $0x8] sm:$0xff]
      %v776 = vld [vmem:[%s759 + $0x10] sm:$0xff]
      %v777 = vld [vmem:[%s759 + $0x18] sm:$0xff]
      %v778 = vld [vmem:[%s759 + $0x20] sm:$0xff]
      %v779 = vld [vmem:[%s759 + $0x28] sm:$0xff]
      %v780 = vld [vmem:[%s759 + $0x30] sm:$0xff]
      %v781 = vld [vmem:[%s759 + $0x38] sm:$0xff]
      %v782 = vld [vmem:[%s764] sm:$0xff]
      %v783 = vld [vmem:[%s764 + $0x8] sm:$0xff]
      %v784 = vld [vmem:[%s764 + $0x10] sm:$0xff]
      %v785 = vld [vmem:[%s764 + $0x18] sm:$0xff]
      %v786 = vld [vmem:[%s764 + $0x20] sm:$0xff]
      %v787 = vld [vmem:[%s764 + $0x28] sm:$0xff]
      %v788 = vld [vmem:[%s764 + $0x30] sm:$0xff]
      %v789 = vld [vmem:[%s764 + $0x38] sm:$0xff]
      %vm790 = vcmask 23552
      %v791 = vsel %vm790, %v774, 0.0
      %v792 = vsel %vm790, %v775, 0.0
      %v793 = vadd.f32 %v791, %v792
      %v794 = vsel %vm790, %v776, 0.0
      %v795 = vadd.f32 %v793, %v794
      %v796 = vsel %vm790, %v777, 0.0
      %v797 = vadd.f32 %v795, %v796
      %v798 = vsel %vm790, %v778, 0.0
      %v799 = vadd.f32 %v797, %v798
      %v800 = vsel %vm790, %v779, 0.0
      %v801 = vadd.f32 %v799, %v800
      %v802 = vsel %vm790, %v780, 0.0
      %v803 = vadd.f32 %v801, %v802
      %v804 = vsel %vm790, %v781, 0.0
      %v805 = vadd.f32 %v803, %v804
      %v806 = vrot.slane %v805, 4
      %v807 = vadd.f32 %v805, %v806
      %v808 = vrot.slane %v807, 2
      %v809 = vadd.f32 %v807, %v808
      %v810 = vrot.slane %v809, 1
      %v811 = vadd.f32 %v809, %v810
      %v812 = vrcp.pop 64.0
      %v813 = vmul.f32 64.0, %v812
      %v814 = vsub.f32 1.0, %v813
      %v815 = vmul.f32 %v812, %v814
      %v816 = vadd.f32 %v812, %v815
      %vm817 = vweird.f32 %v812
      %v818 = vsel %vm817, %v812, %v816
      %v819 = vmul.f32 %v811, %v818
      %v820 = vsub.f32 %v774, %v819
      %v821 = vsub.f32 %v775, %v819
      %v822 = vsub.f32 %v776, %v819
      %v823 = vsub.f32 %v777, %v819
      %v824 = vsub.f32 %v778, %v819
      %v825 = vsub.f32 %v779, %v819
      %v826 = vsub.f32 %v780, %v819
      %v827 = vsub.f32 %v781, %v819
      %v828 = vpack.c.bf16 %v821, %v820
      %v829 = vpack.c.bf16 %v823, %v822
      %v830 = vpack.c.bf16 %v825, %v824
      %v831 = vpack.c.bf16 %v827, %v826
      %v832 = vld [vmem:[%s3] sm:$0x3]
      %v833 = vpack.c.bf16 %v783, %v782
      %v834 = vpack.c.bf16 %v785, %v784
      %v835 = vpack.c.bf16 %v787, %v786
      %v836 = vpack.c.bf16 %v789, %v788
      %v837 = vld [vmem:[%s4] sm:$0x3]
      %v839 = vsel %vm790, %v833, 0
      %v842 = vsel %vm790, %v834, 0
      %v845 = vsel %vm790, %v835, 0
      %v848 = vsel %vm790, %v836, 0
      %vm850 = vcmask 1040384
      %vm851 = vcmask 1041408
      %v852 = vsel %vm850, 4294967295, 65535
      %v853 = vsel %vm851, %v852, 0
      %v855 = vand.u32 %v837, %v853
      %857 = vmatpush.bf16.msra.mxu0 0
      %858 = vmatpush.bf16.msra.mxu0 0
      %859 = vmatpush.bf16.msra.mxu0 0
      %860 = vmatpush.bf16.msra.mxu0 0
      %861 = vmatpush.bf16.msra.mxu0 0
      %862 = vmatpush.bf16.msra.mxu0 0
      %863 = vmatpush.bf16.msra.mxu0 0
      %864 = vmatpush.bf16.msra.mxu0 %v855
      %865 = vmatmul.bf16.gmra.mxu0 %v839
      %v866 = vpop.f32.mrf.mxu0
      %v867 = vadd.f32 0.0, %v866
      %v868 = vpop.f32.mrf.mxu0
      %v869 = vadd.f32 0.0, %v868
      %870 = vmatmul.bf16.gmra.mxu0 %v842
      %v871 = vpop.f32.mrf.mxu0
      %v872 = vadd.f32 0.0, %v871
      %v873 = vpop.f32.mrf.mxu0
      %v874 = vadd.f32 0.0, %v873
      %875 = vmatmul.bf16.gmra.mxu0 %v845
      %v876 = vpop.f32.mrf.mxu0
      %v877 = vadd.f32 0.0, %v876
      %v878 = vpop.f32.mrf.mxu0
      %v879 = vadd.f32 0.0, %v878
      %880 = vmatmul.bf16.gmra.mxu0 %v848
      %v881 = vpop.f32.mrf.mxu0
      %v882 = vadd.f32 0.0, %v881
      %v883 = vpop.f32.mrf.mxu0
      %v884 = vadd.f32 0.0, %v883
      %885 = vdwg.mxu0
      %v887 = vsel %vm790, %v828, 0
      %v890 = vsel %vm790, %v829, 0
      %v893 = vsel %vm790, %v830, 0
      %v896 = vsel %vm790, %v831, 0
      %v899 = vand.u32 %v832, %v853
      %901 = vmatpush.bf16.msra.mxu0 0
      %902 = vmatpush.bf16.msra.mxu0 0
      %903 = vmatpush.bf16.msra.mxu0 0
      %904 = vmatpush.bf16.msra.mxu0 0
      %905 = vmatpush.bf16.msra.mxu0 0
      %906 = vmatpush.bf16.msra.mxu0 0
      %907 = vmatpush.bf16.msra.mxu0 0
      %908 = vmatpush.bf16.msra.mxu0 %v899
      %909 = vmatmul.bf16.gmra.mxu0 %v887
      %v910 = vpop.f32.mrf.mxu0
      %v911 = vadd.f32 %v867, %v910
      %v912 = vpop.f32.mrf.mxu0
      %v913 = vadd.f32 %v869, %v912
      %914 = vmatmul.bf16.gmra.mxu0 %v890
      %v915 = vpop.f32.mrf.mxu0
      %v916 = vadd.f32 %v872, %v915
      %v917 = vpop.f32.mrf.mxu0
      %v918 = vadd.f32 %v874, %v917
      %919 = vmatmul.bf16.gmra.mxu0 %v893
      %v920 = vpop.f32.mrf.mxu0
      %v921 = vadd.f32 %v877, %v920
      %v922 = vpop.f32.mrf.mxu0
      %v923 = vadd.f32 %v879, %v922
      %924 = vmatmul.bf16.gmra.mxu0 %v896
      %v925 = vpop.f32.mrf.mxu0
      %v926 = vadd.f32 %v882, %v925
      %v927 = vpop.f32.mrf.mxu0
      %v928 = vadd.f32 %v884, %v927
      %929 = vdwg.mxu0
      %v930 = vld [vmem:[%s5] sm:$0x1]
      %v932 = vperm.slane %v930, 0
      %v934 = vadd.f32 %v911, %v932
      %v935 = vadd.f32 %v913, %v932
      %v936 = vadd.f32 %v916, %v932
      %v937 = vadd.f32 %v918, %v932
      %v938 = vadd.f32 %v921, %v932
      %v939 = vadd.f32 %v923, %v932
      %v940 = vadd.f32 %v926, %v932
      %v941 = vadd.f32 %v928, %v932
      %v942 = vld [vmem:[%s768] sm:$0x3]
      %v944 = vperm.slane %v942, 0
      %v945 = vperm.slane %v942, 1
      %v948 = vpack.c.bf16 %v944, %v944
      %v949 = vpack.c.bf16 %v945, %v945
      %v950 = vld [vmem:[%s6] sm:$0xf]
      %v951 = vld [vmem:[%s6 + $0x4] sm:$0xf]
      %v952 = vld [vmem:[%s6 + $0x8] sm:$0xf]
      %v953 = vld [vmem:[%s6 + $0xc] sm:$0xf]
      %v954 = vld [vmem:[%s6 + $0x10] sm:$0xf]
      %v955 = vld [vmem:[%s6 + $0x14] sm:$0xf]
      %v956 = vld [vmem:[%s6 + $0x18] sm:$0xf]
      %v957 = vld [vmem:[%s6 + $0x1c] sm:$0xf]
      %v958 = vld [vmem:[%s6 + $0x20] sm:$0xf]
      %v959 = vld [vmem:[%s6 + $0x24] sm:$0xf]
      %v960 = vld [vmem:[%s6 + $0x28] sm:$0xf]
      %v961 = vld [vmem:[%s6 + $0x2c] sm:$0xf]
      %v962 = vld [vmem:[%s6 + $0x30] sm:$0xf]
      %v963 = vld [vmem:[%s6 + $0x34] sm:$0xf]
      %v964 = vld [vmem:[%s6 + $0x38] sm:$0xf]
      %v965 = vld [vmem:[%s6 + $0x3c] sm:$0xf]
      %v966 = vld [vmem:[%s6 + $0x40] sm:$0xf]
      %v967 = vld [vmem:[%s6 + $0x44] sm:$0xf]
      %v968 = vld [vmem:[%s6 + $0x48] sm:$0xf]
      %v969 = vld [vmem:[%s6 + $0x4c] sm:$0xf]
      %v970 = vld [vmem:[%s6 + $0x50] sm:$0xf]
      %v971 = vld [vmem:[%s6 + $0x54] sm:$0xf]
      %v972 = vld [vmem:[%s6 + $0x58] sm:$0xf]
      %v973 = vld [vmem:[%s6 + $0x5c] sm:$0xf]
      %v974 = vld [vmem:[%s6 + $0x60] sm:$0xf]
      %v975 = vld [vmem:[%s6 + $0x64] sm:$0xf]
      %v976 = vld [vmem:[%s6 + $0x68] sm:$0xf]
      %v977 = vld [vmem:[%s6 + $0x6c] sm:$0xf]
      %v978 = vld [vmem:[%s6 + $0x70] sm:$0xf]
      %v979 = vld [vmem:[%s6 + $0x74] sm:$0xf]
      %v980 = vld [vmem:[%s6 + $0x78] sm:$0xf]
      %v981 = vld [vmem:[%s6 + $0x7c] sm:$0xf]
      %v982 = vld [vmem:[%s7] sm:$0x1]
      %v1015 = vunpack.c.l.b16 %v950
      %v1016 = vunpack.c.l.b16 %v951
      %v1017 = vunpack.c.l.b16 %v952
      %v1018 = vunpack.c.l.b16 %v953
      %v1019 = vunpack.c.l.b16 %v954
      %v1020 = vunpack.c.l.b16 %v955
      %v1021 = vunpack.c.l.b16 %v956
      %v1022 = vunpack.c.l.b16 %v957
      %v1023 = vunpack.c.l.b16 %v958
      %v1024 = vunpack.c.l.b16 %v959
      %v1025 = vunpack.c.l.b16 %v960
      %v1026 = vunpack.c.l.b16 %v961
      %v1027 = vunpack.c.l.b16 %v962
      %v1028 = vunpack.c.l.b16 %v963
      %v1029 = vunpack.c.l.b16 %v964
      %v1030 = vunpack.c.l.b16 %v965
      %v1031 = vunpack.c.l.b16 %v966
      %v1032 = vunpack.c.l.b16 %v967
      %v1033 = vunpack.c.l.b16 %v968
      %v1034 = vunpack.c.l.b16 %v969
      %v1035 = vunpack.c.l.b16 %v970
      %v1036 = vunpack.c.l.b16 %v971
      %v1037 = vunpack.c.l.b16 %v972
      %v1038 = vunpack.c.l.b16 %v973
      %v1039 = vunpack.c.l.b16 %v974
      %v1040 = vunpack.c.l.b16 %v975
      %v1041 = vunpack.c.l.b16 %v976
      %v1042 = vunpack.c.l.b16 %v977
      %v1043 = vunpack.c.l.b16 %v978
      %v1044 = vunpack.c.l.b16 %v979
      %v1045 = vunpack.c.l.b16 %v980
      %v1046 = vunpack.c.l.b16 %v981
      %v1047 = vpack.c.b16 %v1016, %v1015
      %v1048 = vpack.c.b16 %v1018, %v1017
      %v1049 = vpack.c.b16 %v1020, %v1019
      %v1050 = vpack.c.b16 %v1022, %v1021
      %v1051 = vpack.c.b16 %v1024, %v1023
      %v1052 = vpack.c.b16 %v1026, %v1025
      %v1053 = vpack.c.b16 %v1028, %v1027
      %v1054 = vpack.c.b16 %v1030, %v1029
      %v1055 = vpack.c.b16 %v1032, %v1031
      %v1056 = vpack.c.b16 %v1034, %v1033
      %v1057 = vpack.c.b16 %v1036, %v1035
      %v1058 = vpack.c.b16 %v1038, %v1037
      %v1059 = vpack.c.b16 %v1040, %v1039
      %v1060 = vpack.c.b16 %v1042, %v1041
      %v1061 = vpack.c.b16 %v1044, %v1043
      %v1062 = vpack.c.b16 %v1046, %v1045
      %1079 = vmatpush.bf16.msra.mxu0 %v1054
      %1080 = vmatpush.bf16.msra.mxu0 %v1053
      %1081 = vmatpush.bf16.msra.mxu0 %v1052
      %1082 = vmatpush.bf16.msra.mxu0 %v1051
      %1083 = vmatpush.bf16.msra.mxu0 %v1050
      %1084 = vmatpush.bf16.msra.mxu0 %v1049
      %1085 = vmatpush.bf16.msra.mxu0 %v1048
      %1086 = vmatpush.bf16.msra.mxu0 %v1047
      %1087 = vmatmul.bf16.gmra.mxu0 %v948
      %v1088 = vpop.f32.mrf.mxu0
      %v1089 = vadd.f32 %v982, %v1088
      %v1090 = vpop.f32.mrf.mxu0
      %1091 = vdwg.mxu0
      %1092 = vmatpush.bf16.msra.mxu0 %v1062
      %1093 = vmatpush.bf16.msra.mxu0 %v1061
      %1094 = vmatpush.bf16.msra.mxu0 %v1060
      %1095 = vmatpush.bf16.msra.mxu0 %v1059
      %1096 = vmatpush.bf16.msra.mxu0 %v1058
      %1097 = vmatpush.bf16.msra.mxu0 %v1057
      %1098 = vmatpush.bf16.msra.mxu0 %v1056
      %1099 = vmatpush.bf16.msra.mxu0 %v1055
      %1100 = vmatmul.bf16.gmra.mxu0 %v949
      %v1101 = vpop.f32.mrf.mxu0
      %v1102 = vadd.f32 %v1089, %v1101
      %v1103 = vpop.f32.mrf.mxu0
      %1104 = vdwg.mxu0
      %v1105 = vxor.u32 %v1102, 2147483648
      %v1106 = vmul.f32 %v1105, 1.442695
      %v1107 = vpow.pop %v1106
      %v1108 = vadd.f32 %v1107, 1.0
      %v1109 = vrcp.pop %v1108
      %v1110 = vmul.f32 %v1108, %v1109
      %v1111 = vsub.f32 1.0, %v1110
      %v1112 = vmul.f32 %v1109, %v1111
      %v1113 = vadd.f32 %v1109, %v1112
      %vm1114 = vweird.f32 %v1108
      %vm1115 = vweird.f32 %v1109
      %vm1116 = vmor %vm1114, %vm1115
      %v1117 = vsel %vm1116, %v1109, %v1113
      %v1118 = vand.u32 2147483647, %v1108
      %vm1119 = vcmp.eq.f32.partialorder %v1118, 8.507059e+37
      %v1120 = vand.u32 %v1108, 2147483648
      %v1121 = vor.u32 1.1754944e-38, %v1120
      %v1122 = vsel %vm1119, %v1121, %v1117
      %v1123 = vmul.f32 1.0, %v1122
      %v1124 = vmul.f32 %v1102, %v1123
      %v1125 = vpack.c.bf16 %v1124, %v1124
      %v1126 = vld [vmem:[%s8] sm:$0xf]
      %v1127 = vld [vmem:[%s8 + $0x4] sm:$0xf]
      %v1128 = vld [vmem:[%s8 + $0x8] sm:$0xf]
      %v1129 = vld [vmem:[%s8 + $0xc] sm:$0xf]
      %v1130 = vld [vmem:[%s8 + $0x10] sm:$0xf]
      %v1131 = vld [vmem:[%s8 + $0x14] sm:$0xf]
      %v1132 = vld [vmem:[%s8 + $0x18] sm:$0xf]
      %v1133 = vld [vmem:[%s8 + $0x1c] sm:$0xf]
      %v1134 = vld [vmem:[%s9] sm:$0x1]
      %v1143 = vunpack.c.l.b16 %v1126
      %v1144 = vunpack.c.l.b16 %v1127
      %v1145 = vunpack.c.l.b16 %v1128
      %v1146 = vunpack.c.l.b16 %v1129
      %v1147 = vunpack.c.l.b16 %v1130
      %v1148 = vunpack.c.l.b16 %v1131
      %v1149 = vunpack.c.l.b16 %v1132
      %v1150 = vunpack.c.l.b16 %v1133
      %v1151 = vpack.c.b16 %v1144, %v1143
      %v1152 = vpack.c.b16 %v1146, %v1145
      %v1153 = vpack.c.b16 %v1148, %v1147
      %v1154 = vpack.c.b16 %v1150, %v1149
      %vm1159 = vcmask 523264
      %v1161 = vsel %vm1159, %v1125, 0
      %1163 = vmatpush.bf16.msra.mxu0 0
      %1164 = vmatpush.bf16.msra.mxu0 0
      %1165 = vmatpush.bf16.msra.mxu0 0
      %1166 = vmatpush.bf16.msra.mxu0 0
      %1167 = vmatpush.bf16.msra.mxu0 %v1154
      %1168 = vmatpush.bf16.msra.mxu0 %v1153
      %1169 = vmatpush.bf16.msra.mxu0 %v1152
      %1170 = vmatpush.bf16.msra.mxu0 %v1151
      %1171 = vmatmul.bf16.gmra.mxu0 %v1161
      %v1172 = vpop.f32.mrf.mxu0
      %v1173 = vadd.f32 %v1134, %v1172
      %v1174 = vpop.f32.mrf.mxu0
      %1175 = vdwg.mxu0
      %v1176 = vxor.u32 %v1173, 2147483648
      %v1177 = vmul.f32 %v1176, 1.442695
      %v1178 = vpow.pop %v1177
      %v1179 = vadd.f32 %v1178, 1.0
      %v1180 = vrcp.pop %v1179
      %v1181 = vmul.f32 %v1179, %v1180
      %v1182 = vsub.f32 1.0, %v1181
      %v1183 = vmul.f32 %v1180, %v1182
      %v1184 = vadd.f32 %v1180, %v1183
      %vm1185 = vweird.f32 %v1179
      %vm1186 = vweird.f32 %v1180
      %vm1187 = vmor %vm1185, %vm1186
      %v1188 = vsel %vm1187, %v1180, %v1184
      %v1189 = vand.u32 2147483647, %v1179
      %vm1190 = vcmp.eq.f32.partialorder %v1189, 8.507059e+37
      %v1191 = vand.u32 %v1179, 2147483648
      %v1192 = vor.u32 1.1754944e-38, %v1191
      %v1193 = vsel %vm1190, %v1192, %v1188
      %v1194 = vmul.f32 1.0, %v1193
      %v1195 = vmul.f32 %v1173, %v1194
      %v1196 = vpack.c.bf16 %v1195, %v1195
      %v1197 = vld [vmem:[%s10] sm:$0xff]
      %v1198 = vld [vmem:[%s10 + $0x8] sm:$0xf]
      %v1199 = vld [vmem:[%s10 + $0xc] sm:$0xff]
      %v1200 = vld [vmem:[%s10 + $0x14] sm:$0xf]
      %v1201 = vld [vmem:[%s10 + $0x18] sm:$0xff]
      %v1202 = vld [vmem:[%s10 + $0x20] sm:$0xf]
      %v1203 = vld [vmem:[%s10 + $0x24] sm:$0xff]
      %v1204 = vld [vmem:[%s10 + $0x2c] sm:$0xf]
      %v1205 = vld [vmem:[%s10 + $0x30] sm:$0xff]
      %v1206 = vld [vmem:[%s10 + $0x38] sm:$0xf]
      %v1207 = vld [vmem:[%s10 + $0x3c] sm:$0xff]
      %v1208 = vld [vmem:[%s10 + $0x44] sm:$0xf]
      %v1209 = vld [vmem:[%s10 + $0x48] sm:$0xff]
      %v1210 = vld [vmem:[%s10 + $0x50] sm:$0xf]
      %v1211 = vld [vmem:[%s10 + $0x54] sm:$0xff]
      %v1212 = vld [vmem:[%s10 + $0x5c] sm:$0xf]
      %v1213 = vld [vmem:[%s11] sm:$0x7]
      %v1230 = vunpack.c.l.b16 %v1197
      %v1231 = vunpack.c.h.b16 %v1197
      %v1232 = vunpack.c.l.b16 %v1198
      %v1233 = vunpack.c.l.b16 %v1199
      %v1234 = vunpack.c.h.b16 %v1199
      %v1235 = vunpack.c.l.b16 %v1200
      %v1236 = vunpack.c.l.b16 %v1201
      %v1237 = vunpack.c.h.b16 %v1201
      %v1238 = vunpack.c.l.b16 %v1202
      %v1239 = vunpack.c.l.b16 %v1203
      %v1240 = vunpack.c.h.b16 %v1203
      %v1241 = vunpack.c.l.b16 %v1204
      %v1242 = vunpack.c.l.b16 %v1205
      %v1243 = vunpack.c.h.b16 %v1205
      %v1244 = vunpack.c.l.b16 %v1206
      %v1245 = vunpack.c.l.b16 %v1207
      %v1246 = vunpack.c.h.b16 %v1207
      %v1247 = vunpack.c.l.b16 %v1208
      %v1248 = vunpack.c.l.b16 %v1209
      %v1249 = vunpack.c.h.b16 %v1209
      %v1250 = vunpack.c.l.b16 %v1210
      %v1251 = vunpack.c.l.b16 %v1211
      %v1252 = vunpack.c.h.b16 %v1211
      %v1253 = vunpack.c.l.b16 %v1212
      %v1254 = vpack.c.b16 %v1233, %v1230
      %v1255 = vpack.c.b16 %v1234, %v1231
      %v1256 = vpack.c.b16 %v1235, %v1232
      %v1257 = vpack.c.b16 %v1239, %v1236
      %v1258 = vpack.c.b16 %v1240, %v1237
      %v1259 = vpack.c.b16 %v1241, %v1238
      %v1260 = vpack.c.b16 %v1245, %v1242
      %v1261 = vpack.c.b16 %v1246, %v1243
      %v1262 = vpack.c.b16 %v1247, %v1244
      %v1263 = vpack.c.b16 %v1251, %v1248
      %v1264 = vpack.c.b16 %v1252, %v1249
      %v1265 = vpack.c.b16 %v1253, %v1250
      %v1279 = vperm.slane %v1213, 0
      %v1280 = vperm.slane %v1213, 1
      %v1281 = vperm.slane %v1213, 2
      %v1286 = vsel %vm1159, %v1196, 0
      %1288 = vmatpush.bf16.msra.mxu0 0
      %1289 = vmatpush.bf16.msra.mxu0 0
      %1290 = vmatpush.bf16.msra.mxu0 0
      %1291 = vmatpush.bf16.msra.mxu0 0
      %1292 = vmatpush.bf16.msra.mxu0 %v1263
      %1293 = vmatpush.bf16.msra.mxu0 %v1260
      %1294 = vmatpush.bf16.msra.mxu0 %v1257
      %1295 = vmatpush.bf16.msra.mxu0 %v1254
      %1296 = vmatmul.bf16.gmra.mxu0 %v1286
      %v1297 = vpop.f32.mrf.mxu0
      %v1298 = vadd.f32 %v1279, %v1297
      %v1299 = vpop.f32.mrf.mxu0
      %1300 = vdwg.mxu0
      %1301 = vmatpush.bf16.msra.mxu0 0
      %1302 = vmatpush.bf16.msra.mxu0 0
      %1303 = vmatpush.bf16.msra.mxu0 0
      %1304 = vmatpush.bf16.msra.mxu0 0
      %1305 = vmatpush.bf16.msra.mxu0 %v1264
      %1306 = vmatpush.bf16.msra.mxu0 %v1261
      %1307 = vmatpush.bf16.msra.mxu0 %v1258
      %1308 = vmatpush.bf16.msra.mxu0 %v1255
      %1309 = vmatmul.bf16.gmra.mxu0 %v1286
      %v1310 = vpop.f32.mrf.mxu0
      %v1311 = vadd.f32 %v1280, %v1310
      %v1312 = vpop.f32.mrf.mxu0
      %1313 = vdwg.mxu0
      %1314 = vmatpush.bf16.msra.mxu0 0
      %1315 = vmatpush.bf16.msra.mxu0 0
      %1316 = vmatpush.bf16.msra.mxu0 0
      %1317 = vmatpush.bf16.msra.mxu0 0
      %1318 = vmatpush.bf16.msra.mxu0 %v1265
      %1319 = vmatpush.bf16.msra.mxu0 %v1262
      %1320 = vmatpush.bf16.msra.mxu0 %v1259
      %1321 = vmatpush.bf16.msra.mxu0 %v1256
      %1322 = vmatmul.bf16.gmra.mxu0 %v1286
      %v1323 = vpop.f32.mrf.mxu0
      %v1324 = vadd.f32 %v1281, %v1323
      %v1325 = vpop.f32.mrf.mxu0
      %1326 = vdwg.mxu0
      %v1327 = vsel %vm1159, %v934, 0.0
      %1328 = vadd.xlane.f32.xlu0 %v1327
      %v1329 = vpop.xlane.xlu0 %1328
      %v1330 = vsel %vm1159, %v935, 0.0
      %1331 = vadd.xlane.f32.xlu0 %v1330
      %v1332 = vpop.xlane.xlu0 %1331
      %v1333 = vsel %vm1159, %v936, 0.0
      %1334 = vadd.xlane.f32.xlu0 %v1333
      %v1335 = vpop.xlane.xlu0 %1334
      %v1336 = vsel %vm1159, %v937, 0.0
      %1337 = vadd.xlane.f32.xlu0 %v1336
      %v1338 = vpop.xlane.xlu0 %1337
      %v1339 = vsel %vm1159, %v938, 0.0
      %1340 = vadd.xlane.f32.xlu0 %v1339
      %v1341 = vpop.xlane.xlu0 %1340
      %v1342 = vsel %vm1159, %v939, 0.0
      %1343 = vadd.xlane.f32.xlu0 %v1342
      %v1344 = vpop.xlane.xlu0 %1343
      %v1345 = vsel %vm1159, %v940, 0.0
      %1346 = vadd.xlane.f32.xlu0 %v1345
      %v1347 = vpop.xlane.xlu0 %1346
      %v1348 = vsel %vm1159, %v941, 0.0
      %1349 = vadd.xlane.f32.xlu0 %v1348
      %v1350 = vpop.xlane.xlu0 %1349
      %v1351 = vmul.f32 %v1329, %v818
      %v1352 = vmul.f32 %v1332, %v818
      %v1353 = vmul.f32 %v1335, %v818
      %v1354 = vmul.f32 %v1338, %v818
      %v1355 = vmul.f32 %v1341, %v818
      %v1356 = vmul.f32 %v1344, %v818
      %v1357 = vmul.f32 %v1347, %v818
      %v1358 = vmul.f32 %v1350, %v818
      %v1359 = vsub.f32 %v934, %v1351
      %v1360 = vsub.f32 %v935, %v1352
      %v1361 = vsub.f32 %v936, %v1353
      %v1362 = vsub.f32 %v937, %v1354
      %v1363 = vsub.f32 %v938, %v1355
      %v1364 = vsub.f32 %v939, %v1356
      %v1365 = vsub.f32 %v940, %v1357
      %v1366 = vsub.f32 %v941, %v1358
      %v1367 = vmul.f32 %v1359, %v1359
      %v1368 = vmul.f32 %v1360, %v1360
      %v1369 = vmul.f32 %v1361, %v1361
      %v1370 = vmul.f32 %v1362, %v1362
      %v1371 = vmul.f32 %v1363, %v1363
      %v1372 = vmul.f32 %v1364, %v1364
      %v1373 = vmul.f32 %v1365, %v1365
      %v1374 = vmul.f32 %v1366, %v1366
      %v1375 = vsel %vm1159, %v1367, 0.0
      %1376 = vadd.xlane.f32.xlu0 %v1375
      %v1377 = vpop.xlane.xlu0 %1376
      %v1378 = vsel %vm1159, %v1368, 0.0
      %1379 = vadd.xlane.f32.xlu0 %v1378
      %v1380 = vpop.xlane.xlu0 %1379
      %v1381 = vsel %vm1159, %v1369, 0.0
      %1382 = vadd.xlane.f32.xlu0 %v1381
      %v1383 = vpop.xlane.xlu0 %1382
      %v1384 = vsel %vm1159, %v1370, 0.0
      %1385 = vadd.xlane.f32.xlu0 %v1384
      %v1386 = vpop.xlane.xlu0 %1385
      %v1387 = vsel %vm1159, %v1371, 0.0
      %1388 = vadd.xlane.f32.xlu0 %v1387
      %v1389 = vpop.xlane.xlu0 %1388
      %v1390 = vsel %vm1159, %v1372, 0.0
      %1391 = vadd.xlane.f32.xlu0 %v1390
      %v1392 = vpop.xlane.xlu0 %1391
      %v1393 = vsel %vm1159, %v1373, 0.0
      %1394 = vadd.xlane.f32.xlu0 %v1393
      %v1395 = vpop.xlane.xlu0 %1394
      %v1396 = vsel %vm1159, %v1374, 0.0
      %1397 = vadd.xlane.f32.xlu0 %v1396
      %v1398 = vpop.xlane.xlu0 %1397
      %v1399 = vmul.f32 %v1377, %v818
      %v1400 = vmul.f32 %v1380, %v818
      %v1401 = vmul.f32 %v1383, %v818
      %v1402 = vmul.f32 %v1386, %v818
      %v1403 = vmul.f32 %v1389, %v818
      %v1404 = vmul.f32 %v1392, %v818
      %v1405 = vmul.f32 %v1395, %v818
      %v1406 = vmul.f32 %v1398, %v818
      %v1407 = vadd.f32 %v1399, 1e-06
      %v1408 = vadd.f32 %v1400, 1e-06
      %v1409 = vadd.f32 %v1401, 1e-06
      %v1410 = vadd.f32 %v1402, 1e-06
      %v1411 = vadd.f32 %v1403, 1e-06
      %v1412 = vadd.f32 %v1404, 1e-06
      %v1413 = vadd.f32 %v1405, 1e-06
      %v1414 = vadd.f32 %v1406, 1e-06
      %v1415 = vrsqrt.pop %v1407
      %v1416 = vmul.f32 %v1415, %v1407
      %v1417 = vmul.f32 %v1416, %v1415
      %v1418 = vmul.f32 0.5, %v1417
      %v1419 = vsub.f32 1.5, %v1418
      %v1420 = vmul.f32 %v1415, %v1419
      %vm1421 = vweird.f32 %v1407
      %vm1422 = vweird.f32 %v1415
      %vm1423 = vmor %vm1421, %vm1422
      %v1424 = vsel %vm1423, %v1415, %v1420
      %v1425 = vrsqrt.pop %v1408
      %v1426 = vmul.f32 %v1425, %v1408
      %v1427 = vmul.f32 %v1426, %v1425
      %v1428 = vmul.f32 0.5, %v1427
      %v1429 = vsub.f32 1.5, %v1428
      %v1430 = vmul.f32 %v1425, %v1429
      %vm1431 = vweird.f32 %v1408
      %vm1432 = vweird.f32 %v1425
      %vm1433 = vmor %vm1431, %vm1432
      %v1434 = vsel %vm1433, %v1425, %v1430
      %v1435 = vrsqrt.pop %v1409
      %v1436 = vmul.f32 %v1435, %v1409
      %v1437 = vmul.f32 %v1436, %v1435
      %v1438 = vmul.f32 0.5, %v1437
      %v1439 = vsub.f32 1.5, %v1438
      %v1440 = vmul.f32 %v1435, %v1439
      %vm1441 = vweird.f32 %v1409
      %vm1442 = vweird.f32 %v1435
      %vm1443 = vmor %vm1441, %vm1442
      %v1444 = vsel %vm1443, %v1435, %v1440
      %v1445 = vrsqrt.pop %v1410
      %v1446 = vmul.f32 %v1445, %v1410
      %v1447 = vmul.f32 %v1446, %v1445
      %v1448 = vmul.f32 0.5, %v1447
      %v1449 = vsub.f32 1.5, %v1448
      %v1450 = vmul.f32 %v1445, %v1449
      %vm1451 = vweird.f32 %v1410
      %vm1452 = vweird.f32 %v1445
      %vm1453 = vmor %vm1451, %vm1452
      %v1454 = vsel %vm1453, %v1445, %v1450
      %v1455 = vrsqrt.pop %v1411
      %v1456 = vmul.f32 %v1455, %v1411
      %v1457 = vmul.f32 %v1456, %v1455
      %v1458 = vmul.f32 0.5, %v1457
      %v1459 = vsub.f32 1.5, %v1458
      %v1460 = vmul.f32 %v1455, %v1459
      %vm1461 = vweird.f32 %v1411
      %vm1462 = vweird.f32 %v1455
      %vm1463 = vmor %vm1461, %vm1462
      %v1464 = vsel %vm1463, %v1455, %v1460
      %v1465 = vrsqrt.pop %v1412
      %v1466 = vmul.f32 %v1465, %v1412
      %v1467 = vmul.f32 %v1466, %v1465
      %v1468 = vmul.f32 0.5, %v1467
      %v1469 = vsub.f32 1.5, %v1468
      %v1470 = vmul.f32 %v1465, %v1469
      %vm1471 = vweird.f32 %v1412
      %vm1472 = vweird.f32 %v1465
      %vm1473 = vmor %vm1471, %vm1472
      %v1474 = vsel %vm1473, %v1465, %v1470
      %v1475 = vrsqrt.pop %v1413
      %v1476 = vmul.f32 %v1475, %v1413
      %v1477 = vmul.f32 %v1476, %v1475
      %v1478 = vmul.f32 0.5, %v1477
      %v1479 = vsub.f32 1.5, %v1478
      %v1480 = vmul.f32 %v1475, %v1479
      %vm1481 = vweird.f32 %v1413
      %vm1482 = vweird.f32 %v1475
      %vm1483 = vmor %vm1481, %vm1482
      %v1484 = vsel %vm1483, %v1475, %v1480
      %v1485 = vrsqrt.pop %v1414
      %v1486 = vmul.f32 %v1485, %v1414
      %v1487 = vmul.f32 %v1486, %v1485
      %v1488 = vmul.f32 0.5, %v1487
      %v1489 = vsub.f32 1.5, %v1488
      %v1490 = vmul.f32 %v1485, %v1489
      %vm1491 = vweird.f32 %v1414
      %vm1492 = vweird.f32 %v1485
      %vm1493 = vmor %vm1491, %vm1492
      %v1494 = vsel %vm1493, %v1485, %v1490
      %v1495 = vmul.f32 %v1359, %v1424
      %v1496 = vmul.f32 %v1360, %v1434
      %v1497 = vmul.f32 %v1361, %v1444
      %v1498 = vmul.f32 %v1362, %v1454
      %v1499 = vmul.f32 %v1363, %v1464
      %v1500 = vmul.f32 %v1364, %v1474
      %v1501 = vmul.f32 %v1365, %v1484
      %v1502 = vmul.f32 %v1366, %v1494
      %v1503 = vadd.f32 %v1298, 1.0
      %v1504 = vperm.slane %v1503, 0
      %1506 = vrot.lane.b32.xlu0 %v1504, 64
      %v1507 = vpop.permute.xlu0 %1506
      %v1509 = vmul.f32 %v1495, %v1507
      %v1510 = vmul.f32 %v1496, %v1507
      %v1511 = vmul.f32 %v1497, %v1507
      %v1512 = vmul.f32 %v1498, %v1507
      %v1513 = vmul.f32 %v1499, %v1507
      %v1514 = vmul.f32 %v1500, %v1507
      %v1515 = vmul.f32 %v1501, %v1507
      %v1516 = vmul.f32 %v1502, %v1507
      %v1517 = vperm.slane %v1298, 0
      %v1518 = vadd.f32 %v1509, %v1517
      %v1519 = vadd.f32 %v1510, %v1517
      %v1520 = vadd.f32 %v1511, %v1517
      %v1521 = vadd.f32 %v1512, %v1517
      %v1522 = vadd.f32 %v1513, %v1517
      %v1523 = vadd.f32 %v1514, %v1517
      %v1524 = vadd.f32 %v1515, %v1517
      %v1525 = vadd.f32 %v1516, %v1517
      %v1526 = vpack.c.bf16 %v1519, %v1518
      %v1527 = vpack.c.bf16 %v1521, %v1520
      %v1528 = vpack.c.bf16 %v1523, %v1522
      %v1529 = vpack.c.bf16 %v1525, %v1524
      %v1530 = vld [vmem:[%s12] sm:$0xff]
      %v1531 = vld [vmem:[%s12 + $0x8] sm:$0xff]
      %v1532 = vld [vmem:[%s12 + $0x10] sm:$0xff]
      %v1533 = vld [vmem:[%s12 + $0x18] sm:$0xff]
      %v1534 = vld [vmem:[%s12 + $0x20] sm:$0xff]
      %v1535 = vld [vmem:[%s12 + $0x28] sm:$0xff]
      %v1536 = vld [vmem:[%s12 + $0x30] sm:$0xff]
      %v1537 = vld [vmem:[%s12 + $0x38] sm:$0xff]
      %v1538 = vld [vmem:[%s13] sm:$0x3]
      %v1540 = vperm.slane %v1538, 0
      %v1541 = vperm.slane %v1538, 1
      %v1552 = vunpack.c.l.b16 %v1530
      %v1553 = vunpack.c.h.b16 %v1530
      %v1554 = vunpack.c.l.b16 %v1531
      %v1555 = vunpack.c.h.b16 %v1531
      %v1556 = vunpack.c.l.b16 %v1532
      %v1557 = vunpack.c.h.b16 %v1532
      %v1558 = vunpack.c.l.b16 %v1533
      %v1559 = vunpack.c.h.b16 %v1533
      %v1560 = vunpack.c.l.b16 %v1534
      %v1561 = vunpack.c.h.b16 %v1534
      %v1562 = vunpack.c.l.b16 %v1535
      %v1563 = vunpack.c.h.b16 %v1535
      %v1564 = vunpack.c.l.b16 %v1536
      %v1565 = vunpack.c.h.b16 %v1536
      %v1566 = vunpack.c.l.b16 %v1537
      %v1567 = vunpack.c.h.b16 %v1537
      %v1568 = vpack.c.b16 %v1554, %v1552
      %v1569 = vpack.c.b16 %v1555, %v1553
      %v1570 = vpack.c.b16 %v1558, %v1556
      %v1571 = vpack.c.b16 %v1559, %v1557
      %v1572 = vpack.c.b16 %v1562, %v1560
      %v1573 = vpack.c.b16 %v1563, %v1561
      %v1574 = vpack.c.b16 %v1566, %v1564
      %v1575 = vpack.c.b16 %v1567, %v1565
      %v1585 = vsel %vm1159, %v1526, 0
      %v1588 = vsel %vm1159, %v1527, 0
      %v1591 = vsel %vm1159, %v1528, 0
      %v1594 = vsel %vm1159, %v1529, 0
      %1596 = vmatpush.bf16.msra.mxu0 0
      %1597 = vmatpush.bf16.msra.mxu0 0
      %1598 = vmatpush.bf16.msra.mxu0 0
      %1599 = vmatpush.bf16.msra.mxu0 0
      %1600 = vmatpush.bf16.msra.mxu0 %v1574
      %1601 = vmatpush.bf16.msra.mxu0 %v1572
      %1602 = vmatpush.bf16.msra.mxu0 %v1570
      %1603 = vmatpush.bf16.msra.mxu0 %v1568
      %1604 = vmatmul.bf16.gmra.mxu0 %v1585
      %v1605 = vpop.f32.mrf.mxu0
      %v1606 = vadd.f32 %v1540, %v1605
      %v1607 = vpop.f32.mrf.mxu0
      %v1608 = vadd.f32 %v1540, %v1607
      %1609 = vmatmul.bf16.gmra.mxu0 %v1588
      %v1610 = vpop.f32.mrf.mxu0
      %v1611 = vadd.f32 %v1540, %v1610
      %v1612 = vpop.f32.mrf.mxu0
      %v1613 = vadd.f32 %v1540, %v1612
      %1614 = vmatmul.bf16.gmra.mxu0 %v1591
      %v1615 = vpop.f32.mrf.mxu0
      %v1616 = vadd.f32 %v1540, %v1615
      %v1617 = vpop.f32.mrf.mxu0
      %v1618 = vadd.f32 %v1540, %v1617
      %1619 = vmatmul.bf16.gmra.mxu0 %v1594
      %v1620 = vpop.f32.mrf.mxu0
      %v1621 = vadd.f32 %v1540, %v1620
      %v1622 = vpop.f32.mrf.mxu0
      %v1623 = vadd.f32 %v1540, %v1622
      %1624 = vdwg.mxu0
      %1625 = vmatpush.bf16.msra.mxu0 0
      %1626 = vmatpush.bf16.msra.mxu0 0
      %1627 = vmatpush.bf16.msra.mxu0 0
      %1628 = vmatpush.bf16.msra.mxu0 0
      %1629 = vmatpush.bf16.msra.mxu0 %v1575
      %1630 = vmatpush.bf16.msra.mxu0 %v1573
      %1631 = vmatpush.bf16.msra.mxu0 %v1571
      %1632 = vmatpush.bf16.msra.mxu0 %v1569
      %1633 = vmatmul.bf16.gmra.mxu0 %v1585
      %v1634 = vpop.f32.mrf.mxu0
      %v1635 = vadd.f32 %v1541, %v1634
      %v1636 = vpop.f32.mrf.mxu0
      %v1637 = vadd.f32 %v1541, %v1636
      %1638 = vmatmul.bf16.gmra.mxu0 %v1588
      %v1639 = vpop.f32.mrf.mxu0
      %v1640 = vadd.f32 %v1541, %v1639
      %v1641 = vpop.f32.mrf.mxu0
      %v1642 = vadd.f32 %v1541, %v1641
      %1643 = vmatmul.bf16.gmra.mxu0 %v1591
      %v1644 = vpop.f32.mrf.mxu0
      %v1645 = vadd.f32 %v1541, %v1644
      %v1646 = vpop.f32.mrf.mxu0
      %v1647 = vadd.f32 %v1541, %v1646
      %1648 = vmatmul.bf16.gmra.mxu0 %v1594
      %v1649 = vpop.f32.mrf.mxu0
      %v1650 = vadd.f32 %v1541, %v1649
      %v1651 = vpop.f32.mrf.mxu0
      %v1652 = vadd.f32 %v1541, %v1651
      %1653 = vdwg.mxu0
      %v1654 = vpack.c.bf16 %v1608, %v1606
      %v1655 = vpack.c.bf16 %v1613, %v1611
      %v1656 = vpack.c.bf16 %v1618, %v1616
      %v1657 = vpack.c.bf16 %v1623, %v1621
      %v1658 = vpack.c.bf16 %v1637, %v1635
      %v1659 = vpack.c.bf16 %v1642, %v1640
      %v1660 = vpack.c.bf16 %v1647, %v1645
      %v1661 = vpack.c.bf16 %v1652, %v1650
      %1666 = vrot.lane.b32.xlu0 %v1654, 64
      %v1667 = vpop.permute.xlu0 %1666
      %1668 = vrot.lane.b32.xlu0 %v1655, 64
      %v1669 = vpop.permute.xlu0 %1668
      %1670 = vrot.lane.b32.xlu0 %v1656, 64
      %v1671 = vpop.permute.xlu0 %1670
      %1672 = vrot.lane.b32.xlu0 %v1657, 64
      %v1673 = vpop.permute.xlu0 %1672
      %vm1674 = vcmask 130048
      %v1676 = vsel %vm1674, %v1654, 0
      %v1679 = vsel %vm1674, %v1655, 0
      %v1682 = vsel %vm1674, %v1656, 0
      %v1685 = vsel %vm1674, %v1657, 0
      %v1688 = vsel %vm1674, %v1667, 0
      %v1691 = vsel %vm1674, %v1669, 0
      %v1694 = vsel %vm1674, %v1671, 0
      %v1697 = vsel %vm1674, %v1673, 0
      %1699 = vmatpush.bf16.xpose.msra.mxu0 0
      %1700 = vmatpush.bf16.xpose.msra.mxu0 0
      %1701 = vmatpush.bf16.xpose.msra.mxu0 0
      %1702 = vmatpush.bf16.xpose.msra.mxu0 0
      %1703 = vmatpush.bf16.xpose.msra.mxu0 %v1697
      %1704 = vmatpush.bf16.xpose.msra.mxu0 %v1694
      %1705 = vmatpush.bf16.xpose.msra.mxu0 %v1691
      %1706 = vmatpush.bf16.xpose.msra.mxu0 %v1688
      %1707 = vmatmul.bf16.gmra.mxu0 %v1676
      %v1708 = vpop.f32.mrf.mxu0
      %v1709 = vadd.f32 0.0, %v1708
      %v1710 = vpop.f32.mrf.mxu0
      %v1711 = vadd.f32 0.0, %v1710
      %1712 = vmatmul.bf16.gmra.mxu0 %v1679
      %v1713 = vpop.f32.mrf.mxu0
      %v1714 = vadd.f32 0.0, %v1713
      %v1715 = vpop.f32.mrf.mxu0
      %v1716 = vadd.f32 0.0, %v1715
      %1717 = vmatmul.bf16.gmra.mxu0 %v1682
      %v1718 = vpop.f32.mrf.mxu0
      %v1719 = vadd.f32 0.0, %v1718
      %v1720 = vpop.f32.mrf.mxu0
      %v1721 = vadd.f32 0.0, %v1720
      %1722 = vmatmul.bf16.gmra.mxu0 %v1685
      %v1723 = vpop.f32.mrf.mxu0
      %v1724 = vadd.f32 0.0, %v1723
      %v1725 = vpop.f32.mrf.mxu0
      %v1726 = vadd.f32 0.0, %v1725
      %1727 = vdwg.mxu0
      %v1728 = vmul.f32 %v1709, 0.25
      %v1729 = vmul.f32 %v1711, 0.25
      %v1730 = vmul.f32 %v1714, 0.25
      %v1731 = vmul.f32 %v1716, 0.25
      %v1732 = vmul.f32 %v1719, 0.25
      %v1733 = vmul.f32 %v1721, 0.25
      %v1734 = vmul.f32 %v1724, 0.25
      %v1735 = vmul.f32 %v1726, 0.25
      %v1736 = vsel %vm1159, %v1728, -inf
      %1737 = vmax.xlane.f32.xlu0 %v1736
      %v1738 = vpop.xlane.xlu0 %1737
      %v1739 = vsel %vm1159, %v1729, -inf
      %1740 = vmax.xlane.f32.xlu0 %v1739
      %v1741 = vpop.xlane.xlu0 %1740
      %v1742 = vsel %vm1159, %v1730, -inf
      %1743 = vmax.xlane.f32.xlu0 %v1742
      %v1744 = vpop.xlane.xlu0 %1743
      %v1745 = vsel %vm1159, %v1731, -inf
      %1746 = vmax.xlane.f32.xlu0 %v1745
      %v1747 = vpop.xlane.xlu0 %1746
      %v1748 = vsel %vm1159, %v1732, -inf
      %1749 = vmax.xlane.f32.xlu0 %v1748
      %v1750 = vpop.xlane.xlu0 %1749
      %v1751 = vsel %vm1159, %v1733, -inf
      %1752 = vmax.xlane.f32.xlu0 %v1751
      %v1753 = vpop.xlane.xlu0 %1752
      %v1754 = vsel %vm1159, %v1734, -inf
      %1755 = vmax.xlane.f32.xlu0 %v1754
      %v1756 = vpop.xlane.xlu0 %1755
      %v1757 = vsel %vm1159, %v1735, -inf
      %1758 = vmax.xlane.f32.xlu0 %v1757
      %v1759 = vpop.xlane.xlu0 %1758
      %v1760 = vsub.f32 %v1728, %v1738
      %v1761 = vsub.f32 %v1729, %v1741
      %v1762 = vsub.f32 %v1730, %v1744
      %v1763 = vsub.f32 %v1731, %v1747
      %v1764 = vsub.f32 %v1732, %v1750
      %v1765 = vsub.f32 %v1733, %v1753
      %v1766 = vsub.f32 %v1734, %v1756
      %v1767 = vsub.f32 %v1735, %v1759
      %v1768 = vmul.f32 %v1760, 1.442695
      %v1769 = vpow.pop %v1768
      %v1770 = vmul.f32 %v1761, 1.442695
      %v1771 = vpow.pop %v1770
      %v1772 = vmul.f32 %v1762, 1.442695
      %v1773 = vpow.pop %v1772
      %v1774 = vmul.f32 %v1763, 1.442695
      %v1775 = vpow.pop %v1774
      %v1776 = vmul.f32 %v1764, 1.442695
      %v1777 = vpow.pop %v1776
      %v1778 = vmul.f32 %v1765, 1.442695
      %v1779 = vpow.pop %v1778
      %v1780 = vmul.f32 %v1766, 1.442695
      %v1781 = vpow.pop %v1780
      %v1782 = vmul.f32 %v1767, 1.442695
      %v1783 = vpow.pop %v1782
      %v1784 = vsel %vm1159, %v1769, 0.0
      %1785 = vadd.xlane.f32.xlu0 %v1784
      %v1786 = vpop.xlane.xlu0 %1785
      %v1787 = vsel %vm1159, %v1771, 0.0
      %1788 = vadd.xlane.f32.xlu0 %v1787
      %v1789 = vpop.xlane.xlu0 %1788
      %v1790 = vsel %vm1159, %v1773, 0.0
      %1791 = vadd.xlane.f32.xlu0 %v1790
      %v1792 = vpop.xlane.xlu0 %1791
      %v1793 = vsel %vm1159, %v1775, 0.0
      %1794 = vadd.xlane.f32.xlu0 %v1793
      %v1795 = vpop.xlane.xlu0 %1794
      %v1796 = vsel %vm1159, %v1777, 0.0
      %1797 = vadd.xlane.f32.xlu0 %v1796
      %v1798 = vpop.xlane.xlu0 %1797
      %v1799 = vsel %vm1159, %v1779, 0.0
      %1800 = vadd.xlane.f32.xlu0 %v1799
      %v1801 = vpop.xlane.xlu0 %1800
      %v1802 = vsel %vm1159, %v1781, 0.0
      %1803 = vadd.xlane.f32.xlu0 %v1802
      %v1804 = vpop.xlane.xlu0 %1803
      %v1805 = vsel %vm1159, %v1783, 0.0
      %1806 = vadd.xlane.f32.xlu0 %v1805
      %v1807 = vpop.xlane.xlu0 %1806
      %v1808 = vrcp.pop %v1786
      %v1809 = vrcp.pop %v1789
      %v1810 = vrcp.pop %v1792
      %v1811 = vrcp.pop %v1795
      %v1812 = vrcp.pop %v1798
      %v1813 = vrcp.pop %v1801
      %v1814 = vrcp.pop %v1804
      %v1815 = vrcp.pop %v1807
      %v1816 = vmul.f32 %v1769, %v1808
      %v1817 = vmul.f32 %v1771, %v1809
      %v1818 = vmul.f32 %v1773, %v1810
      %v1819 = vmul.f32 %v1775, %v1811
      %v1820 = vmul.f32 %v1777, %v1812
      %v1821 = vmul.f32 %v1779, %v1813
      %v1822 = vmul.f32 %v1781, %v1814
      %v1823 = vmul.f32 %v1783, %v1815
      %v1824 = vpack.c.bf16 %v1817, %v1816
      %v1825 = vpack.c.bf16 %v1819, %v1818
      %v1826 = vpack.c.bf16 %v1821, %v1820
      %v1827 = vpack.c.bf16 %v1823, %v1822
      %v1829 = vsel %vm1159, %v1824, 0
      %v1832 = vsel %vm1159, %v1825, 0
      %v1835 = vsel %vm1159, %v1826, 0
      %v1838 = vsel %vm1159, %v1827, 0
      %1840 = vmatpush.bf16.msra.mxu0 0
      %1841 = vmatpush.bf16.msra.mxu0 0
      %1842 = vmatpush.bf16.msra.mxu0 0
      %1843 = vmatpush.bf16.msra.mxu0 0
      %1844 = vmatpush.bf16.msra.mxu0 %v1661
      %1845 = vmatpush.bf16.msra.mxu0 %v1660
      %1846 = vmatpush.bf16.msra.mxu0 %v1659
      %1847 = vmatpush.bf16.msra.mxu0 %v1658
      %1848 = vmatmul.bf16.gmra.mxu0 %v1829
      %v1849 = vpop.f32.mrf.mxu0
      %v1850 = vadd.f32 0.0, %v1849
      %v1851 = vpop.f32.mrf.mxu0
      %v1852 = vadd.f32 0.0, %v1851
      %1853 = vmatmul.bf16.gmra.mxu0 %v1832
      %v1854 = vpop.f32.mrf.mxu0
      %v1855 = vadd.f32 0.0, %v1854
      %v1856 = vpop.f32.mrf.mxu0
      %v1857 = vadd.f32 0.0, %v1856
      %1858 = vmatmul.bf16.gmra.mxu0 %v1835
      %v1859 = vpop.f32.mrf.mxu0
      %v1860 = vadd.f32 0.0, %v1859
      %v1861 = vpop.f32.mrf.mxu0
      %v1862 = vadd.f32 0.0, %v1861
      %1863 = vmatmul.bf16.gmra.mxu0 %v1838
      %v1864 = vpop.f32.mrf.mxu0
      %v1865 = vadd.f32 0.0, %v1864
      %v1866 = vpop.f32.mrf.mxu0
      %v1867 = vadd.f32 0.0, %v1866
      %1868 = vdwg.mxu0
      %1869 = vrot.lane.b32.xlu0 %v1654, 112
      %v1870 = vpop.permute.xlu0 %1869
      %1871 = vrot.lane.b32.xlu0 %v1655, 112
      %v1872 = vpop.permute.xlu0 %1871
      %1873 = vrot.lane.b32.xlu0 %v1656, 112
      %v1874 = vpop.permute.xlu0 %1873
      %1875 = vrot.lane.b32.xlu0 %v1657, 112
      %v1876 = vpop.permute.xlu0 %1875
      %1877 = vrot.lane.b32.xlu0 %v1654, 48
      %v1878 = vpop.permute.xlu0 %1877
      %1879 = vrot.lane.b32.xlu0 %v1655, 48
      %v1880 = vpop.permute.xlu0 %1879
      %1881 = vrot.lane.b32.xlu0 %v1656, 48
      %v1882 = vpop.permute.xlu0 %1881
      %1883 = vrot.lane.b32.xlu0 %v1657, 48
      %v1884 = vpop.permute.xlu0 %1883
      %v1886 = vsel %vm1674, %v1870, 0
      %v1889 = vsel %vm1674, %v1872, 0
      %v1892 = vsel %vm1674, %v1874, 0
      %v1895 = vsel %vm1674, %v1876, 0
      %v1898 = vsel %vm1674, %v1878, 0
      %v1901 = vsel %vm1674, %v1880, 0
      %v1904 = vsel %vm1674, %v1882, 0
      %v1907 = vsel %vm1674, %v1884, 0
      %1909 = vmatpush.bf16.xpose.msra.mxu0 0
      %1910 = vmatpush.bf16.xpose.msra.mxu0 0
      %1911 = vmatpush.bf16.xpose.msra.mxu0 0
      %1912 = vmatpush.bf16.xpose.msra.mxu0 0
      %1913 = vmatpush.bf16.xpose.msra.mxu0 %v1907
      %1914 = vmatpush.bf16.xpose.msra.mxu0 %v1904
      %1915 = vmatpush.bf16.xpose.msra.mxu0 %v1901
      %1916 = vmatpush.bf16.xpose.msra.mxu0 %v1898
      %1917 = vmatmul.bf16.gmra.mxu0 %v1886
      %v1918 = vpop.f32.mrf.mxu0
      %v1919 = vadd.f32 0.0, %v1918
      %v1920 = vpop.f32.mrf.mxu0
      %v1921 = vadd.f32 0.0, %v1920
      %1922 = vmatmul.bf16.gmra.mxu0 %v1889
      %v1923 = vpop.f32.mrf.mxu0
      %v1924 = vadd.f32 0.0, %v1923
      %v1925 = vpop.f32.mrf.mxu0
      %v1926 = vadd.f32 0.0, %v1925
      %1927 = vmatmul.bf16.gmra.mxu0 %v1892
      %v1928 = vpop.f32.mrf.mxu0
      %v1929 = vadd.f32 0.0, %v1928
      %v1930 = vpop.f32.mrf.mxu0
      %v1931 = vadd.f32 0.0, %v1930
      %1932 = vmatmul.bf16.gmra.mxu0 %v1895
      %v1933 = vpop.f32.mrf.mxu0
      %v1934 = vadd.f32 0.0, %v1933
      %v1935 = vpop.f32.mrf.mxu0
      %v1936 = vadd.f32 0.0, %v1935
      %1937 = vdwg.mxu0
      %v1938 = vmul.f32 %v1919, 0.25
      %v1939 = vmul.f32 %v1921, 0.25
      %v1940 = vmul.f32 %v1924, 0.25
      %v1941 = vmul.f32 %v1926, 0.25
      %v1942 = vmul.f32 %v1929, 0.25
      %v1943 = vmul.f32 %v1931, 0.25
      %v1944 = vmul.f32 %v1934, 0.25
      %v1945 = vmul.f32 %v1936, 0.25
      %v1946 = vsel %vm1159, %v1938, -inf
      %1947 = vmax.xlane.f32.xlu0 %v1946
      %v1948 = vpop.xlane.xlu0 %1947
      %v1949 = vsel %vm1159, %v1939, -inf
      %1950 = vmax.xlane.f32.xlu0 %v1949
      %v1951 = vpop.xlane.xlu0 %1950
      %v1952 = vsel %vm1159, %v1940, -inf
      %1953 = vmax.xlane.f32.xlu0 %v1952
      %v1954 = vpop.xlane.xlu0 %1953
      %v1955 = vsel %vm1159, %v1941, -inf
      %1956 = vmax.xlane.f32.xlu0 %v1955
      %v1957 = vpop.xlane.xlu0 %1956
      %v1958 = vsel %vm1159, %v1942, -inf
      %1959 = vmax.xlane.f32.xlu0 %v1958
      %v1960 = vpop.xlane.xlu0 %1959
      %v1961 = vsel %vm1159, %v1943, -inf
      %1962 = vmax.xlane.f32.xlu0 %v1961
      %v1963 = vpop.xlane.xlu0 %1962
      %v1964 = vsel %vm1159, %v1944, -inf
      %1965 = vmax.xlane.f32.xlu0 %v1964
      %v1966 = vpop.xlane.xlu0 %1965
      %v1967 = vsel %vm1159, %v1945, -inf
      %1968 = vmax.xlane.f32.xlu0 %v1967
      %v1969 = vpop.xlane.xlu0 %1968
      %v1970 = vsub.f32 %v1938, %v1948
      %v1971 = vsub.f32 %v1939, %v1951
      %v1972 = vsub.f32 %v1940, %v1954
      %v1973 = vsub.f32 %v1941, %v1957
      %v1974 = vsub.f32 %v1942, %v1960
      %v1975 = vsub.f32 %v1943, %v1963
      %v1976 = vsub.f32 %v1944, %v1966
      %v1977 = vsub.f32 %v1945, %v1969
      %v1978 = vmul.f32 %v1970, 1.442695
      %v1979 = vpow.pop %v1978
      %v1980 = vmul.f32 %v1971, 1.442695
      %v1981 = vpow.pop %v1980
      %v1982 = vmul.f32 %v1972, 1.442695
      %v1983 = vpow.pop %v1982
      %v1984 = vmul.f32 %v1973, 1.442695
      %v1985 = vpow.pop %v1984
      %v1986 = vmul.f32 %v1974, 1.442695
      %v1987 = vpow.pop %v1986
      %v1988 = vmul.f32 %v1975, 1.442695
      %v1989 = vpow.pop %v1988
      %v1990 = vmul.f32 %v1976, 1.442695
      %v1991 = vpow.pop %v1990
      %v1992 = vmul.f32 %v1977, 1.442695
      %v1993 = vpow.pop %v1992
      %v1994 = vsel %vm1159, %v1979, 0.0
      %1995 = vadd.xlane.f32.xlu0 %v1994
      %v1996 = vpop.xlane.xlu0 %1995
      %v1997 = vsel %vm1159, %v1981, 0.0
      %1998 = vadd.xlane.f32.xlu0 %v1997
      %v1999 = vpop.xlane.xlu0 %1998
      %v2000 = vsel %vm1159, %v1983, 0.0
      %2001 = vadd.xlane.f32.xlu0 %v2000
      %v2002 = vpop.xlane.xlu0 %2001
      %v2003 = vsel %vm1159, %v1985, 0.0
      %2004 = vadd.xlane.f32.xlu0 %v2003
      %v2005 = vpop.xlane.xlu0 %2004
      %v2006 = vsel %vm1159, %v1987, 0.0
      %2007 = vadd.xlane.f32.xlu0 %v2006
      %v2008 = vpop.xlane.xlu0 %2007
      %v2009 = vsel %vm1159, %v1989, 0.0
      %2010 = vadd.xlane.f32.xlu0 %v2009
      %v2011 = vpop.xlane.xlu0 %2010
      %v2012 = vsel %vm1159, %v1991, 0.0
      %2013 = vadd.xlane.f32.xlu0 %v2012
      %v2014 = vpop.xlane.xlu0 %2013
      %v2015 = vsel %vm1159, %v1993, 0.0
      %2016 = vadd.xlane.f32.xlu0 %v2015
      %v2017 = vpop.xlane.xlu0 %2016
      %v2018 = vrcp.pop %v1996
      %v2019 = vrcp.pop %v1999
      %v2020 = vrcp.pop %v2002
      %v2021 = vrcp.pop %v2005
      %v2022 = vrcp.pop %v2008
      %v2023 = vrcp.pop %v2011
      %v2024 = vrcp.pop %v2014
      %v2025 = vrcp.pop %v2017
      %v2026 = vmul.f32 %v1979, %v2018
      %v2027 = vmul.f32 %v1981, %v2019
      %v2028 = vmul.f32 %v1983, %v2020
      %v2029 = vmul.f32 %v1985, %v2021
      %v2030 = vmul.f32 %v1987, %v2022
      %v2031 = vmul.f32 %v1989, %v2023
      %v2032 = vmul.f32 %v1991, %v2024
      %v2033 = vmul.f32 %v1993, %v2025
      %v2034 = vpack.c.bf16 %v2027, %v2026
      %v2035 = vpack.c.bf16 %v2029, %v2028
      %v2036 = vpack.c.bf16 %v2031, %v2030
      %v2037 = vpack.c.bf16 %v2033, %v2032
      %2042 = vrot.lane.b32.xlu0 %v1658, 112
      %v2043 = vpop.permute.xlu0 %2042
      %2044 = vrot.lane.b32.xlu0 %v1659, 112
      %v2045 = vpop.permute.xlu0 %2044
      %2046 = vrot.lane.b32.xlu0 %v1660, 112
      %v2047 = vpop.permute.xlu0 %2046
      %2048 = vrot.lane.b32.xlu0 %v1661, 112
      %v2049 = vpop.permute.xlu0 %2048
      %v2055 = vsel %vm1159, %v2034, 0
      %v2058 = vsel %vm1159, %v2035, 0
      %v2061 = vsel %vm1159, %v2036, 0
      %v2064 = vsel %vm1159, %v2037, 0
      %2066 = vmatpush.bf16.msra.mxu0 0
      %2067 = vmatpush.bf16.msra.mxu0 0
      %2068 = vmatpush.bf16.msra.mxu0 0
      %2069 = vmatpush.bf16.msra.mxu0 0
      %2070 = vmatpush.bf16.msra.mxu0 %v2049
      %2071 = vmatpush.bf16.msra.mxu0 %v2047
      %2072 = vmatpush.bf16.msra.mxu0 %v2045
      %2073 = vmatpush.bf16.msra.mxu0 %v2043
      %2074 = vmatmul.bf16.gmra.mxu0 %v2055
      %v2075 = vpop.f32.mrf.mxu0
      %v2076 = vadd.f32 0.0, %v2075
      %v2077 = vpop.f32.mrf.mxu0
      %v2078 = vadd.f32 0.0, %v2077
      %2079 = vmatmul.bf16.gmra.mxu0 %v2058
      %v2080 = vpop.f32.mrf.mxu0
      %v2081 = vadd.f32 0.0, %v2080
      %v2082 = vpop.f32.mrf.mxu0
      %v2083 = vadd.f32 0.0, %v2082
      %2084 = vmatmul.bf16.gmra.mxu0 %v2061
      %v2085 = vpop.f32.mrf.mxu0
      %v2086 = vadd.f32 0.0, %v2085
      %v2087 = vpop.f32.mrf.mxu0
      %v2088 = vadd.f32 0.0, %v2087
      %2089 = vmatmul.bf16.gmra.mxu0 %v2064
      %v2090 = vpop.f32.mrf.mxu0
      %v2091 = vadd.f32 0.0, %v2090
      %v2092 = vpop.f32.mrf.mxu0
      %v2093 = vadd.f32 0.0, %v2092
      %2094 = vdwg.mxu0
      %2095 = vrot.lane.b32.xlu0 %v1654, 96
      %v2096 = vpop.permute.xlu0 %2095
      %2097 = vrot.lane.b32.xlu0 %v1655, 96
      %v2098 = vpop.permute.xlu0 %2097
      %2099 = vrot.lane.b32.xlu0 %v1656, 96
      %v2100 = vpop.permute.xlu0 %2099
      %2101 = vrot.lane.b32.xlu0 %v1657, 96
      %v2102 = vpop.permute.xlu0 %2101
      %2103 = vrot.lane.b32.xlu0 %v1654, 32
      %v2104 = vpop.permute.xlu0 %2103
      %2105 = vrot.lane.b32.xlu0 %v1655, 32
      %v2106 = vpop.permute.xlu0 %2105
      %2107 = vrot.lane.b32.xlu0 %v1656, 32
      %v2108 = vpop.permute.xlu0 %2107
      %2109 = vrot.lane.b32.xlu0 %v1657, 32
      %v2110 = vpop.permute.xlu0 %2109
      %v2112 = vsel %vm1674, %v2096, 0
      %v2115 = vsel %vm1674, %v2098, 0
      %v2118 = vsel %vm1674, %v2100, 0
      %v2121 = vsel %vm1674, %v2102, 0
      %v2124 = vsel %vm1674, %v2104, 0
      %v2127 = vsel %vm1674, %v2106, 0
      %v2130 = vsel %vm1674, %v2108, 0
      %v2133 = vsel %vm1674, %v2110, 0
      %2135 = vmatpush.bf16.xpose.msra.mxu0 0
      %2136 = vmatpush.bf16.xpose.msra.mxu0 0
      %2137 = vmatpush.bf16.xpose.msra.mxu0 0
      %2138 = vmatpush.bf16.xpose.msra.mxu0 0
      %2139 = vmatpush.bf16.xpose.msra.mxu0 %v2133
      %2140 = vmatpush.bf16.xpose.msra.mxu0 %v2130
      %2141 = vmatpush.bf16.xpose.msra.mxu0 %v2127
      %2142 = vmatpush.bf16.xpose.msra.mxu0 %v2124
      %2143 = vmatmul.bf16.gmra.mxu0 %v2112
      %v2144 = vpop.f32.mrf.mxu0
      %v2145 = vadd.f32 0.0, %v2144
      %v2146 = vpop.f32.mrf.mxu0
      %v2147 = vadd.f32 0.0, %v2146
      %2148 = vmatmul.bf16.gmra.mxu0 %v2115
      %v2149 = vpop.f32.mrf.mxu0
      %v2150 = vadd.f32 0.0, %v2149
      %v2151 = vpop.f32.mrf.mxu0
      %v2152 = vadd.f32 0.0, %v2151
      %2153 = vmatmul.bf16.gmra.mxu0 %v2118
      %v2154 = vpop.f32.mrf.mxu0
      %v2155 = vadd.f32 0.0, %v2154
      %v2156 = vpop.f32.mrf.mxu0
      %v2157 = vadd.f32 0.0, %v2156
      %2158 = vmatmul.bf16.gmra.mxu0 %v2121
      %v2159 = vpop.f32.mrf.mxu0
      %v2160 = vadd.f32 0.0, %v2159
      %v2161 = vpop.f32.mrf.mxu0
      %v2162 = vadd.f32 0.0, %v2161
      %2163 = vdwg.mxu0
      %v2164 = vmul.f32 %v2145, 0.25
      %v2165 = vmul.f32 %v2147, 0.25
      %v2166 = vmul.f32 %v2150, 0.25
      %v2167 = vmul.f32 %v2152, 0.25
      %v2168 = vmul.f32 %v2155, 0.25
      %v2169 = vmul.f32 %v2157, 0.25
      %v2170 = vmul.f32 %v2160, 0.25
      %v2171 = vmul.f32 %v2162, 0.25
      %v2172 = vsel %vm1159, %v2164, -inf
      %2173 = vmax.xlane.f32.xlu0 %v2172
      %v2174 = vpop.xlane.xlu0 %2173
      %v2175 = vsel %vm1159, %v2165, -inf
      %2176 = vmax.xlane.f32.xlu0 %v2175
      %v2177 = vpop.xlane.xlu0 %2176
      %v2178 = vsel %vm1159, %v2166, -inf
      %2179 = vmax.xlane.f32.xlu0 %v2178
      %v2180 = vpop.xlane.xlu0 %2179
      %v2181 = vsel %vm1159, %v2167, -inf
      %2182 = vmax.xlane.f32.xlu0 %v2181
      %v2183 = vpop.xlane.xlu0 %2182
      %v2184 = vsel %vm1159, %v2168, -inf
      %2185 = vmax.xlane.f32.xlu0 %v2184
      %v2186 = vpop.xlane.xlu0 %2185
      %v2187 = vsel %vm1159, %v2169, -inf
      %2188 = vmax.xlane.f32.xlu0 %v2187
      %v2189 = vpop.xlane.xlu0 %2188
      %v2190 = vsel %vm1159, %v2170, -inf
      %2191 = vmax.xlane.f32.xlu0 %v2190
      %v2192 = vpop.xlane.xlu0 %2191
      %v2193 = vsel %vm1159, %v2171, -inf
      %2194 = vmax.xlane.f32.xlu0 %v2193
      %v2195 = vpop.xlane.xlu0 %2194
      %v2196 = vsub.f32 %v2164, %v2174
      %v2197 = vsub.f32 %v2165, %v2177
      %v2198 = vsub.f32 %v2166, %v2180
      %v2199 = vsub.f32 %v2167, %v2183
      %v2200 = vsub.f32 %v2168, %v2186
      %v2201 = vsub.f32 %v2169, %v2189
      %v2202 = vsub.f32 %v2170, %v2192
      %v2203 = vsub.f32 %v2171, %v2195
      %v2204 = vmul.f32 %v2196, 1.442695
      %v2205 = vpow.pop %v2204
      %v2206 = vmul.f32 %v2197, 1.442695
      %v2207 = vpow.pop %v2206
      %v2208 = vmul.f32 %v2198, 1.442695
      %v2209 = vpow.pop %v2208
      %v2210 = vmul.f32 %v2199, 1.442695
      %v2211 = vpow.pop %v2210
      %v2212 = vmul.f32 %v2200, 1.442695
      %v2213 = vpow.pop %v2212
      %v2214 = vmul.f32 %v2201, 1.442695
      %v2215 = vpow.pop %v2214
      %v2216 = vmul.f32 %v2202, 1.442695
      %v2217 = vpow.pop %v2216
      %v2218 = vmul.f32 %v2203, 1.442695
      %v2219 = vpow.pop %v2218
      %v2220 = vsel %vm1159, %v2205, 0.0
      %2221 = vadd.xlane.f32.xlu0 %v2220
      %v2222 = vpop.xlane.xlu0 %2221
      %v2223 = vsel %vm1159, %v2207, 0.0
      %2224 = vadd.xlane.f32.xlu0 %v2223
      %v2225 = vpop.xlane.xlu0 %2224
      %v2226 = vsel %vm1159, %v2209, 0.0
      %2227 = vadd.xlane.f32.xlu0 %v2226
      %v2228 = vpop.xlane.xlu0 %2227
      %v2229 = vsel %vm1159, %v2211, 0.0
      %2230 = vadd.xlane.f32.xlu0 %v2229
      %v2231 = vpop.xlane.xlu0 %2230
      %v2232 = vsel %vm1159, %v2213, 0.0
      %2233 = vadd.xlane.f32.xlu0 %v2232
      %v2234 = vpop.xlane.xlu0 %2233
      %v2235 = vsel %vm1159, %v2215, 0.0
      %2236 = vadd.xlane.f32.xlu0 %v2235
      %v2237 = vpop.xlane.xlu0 %2236
      %v2238 = vsel %vm1159, %v2217, 0.0
      %2239 = vadd.xlane.f32.xlu0 %v2238
      %v2240 = vpop.xlane.xlu0 %2239
      %v2241 = vsel %vm1159, %v2219, 0.0
      %2242 = vadd.xlane.f32.xlu0 %v2241
      %v2243 = vpop.xlane.xlu0 %2242
      %v2244 = vrcp.pop %v2222
      %v2245 = vrcp.pop %v2225
      %v2246 = vrcp.pop %v2228
      %v2247 = vrcp.pop %v2231
      %v2248 = vrcp.pop %v2234
      %v2249 = vrcp.pop %v2237
      %v2250 = vrcp.pop %v2240
      %v2251 = vrcp.pop %v2243
      %v2252 = vmul.f32 %v2205, %v2244
      %v2253 = vmul.f32 %v2207, %v2245
      %v2254 = vmul.f32 %v2209, %v2246
      %v2255 = vmul.f32 %v2211, %v2247
      %v2256 = vmul.f32 %v2213, %v2248
      %v2257 = vmul.f32 %v2215, %v2249
      %v2258 = vmul.f32 %v2217, %v2250
      %v2259 = vmul.f32 %v2219, %v2251
      %v2260 = vpack.c.bf16 %v2253, %v2252
      %v2261 = vpack.c.bf16 %v2255, %v2254
      %v2262 = vpack.c.bf16 %v2257, %v2256
      %v2263 = vpack.c.bf16 %v2259, %v2258
      %2264 = vrot.lane.b32.xlu0 %v1658, 96
      %v2265 = vpop.permute.xlu0 %2264
      %2266 = vrot.lane.b32.xlu0 %v1659, 96
      %v2267 = vpop.permute.xlu0 %2266
      %2268 = vrot.lane.b32.xlu0 %v1660, 96
      %v2269 = vpop.permute.xlu0 %2268
      %2270 = vrot.lane.b32.xlu0 %v1661, 96
      %v2271 = vpop.permute.xlu0 %2270
      %v2277 = vsel %vm1159, %v2260, 0
      %v2280 = vsel %vm1159, %v2261, 0
      %v2283 = vsel %vm1159, %v2262, 0
      %v2286 = vsel %vm1159, %v2263, 0
      %2288 = vmatpush.bf16.msra.mxu0 0
      %2289 = vmatpush.bf16.msra.mxu0 0
      %2290 = vmatpush.bf16.msra.mxu0 0
      %2291 = vmatpush.bf16.msra.mxu0 0
      %2292 = vmatpush.bf16.msra.mxu0 %v2271
      %2293 = vmatpush.bf16.msra.mxu0 %v2269
      %2294 = vmatpush.bf16.msra.mxu0 %v2267
      %2295 = vmatpush.bf16.msra.mxu0 %v2265
      %2296 = vmatmul.bf16.gmra.mxu0 %v2277
      %v2297 = vpop.f32.mrf.mxu0
      %v2298 = vadd.f32 0.0, %v2297
      %v2299 = vpop.f32.mrf.mxu0
      %v2300 = vadd.f32 0.0, %v2299
      %2301 = vmatmul.bf16.gmra.mxu0 %v2280
      %v2302 = vpop.f32.mrf.mxu0
      %v2303 = vadd.f32 0.0, %v2302
      %v2304 = vpop.f32.mrf.mxu0
      %v2305 = vadd.f32 0.0, %v2304
      %2306 = vmatmul.bf16.gmra.mxu0 %v2283
      %v2307 = vpop.f32.mrf.mxu0
      %v2308 = vadd.f32 0.0, %v2307
      %v2309 = vpop.f32.mrf.mxu0
      %v2310 = vadd.f32 0.0, %v2309
      %2311 = vmatmul.bf16.gmra.mxu0 %v2286
      %v2312 = vpop.f32.mrf.mxu0
      %v2313 = vadd.f32 0.0, %v2312
      %v2314 = vpop.f32.mrf.mxu0
      %v2315 = vadd.f32 0.0, %v2314
      %2316 = vdwg.mxu0
      %2317 = vrot.lane.b32.xlu0 %v1654, 80
      %v2318 = vpop.permute.xlu0 %2317
      %2319 = vrot.lane.b32.xlu0 %v1655, 80
      %v2320 = vpop.permute.xlu0 %2319
      %2321 = vrot.lane.b32.xlu0 %v1656, 80
      %v2322 = vpop.permute.xlu0 %2321
      %2323 = vrot.lane.b32.xlu0 %v1657, 80
      %v2324 = vpop.permute.xlu0 %2323
      %2325 = vrot.lane.b32.xlu0 %v1654, 16
      %v2326 = vpop.permute.xlu0 %2325
      %2327 = vrot.lane.b32.xlu0 %v1655, 16
      %v2328 = vpop.permute.xlu0 %2327
      %2329 = vrot.lane.b32.xlu0 %v1656, 16
      %v2330 = vpop.permute.xlu0 %2329
      %2331 = vrot.lane.b32.xlu0 %v1657, 16
      %v2332 = vpop.permute.xlu0 %2331
      %v2334 = vsel %vm1674, %v2318, 0
      %v2337 = vsel %vm1674, %v2320, 0
      %v2340 = vsel %vm1674, %v2322, 0
      %v2343 = vsel %vm1674, %v2324, 0
      %v2346 = vsel %vm1674, %v2326, 0
      %v2349 = vsel %vm1674, %v2328, 0
      %v2352 = vsel %vm1674, %v2330, 0
      %v2355 = vsel %vm1674, %v2332, 0
      %2357 = vmatpush.bf16.xpose.msra.mxu0 0
      %2358 = vmatpush.bf16.xpose.msra.mxu0 0
      %2359 = vmatpush.bf16.xpose.msra.mxu0 0
      %2360 = vmatpush.bf16.xpose.msra.mxu0 0
      %2361 = vmatpush.bf16.xpose.msra.mxu0 %v2355
      %2362 = vmatpush.bf16.xpose.msra.mxu0 %v2352
      %2363 = vmatpush.bf16.xpose.msra.mxu0 %v2349
      %2364 = vmatpush.bf16.xpose.msra.mxu0 %v2346
      %2365 = vmatmul.bf16.gmra.mxu0 %v2334
      %v2366 = vpop.f32.mrf.mxu0
      %v2367 = vadd.f32 0.0, %v2366
      %v2368 = vpop.f32.mrf.mxu0
      %v2369 = vadd.f32 0.0, %v2368
      %2370 = vmatmul.bf16.gmra.mxu0 %v2337
      %v2371 = vpop.f32.mrf.mxu0
      %v2372 = vadd.f32 0.0, %v2371
      %v2373 = vpop.f32.mrf.mxu0
      %v2374 = vadd.f32 0.0, %v2373
      %2375 = vmatmul.bf16.gmra.mxu0 %v2340
      %v2376 = vpop.f32.mrf.mxu0
      %v2377 = vadd.f32 0.0, %v2376
      %v2378 = vpop.f32.mrf.mxu0
      %v2379 = vadd.f32 0.0, %v2378
      %2380 = vmatmul.bf16.gmra.mxu0 %v2343
      %v2381 = vpop.f32.mrf.mxu0
      %v2382 = vadd.f32 0.0, %v2381
      %v2383 = vpop.f32.mrf.mxu0
      %v2384 = vadd.f32 0.0, %v2383
      %2385 = vdwg.mxu0
      %v2386 = vmul.f32 %v2367, 0.25
      %v2387 = vmul.f32 %v2369, 0.25
      %v2388 = vmul.f32 %v2372, 0.25
      %v2389 = vmul.f32 %v2374, 0.25
      %v2390 = vmul.f32 %v2377, 0.25
      %v2391 = vmul.f32 %v2379, 0.25
      %v2392 = vmul.f32 %v2382, 0.25
      %v2393 = vmul.f32 %v2384, 0.25
      %v2394 = vsel %vm1159, %v2386, -inf
      %2395 = vmax.xlane.f32.xlu0 %v2394
      %v2396 = vpop.xlane.xlu0 %2395
      %v2397 = vsel %vm1159, %v2387, -inf
      %2398 = vmax.xlane.f32.xlu0 %v2397
      %v2399 = vpop.xlane.xlu0 %2398
      %v2400 = vsel %vm1159, %v2388, -inf
      %2401 = vmax.xlane.f32.xlu0 %v2400
      %v2402 = vpop.xlane.xlu0 %2401
      %v2403 = vsel %vm1159, %v2389, -inf
      %2404 = vmax.xlane.f32.xlu0 %v2403
      %v2405 = vpop.xlane.xlu0 %2404
      %v2406 = vsel %vm1159, %v2390, -inf
      %2407 = vmax.xlane.f32.xlu0 %v2406
      %v2408 = vpop.xlane.xlu0 %2407
      %v2409 = vsel %vm1159, %v2391, -inf
      %2410 = vmax.xlane.f32.xlu0 %v2409
      %v2411 = vpop.xlane.xlu0 %2410
      %v2412 = vsel %vm1159, %v2392, -inf
      %2413 = vmax.xlane.f32.xlu0 %v2412
      %v2414 = vpop.xlane.xlu0 %2413
      %v2415 = vsel %vm1159, %v2393, -inf
      %2416 = vmax.xlane.f32.xlu0 %v2415
      %v2417 = vpop.xlane.xlu0 %2416
      %v2418 = vsub.f32 %v2386, %v2396
      %v2419 = vsub.f32 %v2387, %v2399
      %v2420 = vsub.f32 %v2388, %v2402
      %v2421 = vsub.f32 %v2389, %v2405
      %v2422 = vsub.f32 %v2390, %v2408
      %v2423 = vsub.f32 %v2391, %v2411
      %v2424 = vsub.f32 %v2392, %v2414
      %v2425 = vsub.f32 %v2393, %v2417
      %v2426 = vmul.f32 %v2418, 1.442695
      %v2427 = vpow.pop %v2426
      %v2428 = vmul.f32 %v2419, 1.442695
      %v2429 = vpow.pop %v2428
      %v2430 = vmul.f32 %v2420, 1.442695
      %v2431 = vpow.pop %v2430
      %v2432 = vmul.f32 %v2421, 1.442695
      %v2433 = vpow.pop %v2432
      %v2434 = vmul.f32 %v2422, 1.442695
      %v2435 = vpow.pop %v2434
      %v2436 = vmul.f32 %v2423, 1.442695
      %v2437 = vpow.pop %v2436
      %v2438 = vmul.f32 %v2424, 1.442695
      %v2439 = vpow.pop %v2438
      %v2440 = vmul.f32 %v2425, 1.442695
      %v2441 = vpow.pop %v2440
      %v2442 = vsel %vm1159, %v2427, 0.0
      %2443 = vadd.xlane.f32.xlu0 %v2442
      %v2444 = vpop.xlane.xlu0 %2443
      %v2445 = vsel %vm1159, %v2429, 0.0
      %2446 = vadd.xlane.f32.xlu0 %v2445
      %v2447 = vpop.xlane.xlu0 %2446
      %v2448 = vsel %vm1159, %v2431, 0.0
      %2449 = vadd.xlane.f32.xlu0 %v2448
      %v2450 = vpop.xlane.xlu0 %2449
      %v2451 = vsel %vm1159, %v2433, 0.0
      %2452 = vadd.xlane.f32.xlu0 %v2451
      %v2453 = vpop.xlane.xlu0 %2452
      %v2454 = vsel %vm1159, %v2435, 0.0
      %2455 = vadd.xlane.f32.xlu0 %v2454
      %v2456 = vpop.xlane.xlu0 %2455
      %v2457 = vsel %vm1159, %v2437, 0.0
      %2458 = vadd.xlane.f32.xlu0 %v2457
      %v2459 = vpop.xlane.xlu0 %2458
      %v2460 = vsel %vm1159, %v2439, 0.0
      %2461 = vadd.xlane.f32.xlu0 %v2460
      %v2462 = vpop.xlane.xlu0 %2461
      %v2463 = vsel %vm1159, %v2441, 0.0
      %2464 = vadd.xlane.f32.xlu0 %v2463
      %v2465 = vpop.xlane.xlu0 %2464
      %v2466 = vrcp.pop %v2444
      %v2467 = vrcp.pop %v2447
      %v2468 = vrcp.pop %v2450
      %v2469 = vrcp.pop %v2453
      %v2470 = vrcp.pop %v2456
      %v2471 = vrcp.pop %v2459
      %v2472 = vrcp.pop %v2462
      %v2473 = vrcp.pop %v2465
      %v2474 = vmul.f32 %v2427, %v2466
      %v2475 = vmul.f32 %v2429, %v2467
      %v2476 = vmul.f32 %v2431, %v2468
      %v2477 = vmul.f32 %v2433, %v2469
      %v2478 = vmul.f32 %v2435, %v2470
      %v2479 = vmul.f32 %v2437, %v2471
      %v2480 = vmul.f32 %v2439, %v2472
      %v2481 = vmul.f32 %v2441, %v2473
      %v2482 = vpack.c.bf16 %v2475, %v2474
      %v2483 = vpack.c.bf16 %v2477, %v2476
      %v2484 = vpack.c.bf16 %v2479, %v2478
      %v2485 = vpack.c.bf16 %v2481, %v2480
      %2486 = vrot.lane.b32.xlu0 %v1658, 80
      %v2487 = vpop.permute.xlu0 %2486
      %2488 = vrot.lane.b32.xlu0 %v1659, 80
      %v2489 = vpop.permute.xlu0 %2488
      %2490 = vrot.lane.b32.xlu0 %v1660, 80
      %v2491 = vpop.permute.xlu0 %2490
      %2492 = vrot.lane.b32.xlu0 %v1661, 80
      %v2493 = vpop.permute.xlu0 %2492
      %v2499 = vsel %vm1159, %v2482, 0
      %v2502 = vsel %vm1159, %v2483, 0
      %v2505 = vsel %vm1159, %v2484, 0
      %v2508 = vsel %vm1159, %v2485, 0
      %2510 = vmatpush.bf16.msra.mxu0 0
      %2511 = vmatpush.bf16.msra.mxu0 0
      %2512 = vmatpush.bf16.msra.mxu0 0
      %2513 = vmatpush.bf16.msra.mxu0 0
      %2514 = vmatpush.bf16.msra.mxu0 %v2493
      %2515 = vmatpush.bf16.msra.mxu0 %v2491
      %2516 = vmatpush.bf16.msra.mxu0 %v2489
      %2517 = vmatpush.bf16.msra.mxu0 %v2487
      %2518 = vmatmul.bf16.gmra.mxu0 %v2499
      %v2519 = vpop.f32.mrf.mxu0
      %v2520 = vadd.f32 0.0, %v2519
      %v2521 = vpop.f32.mrf.mxu0
      %v2522 = vadd.f32 0.0, %v2521
      %2523 = vmatmul.bf16.gmra.mxu0 %v2502
      %v2524 = vpop.f32.mrf.mxu0
      %v2525 = vadd.f32 0.0, %v2524
      %v2526 = vpop.f32.mrf.mxu0
      %v2527 = vadd.f32 0.0, %v2526
      %2528 = vmatmul.bf16.gmra.mxu0 %v2505
      %v2529 = vpop.f32.mrf.mxu0
      %v2530 = vadd.f32 0.0, %v2529
      %v2531 = vpop.f32.mrf.mxu0
      %v2532 = vadd.f32 0.0, %v2531
      %2533 = vmatmul.bf16.gmra.mxu0 %v2508
      %v2534 = vpop.f32.mrf.mxu0
      %v2535 = vadd.f32 0.0, %v2534
      %v2536 = vpop.f32.mrf.mxu0
      %v2537 = vadd.f32 0.0, %v2536
      %2538 = vdwg.mxu0
      %2547 = vrot.lane.b32.xlu0 %v2076, 16
      %v2548 = vpop.permute.xlu0 %2547
      %2549 = vrot.lane.b32.xlu0 %v2078, 16
      %v2550 = vpop.permute.xlu0 %2549
      %2551 = vrot.lane.b32.xlu0 %v2081, 16
      %v2552 = vpop.permute.xlu0 %2551
      %2553 = vrot.lane.b32.xlu0 %v2083, 16
      %v2554 = vpop.permute.xlu0 %2553
      %2555 = vrot.lane.b32.xlu0 %v2086, 16
      %v2556 = vpop.permute.xlu0 %2555
      %2557 = vrot.lane.b32.xlu0 %v2088, 16
      %v2558 = vpop.permute.xlu0 %2557
      %2559 = vrot.lane.b32.xlu0 %v2091, 16
      %v2560 = vpop.permute.xlu0 %2559
      %2561 = vrot.lane.b32.xlu0 %v2093, 16
      %v2562 = vpop.permute.xlu0 %2561
      %2579 = vrot.lane.b32.xlu0 %v2298, 32
      %v2580 = vpop.permute.xlu0 %2579
      %2581 = vrot.lane.b32.xlu0 %v2300, 32
      %v2582 = vpop.permute.xlu0 %2581
      %2583 = vrot.lane.b32.xlu0 %v2303, 32
      %v2584 = vpop.permute.xlu0 %2583
      %2585 = vrot.lane.b32.xlu0 %v2305, 32
      %v2586 = vpop.permute.xlu0 %2585
      %2587 = vrot.lane.b32.xlu0 %v2308, 32
      %v2588 = vpop.permute.xlu0 %2587
      %2589 = vrot.lane.b32.xlu0 %v2310, 32
      %v2590 = vpop.permute.xlu0 %2589
      %2591 = vrot.lane.b32.xlu0 %v2313, 32
      %v2592 = vpop.permute.xlu0 %2591
      %2593 = vrot.lane.b32.xlu0 %v2315, 32
      %v2594 = vpop.permute.xlu0 %2593
      %2611 = vrot.lane.b32.xlu0 %v2520, 48
      %v2612 = vpop.permute.xlu0 %2611
      %2613 = vrot.lane.b32.xlu0 %v2522, 48
      %v2614 = vpop.permute.xlu0 %2613
      %2615 = vrot.lane.b32.xlu0 %v2525, 48
      %v2616 = vpop.permute.xlu0 %2615
      %2617 = vrot.lane.b32.xlu0 %v2527, 48
      %v2618 = vpop.permute.xlu0 %2617
      %2619 = vrot.lane.b32.xlu0 %v2530, 48
      %v2620 = vpop.permute.xlu0 %2619
      %2621 = vrot.lane.b32.xlu0 %v2532, 48
      %v2622 = vpop.permute.xlu0 %2621
      %2623 = vrot.lane.b32.xlu0 %v2535, 48
      %v2624 = vpop.permute.xlu0 %2623
      %2625 = vrot.lane.b32.xlu0 %v2537, 48
      %v2626 = vpop.permute.xlu0 %2625
      %v2635 = vsel %vm1674, %v1850, %v2548
      %v2636 = vsel %vm1674, %v1852, %v2550
      %v2637 = vsel %vm1674, %v1855, %v2552
      %v2638 = vsel %vm1674, %v1857, %v2554
      %v2639 = vsel %vm1674, %v1860, %v2556
      %v2640 = vsel %vm1674, %v1862, %v2558
      %v2641 = vsel %vm1674, %v1865, %v2560
      %v2642 = vsel %vm1674, %v1867, %v2562
      %vm2643 = vcmask 261120
      %v2644 = vsel %vm2643, %v2635, %v2580
      %v2645 = vsel %vm2643, %v2636, %v2582
      %v2646 = vsel %vm2643, %v2637, %v2584
      %v2647 = vsel %vm2643, %v2638, %v2586
      %v2648 = vsel %vm2643, %v2639, %v2588
      %v2649 = vsel %vm2643, %v2640, %v2590
      %v2650 = vsel %vm2643, %v2641, %v2592
      %v2651 = vsel %vm2643, %v2642, %v2594
      %vm2652 = vcmask 392192
      %v2653 = vsel %vm2652, %v2644, %v2612
      %v2654 = vsel %vm2652, %v2645, %v2614
      %v2655 = vsel %vm2652, %v2646, %v2616
      %v2656 = vsel %vm2652, %v2647, %v2618
      %v2657 = vsel %vm2652, %v2648, %v2620
      %v2658 = vsel %vm2652, %v2649, %v2622
      %v2659 = vsel %vm2652, %v2650, %v2624
      %v2660 = vsel %vm2652, %v2651, %v2626
      %v2661 = vpack.c.bf16 %v2654, %v2653
      %v2662 = vpack.c.bf16 %v2656, %v2655
      %v2663 = vpack.c.bf16 %v2658, %v2657
      %v2664 = vpack.c.bf16 %v2660, %v2659
      %v2665 = vld [vmem:[%s14] sm:$0xf]
      %v2666 = vld [vmem:[%s14 + $0x4] sm:$0xf]
      %v2667 = vld [vmem:[%s14 + $0x8] sm:$0xf]
      %v2668 = vld [vmem:[%s14 + $0xc] sm:$0xf]
      %v2669 = vld [vmem:[%s14 + $0x10] sm:$0xf]
      %v2670 = vld [vmem:[%s14 + $0x14] sm:$0xf]
      %v2671 = vld [vmem:[%s14 + $0x18] sm:$0xf]
      %v2672 = vld [vmem:[%s14 + $0x1c] sm:$0xf]
      %v2673 = vld [vmem:[%s15] sm:$0x1]
      %v2675 = vperm.slane %v2673, 0
      %v2685 = vunpack.c.l.b16 %v2665
      %v2686 = vunpack.c.l.b16 %v2666
      %v2687 = vunpack.c.l.b16 %v2667
      %v2688 = vunpack.c.l.b16 %v2668
      %v2689 = vunpack.c.l.b16 %v2669
      %v2690 = vunpack.c.l.b16 %v2670
      %v2691 = vunpack.c.l.b16 %v2671
      %v2692 = vunpack.c.l.b16 %v2672
      %v2693 = vpack.c.b16 %v2686, %v2685
      %v2694 = vpack.c.b16 %v2688, %v2687
      %v2695 = vpack.c.b16 %v2690, %v2689
      %v2696 = vpack.c.b16 %v2692, %v2691
      %v2702 = vsel %vm1159, %v2661, 0
      %v2705 = vsel %vm1159, %v2662, 0
      %v2708 = vsel %vm1159, %v2663, 0
      %v2711 = vsel %vm1159, %v2664, 0
      %2713 = vmatpush.bf16.msra.mxu0 0
      %2714 = vmatpush.bf16.msra.mxu0 0
      %2715 = vmatpush.bf16.msra.mxu0 0
      %2716 = vmatpush.bf16.msra.mxu0 0
      %2717 = vmatpush.bf16.msra.mxu0 %v2696
      %2718 = vmatpush.bf16.msra.mxu0 %v2695
      %2719 = vmatpush.bf16.msra.mxu0 %v2694
      %2720 = vmatpush.bf16.msra.mxu0 %v2693
      %2721 = vmatmul.bf16.gmra.mxu0 %v2702
      %v2722 = vpop.f32.mrf.mxu0
      %v2723 = vadd.f32 %v2675, %v2722
      %v2724 = vpop.f32.mrf.mxu0
      %v2725 = vadd.f32 %v2675, %v2724
      %2726 = vmatmul.bf16.gmra.mxu0 %v2705
      %v2727 = vpop.f32.mrf.mxu0
      %v2728 = vadd.f32 %v2675, %v2727
      %v2729 = vpop.f32.mrf.mxu0
      %v2730 = vadd.f32 %v2675, %v2729
      %2731 = vmatmul.bf16.gmra.mxu0 %v2708
      %v2732 = vpop.f32.mrf.mxu0
      %v2733 = vadd.f32 %v2675, %v2732
      %v2734 = vpop.f32.mrf.mxu0
      %v2735 = vadd.f32 %v2675, %v2734
      %2736 = vmatmul.bf16.gmra.mxu0 %v2711
      %v2737 = vpop.f32.mrf.mxu0
      %v2738 = vadd.f32 %v2675, %v2737
      %v2739 = vpop.f32.mrf.mxu0
      %v2740 = vadd.f32 %v2675, %v2739
      %2741 = vdwg.mxu0
      %v2742 = vperm.slane %v1311, 0
      %v2743 = vmul.f32 %v2742, %v2723
      %v2744 = vmul.f32 %v2742, %v2725
      %v2745 = vmul.f32 %v2742, %v2728
      %v2746 = vmul.f32 %v2742, %v2730
      %v2747 = vmul.f32 %v2742, %v2733
      %v2748 = vmul.f32 %v2742, %v2735
      %v2749 = vmul.f32 %v2742, %v2738
      %v2750 = vmul.f32 %v2742, %v2740
      %v2751 = vadd.f32 %v934, %v2743
      %v2752 = vadd.f32 %v935, %v2744
      %v2753 = vadd.f32 %v936, %v2745
      %v2754 = vadd.f32 %v937, %v2746
      %v2755 = vadd.f32 %v938, %v2747
      %v2756 = vadd.f32 %v939, %v2748
      %v2757 = vadd.f32 %v940, %v2749
      %v2758 = vadd.f32 %v941, %v2750
      %v2759 = vsel %vm1159, %v2751, 0.0
      %2760 = vadd.xlane.f32.xlu0 %v2759
      %v2761 = vpop.xlane.xlu0 %2760
      %v2762 = vsel %vm1159, %v2752, 0.0
      %2763 = vadd.xlane.f32.xlu0 %v2762
      %v2764 = vpop.xlane.xlu0 %2763
      %v2765 = vsel %vm1159, %v2753, 0.0
      %2766 = vadd.xlane.f32.xlu0 %v2765
      %v2767 = vpop.xlane.xlu0 %2766
      %v2768 = vsel %vm1159, %v2754, 0.0
      %2769 = vadd.xlane.f32.xlu0 %v2768
      %v2770 = vpop.xlane.xlu0 %2769
      %v2771 = vsel %vm1159, %v2755, 0.0
      %2772 = vadd.xlane.f32.xlu0 %v2771
      %v2773 = vpop.xlane.xlu0 %2772
      %v2774 = vsel %vm1159, %v2756, 0.0
      %2775 = vadd.xlane.f32.xlu0 %v2774
      %v2776 = vpop.xlane.xlu0 %2775
      %v2777 = vsel %vm1159, %v2757, 0.0
      %2778 = vadd.xlane.f32.xlu0 %v2777
      %v2779 = vpop.xlane.xlu0 %2778
      %v2780 = vsel %vm1159, %v2758, 0.0
      %2781 = vadd.xlane.f32.xlu0 %v2780
      %v2782 = vpop.xlane.xlu0 %2781
      %v2783 = vmul.f32 %v2761, %v818
      %v2784 = vmul.f32 %v2764, %v818
      %v2785 = vmul.f32 %v2767, %v818
      %v2786 = vmul.f32 %v2770, %v818
      %v2787 = vmul.f32 %v2773, %v818
      %v2788 = vmul.f32 %v2776, %v818
      %v2789 = vmul.f32 %v2779, %v818
      %v2790 = vmul.f32 %v2782, %v818
      %v2791 = vsub.f32 %v2751, %v2783
      %v2792 = vsub.f32 %v2752, %v2784
      %v2793 = vsub.f32 %v2753, %v2785
      %v2794 = vsub.f32 %v2754, %v2786
      %v2795 = vsub.f32 %v2755, %v2787
      %v2796 = vsub.f32 %v2756, %v2788
      %v2797 = vsub.f32 %v2757, %v2789
      %v2798 = vsub.f32 %v2758, %v2790
      %v2799 = vmul.f32 %v2791, %v2791
      %v2800 = vmul.f32 %v2792, %v2792
      %v2801 = vmul.f32 %v2793, %v2793
      %v2802 = vmul.f32 %v2794, %v2794
      %v2803 = vmul.f32 %v2795, %v2795
      %v2804 = vmul.f32 %v2796, %v2796
      %v2805 = vmul.f32 %v2797, %v2797
      %v2806 = vmul.f32 %v2798, %v2798
      %v2807 = vsel %vm1159, %v2799, 0.0
      %2808 = vadd.xlane.f32.xlu0 %v2807
      %v2809 = vpop.xlane.xlu0 %2808
      %v2810 = vsel %vm1159, %v2800, 0.0
      %2811 = vadd.xlane.f32.xlu0 %v2810
      %v2812 = vpop.xlane.xlu0 %2811
      %v2813 = vsel %vm1159, %v2801, 0.0
      %2814 = vadd.xlane.f32.xlu0 %v2813
      %v2815 = vpop.xlane.xlu0 %2814
      %v2816 = vsel %vm1159, %v2802, 0.0
      %2817 = vadd.xlane.f32.xlu0 %v2816
      %v2818 = vpop.xlane.xlu0 %2817
      %v2819 = vsel %vm1159, %v2803, 0.0
      %2820 = vadd.xlane.f32.xlu0 %v2819
      %v2821 = vpop.xlane.xlu0 %2820
      %v2822 = vsel %vm1159, %v2804, 0.0
      %2823 = vadd.xlane.f32.xlu0 %v2822
      %v2824 = vpop.xlane.xlu0 %2823
      %v2825 = vsel %vm1159, %v2805, 0.0
      %2826 = vadd.xlane.f32.xlu0 %v2825
      %v2827 = vpop.xlane.xlu0 %2826
      %v2828 = vsel %vm1159, %v2806, 0.0
      %2829 = vadd.xlane.f32.xlu0 %v2828
      %v2830 = vpop.xlane.xlu0 %2829
      %v2831 = vmul.f32 %v2809, %v818
      %v2832 = vmul.f32 %v2812, %v818
      %v2833 = vmul.f32 %v2815, %v818
      %v2834 = vmul.f32 %v2818, %v818
      %v2835 = vmul.f32 %v2821, %v818
      %v2836 = vmul.f32 %v2824, %v818
      %v2837 = vmul.f32 %v2827, %v818
      %v2838 = vmul.f32 %v2830, %v818
      %v2839 = vadd.f32 %v2831, 1e-06
      %v2840 = vadd.f32 %v2832, 1e-06
      %v2841 = vadd.f32 %v2833, 1e-06
      %v2842 = vadd.f32 %v2834, 1e-06
      %v2843 = vadd.f32 %v2835, 1e-06
      %v2844 = vadd.f32 %v2836, 1e-06
      %v2845 = vadd.f32 %v2837, 1e-06
      %v2846 = vadd.f32 %v2838, 1e-06
      %v2847 = vrsqrt.pop %v2839
      %v2848 = vmul.f32 %v2847, %v2839
      %v2849 = vmul.f32 %v2848, %v2847
      %v2850 = vmul.f32 0.5, %v2849
      %v2851 = vsub.f32 1.5, %v2850
      %v2852 = vmul.f32 %v2847, %v2851
      %vm2853 = vweird.f32 %v2839
      %vm2854 = vweird.f32 %v2847
      %vm2855 = vmor %vm2853, %vm2854
      %v2856 = vsel %vm2855, %v2847, %v2852
      %v2857 = vrsqrt.pop %v2840
      %v2858 = vmul.f32 %v2857, %v2840
      %v2859 = vmul.f32 %v2858, %v2857
      %v2860 = vmul.f32 0.5, %v2859
      %v2861 = vsub.f32 1.5, %v2860
      %v2862 = vmul.f32 %v2857, %v2861
      %vm2863 = vweird.f32 %v2840
      %vm2864 = vweird.f32 %v2857
      %vm2865 = vmor %vm2863, %vm2864
      %v2866 = vsel %vm2865, %v2857, %v2862
      %v2867 = vrsqrt.pop %v2841
      %v2868 = vmul.f32 %v2867, %v2841
      %v2869 = vmul.f32 %v2868, %v2867
      %v2870 = vmul.f32 0.5, %v2869
      %v2871 = vsub.f32 1.5, %v2870
      %v2872 = vmul.f32 %v2867, %v2871
      %vm2873 = vweird.f32 %v2841
      %vm2874 = vweird.f32 %v2867
      %vm2875 = vmor %vm2873, %vm2874
      %v2876 = vsel %vm2875, %v2867, %v2872
      %v2877 = vrsqrt.pop %v2842
      %v2878 = vmul.f32 %v2877, %v2842
      %v2879 = vmul.f32 %v2878, %v2877
      %v2880 = vmul.f32 0.5, %v2879
      %v2881 = vsub.f32 1.5, %v2880
      %v2882 = vmul.f32 %v2877, %v2881
      %vm2883 = vweird.f32 %v2842
      %vm2884 = vweird.f32 %v2877
      %vm2885 = vmor %vm2883, %vm2884
      %v2886 = vsel %vm2885, %v2877, %v2882
      %v2887 = vrsqrt.pop %v2843
      %v2888 = vmul.f32 %v2887, %v2843
      %v2889 = vmul.f32 %v2888, %v2887
      %v2890 = vmul.f32 0.5, %v2889
      %v2891 = vsub.f32 1.5, %v2890
      %v2892 = vmul.f32 %v2887, %v2891
      %vm2893 = vweird.f32 %v2843
      %vm2894 = vweird.f32 %v2887
      %vm2895 = vmor %vm2893, %vm2894
      %v2896 = vsel %vm2895, %v2887, %v2892
      %v2897 = vrsqrt.pop %v2844
      %v2898 = vmul.f32 %v2897, %v2844
      %v2899 = vmul.f32 %v2898, %v2897
      %v2900 = vmul.f32 0.5, %v2899
      %v2901 = vsub.f32 1.5, %v2900
      %v2902 = vmul.f32 %v2897, %v2901
      %vm2903 = vweird.f32 %v2844
      %vm2904 = vweird.f32 %v2897
      %vm2905 = vmor %vm2903, %vm2904
      %v2906 = vsel %vm2905, %v2897, %v2902
      %v2907 = vrsqrt.pop %v2845
      %v2908 = vmul.f32 %v2907, %v2845
      %v2909 = vmul.f32 %v2908, %v2907
      %v2910 = vmul.f32 0.5, %v2909
      %v2911 = vsub.f32 1.5, %v2910
      %v2912 = vmul.f32 %v2907, %v2911
      %vm2913 = vweird.f32 %v2845
      %vm2914 = vweird.f32 %v2907
      %vm2915 = vmor %vm2913, %vm2914
      %v2916 = vsel %vm2915, %v2907, %v2912
      %v2917 = vrsqrt.pop %v2846
      %v2918 = vmul.f32 %v2917, %v2846
      %v2919 = vmul.f32 %v2918, %v2917
      %v2920 = vmul.f32 0.5, %v2919
      %v2921 = vsub.f32 1.5, %v2920
      %v2922 = vmul.f32 %v2917, %v2921
      %vm2923 = vweird.f32 %v2846
      %vm2924 = vweird.f32 %v2917
      %vm2925 = vmor %vm2923, %vm2924
      %v2926 = vsel %vm2925, %v2917, %v2922
      %v2927 = vmul.f32 %v2791, %v2856
      %v2928 = vmul.f32 %v2792, %v2866
      %v2929 = vmul.f32 %v2793, %v2876
      %v2930 = vmul.f32 %v2794, %v2886
      %v2931 = vmul.f32 %v2795, %v2896
      %v2932 = vmul.f32 %v2796, %v2906
      %v2933 = vmul.f32 %v2797, %v2916
      %v2934 = vmul.f32 %v2798, %v2926
      %v2935 = vadd.f32 %v1324, 1.0
      %v2936 = vperm.slane %v2935, 0
      %v2937 = vmul.f32 %v2927, %v2936
      %v2938 = vmul.f32 %v2928, %v2936
      %v2939 = vmul.f32 %v2929, %v2936
      %v2940 = vmul.f32 %v2930, %v2936
      %v2941 = vmul.f32 %v2931, %v2936
      %v2942 = vmul.f32 %v2932, %v2936
      %v2943 = vmul.f32 %v2933, %v2936
      %v2944 = vmul.f32 %v2934, %v2936
      %2946 = vrot.lane.b32.xlu0 %v2742, 64
      %v2947 = vpop.permute.xlu0 %2946
      %v2949 = vadd.f32 %v2937, %v2947
      %v2950 = vadd.f32 %v2938, %v2947
      %v2951 = vadd.f32 %v2939, %v2947
      %v2952 = vadd.f32 %v2940, %v2947
      %v2953 = vadd.f32 %v2941, %v2947
      %v2954 = vadd.f32 %v2942, %v2947
      %v2955 = vadd.f32 %v2943, %v2947
      %v2956 = vadd.f32 %v2944, %v2947
      %v2957 = vpack.c.bf16 %v2950, %v2949
      %v2958 = vpack.c.bf16 %v2952, %v2951
      %v2959 = vpack.c.bf16 %v2954, %v2953
      %v2960 = vpack.c.bf16 %v2956, %v2955
      %v2961 = vld [vmem:[%s16] sm:$0xff]
      %v2962 = vld [vmem:[%s16 + $0x8] sm:$0xff]
      %v2963 = vld [vmem:[%s16 + $0x10] sm:$0xff]
      %v2964 = vld [vmem:[%s16 + $0x18] sm:$0xff]
      %v2965 = vld [vmem:[%s16 + $0x20] sm:$0xff]
      %v2966 = vld [vmem:[%s16 + $0x28] sm:$0xff]
      %v2967 = vld [vmem:[%s16 + $0x30] sm:$0xff]
      %v2968 = vld [vmem:[%s16 + $0x38] sm:$0xff]
      %v2969 = vld [vmem:[%s17] sm:$0x3]
      %v2971 = vperm.slane %v2969, 0
      %v2972 = vperm.slane %v2969, 1
      %v2983 = vunpack.c.l.b16 %v2961
      %v2984 = vunpack.c.h.b16 %v2961
      %v2985 = vunpack.c.l.b16 %v2962
      %v2986 = vunpack.c.h.b16 %v2962
      %v2987 = vunpack.c.l.b16 %v2963
      %v2988 = vunpack.c.h.b16 %v2963
      %v2989 = vunpack.c.l.b16 %v2964
      %v2990 = vunpack.c.h.b16 %v2964
      %v2991 = vunpack.c.l.b16 %v2965
      %v2992 = vunpack.c.h.b16 %v2965
      %v2993 = vunpack.c.l.b16 %v2966
      %v2994 = vunpack.c.h.b16 %v2966
      %v2995 = vunpack.c.l.b16 %v2967
      %v2996 = vunpack.c.h.b16 %v2967
      %v2997 = vunpack.c.l.b16 %v2968
      %v2998 = vunpack.c.h.b16 %v2968
      %v2999 = vpack.c.b16 %v2985, %v2983
      %v3000 = vpack.c.b16 %v2986, %v2984
      %v3001 = vpack.c.b16 %v2989, %v2987
      %v3002 = vpack.c.b16 %v2990, %v2988
      %v3003 = vpack.c.b16 %v2993, %v2991
      %v3004 = vpack.c.b16 %v2994, %v2992
      %v3005 = vpack.c.b16 %v2997, %v2995
      %v3006 = vpack.c.b16 %v2998, %v2996
      %v3016 = vsel %vm1159, %v2957, 0
      %v3019 = vsel %vm1159, %v2958, 0
      %v3022 = vsel %vm1159, %v2959, 0
      %v3025 = vsel %vm1159, %v2960, 0
      %3027 = vmatpush.bf16.msra.mxu0 0
      %3028 = vmatpush.bf16.msra.mxu0 0
      %3029 = vmatpush.bf16.msra.mxu0 0
      %3030 = vmatpush.bf16.msra.mxu0 0
      %3031 = vmatpush.bf16.msra.mxu0 %v3005
      %3032 = vmatpush.bf16.msra.mxu0 %v3003
      %3033 = vmatpush.bf16.msra.mxu0 %v3001
      %3034 = vmatpush.bf16.msra.mxu0 %v2999
      %3035 = vmatmul.bf16.gmra.mxu0 %v3016
      %v3036 = vpop.f32.mrf.mxu0
      %v3037 = vadd.f32 %v2971, %v3036
      %v3038 = vpop.f32.mrf.mxu0
      %v3039 = vadd.f32 %v2971, %v3038
      %3040 = vmatmul.bf16.gmra.mxu0 %v3019
      %v3041 = vpop.f32.mrf.mxu0
      %v3042 = vadd.f32 %v2971, %v3041
      %v3043 = vpop.f32.mrf.mxu0
      %v3044 = vadd.f32 %v2971, %v3043
      %3045 = vmatmul.bf16.gmra.mxu0 %v3022
      %v3046 = vpop.f32.mrf.mxu0
      %v3047 = vadd.f32 %v2971, %v3046
      %v3048 = vpop.f32.mrf.mxu0
      %v3049 = vadd.f32 %v2971, %v3048
      %3050 = vmatmul.bf16.gmra.mxu0 %v3025
      %v3051 = vpop.f32.mrf.mxu0
      %v3052 = vadd.f32 %v2971, %v3051
      %v3053 = vpop.f32.mrf.mxu0
      %v3054 = vadd.f32 %v2971, %v3053
      %3055 = vdwg.mxu0
      %3056 = vmatpush.bf16.msra.mxu0 0
      %3057 = vmatpush.bf16.msra.mxu0 0
      %3058 = vmatpush.bf16.msra.mxu0 0
      %3059 = vmatpush.bf16.msra.mxu0 0
      %3060 = vmatpush.bf16.msra.mxu0 %v3006
      %3061 = vmatpush.bf16.msra.mxu0 %v3004
      %3062 = vmatpush.bf16.msra.mxu0 %v3002
      %3063 = vmatpush.bf16.msra.mxu0 %v3000
      %3064 = vmatmul.bf16.gmra.mxu0 %v3016
      %v3065 = vpop.f32.mrf.mxu0
      %v3066 = vadd.f32 %v2972, %v3065
      %v3067 = vpop.f32.mrf.mxu0
      %v3068 = vadd.f32 %v2972, %v3067
      %3069 = vmatmul.bf16.gmra.mxu0 %v3019
      %v3070 = vpop.f32.mrf.mxu0
      %v3071 = vadd.f32 %v2972, %v3070
      %v3072 = vpop.f32.mrf.mxu0
      %v3073 = vadd.f32 %v2972, %v3072
      %3074 = vmatmul.bf16.gmra.mxu0 %v3022
      %v3075 = vpop.f32.mrf.mxu0
      %v3076 = vadd.f32 %v2972, %v3075
      %v3077 = vpop.f32.mrf.mxu0
      %v3078 = vadd.f32 %v2972, %v3077
      %3079 = vmatmul.bf16.gmra.mxu0 %v3025
      %v3080 = vpop.f32.mrf.mxu0
      %v3081 = vadd.f32 %v2972, %v3080
      %v3082 = vpop.f32.mrf.mxu0
      %v3083 = vadd.f32 %v2972, %v3082
      %3084 = vdwg.mxu0
      %v3085 = vmul.f32 %v3037, %v3037
      %v3086 = vmul.f32 %v3066, %v3066
      %v3087 = vmul.f32 %v3039, %v3039
      %v3088 = vmul.f32 %v3068, %v3068
      %v3089 = vmul.f32 %v3042, %v3042
      %v3090 = vmul.f32 %v3071, %v3071
      %v3091 = vmul.f32 %v3044, %v3044
      %v3092 = vmul.f32 %v3073, %v3073
      %v3093 = vmul.f32 %v3047, %v3047
      %v3094 = vmul.f32 %v3076, %v3076
      %v3095 = vmul.f32 %v3049, %v3049
      %v3096 = vmul.f32 %v3078, %v3078
      %v3097 = vmul.f32 %v3052, %v3052
      %v3098 = vmul.f32 %v3081, %v3081
      %v3099 = vmul.f32 %v3054, %v3054
      %v3100 = vmul.f32 %v3083, %v3083
      %v3101 = vmul.f32 %v3037, %v3085
      %v3102 = vmul.f32 %v3066, %v3086
      %v3103 = vmul.f32 %v3039, %v3087
      %v3104 = vmul.f32 %v3068, %v3088
      %v3105 = vmul.f32 %v3042, %v3089
      %v3106 = vmul.f32 %v3071, %v3090
      %v3107 = vmul.f32 %v3044, %v3091
      %v3108 = vmul.f32 %v3073, %v3092
      %v3109 = vmul.f32 %v3047, %v3093
      %v3110 = vmul.f32 %v3076, %v3094
      %v3111 = vmul.f32 %v3049, %v3095
      %v3112 = vmul.f32 %v3078, %v3096
      %v3113 = vmul.f32 %v3052, %v3097
      %v3114 = vmul.f32 %v3081, %v3098
      %v3115 = vmul.f32 %v3054, %v3099
      %v3116 = vmul.f32 %v3083, %v3100
      %v3117 = vmul.f32 %v3101, 0.044715
      %v3118 = vmul.f32 %v3102, 0.044715
      %v3119 = vmul.f32 %v3103, 0.044715
      %v3120 = vmul.f32 %v3104, 0.044715
      %v3121 = vmul.f32 %v3105, 0.044715
      %v3122 = vmul.f32 %v3106, 0.044715
      %v3123 = vmul.f32 %v3107, 0.044715
      %v3124 = vmul.f32 %v3108, 0.044715
      %v3125 = vmul.f32 %v3109, 0.044715
      %v3126 = vmul.f32 %v3110, 0.044715
      %v3127 = vmul.f32 %v3111, 0.044715
      %v3128 = vmul.f32 %v3112, 0.044715
      %v3129 = vmul.f32 %v3113, 0.044715
      %v3130 = vmul.f32 %v3114, 0.044715
      %v3131 = vmul.f32 %v3115, 0.044715
      %v3132 = vmul.f32 %v3116, 0.044715
      %v3133 = vadd.f32 %v3037, %v3117
      %v3134 = vadd.f32 %v3066, %v3118
      %v3135 = vadd.f32 %v3039, %v3119
      %v3136 = vadd.f32 %v3068, %v3120
      %v3137 = vadd.f32 %v3042, %v3121
      %v3138 = vadd.f32 %v3071, %v3122
      %v3139 = vadd.f32 %v3044, %v3123
      %v3140 = vadd.f32 %v3073, %v3124
      %v3141 = vadd.f32 %v3047, %v3125
      %v3142 = vadd.f32 %v3076, %v3126
      %v3143 = vadd.f32 %v3049, %v3127
      %v3144 = vadd.f32 %v3078, %v3128
      %v3145 = vadd.f32 %v3052, %v3129
      %v3146 = vadd.f32 %v3081, %v3130
      %v3147 = vadd.f32 %v3054, %v3131
      %v3148 = vadd.f32 %v3083, %v3132
      %v3149 = vmul.f32 %v3133, 0.7978846
      %v3150 = vmul.f32 %v3134, 0.7978846
      %v3151 = vmul.f32 %v3135, 0.7978846
      %v3152 = vmul.f32 %v3136, 0.7978846
      %v3153 = vmul.f32 %v3137, 0.7978846
      %v3154 = vmul.f32 %v3138, 0.7978846
      %v3155 = vmul.f32 %v3139, 0.7978846
      %v3156 = vmul.f32 %v3140, 0.7978846
      %v3157 = vmul.f32 %v3141, 0.7978846
      %v3158 = vmul.f32 %v3142, 0.7978846
      %v3159 = vmul.f32 %v3143, 0.7978846
      %v3160 = vmul.f32 %v3144, 0.7978846
      %v3161 = vmul.f32 %v3145, 0.7978846
      %v3162 = vmul.f32 %v3146, 0.7978846
      %v3163 = vmul.f32 %v3147, 0.7978846
      %v3164 = vmul.f32 %v3148, 0.7978846
      %v3165 = vtanh.pop %v3149
      %v3166 = vtanh.pop %v3150
      %v3167 = vtanh.pop %v3151
      %v3168 = vtanh.pop %v3152
      %v3169 = vtanh.pop %v3153
      %v3170 = vtanh.pop %v3154
      %v3171 = vtanh.pop %v3155
      %v3172 = vtanh.pop %v3156
      %v3173 = vtanh.pop %v3157
      %v3174 = vtanh.pop %v3158
      %v3175 = vtanh.pop %v3159
      %v3176 = vtanh.pop %v3160
      %v3177 = vtanh.pop %v3161
      %v3178 = vtanh.pop %v3162
      %v3179 = vtanh.pop %v3163
      %v3180 = vtanh.pop %v3164
      %v3181 = vadd.f32 %v3165, 1.0
      %v3182 = vadd.f32 %v3166, 1.0
      %v3183 = vadd.f32 %v3167, 1.0
      %v3184 = vadd.f32 %v3168, 1.0
      %v3185 = vadd.f32 %v3169, 1.0
      %v3186 = vadd.f32 %v3170, 1.0
      %v3187 = vadd.f32 %v3171, 1.0
      %v3188 = vadd.f32 %v3172, 1.0
      %v3189 = vadd.f32 %v3173, 1.0
      %v3190 = vadd.f32 %v3174, 1.0
      %v3191 = vadd.f32 %v3175, 1.0
      %v3192 = vadd.f32 %v3176, 1.0
      %v3193 = vadd.f32 %v3177, 1.0
      %v3194 = vadd.f32 %v3178, 1.0
      %v3195 = vadd.f32 %v3179, 1.0
      %v3196 = vadd.f32 %v3180, 1.0
      %v3197 = vmul.f32 %v3181, 0.5
      %v3198 = vmul.f32 %v3182, 0.5
      %v3199 = vmul.f32 %v3183, 0.5
      %v3200 = vmul.f32 %v3184, 0.5
      %v3201 = vmul.f32 %v3185, 0.5
      %v3202 = vmul.f32 %v3186, 0.5
      %v3203 = vmul.f32 %v3187, 0.5
      %v3204 = vmul.f32 %v3188, 0.5
      %v3205 = vmul.f32 %v3189, 0.5
      %v3206 = vmul.f32 %v3190, 0.5
      %v3207 = vmul.f32 %v3191, 0.5
      %v3208 = vmul.f32 %v3192, 0.5
      %v3209 = vmul.f32 %v3193, 0.5
      %v3210 = vmul.f32 %v3194, 0.5
      %v3211 = vmul.f32 %v3195, 0.5
      %v3212 = vmul.f32 %v3196, 0.5
      %v3213 = vmul.f32 %v3037, %v3197
      %v3214 = vmul.f32 %v3066, %v3198
      %v3215 = vmul.f32 %v3039, %v3199
      %v3216 = vmul.f32 %v3068, %v3200
      %v3217 = vmul.f32 %v3042, %v3201
      %v3218 = vmul.f32 %v3071, %v3202
      %v3219 = vmul.f32 %v3044, %v3203
      %v3220 = vmul.f32 %v3073, %v3204
      %v3221 = vmul.f32 %v3047, %v3205
      %v3222 = vmul.f32 %v3076, %v3206
      %v3223 = vmul.f32 %v3049, %v3207
      %v3224 = vmul.f32 %v3078, %v3208
      %v3225 = vmul.f32 %v3052, %v3209
      %v3226 = vmul.f32 %v3081, %v3210
      %v3227 = vmul.f32 %v3054, %v3211
      %v3228 = vmul.f32 %v3083, %v3212
      %v3229 = vpack.c.bf16 %v3215, %v3213
      %v3230 = vpack.c.bf16 %v3216, %v3214
      %v3231 = vpack.c.bf16 %v3219, %v3217
      %v3232 = vpack.c.bf16 %v3220, %v3218
      %v3233 = vpack.c.bf16 %v3223, %v3221
      %v3234 = vpack.c.bf16 %v3224, %v3222
      %v3235 = vpack.c.bf16 %v3227, %v3225
      %v3236 = vpack.c.bf16 %v3228, %v3226
      %v3237 = vld [vmem:[%s18] sm:$0xf]
      %v3238 = vld [vmem:[%s18 + $0x4] sm:$0xf]
      %v3239 = vld [vmem:[%s18 + $0x8] sm:$0xf]
      %v3240 = vld [vmem:[%s18 + $0xc] sm:$0xf]
      %v3241 = vld [vmem:[%s18 + $0x10] sm:$0xf]
      %v3242 = vld [vmem:[%s18 + $0x14] sm:$0xf]
      %v3243 = vld [vmem:[%s18 + $0x18] sm:$0xf]
      %v3244 = vld [vmem:[%s18 + $0x1c] sm:$0xf]
      %v3245 = vld [vmem:[%s18 + $0x20] sm:$0xf]
      %v3246 = vld [vmem:[%s18 + $0x24] sm:$0xf]
      %v3247 = vld [vmem:[%s18 + $0x28] sm:$0xf]
      %v3248 = vld [vmem:[%s18 + $0x2c] sm:$0xf]
      %v3249 = vld [vmem:[%s18 + $0x30] sm:$0xf]
      %v3250 = vld [vmem:[%s18 + $0x34] sm:$0xf]
      %v3251 = vld [vmem:[%s18 + $0x38] sm:$0xf]
      %v3252 = vld [vmem:[%s18 + $0x3c] sm:$0xf]
      %v3253 = vld [vmem:[%s18 + $0x40] sm:$0xf]
      %v3254 = vld [vmem:[%s18 + $0x44] sm:$0xf]
      %v3255 = vld [vmem:[%s18 + $0x48] sm:$0xf]
      %v3256 = vld [vmem:[%s18 + $0x4c] sm:$0xf]
      %v3257 = vld [vmem:[%s18 + $0x50] sm:$0xf]
      %v3258 = vld [vmem:[%s18 + $0x54] sm:$0xf]
      %v3259 = vld [vmem:[%s18 + $0x58] sm:$0xf]
      %v3260 = vld [vmem:[%s18 + $0x5c] sm:$0xf]
      %v3261 = vld [vmem:[%s18 + $0x60] sm:$0xf]
      %v3262 = vld [vmem:[%s18 + $0x64] sm:$0xf]
      %v3263 = vld [vmem:[%s18 + $0x68] sm:$0xf]
      %v3264 = vld [vmem:[%s18 + $0x6c] sm:$0xf]
      %v3265 = vld [vmem:[%s18 + $0x70] sm:$0xf]
      %v3266 = vld [vmem:[%s18 + $0x74] sm:$0xf]
      %v3267 = vld [vmem:[%s18 + $0x78] sm:$0xf]
      %v3268 = vld [vmem:[%s18 + $0x7c] sm:$0xf]
      %v3269 = vld [vmem:[%s19] sm:$0x1]
      %v3271 = vperm.slane %v3269, 0
      %v3305 = vunpack.c.l.b16 %v3237
      %v3306 = vunpack.c.l.b16 %v3238
      %v3307 = vunpack.c.l.b16 %v3239
      %v3308 = vunpack.c.l.b16 %v3240
      %v3309 = vunpack.c.l.b16 %v3241
      %v3310 = vunpack.c.l.b16 %v3242
      %v3311 = vunpack.c.l.b16 %v3243
      %v3312 = vunpack.c.l.b16 %v3244
      %v3313 = vunpack.c.l.b16 %v3245
      %v3314 = vunpack.c.l.b16 %v3246
      %v3315 = vunpack.c.l.b16 %v3247
      %v3316 = vunpack.c.l.b16 %v3248
      %v3317 = vunpack.c.l.b16 %v3249
      %v3318 = vunpack.c.l.b16 %v3250
      %v3319 = vunpack.c.l.b16 %v3251
      %v3320 = vunpack.c.l.b16 %v3252
      %v3321 = vunpack.c.l.b16 %v3253
      %v3322 = vunpack.c.l.b16 %v3254
      %v3323 = vunpack.c.l.b16 %v3255
      %v3324 = vunpack.c.l.b16 %v3256
      %v3325 = vunpack.c.l.b16 %v3257
      %v3326 = vunpack.c.l.b16 %v3258
      %v3327 = vunpack.c.l.b16 %v3259
      %v3328 = vunpack.c.l.b16 %v3260
      %v3329 = vunpack.c.l.b16 %v3261
      %v3330 = vunpack.c.l.b16 %v3262
      %v3331 = vunpack.c.l.b16 %v3263
      %v3332 = vunpack.c.l.b16 %v3264
      %v3333 = vunpack.c.l.b16 %v3265
      %v3334 = vunpack.c.l.b16 %v3266
      %v3335 = vunpack.c.l.b16 %v3267
      %v3336 = vunpack.c.l.b16 %v3268
      %v3337 = vpack.c.b16 %v3306, %v3305
      %v3338 = vpack.c.b16 %v3308, %v3307
      %v3339 = vpack.c.b16 %v3310, %v3309
      %v3340 = vpack.c.b16 %v3312, %v3311
      %v3341 = vpack.c.b16 %v3314, %v3313
      %v3342 = vpack.c.b16 %v3316, %v3315
      %v3343 = vpack.c.b16 %v3318, %v3317
      %v3344 = vpack.c.b16 %v3320, %v3319
      %v3345 = vpack.c.b16 %v3322, %v3321
      %v3346 = vpack.c.b16 %v3324, %v3323
      %v3347 = vpack.c.b16 %v3326, %v3325
      %v3348 = vpack.c.b16 %v3328, %v3327
      %v3349 = vpack.c.b16 %v3330, %v3329
      %v3350 = vpack.c.b16 %v3332, %v3331
      %v3351 = vpack.c.b16 %v3334, %v3333
      %v3352 = vpack.c.b16 %v3336, %v3335
      %3369 = vmatpush.bf16.msra.mxu0 %v3344
      %3370 = vmatpush.bf16.msra.mxu0 %v3343
      %3371 = vmatpush.bf16.msra.mxu0 %v3342
      %3372 = vmatpush.bf16.msra.mxu0 %v3341
      %3373 = vmatpush.bf16.msra.mxu0 %v3340
      %3374 = vmatpush.bf16.msra.mxu0 %v3339
      %3375 = vmatpush.bf16.msra.mxu0 %v3338
      %3376 = vmatpush.bf16.msra.mxu0 %v3337
      %3377 = vmatmul.bf16.gmra.mxu0 %v3229
      %v3378 = vpop.f32.mrf.mxu0
      %v3379 = vadd.f32 %v3271, %v3378
      %v3380 = vpop.f32.mrf.mxu0
      %v3381 = vadd.f32 %v3271, %v3380
      %3382 = vmatmul.bf16.gmra.mxu0 %v3231
      %v3383 = vpop.f32.mrf.mxu0
      %v3384 = vadd.f32 %v3271, %v3383
      %v3385 = vpop.f32.mrf.mxu0
      %v3386 = vadd.f32 %v3271, %v3385
      %3387 = vmatmul.bf16.gmra.mxu0 %v3233
      %v3388 = vpop.f32.mrf.mxu0
      %v3389 = vadd.f32 %v3271, %v3388
      %v3390 = vpop.f32.mrf.mxu0
      %v3391 = vadd.f32 %v3271, %v3390
      %3392 = vmatmul.bf16.gmra.mxu0 %v3235
      %v3393 = vpop.f32.mrf.mxu0
      %v3394 = vadd.f32 %v3271, %v3393
      %v3395 = vpop.f32.mrf.mxu0
      %v3396 = vadd.f32 %v3271, %v3395
      %3397 = vdwg.mxu0
      %3398 = vmatpush.bf16.msra.mxu0 %v3352
      %3399 = vmatpush.bf16.msra.mxu0 %v3351
      %3400 = vmatpush.bf16.msra.mxu0 %v3350
      %3401 = vmatpush.bf16.msra.mxu0 %v3349
      %3402 = vmatpush.bf16.msra.mxu0 %v3348
      %3403 = vmatpush.bf16.msra.mxu0 %v3347
      %3404 = vmatpush.bf16.msra.mxu0 %v3346
      %3405 = vmatpush.bf16.msra.mxu0 %v3345
      %3406 = vmatmul.bf16.gmra.mxu0 %v3230
      %v3407 = vpop.f32.mrf.mxu0
      %v3408 = vadd.f32 %v3379, %v3407
      %v3409 = vpop.f32.mrf.mxu0
      %v3410 = vadd.f32 %v3381, %v3409
      %3411 = vmatmul.bf16.gmra.mxu0 %v3232
      %v3412 = vpop.f32.mrf.mxu0
      %v3413 = vadd.f32 %v3384, %v3412
      %v3414 = vpop.f32.mrf.mxu0
      %v3415 = vadd.f32 %v3386, %v3414
      %3416 = vmatmul.bf16.gmra.mxu0 %v3234
      %v3417 = vpop.f32.mrf.mxu0
      %v3418 = vadd.f32 %v3389, %v3417
      %v3419 = vpop.f32.mrf.mxu0
      %v3420 = vadd.f32 %v3391, %v3419
      %3421 = vmatmul.bf16.gmra.mxu0 %v3236
      %v3422 = vpop.f32.mrf.mxu0
      %v3423 = vadd.f32 %v3394, %v3422
      %v3424 = vpop.f32.mrf.mxu0
      %v3425 = vadd.f32 %v3396, %v3424
      %3426 = vdwg.mxu0
      %v3427 = vperm.slane %v1324, 0
      %3436 = vrot.lane.b32.xlu0 %v3408, 64
      %v3437 = vpop.permute.xlu0 %3436
      %3438 = vrot.lane.b32.xlu0 %v3410, 64
      %v3439 = vpop.permute.xlu0 %3438
      %3440 = vrot.lane.b32.xlu0 %v3413, 64
      %v3441 = vpop.permute.xlu0 %3440
      %3442 = vrot.lane.b32.xlu0 %v3415, 64
      %v3443 = vpop.permute.xlu0 %3442
      %3444 = vrot.lane.b32.xlu0 %v3418, 64
      %v3445 = vpop.permute.xlu0 %3444
      %3446 = vrot.lane.b32.xlu0 %v3420, 64
      %v3447 = vpop.permute.xlu0 %3446
      %3448 = vrot.lane.b32.xlu0 %v3423, 64
      %v3449 = vpop.permute.xlu0 %3448
      %3450 = vrot.lane.b32.xlu0 %v3425, 64
      %v3451 = vpop.permute.xlu0 %3450
      %v3460 = vmul.f32 %v3427, %v3437
      %v3461 = vmul.f32 %v3427, %v3439
      %v3462 = vmul.f32 %v3427, %v3441
      %v3463 = vmul.f32 %v3427, %v3443
      %v3464 = vmul.f32 %v3427, %v3445
      %v3465 = vmul.f32 %v3427, %v3447
      %v3466 = vmul.f32 %v3427, %v3449
      %v3467 = vmul.f32 %v3427, %v3451
      %3476 = vrot.lane.b32.xlu0 %v3460, 64
      %v3477 = vpop.permute.xlu0 %3476
      %3478 = vrot.lane.b32.xlu0 %v3461, 64
      %v3479 = vpop.permute.xlu0 %3478
      %3480 = vrot.lane.b32.xlu0 %v3462, 64
      %v3481 = vpop.permute.xlu0 %3480
      %3482 = vrot.lane.b32.xlu0 %v3463, 64
      %v3483 = vpop.permute.xlu0 %3482
      %3484 = vrot.lane.b32.xlu0 %v3464, 64
      %v3485 = vpop.permute.xlu0 %3484
      %3486 = vrot.lane.b32.xlu0 %v3465, 64
      %v3487 = vpop.permute.xlu0 %3486
      %3488 = vrot.lane.b32.xlu0 %v3466, 64
      %v3489 = vpop.permute.xlu0 %3488
      %3490 = vrot.lane.b32.xlu0 %v3467, 64
      %v3491 = vpop.permute.xlu0 %3490
      %v3500 = vadd.f32 %v2751, %v3477
      %v3501 = vadd.f32 %v2752, %v3479
      %v3502 = vadd.f32 %v2753, %v3481
      %v3503 = vadd.f32 %v2754, %v3483
      %v3504 = vadd.f32 %v2755, %v3485
      %v3505 = vadd.f32 %v2756, %v3487
      %v3506 = vadd.f32 %v2757, %v3489
      %v3507 = vadd.f32 %v2758, %v3491
      %s3508 = scalar_lea.vmem %s10, 96
      %v3509 = vld [vmem:[%s3508] sm:$0xff]
      %v3510 = vld [vmem:[%s3508 + $0x8] sm:$0xf]
      %v3511 = vld [vmem:[%s3508 + $0xc] sm:$0xff]
      %v3512 = vld [vmem:[%s3508 + $0x14] sm:$0xf]
      %v3513 = vld [vmem:[%s3508 + $0x18] sm:$0xff]
      %v3514 = vld [vmem:[%s3508 + $0x20] sm:$0xf]
      %v3515 = vld [vmem:[%s3508 + $0x24] sm:$0xff]
      %v3516 = vld [vmem:[%s3508 + $0x2c] sm:$0xf]
      %v3517 = vld [vmem:[%s3508 + $0x30] sm:$0xff]
      %v3518 = vld [vmem:[%s3508 + $0x38] sm:$0xf]
      %v3519 = vld [vmem:[%s3508 + $0x3c] sm:$0xff]
      %v3520 = vld [vmem:[%s3508 + $0x44] sm:$0xf]
      %v3521 = vld [vmem:[%s3508 + $0x48] sm:$0xff]
      %v3522 = vld [vmem:[%s3508 + $0x50] sm:$0xf]
      %v3523 = vld [vmem:[%s3508 + $0x54] sm:$0xff]
      %v3524 = vld [vmem:[%s3508 + $0x5c] sm:$0xf]
      %s3525 = scalar_lea.vmem %s11, 3
      %v3526 = vld [vmem:[%s3525] sm:$0x7]
      %v3543 = vunpack.c.l.b16 %v3509
      %v3544 = vunpack.c.h.b16 %v3509
      %v3545 = vunpack.c.l.b16 %v3510
      %v3546 = vunpack.c.l.b16 %v3511
      %v3547 = vunpack.c.h.b16 %v3511
      %v3548 = vunpack.c.l.b16 %v3512
      %v3549 = vunpack.c.l.b16 %v3513
      %v3550 = vunpack.c.h.b16 %v3513
      %v3551 = vunpack.c.l.b16 %v3514
      %v3552 = vunpack.c.l.b16 %v3515
      %v3553 = vunpack.c.h.b16 %v3515
      %v3554 = vunpack.c.l.b16 %v3516
      %v3555 = vunpack.c.l.b16 %v3517
      %v3556 = vunpack.c.h.b16 %v3517
      %v3557 = vunpack.c.l.b16 %v3518
      %v3558 = vunpack.c.l.b16 %v3519
      %v3559 = vunpack.c.h.b16 %v3519
      %v3560 = vunpack.c.l.b16 %v3520
      %v3561 = vunpack.c.l.b16 %v3521
      %v3562 = vunpack.c.h.b16 %v3521
      %v3563 = vunpack.c.l.b16 %v3522
      %v3564 = vunpack.c.l.b16 %v3523
      %v3565 = vunpack.c.h.b16 %v3523
      %v3566 = vunpack.c.l.b16 %v3524
      %v3567 = vpack.c.b16 %v3546, %v3543
      %v3568 = vpack.c.b16 %v3547, %v3544
      %v3569 = vpack.c.b16 %v3548, %v3545
      %v3570 = vpack.c.b16 %v3552, %v3549
      %v3571 = vpack.c.b16 %v3553, %v3550
      %v3572 = vpack.c.b16 %v3554, %v3551
      %v3573 = vpack.c.b16 %v3558, %v3555
      %v3574 = vpack.c.b16 %v3559, %v3556
      %v3575 = vpack.c.b16 %v3560, %v3557
      %v3576 = vpack.c.b16 %v3564, %v3561
      %v3577 = vpack.c.b16 %v3565, %v3562
      %v3578 = vpack.c.b16 %v3566, %v3563
      %v3592 = vperm.slane %v3526, 0
      %v3593 = vperm.slane %v3526, 1
      %v3594 = vperm.slane %v3526, 2
      %3598 = vmatpush.bf16.msra.mxu0 0
      %3599 = vmatpush.bf16.msra.mxu0 0
      %3600 = vmatpush.bf16.msra.mxu0 0
      %3601 = vmatpush.bf16.msra.mxu0 0
      %3602 = vmatpush.bf16.msra.mxu0 %v3576
      %3603 = vmatpush.bf16.msra.mxu0 %v3573
      %3604 = vmatpush.bf16.msra.mxu0 %v3570
      %3605 = vmatpush.bf16.msra.mxu0 %v3567
      %3606 = vmatmul.bf16.gmra.mxu0 %v1286
      %v3607 = vpop.f32.mrf.mxu0
      %v3608 = vadd.f32 %v3592, %v3607
      %v3609 = vpop.f32.mrf.mxu0
      %3610 = vdwg.mxu0
      %3611 = vmatpush.bf16.msra.mxu0 0
      %3612 = vmatpush.bf16.msra.mxu0 0
      %3613 = vmatpush.bf16.msra.mxu0 0
      %3614 = vmatpush.bf16.msra.mxu0 0
      %3615 = vmatpush.bf16.msra.mxu0 %v3577
      %3616 = vmatpush.bf16.msra.mxu0 %v3574
      %3617 = vmatpush.bf16.msra.mxu0 %v3571
      %3618 = vmatpush.bf16.msra.mxu0 %v3568
      %3619 = vmatmul.bf16.gmra.mxu0 %v1286
      %v3620 = vpop.f32.mrf.mxu0
      %v3621 = vadd.f32 %v3593, %v3620
      %v3622 = vpop.f32.mrf.mxu0
      %3623 = vdwg.mxu0
      %3624 = vmatpush.bf16.msra.mxu0 0
      %3625 = vmatpush.bf16.msra.mxu0 0
      %3626 = vmatpush.bf16.msra.mxu0 0
      %3627 = vmatpush.bf16.msra.mxu0 0
      %3628 = vmatpush.bf16.msra.mxu0 %v3578
      %3629 = vmatpush.bf16.msra.mxu0 %v3575
      %3630 = vmatpush.bf16.msra.mxu0 %v3572
      %3631 = vmatpush.bf16.msra.mxu0 %v3569
      %3632 = vmatmul.bf16.gmra.mxu0 %v1286
      %v3633 = vpop.f32.mrf.mxu0
      %v3634 = vadd.f32 %v3594, %v3633
      %v3635 = vpop.f32.mrf.mxu0
      %3636 = vdwg.mxu0
      %v3637 = vsel %vm1159, %v3500, 0.0
      %3638 = vadd.xlane.f32.xlu0 %v3637
      %v3639 = vpop.xlane.xlu0 %3638
      %v3640 = vsel %vm1159, %v3501, 0.0
      %3641 = vadd.xlane.f32.xlu0 %v3640
      %v3642 = vpop.xlane.xlu0 %3641
      %v3643 = vsel %vm1159, %v3502, 0.0
      %3644 = vadd.xlane.f32.xlu0 %v3643
      %v3645 = vpop.xlane.xlu0 %3644
      %v3646 = vsel %vm1159, %v3503, 0.0
      %3647 = vadd.xlane.f32.xlu0 %v3646
      %v3648 = vpop.xlane.xlu0 %3647
      %v3649 = vsel %vm1159, %v3504, 0.0
      %3650 = vadd.xlane.f32.xlu0 %v3649
      %v3651 = vpop.xlane.xlu0 %3650
      %v3652 = vsel %vm1159, %v3505, 0.0
      %3653 = vadd.xlane.f32.xlu0 %v3652
      %v3654 = vpop.xlane.xlu0 %3653
      %v3655 = vsel %vm1159, %v3506, 0.0
      %3656 = vadd.xlane.f32.xlu0 %v3655
      %v3657 = vpop.xlane.xlu0 %3656
      %v3658 = vsel %vm1159, %v3507, 0.0
      %3659 = vadd.xlane.f32.xlu0 %v3658
      %v3660 = vpop.xlane.xlu0 %3659
      %v3661 = vmul.f32 %v3639, %v818
      %v3662 = vmul.f32 %v3642, %v818
      %v3663 = vmul.f32 %v3645, %v818
      %v3664 = vmul.f32 %v3648, %v818
      %v3665 = vmul.f32 %v3651, %v818
      %v3666 = vmul.f32 %v3654, %v818
      %v3667 = vmul.f32 %v3657, %v818
      %v3668 = vmul.f32 %v3660, %v818
      %v3669 = vsub.f32 %v3500, %v3661
      %v3670 = vsub.f32 %v3501, %v3662
      %v3671 = vsub.f32 %v3502, %v3663
      %v3672 = vsub.f32 %v3503, %v3664
      %v3673 = vsub.f32 %v3504, %v3665
      %v3674 = vsub.f32 %v3505, %v3666
      %v3675 = vsub.f32 %v3506, %v3667
      %v3676 = vsub.f32 %v3507, %v3668
      %v3677 = vmul.f32 %v3669, %v3669
      %v3678 = vmul.f32 %v3670, %v3670
      %v3679 = vmul.f32 %v3671, %v3671
      %v3680 = vmul.f32 %v3672, %v3672
      %v3681 = vmul.f32 %v3673, %v3673
      %v3682 = vmul.f32 %v3674, %v3674
      %v3683 = vmul.f32 %v3675, %v3675
      %v3684 = vmul.f32 %v3676, %v3676
      %v3685 = vsel %vm1159, %v3677, 0.0
      %3686 = vadd.xlane.f32.xlu0 %v3685
      %v3687 = vpop.xlane.xlu0 %3686
      %v3688 = vsel %vm1159, %v3678, 0.0
      %3689 = vadd.xlane.f32.xlu0 %v3688
      %v3690 = vpop.xlane.xlu0 %3689
      %v3691 = vsel %vm1159, %v3679, 0.0
      %3692 = vadd.xlane.f32.xlu0 %v3691
      %v3693 = vpop.xlane.xlu0 %3692
      %v3694 = vsel %vm1159, %v3680, 0.0
      %3695 = vadd.xlane.f32.xlu0 %v3694
      %v3696 = vpop.xlane.xlu0 %3695
      %v3697 = vsel %vm1159, %v3681, 0.0
      %3698 = vadd.xlane.f32.xlu0 %v3697
      %v3699 = vpop.xlane.xlu0 %3698
      %v3700 = vsel %vm1159, %v3682, 0.0
      %3701 = vadd.xlane.f32.xlu0 %v3700
      %v3702 = vpop.xlane.xlu0 %3701
      %v3703 = vsel %vm1159, %v3683, 0.0
      %3704 = vadd.xlane.f32.xlu0 %v3703
      %v3705 = vpop.xlane.xlu0 %3704
      %v3706 = vsel %vm1159, %v3684, 0.0
      %3707 = vadd.xlane.f32.xlu0 %v3706
      %v3708 = vpop.xlane.xlu0 %3707
      %v3709 = vmul.f32 %v3687, %v818
      %v3710 = vmul.f32 %v3690, %v818
      %v3711 = vmul.f32 %v3693, %v818
      %v3712 = vmul.f32 %v3696, %v818
      %v3713 = vmul.f32 %v3699, %v818
      %v3714 = vmul.f32 %v3702, %v818
      %v3715 = vmul.f32 %v3705, %v818
      %v3716 = vmul.f32 %v3708, %v818
      %v3717 = vadd.f32 %v3709, 1e-06
      %v3718 = vadd.f32 %v3710, 1e-06
      %v3719 = vadd.f32 %v3711, 1e-06
      %v3720 = vadd.f32 %v3712, 1e-06
      %v3721 = vadd.f32 %v3713, 1e-06
      %v3722 = vadd.f32 %v3714, 1e-06
      %v3723 = vadd.f32 %v3715, 1e-06
      %v3724 = vadd.f32 %v3716, 1e-06
      %v3725 = vrsqrt.pop %v3717
      %v3726 = vmul.f32 %v3725, %v3717
      %v3727 = vmul.f32 %v3726, %v3725
      %v3728 = vmul.f32 0.5, %v3727
      %v3729 = vsub.f32 1.5, %v3728
      %v3730 = vmul.f32 %v3725, %v3729
      %vm3731 = vweird.f32 %v3717
      %vm3732 = vweird.f32 %v3725
      %vm3733 = vmor %vm3731, %vm3732
      %v3734 = vsel %vm3733, %v3725, %v3730
      %v3735 = vrsqrt.pop %v3718
      %v3736 = vmul.f32 %v3735, %v3718
      %v3737 = vmul.f32 %v3736, %v3735
      %v3738 = vmul.f32 0.5, %v3737
      %v3739 = vsub.f32 1.5, %v3738
      %v3740 = vmul.f32 %v3735, %v3739
      %vm3741 = vweird.f32 %v3718
      %vm3742 = vweird.f32 %v3735
      %vm3743 = vmor %vm3741, %vm3742
      %v3744 = vsel %vm3743, %v3735, %v3740
      %v3745 = vrsqrt.pop %v3719
      %v3746 = vmul.f32 %v3745, %v3719
      %v3747 = vmul.f32 %v3746, %v3745
      %v3748 = vmul.f32 0.5, %v3747
      %v3749 = vsub.f32 1.5, %v3748
      %v3750 = vmul.f32 %v3745, %v3749
      %vm3751 = vweird.f32 %v3719
      %vm3752 = vweird.f32 %v3745
      %vm3753 = vmor %vm3751, %vm3752
      %v3754 = vsel %vm3753, %v3745, %v3750
      %v3755 = vrsqrt.pop %v3720
      %v3756 = vmul.f32 %v3755, %v3720
      %v3757 = vmul.f32 %v3756, %v3755
      %v3758 = vmul.f32 0.5, %v3757
      %v3759 = vsub.f32 1.5, %v3758
      %v3760 = vmul.f32 %v3755, %v3759
      %vm3761 = vweird.f32 %v3720
      %vm3762 = vweird.f32 %v3755
      %vm3763 = vmor %vm3761, %vm3762
      %v3764 = vsel %vm3763, %v3755, %v3760
      %v3765 = vrsqrt.pop %v3721
      %v3766 = vmul.f32 %v3765, %v3721
      %v3767 = vmul.f32 %v3766, %v3765
      %v3768 = vmul.f32 0.5, %v3767
      %v3769 = vsub.f32 1.5, %v3768
      %v3770 = vmul.f32 %v3765, %v3769
      %vm3771 = vweird.f32 %v3721
      %vm3772 = vweird.f32 %v3765
      %vm3773 = vmor %vm3771, %vm3772
      %v3774 = vsel %vm3773, %v3765, %v3770
      %v3775 = vrsqrt.pop %v3722
      %v3776 = vmul.f32 %v3775, %v3722
      %v3777 = vmul.f32 %v3776, %v3775
      %v3778 = vmul.f32 0.5, %v3777
      %v3779 = vsub.f32 1.5, %v3778
      %v3780 = vmul.f32 %v3775, %v3779
      %vm3781 = vweird.f32 %v3722
      %vm3782 = vweird.f32 %v3775
      %vm3783 = vmor %vm3781, %vm3782
      %v3784 = vsel %vm3783, %v3775, %v3780
      %v3785 = vrsqrt.pop %v3723
      %v3786 = vmul.f32 %v3785, %v3723
      %v3787 = vmul.f32 %v3786, %v3785
      %v3788 = vmul.f32 0.5, %v3787
      %v3789 = vsub.f32 1.5, %v3788
      %v3790 = vmul.f32 %v3785, %v3789
      %vm3791 = vweird.f32 %v3723
      %vm3792 = vweird.f32 %v3785
      %vm3793 = vmor %vm3791, %vm3792
      %v3794 = vsel %vm3793, %v3785, %v3790
      %v3795 = vrsqrt.pop %v3724
      %v3796 = vmul.f32 %v3795, %v3724
      %v3797 = vmul.f32 %v3796, %v3795
      %v3798 = vmul.f32 0.5, %v3797
      %v3799 = vsub.f32 1.5, %v3798
      %v3800 = vmul.f32 %v3795, %v3799
      %vm3801 = vweird.f32 %v3724
      %vm3802 = vweird.f32 %v3795
      %vm3803 = vmor %vm3801, %vm3802
      %v3804 = vsel %vm3803, %v3795, %v3800
      %v3805 = vmul.f32 %v3669, %v3734
      %v3806 = vmul.f32 %v3670, %v3744
      %v3807 = vmul.f32 %v3671, %v3754
      %v3808 = vmul.f32 %v3672, %v3764
      %v3809 = vmul.f32 %v3673, %v3774
      %v3810 = vmul.f32 %v3674, %v3784
      %v3811 = vmul.f32 %v3675, %v3794
      %v3812 = vmul.f32 %v3676, %v3804
      %v3813 = vadd.f32 %v3608, 1.0
      %v3814 = vperm.slane %v3813, 0
      %3816 = vrot.lane.b32.xlu0 %v3814, 64
      %v3817 = vpop.permute.xlu0 %3816
      %v3819 = vmul.f32 %v3805, %v3817
      %v3820 = vmul.f32 %v3806, %v3817
      %v3821 = vmul.f32 %v3807, %v3817
      %v3822 = vmul.f32 %v3808, %v3817
      %v3823 = vmul.f32 %v3809, %v3817
      %v3824 = vmul.f32 %v3810, %v3817
      %v3825 = vmul.f32 %v3811, %v3817
      %v3826 = vmul.f32 %v3812, %v3817
      %v3827 = vperm.slane %v3608, 0
      %v3828 = vadd.f32 %v3819, %v3827
      %v3829 = vadd.f32 %v3820, %v3827
      %v3830 = vadd.f32 %v3821, %v3827
      %v3831 = vadd.f32 %v3822, %v3827
      %v3832 = vadd.f32 %v3823, %v3827
      %v3833 = vadd.f32 %v3824, %v3827
      %v3834 = vadd.f32 %v3825, %v3827
      %v3835 = vadd.f32 %v3826, %v3827
      %v3836 = vpack.c.bf16 %v3829, %v3828
      %v3837 = vpack.c.bf16 %v3831, %v3830
      %v3838 = vpack.c.bf16 %v3833, %v3832
      %v3839 = vpack.c.bf16 %v3835, %v3834
      %s3840 = scalar_lea.vmem %s12, 64
      %v3841 = vld [vmem:[%s3840] sm:$0xff]
      %v3842 = vld [vmem:[%s3840 + $0x8] sm:$0xff]
      %v3843 = vld [vmem:[%s3840 + $0x10] sm:$0xff]
      %v3844 = vld [vmem:[%s3840 + $0x18] sm:$0xff]
      %v3845 = vld [vmem:[%s3840 + $0x20] sm:$0xff]
      %v3846 = vld [vmem:[%s3840 + $0x28] sm:$0xff]
      %v3847 = vld [vmem:[%s3840 + $0x30] sm:$0xff]
      %v3848 = vld [vmem:[%s3840 + $0x38] sm:$0xff]
      %s3849 = scalar_lea.vmem %s13, 2
      %v3850 = vld [vmem:[%s3849] sm:$0x3]
      %v3852 = vperm.slane %v3850, 0
      %v3853 = vperm.slane %v3850, 1
      %v3864 = vunpack.c.l.b16 %v3841
      %v3865 = vunpack.c.h.b16 %v3841
      %v3866 = vunpack.c.l.b16 %v3842
      %v3867 = vunpack.c.h.b16 %v3842
      %v3868 = vunpack.c.l.b16 %v3843
      %v3869 = vunpack.c.h.b16 %v3843
      %v3870 = vunpack.c.l.b16 %v3844
      %v3871 = vunpack.c.h.b16 %v3844
      %v3872 = vunpack.c.l.b16 %v3845
      %v3873 = vunpack.c.h.b16 %v3845
      %v3874 = vunpack.c.l.b16 %v3846
      %v3875 = vunpack.c.h.b16 %v3846
      %v3876 = vunpack.c.l.b16 %v3847
      %v3877 = vunpack.c.h.b16 %v3847
      %v3878 = vunpack.c.l.b16 %v3848
      %v3879 = vunpack.c.h.b16 %v3848
      %v3880 = vpack.c.b16 %v3866, %v3864
      %v3881 = vpack.c.b16 %v3867, %v3865
      %v3882 = vpack.c.b16 %v3870, %v3868
      %v3883 = vpack.c.b16 %v3871, %v3869
      %v3884 = vpack.c.b16 %v3874, %v3872
      %v3885 = vpack.c.b16 %v3875, %v3873
      %v3886 = vpack.c.b16 %v3878, %v3876
      %v3887 = vpack.c.b16 %v3879, %v3877
      %v3897 = vsel %vm1159, %v3836, 0
      %v3900 = vsel %vm1159, %v3837, 0
      %v3903 = vsel %vm1159, %v3838, 0
      %v3906 = vsel %vm1159, %v3839, 0
      %3908 = vmatpush.bf16.msra.mxu0 0
      %3909 = vmatpush.bf16.msra.mxu0 0
      %3910 = vmatpush.bf16.msra.mxu0 0
      %3911 = vmatpush.bf16.msra.mxu0 0
      %3912 = vmatpush.bf16.msra.mxu0 %v3886
      %3913 = vmatpush.bf16.msra.mxu0 %v3884
      %3914 = vmatpush.bf16.msra.mxu0 %v3882
      %3915 = vmatpush.bf16.msra.mxu0 %v3880
      %3916 = vmatmul.bf16.gmra.mxu0 %v3897
      %v3917 = vpop.f32.mrf.mxu0
      %v3918 = vadd.f32 %v3852, %v3917
      %v3919 = vpop.f32.mrf.mxu0
      %v3920 = vadd.f32 %v3852, %v3919
      %3921 = vmatmul.bf16.gmra.mxu0 %v3900
      %v3922 = vpop.f32.mrf.mxu0
      %v3923 = vadd.f32 %v3852, %v3922
      %v3924 = vpop.f32.mrf.mxu0
      %v3925 = vadd.f32 %v3852, %v3924
      %3926 = vmatmul.bf16.gmra.mxu0 %v3903
      %v3927 = vpop.f32.mrf.mxu0
      %v3928 = vadd.f32 %v3852, %v3927
      %v3929 = vpop.f32.mrf.mxu0
      %v3930 = vadd.f32 %v3852, %v3929
      %3931 = vmatmul.bf16.gmra.mxu0 %v3906
      %v3932 = vpop.f32.mrf.mxu0
      %v3933 = vadd.f32 %v3852, %v3932
      %v3934 = vpop.f32.mrf.mxu0
      %v3935 = vadd.f32 %v3852, %v3934
      %3936 = vdwg.mxu0
      %3937 = vmatpush.bf16.msra.mxu0 0
      %3938 = vmatpush.bf16.msra.mxu0 0
      %3939 = vmatpush.bf16.msra.mxu0 0
      %3940 = vmatpush.bf16.msra.mxu0 0
      %3941 = vmatpush.bf16.msra.mxu0 %v3887
      %3942 = vmatpush.bf16.msra.mxu0 %v3885
      %3943 = vmatpush.bf16.msra.mxu0 %v3883
      %3944 = vmatpush.bf16.msra.mxu0 %v3881
      %3945 = vmatmul.bf16.gmra.mxu0 %v3897
      %v3946 = vpop.f32.mrf.mxu0
      %v3947 = vadd.f32 %v3853, %v3946
      %v3948 = vpop.f32.mrf.mxu0
      %v3949 = vadd.f32 %v3853, %v3948
      %3950 = vmatmul.bf16.gmra.mxu0 %v3900
      %v3951 = vpop.f32.mrf.mxu0
      %v3952 = vadd.f32 %v3853, %v3951
      %v3953 = vpop.f32.mrf.mxu0
      %v3954 = vadd.f32 %v3853, %v3953
      %3955 = vmatmul.bf16.gmra.mxu0 %v3903
      %v3956 = vpop.f32.mrf.mxu0
      %v3957 = vadd.f32 %v3853, %v3956
      %v3958 = vpop.f32.mrf.mxu0
      %v3959 = vadd.f32 %v3853, %v3958
      %3960 = vmatmul.bf16.gmra.mxu0 %v3906
      %v3961 = vpop.f32.mrf.mxu0
      %v3962 = vadd.f32 %v3853, %v3961
      %v3963 = vpop.f32.mrf.mxu0
      %v3964 = vadd.f32 %v3853, %v3963
      %3965 = vdwg.mxu0
      %v3966 = vpack.c.bf16 %v3920, %v3918
      %v3967 = vpack.c.bf16 %v3925, %v3923
      %v3968 = vpack.c.bf16 %v3930, %v3928
      %v3969 = vpack.c.bf16 %v3935, %v3933
      %v3970 = vpack.c.bf16 %v3949, %v3947
      %v3971 = vpack.c.bf16 %v3954, %v3952
      %v3972 = vpack.c.bf16 %v3959, %v3957
      %v3973 = vpack.c.bf16 %v3964, %v3962
      %3978 = vrot.lane.b32.xlu0 %v3966, 64
      %v3979 = vpop.permute.xlu0 %3978
      %3980 = vrot.lane.b32.xlu0 %v3967, 64
      %v3981 = vpop.permute.xlu0 %3980
      %3982 = vrot.lane.b32.xlu0 %v3968, 64
      %v3983 = vpop.permute.xlu0 %3982
      %3984 = vrot.lane.b32.xlu0 %v3969, 64
      %v3985 = vpop.permute.xlu0 %3984
      %v3987 = vsel %vm1674, %v3966, 0
      %v3990 = vsel %vm1674, %v3967, 0
      %v3993 = vsel %vm1674, %v3968, 0
      %v3996 = vsel %vm1674, %v3969, 0
      %v3999 = vsel %vm1674, %v3979, 0
      %v4002 = vsel %vm1674, %v3981, 0
      %v4005 = vsel %vm1674, %v3983, 0
      %v4008 = vsel %vm1674, %v3985, 0
      %4010 = vmatpush.bf16.xpose.msra.mxu0 0
      %4011 = vmatpush.bf16.xpose.msra.mxu0 0
      %4012 = vmatpush.bf16.xpose.msra.mxu0 0
      %4013 = vmatpush.bf16.xpose.msra.mxu0 0
      %4014 = vmatpush.bf16.xpose.msra.mxu0 %v4008
      %4015 = vmatpush.bf16.xpose.msra.mxu0 %v4005
      %4016 = vmatpush.bf16.xpose.msra.mxu0 %v4002
      %4017 = vmatpush.bf16.xpose.msra.mxu0 %v3999
      %4018 = vmatmul.bf16.gmra.mxu0 %v3987
      %v4019 = vpop.f32.mrf.mxu0
      %v4020 = vadd.f32 0.0, %v4019
      %v4021 = vpop.f32.mrf.mxu0
      %v4022 = vadd.f32 0.0, %v4021
      %4023 = vmatmul.bf16.gmra.mxu0 %v3990
      %v4024 = vpop.f32.mrf.mxu0
      %v4025 = vadd.f32 0.0, %v4024
      %v4026 = vpop.f32.mrf.mxu0
      %v4027 = vadd.f32 0.0, %v4026
      %4028 = vmatmul.bf16.gmra.mxu0 %v3993
      %v4029 = vpop.f32.mrf.mxu0
      %v4030 = vadd.f32 0.0, %v4029
      %v4031 = vpop.f32.mrf.mxu0
      %v4032 = vadd.f32 0.0, %v4031
      %4033 = vmatmul.bf16.gmra.mxu0 %v3996
      %v4034 = vpop.f32.mrf.mxu0
      %v4035 = vadd.f32 0.0, %v4034
      %v4036 = vpop.f32.mrf.mxu0
      %v4037 = vadd.f32 0.0, %v4036
      %4038 = vdwg.mxu0
      %v4039 = vmul.f32 %v4020, 0.25
      %v4040 = vmul.f32 %v4022, 0.25
      %v4041 = vmul.f32 %v4025, 0.25
      %v4042 = vmul.f32 %v4027, 0.25
      %v4043 = vmul.f32 %v4030, 0.25
      %v4044 = vmul.f32 %v4032, 0.25
      %v4045 = vmul.f32 %v4035, 0.25
      %v4046 = vmul.f32 %v4037, 0.25
      %v4047 = vsel %vm1159, %v4039, -inf
      %4048 = vmax.xlane.f32.xlu0 %v4047
      %v4049 = vpop.xlane.xlu0 %4048
      %v4050 = vsel %vm1159, %v4040, -inf
      %4051 = vmax.xlane.f32.xlu0 %v4050
      %v4052 = vpop.xlane.xlu0 %4051
      %v4053 = vsel %vm1159, %v4041, -inf
      %4054 = vmax.xlane.f32.xlu0 %v4053
      %v4055 = vpop.xlane.xlu0 %4054
      %v4056 = vsel %vm1159, %v4042, -inf
      %4057 = vmax.xlane.f32.xlu0 %v4056
      %v4058 = vpop.xlane.xlu0 %4057
      %v4059 = vsel %vm1159, %v4043, -inf
      %4060 = vmax.xlane.f32.xlu0 %v4059
      %v4061 = vpop.xlane.xlu0 %4060
      %v4062 = vsel %vm1159, %v4044, -inf
      %4063 = vmax.xlane.f32.xlu0 %v4062
      %v4064 = vpop.xlane.xlu0 %4063
      %v4065 = vsel %vm1159, %v4045, -inf
      %4066 = vmax.xlane.f32.xlu0 %v4065
      %v4067 = vpop.xlane.xlu0 %4066
      %v4068 = vsel %vm1159, %v4046, -inf
      %4069 = vmax.xlane.f32.xlu0 %v4068
      %v4070 = vpop.xlane.xlu0 %4069
      %v4071 = vsub.f32 %v4039, %v4049
      %v4072 = vsub.f32 %v4040, %v4052
      %v4073 = vsub.f32 %v4041, %v4055
      %v4074 = vsub.f32 %v4042, %v4058
      %v4075 = vsub.f32 %v4043, %v4061
      %v4076 = vsub.f32 %v4044, %v4064
      %v4077 = vsub.f32 %v4045, %v4067
      %v4078 = vsub.f32 %v4046, %v4070
      %v4079 = vmul.f32 %v4071, 1.442695
      %v4080 = vpow.pop %v4079
      %v4081 = vmul.f32 %v4072, 1.442695
      %v4082 = vpow.pop %v4081
      %v4083 = vmul.f32 %v4073, 1.442695
      %v4084 = vpow.pop %v4083
      %v4085 = vmul.f32 %v4074, 1.442695
      %v4086 = vpow.pop %v4085
      %v4087 = vmul.f32 %v4075, 1.442695
      %v4088 = vpow.pop %v4087
      %v4089 = vmul.f32 %v4076, 1.442695
      %v4090 = vpow.pop %v4089
      %v4091 = vmul.f32 %v4077, 1.442695
      %v4092 = vpow.pop %v4091
      %v4093 = vmul.f32 %v4078, 1.442695
      %v4094 = vpow.pop %v4093
      %v4095 = vsel %vm1159, %v4080, 0.0
      %4096 = vadd.xlane.f32.xlu0 %v4095
      %v4097 = vpop.xlane.xlu0 %4096
      %v4098 = vsel %vm1159, %v4082, 0.0
      %4099 = vadd.xlane.f32.xlu0 %v4098
      %v4100 = vpop.xlane.xlu0 %4099
      %v4101 = vsel %vm1159, %v4084, 0.0
      %4102 = vadd.xlane.f32.xlu0 %v4101
      %v4103 = vpop.xlane.xlu0 %4102
      %v4104 = vsel %vm1159, %v4086, 0.0
      %4105 = vadd.xlane.f32.xlu0 %v4104
      %v4106 = vpop.xlane.xlu0 %4105
      %v4107 = vsel %vm1159, %v4088, 0.0
      %4108 = vadd.xlane.f32.xlu0 %v4107
      %v4109 = vpop.xlane.xlu0 %4108
      %v4110 = vsel %vm1159, %v4090, 0.0
      %4111 = vadd.xlane.f32.xlu0 %v4110
      %v4112 = vpop.xlane.xlu0 %4111
      %v4113 = vsel %vm1159, %v4092, 0.0
      %4114 = vadd.xlane.f32.xlu0 %v4113
      %v4115 = vpop.xlane.xlu0 %4114
      %v4116 = vsel %vm1159, %v4094, 0.0
      %4117 = vadd.xlane.f32.xlu0 %v4116
      %v4118 = vpop.xlane.xlu0 %4117
      %v4119 = vrcp.pop %v4097
      %v4120 = vrcp.pop %v4100
      %v4121 = vrcp.pop %v4103
      %v4122 = vrcp.pop %v4106
      %v4123 = vrcp.pop %v4109
      %v4124 = vrcp.pop %v4112
      %v4125 = vrcp.pop %v4115
      %v4126 = vrcp.pop %v4118
      %v4127 = vmul.f32 %v4080, %v4119
      %v4128 = vmul.f32 %v4082, %v4120
      %v4129 = vmul.f32 %v4084, %v4121
      %v4130 = vmul.f32 %v4086, %v4122
      %v4131 = vmul.f32 %v4088, %v4123
      %v4132 = vmul.f32 %v4090, %v4124
      %v4133 = vmul.f32 %v4092, %v4125
      %v4134 = vmul.f32 %v4094, %v4126
      %v4135 = vpack.c.bf16 %v4128, %v4127
      %v4136 = vpack.c.bf16 %v4130, %v4129
      %v4137 = vpack.c.bf16 %v4132, %v4131
      %v4138 = vpack.c.bf16 %v4134, %v4133
      %v4140 = vsel %vm1159, %v4135, 0
      %v4143 = vsel %vm1159, %v4136, 0
      %v4146 = vsel %vm1159, %v4137, 0
      %v4149 = vsel %vm1159, %v4138, 0
      %4151 = vmatpush.bf16.msra.mxu0 0
      %4152 = vmatpush.bf16.msra.mxu0 0
      %4153 = vmatpush.bf16.msra.mxu0 0
      %4154 = vmatpush.bf16.msra.mxu0 0
      %4155 = vmatpush.bf16.msra.mxu0 %v3973
      %4156 = vmatpush.bf16.msra.mxu0 %v3972
      %4157 = vmatpush.bf16.msra.mxu0 %v3971
      %4158 = vmatpush.bf16.msra.mxu0 %v3970
      %4159 = vmatmul.bf16.gmra.mxu0 %v4140
      %v4160 = vpop.f32.mrf.mxu0
      %v4161 = vadd.f32 0.0, %v4160
      %v4162 = vpop.f32.mrf.mxu0
      %v4163 = vadd.f32 0.0, %v4162
      %4164 = vmatmul.bf16.gmra.mxu0 %v4143
      %v4165 = vpop.f32.mrf.mxu0
      %v4166 = vadd.f32 0.0, %v4165
      %v4167 = vpop.f32.mrf.mxu0
      %v4168 = vadd.f32 0.0, %v4167
      %4169 = vmatmul.bf16.gmra.mxu0 %v4146
      %v4170 = vpop.f32.mrf.mxu0
      %v4171 = vadd.f32 0.0, %v4170
      %v4172 = vpop.f32.mrf.mxu0
      %v4173 = vadd.f32 0.0, %v4172
      %4174 = vmatmul.bf16.gmra.mxu0 %v4149
      %v4175 = vpop.f32.mrf.mxu0
      %v4176 = vadd.f32 0.0, %v4175
      %v4177 = vpop.f32.mrf.mxu0
      %v4178 = vadd.f32 0.0, %v4177
      %4179 = vdwg.mxu0
      %4180 = vrot.lane.b32.xlu0 %v3966, 112
      %v4181 = vpop.permute.xlu0 %4180
      %4182 = vrot.lane.b32.xlu0 %v3967, 112
      %v4183 = vpop.permute.xlu0 %4182
      %4184 = vrot.lane.b32.xlu0 %v3968, 112
      %v4185 = vpop.permute.xlu0 %4184
      %4186 = vrot.lane.b32.xlu0 %v3969, 112
      %v4187 = vpop.permute.xlu0 %4186
      %4188 = vrot.lane.b32.xlu0 %v3966, 48
      %v4189 = vpop.permute.xlu0 %4188
      %4190 = vrot.lane.b32.xlu0 %v3967, 48
      %v4191 = vpop.permute.xlu0 %4190
      %4192 = vrot.lane.b32.xlu0 %v3968, 48
      %v4193 = vpop.permute.xlu0 %4192
      %4194 = vrot.lane.b32.xlu0 %v3969, 48
      %v4195 = vpop.permute.xlu0 %4194
      %v4197 = vsel %vm1674, %v4181, 0
      %v4200 = vsel %vm1674, %v4183, 0
      %v4203 = vsel %vm1674, %v4185, 0
      %v4206 = vsel %vm1674, %v4187, 0
      %v4209 = vsel %vm1674, %v4189, 0
      %v4212 = vsel %vm1674, %v4191, 0
      %v4215 = vsel %vm1674, %v4193, 0
      %v4218 = vsel %vm1674, %v4195, 0
      %4220 = vmatpush.bf16.xpose.msra.mxu0 0
      %4221 = vmatpush.bf16.xpose.msra.mxu0 0
      %4222 = vmatpush.bf16.xpose.msra.mxu0 0
      %4223 = vmatpush.bf16.xpose.msra.mxu0 0
      %4224 = vmatpush.bf16.xpose.msra.mxu0 %v4218
      %4225 = vmatpush.bf16.xpose.msra.mxu0 %v4215
      %4226 = vmatpush.bf16.xpose.msra.mxu0 %v4212
      %4227 = vmatpush.bf16.xpose.msra.mxu0 %v4209
      %4228 = vmatmul.bf16.gmra.mxu0 %v4197
      %v4229 = vpop.f32.mrf.mxu0
      %v4230 = vadd.f32 0.0, %v4229
      %v4231 = vpop.f32.mrf.mxu0
      %v4232 = vadd.f32 0.0, %v4231
      %4233 = vmatmul.bf16.gmra.mxu0 %v4200
      %v4234 = vpop.f32.mrf.mxu0
      %v4235 = vadd.f32 0.0, %v4234
      %v4236 = vpop.f32.mrf.mxu0
      %v4237 = vadd.f32 0.0, %v4236
      %4238 = vmatmul.bf16.gmra.mxu0 %v4203
      %v4239 = vpop.f32.mrf.mxu0
      %v4240 = vadd.f32 0.0, %v4239
      %v4241 = vpop.f32.mrf.mxu0
      %v4242 = vadd.f32 0.0, %v4241
      %4243 = vmatmul.bf16.gmra.mxu0 %v4206
      %v4244 = vpop.f32.mrf.mxu0
      %v4245 = vadd.f32 0.0, %v4244
      %v4246 = vpop.f32.mrf.mxu0
      %v4247 = vadd.f32 0.0, %v4246
      %4248 = vdwg.mxu0
      %v4249 = vmul.f32 %v4230, 0.25
      %v4250 = vmul.f32 %v4232, 0.25
      %v4251 = vmul.f32 %v4235, 0.25
      %v4252 = vmul.f32 %v4237, 0.25
      %v4253 = vmul.f32 %v4240, 0.25
      %v4254 = vmul.f32 %v4242, 0.25
      %v4255 = vmul.f32 %v4245, 0.25
      %v4256 = vmul.f32 %v4247, 0.25
      %v4257 = vsel %vm1159, %v4249, -inf
      %4258 = vmax.xlane.f32.xlu0 %v4257
      %v4259 = vpop.xlane.xlu0 %4258
      %v4260 = vsel %vm1159, %v4250, -inf
      %4261 = vmax.xlane.f32.xlu0 %v4260
      %v4262 = vpop.xlane.xlu0 %4261
      %v4263 = vsel %vm1159, %v4251, -inf
      %4264 = vmax.xlane.f32.xlu0 %v4263
      %v4265 = vpop.xlane.xlu0 %4264
      %v4266 = vsel %vm1159, %v4252, -inf
      %4267 = vmax.xlane.f32.xlu0 %v4266
      %v4268 = vpop.xlane.xlu0 %4267
      %v4269 = vsel %vm1159, %v4253, -inf
      %4270 = vmax.xlane.f32.xlu0 %v4269
      %v4271 = vpop.xlane.xlu0 %4270
      %v4272 = vsel %vm1159, %v4254, -inf
      %4273 = vmax.xlane.f32.xlu0 %v4272
      %v4274 = vpop.xlane.xlu0 %4273
      %v4275 = vsel %vm1159, %v4255, -inf
      %4276 = vmax.xlane.f32.xlu0 %v4275
      %v4277 = vpop.xlane.xlu0 %4276
      %v4278 = vsel %vm1159, %v4256, -inf
      %4279 = vmax.xlane.f32.xlu0 %v4278
      %v4280 = vpop.xlane.xlu0 %4279
      %v4281 = vsub.f32 %v4249, %v4259
      %v4282 = vsub.f32 %v4250, %v4262
      %v4283 = vsub.f32 %v4251, %v4265
      %v4284 = vsub.f32 %v4252, %v4268
      %v4285 = vsub.f32 %v4253, %v4271
      %v4286 = vsub.f32 %v4254, %v4274
      %v4287 = vsub.f32 %v4255, %v4277
      %v4288 = vsub.f32 %v4256, %v4280
      %v4289 = vmul.f32 %v4281, 1.442695
      %v4290 = vpow.pop %v4289
      %v4291 = vmul.f32 %v4282, 1.442695
      %v4292 = vpow.pop %v4291
      %v4293 = vmul.f32 %v4283, 1.442695
      %v4294 = vpow.pop %v4293
      %v4295 = vmul.f32 %v4284, 1.442695
      %v4296 = vpow.pop %v4295
      %v4297 = vmul.f32 %v4285, 1.442695
      %v4298 = vpow.pop %v4297
      %v4299 = vmul.f32 %v4286, 1.442695
      %v4300 = vpow.pop %v4299
      %v4301 = vmul.f32 %v4287, 1.442695
      %v4302 = vpow.pop %v4301
      %v4303 = vmul.f32 %v4288, 1.442695
      %v4304 = vpow.pop %v4303
      %v4305 = vsel %vm1159, %v4290, 0.0
      %4306 = vadd.xlane.f32.xlu0 %v4305
      %v4307 = vpop.xlane.xlu0 %4306
      %v4308 = vsel %vm1159, %v4292, 0.0
      %4309 = vadd.xlane.f32.xlu0 %v4308
      %v4310 = vpop.xlane.xlu0 %4309
      %v4311 = vsel %vm1159, %v4294, 0.0
      %4312 = vadd.xlane.f32.xlu0 %v4311
      %v4313 = vpop.xlane.xlu0 %4312
      %v4314 = vsel %vm1159, %v4296, 0.0
      %4315 = vadd.xlane.f32.xlu0 %v4314
      %v4316 = vpop.xlane.xlu0 %4315
      %v4317 = vsel %vm1159, %v4298, 0.0
      %4318 = vadd.xlane.f32.xlu0 %v4317
      %v4319 = vpop.xlane.xlu0 %4318
      %v4320 = vsel %vm1159, %v4300, 0.0
      %4321 = vadd.xlane.f32.xlu0 %v4320
      %v4322 = vpop.xlane.xlu0 %4321
      %v4323 = vsel %vm1159, %v4302, 0.0
      %4324 = vadd.xlane.f32.xlu0 %v4323
      %v4325 = vpop.xlane.xlu0 %4324
      %v4326 = vsel %vm1159, %v4304, 0.0
      %4327 = vadd.xlane.f32.xlu0 %v4326
      %v4328 = vpop.xlane.xlu0 %4327
      %v4329 = vrcp.pop %v4307
      %v4330 = vrcp.pop %v4310
      %v4331 = vrcp.pop %v4313
      %v4332 = vrcp.pop %v4316
      %v4333 = vrcp.pop %v4319
      %v4334 = vrcp.pop %v4322
      %v4335 = vrcp.pop %v4325
      %v4336 = vrcp.pop %v4328
      %v4337 = vmul.f32 %v4290, %v4329
      %v4338 = vmul.f32 %v4292, %v4330
      %v4339 = vmul.f32 %v4294, %v4331
      %v4340 = vmul.f32 %v4296, %v4332
      %v4341 = vmul.f32 %v4298, %v4333
      %v4342 = vmul.f32 %v4300, %v4334
      %v4343 = vmul.f32 %v4302, %v4335
      %v4344 = vmul.f32 %v4304, %v4336
      %v4345 = vpack.c.bf16 %v4338, %v4337
      %v4346 = vpack.c.bf16 %v4340, %v4339
      %v4347 = vpack.c.bf16 %v4342, %v4341
      %v4348 = vpack.c.bf16 %v4344, %v4343
      %4353 = vrot.lane.b32.xlu0 %v3970, 112
      %v4354 = vpop.permute.xlu0 %4353
      %4355 = vrot.lane.b32.xlu0 %v3971, 112
      %v4356 = vpop.permute.xlu0 %4355
      %4357 = vrot.lane.b32.xlu0 %v3972, 112
      %v4358 = vpop.permute.xlu0 %4357
      %4359 = vrot.lane.b32.xlu0 %v3973, 112
      %v4360 = vpop.permute.xlu0 %4359
      %v4366 = vsel %vm1159, %v4345, 0
      %v4369 = vsel %vm1159, %v4346, 0
      %v4372 = vsel %vm1159, %v4347, 0
      %v4375 = vsel %vm1159, %v4348, 0
      %4377 = vmatpush.bf16.msra.mxu0 0
      %4378 = vmatpush.bf16.msra.mxu0 0
      %4379 = vmatpush.bf16.msra.mxu0 0
      %4380 = vmatpush.bf16.msra.mxu0 0
      %4381 = vmatpush.bf16.msra.mxu0 %v4360
      %4382 = vmatpush.bf16.msra.mxu0 %v4358
      %4383 = vmatpush.bf16.msra.mxu0 %v4356
      %4384 = vmatpush.bf16.msra.mxu0 %v4354
      %4385 = vmatmul.bf16.gmra.mxu0 %v4366
      %v4386 = vpop.f32.mrf.mxu0
      %v4387 = vadd.f32 0.0, %v4386
      %v4388 = vpop.f32.mrf.mxu0
      %v4389 = vadd.f32 0.0, %v4388
      %4390 = vmatmul.bf16.gmra.mxu0 %v4369
      %v4391 = vpop.f32.mrf.mxu0
      %v4392 = vadd.f32 0.0, %v4391
      %v4393 = vpop.f32.mrf.mxu0
      %v4394 = vadd.f32 0.0, %v4393
      %4395 = vmatmul.bf16.gmra.mxu0 %v4372
      %v4396 = vpop.f32.mrf.mxu0
      %v4397 = vadd.f32 0.0, %v4396
      %v4398 = vpop.f32.mrf.mxu0
      %v4399 = vadd.f32 0.0, %v4398
      %4400 = vmatmul.bf16.gmra.mxu0 %v4375
      %v4401 = vpop.f32.mrf.mxu0
      %v4402 = vadd.f32 0.0, %v4401
      %v4403 = vpop.f32.mrf.mxu0
      %v4404 = vadd.f32 0.0, %v4403
      %4405 = vdwg.mxu0
      %4406 = vrot.lane.b32.xlu0 %v3966, 96
      %v4407 = vpop.permute.xlu0 %4406
      %4408 = vrot.lane.b32.xlu0 %v3967, 96
      %v4409 = vpop.permute.xlu0 %4408
      %4410 = vrot.lane.b32.xlu0 %v3968, 96
      %v4411 = vpop.permute.xlu0 %4410
      %4412 = vrot.lane.b32.xlu0 %v3969, 96
      %v4413 = vpop.permute.xlu0 %4412
      %4414 = vrot.lane.b32.xlu0 %v3966, 32
      %v4415 = vpop.permute.xlu0 %4414
      %4416 = vrot.lane.b32.xlu0 %v3967, 32
      %v4417 = vpop.permute.xlu0 %4416
      %4418 = vrot.lane.b32.xlu0 %v3968, 32
      %v4419 = vpop.permute.xlu0 %4418
      %4420 = vrot.lane.b32.xlu0 %v3969, 32
      %v4421 = vpop.permute.xlu0 %4420
      %v4423 = vsel %vm1674, %v4407, 0
      %v4426 = vsel %vm1674, %v4409, 0
      %v4429 = vsel %vm1674, %v4411, 0
      %v4432 = vsel %vm1674, %v4413, 0
      %v4435 = vsel %vm1674, %v4415, 0
      %v4438 = vsel %vm1674, %v4417, 0
      %v4441 = vsel %vm1674, %v4419, 0
      %v4444 = vsel %vm1674, %v4421, 0
      %4446 = vmatpush.bf16.xpose.msra.mxu0 0
      %4447 = vmatpush.bf16.xpose.msra.mxu0 0
      %4448 = vmatpush.bf16.xpose.msra.mxu0 0
      %4449 = vmatpush.bf16.xpose.msra.mxu0 0
      %4450 = vmatpush.bf16.xpose.msra.mxu0 %v4444
      %4451 = vmatpush.bf16.xpose.msra.mxu0 %v4441
      %4452 = vmatpush.bf16.xpose.msra.mxu0 %v4438
      %4453 = vmatpush.bf16.xpose.msra.mxu0 %v4435
      %4454 = vmatmul.bf16.gmra.mxu0 %v4423
      %v4455 = vpop.f32.mrf.mxu0
      %v4456 = vadd.f32 0.0, %v4455
      %v4457 = vpop.f32.mrf.mxu0
      %v4458 = vadd.f32 0.0, %v4457
      %4459 = vmatmul.bf16.gmra.mxu0 %v4426
      %v4460 = vpop.f32.mrf.mxu0
      %v4461 = vadd.f32 0.0, %v4460
      %v4462 = vpop.f32.mrf.mxu0
      %v4463 = vadd.f32 0.0, %v4462
      %4464 = vmatmul.bf16.gmra.mxu0 %v4429
      %v4465 = vpop.f32.mrf.mxu0
      %v4466 = vadd.f32 0.0, %v4465
      %v4467 = vpop.f32.mrf.mxu0
      %v4468 = vadd.f32 0.0, %v4467
      %4469 = vmatmul.bf16.gmra.mxu0 %v4432
      %v4470 = vpop.f32.mrf.mxu0
      %v4471 = vadd.f32 0.0, %v4470
      %v4472 = vpop.f32.mrf.mxu0
      %v4473 = vadd.f32 0.0, %v4472
      %4474 = vdwg.mxu0
      %v4475 = vmul.f32 %v4456, 0.25
      %v4476 = vmul.f32 %v4458, 0.25
      %v4477 = vmul.f32 %v4461, 0.25
      %v4478 = vmul.f32 %v4463, 0.25
      %v4479 = vmul.f32 %v4466, 0.25
      %v4480 = vmul.f32 %v4468, 0.25
      %v4481 = vmul.f32 %v4471, 0.25
      %v4482 = vmul.f32 %v4473, 0.25
      %v4483 = vsel %vm1159, %v4475, -inf
      %4484 = vmax.xlane.f32.xlu0 %v4483
      %v4485 = vpop.xlane.xlu0 %4484
      %v4486 = vsel %vm1159, %v4476, -inf
      %4487 = vmax.xlane.f32.xlu0 %v4486
      %v4488 = vpop.xlane.xlu0 %4487
      %v4489 = vsel %vm1159, %v4477, -inf
      %4490 = vmax.xlane.f32.xlu0 %v4489
      %v4491 = vpop.xlane.xlu0 %4490
      %v4492 = vsel %vm1159, %v4478, -inf
      %4493 = vmax.xlane.f32.xlu0 %v4492
      %v4494 = vpop.xlane.xlu0 %4493
      %v4495 = vsel %vm1159, %v4479, -inf
      %4496 = vmax.xlane.f32.xlu0 %v4495
      %v4497 = vpop.xlane.xlu0 %4496
      %v4498 = vsel %vm1159, %v4480, -inf
      %4499 = vmax.xlane.f32.xlu0 %v4498
      %v4500 = vpop.xlane.xlu0 %4499
      %v4501 = vsel %vm1159, %v4481, -inf
      %4502 = vmax.xlane.f32.xlu0 %v4501
      %v4503 = vpop.xlane.xlu0 %4502
      %v4504 = vsel %vm1159, %v4482, -inf
      %4505 = vmax.xlane.f32.xlu0 %v4504
      %v4506 = vpop.xlane.xlu0 %4505
      %v4507 = vsub.f32 %v4475, %v4485
      %v4508 = vsub.f32 %v4476, %v4488
      %v4509 = vsub.f32 %v4477, %v4491
      %v4510 = vsub.f32 %v4478, %v4494
      %v4511 = vsub.f32 %v4479, %v4497
      %v4512 = vsub.f32 %v4480, %v4500
      %v4513 = vsub.f32 %v4481, %v4503
      %v4514 = vsub.f32 %v4482, %v4506
      %v4515 = vmul.f32 %v4507, 1.442695
      %v4516 = vpow.pop %v4515
      %v4517 = vmul.f32 %v4508, 1.442695
      %v4518 = vpow.pop %v4517
      %v4519 = vmul.f32 %v4509, 1.442695
      %v4520 = vpow.pop %v4519
      %v4521 = vmul.f32 %v4510, 1.442695
      %v4522 = vpow.pop %v4521
      %v4523 = vmul.f32 %v4511, 1.442695
      %v4524 = vpow.pop %v4523
      %v4525 = vmul.f32 %v4512, 1.442695
      %v4526 = vpow.pop %v4525
      %v4527 = vmul.f32 %v4513, 1.442695
      %v4528 = vpow.pop %v4527
      %v4529 = vmul.f32 %v4514, 1.442695
      %v4530 = vpow.pop %v4529
      %v4531 = vsel %vm1159, %v4516, 0.0
      %4532 = vadd.xlane.f32.xlu0 %v4531
      %v4533 = vpop.xlane.xlu0 %4532
      %v4534 = vsel %vm1159, %v4518, 0.0
      %4535 = vadd.xlane.f32.xlu0 %v4534
      %v4536 = vpop.xlane.xlu0 %4535
      %v4537 = vsel %vm1159, %v4520, 0.0
      %4538 = vadd.xlane.f32.xlu0 %v4537
      %v4539 = vpop.xlane.xlu0 %4538
      %v4540 = vsel %vm1159, %v4522, 0.0
      %4541 = vadd.xlane.f32.xlu0 %v4540
      %v4542 = vpop.xlane.xlu0 %4541
      %v4543 = vsel %vm1159, %v4524, 0.0
      %4544 = vadd.xlane.f32.xlu0 %v4543
      %v4545 = vpop.xlane.xlu0 %4544
      %v4546 = vsel %vm1159, %v4526, 0.0
      %4547 = vadd.xlane.f32.xlu0 %v4546
      %v4548 = vpop.xlane.xlu0 %4547
      %v4549 = vsel %vm1159, %v4528, 0.0
      %4550 = vadd.xlane.f32.xlu0 %v4549
      %v4551 = vpop.xlane.xlu0 %4550
      %v4552 = vsel %vm1159, %v4530, 0.0
      %4553 = vadd.xlane.f32.xlu0 %v4552
      %v4554 = vpop.xlane.xlu0 %4553
      %v4555 = vrcp.pop %v4533
      %v4556 = vrcp.pop %v4536
      %v4557 = vrcp.pop %v4539
      %v4558 = vrcp.pop %v4542
      %v4559 = vrcp.pop %v4545
      %v4560 = vrcp.pop %v4548
      %v4561 = vrcp.pop %v4551
      %v4562 = vrcp.pop %v4554
      %v4563 = vmul.f32 %v4516, %v4555
      %v4564 = vmul.f32 %v4518, %v4556
      %v4565 = vmul.f32 %v4520, %v4557
      %v4566 = vmul.f32 %v4522, %v4558
      %v4567 = vmul.f32 %v4524, %v4559
      %v4568 = vmul.f32 %v4526, %v4560
      %v4569 = vmul.f32 %v4528, %v4561
      %v4570 = vmul.f32 %v4530, %v4562
      %v4571 = vpack.c.bf16 %v4564, %v4563
      %v4572 = vpack.c.bf16 %v4566, %v4565
      %v4573 = vpack.c.bf16 %v4568, %v4567
      %v4574 = vpack.c.bf16 %v4570, %v4569
      %4575 = vrot.lane.b32.xlu0 %v3970, 96
      %v4576 = vpop.permute.xlu0 %4575
      %4577 = vrot.lane.b32.xlu0 %v3971, 96
      %v4578 = vpop.permute.xlu0 %4577
      %4579 = vrot.lane.b32.xlu0 %v3972, 96
      %v4580 = vpop.permute.xlu0 %4579
      %4581 = vrot.lane.b32.xlu0 %v3973, 96
      %v4582 = vpop.permute.xlu0 %4581
      %v4588 = vsel %vm1159, %v4571, 0
      %v4591 = vsel %vm1159, %v4572, 0
      %v4594 = vsel %vm1159, %v4573, 0
      %v4597 = vsel %vm1159, %v4574, 0
      %4599 = vmatpush.bf16.msra.mxu0 0
      %4600 = vmatpush.bf16.msra.mxu0 0
      %4601 = vmatpush.bf16.msra.mxu0 0
      %4602 = vmatpush.bf16.msra.mxu0 0
      %4603 = vmatpush.bf16.msra.mxu0 %v4582
      %4604 = vmatpush.bf16.msra.mxu0 %v4580
      %4605 = vmatpush.bf16.msra.mxu0 %v4578
      %4606 = vmatpush.bf16.msra.mxu0 %v4576
      %4607 = vmatmul.bf16.gmra.mxu0 %v4588
      %v4608 = vpop.f32.mrf.mxu0
      %v4609 = vadd.f32 0.0, %v4608
      %v4610 = vpop.f32.mrf.mxu0
      %v4611 = vadd.f32 0.0, %v4610
      %4612 = vmatmul.bf16.gmra.mxu0 %v4591
      %v4613 = vpop.f32.mrf.mxu0
      %v4614 = vadd.f32 0.0, %v4613
      %v4615 = vpop.f32.mrf.mxu0
      %v4616 = vadd.f32 0.0, %v4615
      %4617 = vmatmul.bf16.gmra.mxu0 %v4594
      %v4618 = vpop.f32.mrf.mxu0
      %v4619 = vadd.f32 0.0, %v4618
      %v4620 = vpop.f32.mrf.mxu0
      %v4621 = vadd.f32 0.0, %v4620
      %4622 = vmatmul.bf16.gmra.mxu0 %v4597
      %v4623 = vpop.f32.mrf.mxu0
      %v4624 = vadd.f32 0.0, %v4623
      %v4625 = vpop.f32.mrf.mxu0
      %v4626 = vadd.f32 0.0, %v4625
      %4627 = vdwg.mxu0
      %4628 = vrot.lane.b32.xlu0 %v3966, 80
      %v4629 = vpop.permute.xlu0 %4628
      %4630 = vrot.lane.b32.xlu0 %v3967, 80
      %v4631 = vpop.permute.xlu0 %4630
      %4632 = vrot.lane.b32.xlu0 %v3968, 80
      %v4633 = vpop.permute.xlu0 %4632
      %4634 = vrot.lane.b32.xlu0 %v3969, 80
      %v4635 = vpop.permute.xlu0 %4634
      %4636 = vrot.lane.b32.xlu0 %v3966, 16
      %v4637 = vpop.permute.xlu0 %4636
      %4638 = vrot.lane.b32.xlu0 %v3967, 16
      %v4639 = vpop.permute.xlu0 %4638
      %4640 = vrot.lane.b32.xlu0 %v3968, 16
      %v4641 = vpop.permute.xlu0 %4640
      %4642 = vrot.lane.b32.xlu0 %v3969, 16
      %v4643 = vpop.permute.xlu0 %4642
      %v4645 = vsel %vm1674, %v4629, 0
      %v4648 = vsel %vm1674, %v4631, 0
      %v4651 = vsel %vm1674, %v4633, 0
      %v4654 = vsel %vm1674, %v4635, 0
      %v4657 = vsel %vm1674, %v4637, 0
      %v4660 = vsel %vm1674, %v4639, 0
      %v4663 = vsel %vm1674, %v4641, 0
      %v4666 = vsel %vm1674, %v4643, 0
      %4668 = vmatpush.bf16.xpose.msra.mxu0 0
      %4669 = vmatpush.bf16.xpose.msra.mxu0 0
      %4670 = vmatpush.bf16.xpose.msra.mxu0 0
      %4671 = vmatpush.bf16.xpose.msra.mxu0 0
      %4672 = vmatpush.bf16.xpose.msra.mxu0 %v4666
      %4673 = vmatpush.bf16.xpose.msra.mxu0 %v4663
      %4674 = vmatpush.bf16.xpose.msra.mxu0 %v4660
      %4675 = vmatpush.bf16.xpose.msra.mxu0 %v4657
      %4676 = vmatmul.bf16.gmra.mxu0 %v4645
      %v4677 = vpop.f32.mrf.mxu0
      %v4678 = vadd.f32 0.0, %v4677
      %v4679 = vpop.f32.mrf.mxu0
      %v4680 = vadd.f32 0.0, %v4679
      %4681 = vmatmul.bf16.gmra.mxu0 %v4648
      %v4682 = vpop.f32.mrf.mxu0
      %v4683 = vadd.f32 0.0, %v4682
      %v4684 = vpop.f32.mrf.mxu0
      %v4685 = vadd.f32 0.0, %v4684
      %4686 = vmatmul.bf16.gmra.mxu0 %v4651
      %v4687 = vpop.f32.mrf.mxu0
      %v4688 = vadd.f32 0.0, %v4687
      %v4689 = vpop.f32.mrf.mxu0
      %v4690 = vadd.f32 0.0, %v4689
      %4691 = vmatmul.bf16.gmra.mxu0 %v4654
      %v4692 = vpop.f32.mrf.mxu0
      %v4693 = vadd.f32 0.0, %v4692
      %v4694 = vpop.f32.mrf.mxu0
      %v4695 = vadd.f32 0.0, %v4694
      %4696 = vdwg.mxu0
      %v4697 = vmul.f32 %v4678, 0.25
      %v4698 = vmul.f32 %v4680, 0.25
      %v4699 = vmul.f32 %v4683, 0.25
      %v4700 = vmul.f32 %v4685, 0.25
      %v4701 = vmul.f32 %v4688, 0.25
      %v4702 = vmul.f32 %v4690, 0.25
      %v4703 = vmul.f32 %v4693, 0.25
      %v4704 = vmul.f32 %v4695, 0.25
      %v4705 = vsel %vm1159, %v4697, -inf
      %4706 = vmax.xlane.f32.xlu0 %v4705
      %v4707 = vpop.xlane.xlu0 %4706
      %v4708 = vsel %vm1159, %v4698, -inf
      %4709 = vmax.xlane.f32.xlu0 %v4708
      %v4710 = vpop.xlane.xlu0 %4709
      %v4711 = vsel %vm1159, %v4699, -inf
      %4712 = vmax.xlane.f32.xlu0 %v4711
      %v4713 = vpop.xlane.xlu0 %4712
      %v4714 = vsel %vm1159, %v4700, -inf
      %4715 = vmax.xlane.f32.xlu0 %v4714
      %v4716 = vpop.xlane.xlu0 %4715
      %v4717 = vsel %vm1159, %v4701, -inf
      %4718 = vmax.xlane.f32.xlu0 %v4717
      %v4719 = vpop.xlane.xlu0 %4718
      %v4720 = vsel %vm1159, %v4702, -inf
      %4721 = vmax.xlane.f32.xlu0 %v4720
      %v4722 = vpop.xlane.xlu0 %4721
      %v4723 = vsel %vm1159, %v4703, -inf
      %4724 = vmax.xlane.f32.xlu0 %v4723
      %v4725 = vpop.xlane.xlu0 %4724
      %v4726 = vsel %vm1159, %v4704, -inf
      %4727 = vmax.xlane.f32.xlu0 %v4726
      %v4728 = vpop.xlane.xlu0 %4727
      %v4729 = vsub.f32 %v4697, %v4707
      %v4730 = vsub.f32 %v4698, %v4710
      %v4731 = vsub.f32 %v4699, %v4713
      %v4732 = vsub.f32 %v4700, %v4716
      %v4733 = vsub.f32 %v4701, %v4719
      %v4734 = vsub.f32 %v4702, %v4722
      %v4735 = vsub.f32 %v4703, %v4725
      %v4736 = vsub.f32 %v4704, %v4728
      %v4737 = vmul.f32 %v4729, 1.442695
      %v4738 = vpow.pop %v4737
      %v4739 = vmul.f32 %v4730, 1.442695
      %v4740 = vpow.pop %v4739
      %v4741 = vmul.f32 %v4731, 1.442695
      %v4742 = vpow.pop %v4741
      %v4743 = vmul.f32 %v4732, 1.442695
      %v4744 = vpow.pop %v4743
      %v4745 = vmul.f32 %v4733, 1.442695
      %v4746 = vpow.pop %v4745
      %v4747 = vmul.f32 %v4734, 1.442695
      %v4748 = vpow.pop %v4747
      %v4749 = vmul.f32 %v4735, 1.442695
      %v4750 = vpow.pop %v4749
      %v4751 = vmul.f32 %v4736, 1.442695
      %v4752 = vpow.pop %v4751
      %v4753 = vsel %vm1159, %v4738, 0.0
      %4754 = vadd.xlane.f32.xlu0 %v4753
      %v4755 = vpop.xlane.xlu0 %4754
      %v4756 = vsel %vm1159, %v4740, 0.0
      %4757 = vadd.xlane.f32.xlu0 %v4756
      %v4758 = vpop.xlane.xlu0 %4757
      %v4759 = vsel %vm1159, %v4742, 0.0
      %4760 = vadd.xlane.f32.xlu0 %v4759
      %v4761 = vpop.xlane.xlu0 %4760
      %v4762 = vsel %vm1159, %v4744, 0.0
      %4763 = vadd.xlane.f32.xlu0 %v4762
      %v4764 = vpop.xlane.xlu0 %4763
      %v4765 = vsel %vm1159, %v4746, 0.0
      %4766 = vadd.xlane.f32.xlu0 %v4765
      %v4767 = vpop.xlane.xlu0 %4766
      %v4768 = vsel %vm1159, %v4748, 0.0
      %4769 = vadd.xlane.f32.xlu0 %v4768
      %v4770 = vpop.xlane.xlu0 %4769
      %v4771 = vsel %vm1159, %v4750, 0.0
      %4772 = vadd.xlane.f32.xlu0 %v4771
      %v4773 = vpop.xlane.xlu0 %4772
      %v4774 = vsel %vm1159, %v4752, 0.0
      %4775 = vadd.xlane.f32.xlu0 %v4774
      %v4776 = vpop.xlane.xlu0 %4775
      %v4777 = vrcp.pop %v4755
      %v4778 = vrcp.pop %v4758
      %v4779 = vrcp.pop %v4761
      %v4780 = vrcp.pop %v4764
      %v4781 = vrcp.pop %v4767
      %v4782 = vrcp.pop %v4770
      %v4783 = vrcp.pop %v4773
      %v4784 = vrcp.pop %v4776
      %v4785 = vmul.f32 %v4738, %v4777
      %v4786 = vmul.f32 %v4740, %v4778
      %v4787 = vmul.f32 %v4742, %v4779
      %v4788 = vmul.f32 %v4744, %v4780
      %v4789 = vmul.f32 %v4746, %v4781
      %v4790 = vmul.f32 %v4748, %v4782
      %v4791 = vmul.f32 %v4750, %v4783
      %v4792 = vmul.f32 %v4752, %v4784
      %v4793 = vpack.c.bf16 %v4786, %v4785
      %v4794 = vpack.c.bf16 %v4788, %v4787
      %v4795 = vpack.c.bf16 %v4790, %v4789
      %v4796 = vpack.c.bf16 %v4792, %v4791
      %4797 = vrot.lane.b32.xlu0 %v3970, 80
      %v4798 = vpop.permute.xlu0 %4797
      %4799 = vrot.lane.b32.xlu0 %v3971, 80
      %v4800 = vpop.permute.xlu0 %4799
      %4801 = vrot.lane.b32.xlu0 %v3972, 80
      %v4802 = vpop.permute.xlu0 %4801
      %4803 = vrot.lane.b32.xlu0 %v3973, 80
      %v4804 = vpop.permute.xlu0 %4803
      %v4810 = vsel %vm1159, %v4793, 0
      %v4813 = vsel %vm1159, %v4794, 0
      %v4816 = vsel %vm1159, %v4795, 0
      %v4819 = vsel %vm1159, %v4796, 0
      %4821 = vmatpush.bf16.msra.mxu0 0
      %4822 = vmatpush.bf16.msra.mxu0 0
      %4823 = vmatpush.bf16.msra.mxu0 0
      %4824 = vmatpush.bf16.msra.mxu0 0
      %4825 = vmatpush.bf16.msra.mxu0 %v4804
      %4826 = vmatpush.bf16.msra.mxu0 %v4802
      %4827 = vmatpush.bf16.msra.mxu0 %v4800
      %4828 = vmatpush.bf16.msra.mxu0 %v4798
      %4829 = vmatmul.bf16.gmra.mxu0 %v4810
      %v4830 = vpop.f32.mrf.mxu0
      %v4831 = vadd.f32 0.0, %v4830
      %v4832 = vpop.f32.mrf.mxu0
      %v4833 = vadd.f32 0.0, %v4832
      %4834 = vmatmul.bf16.gmra.mxu0 %v4813
      %v4835 = vpop.f32.mrf.mxu0
      %v4836 = vadd.f32 0.0, %v4835
      %v4837 = vpop.f32.mrf.mxu0
      %v4838 = vadd.f32 0.0, %v4837
      %4839 = vmatmul.bf16.gmra.mxu0 %v4816
      %v4840 = vpop.f32.mrf.mxu0
      %v4841 = vadd.f32 0.0, %v4840
      %v4842 = vpop.f32.mrf.mxu0
      %v4843 = vadd.f32 0.0, %v4842
      %4844 = vmatmul.bf16.gmra.mxu0 %v4819
      %v4845 = vpop.f32.mrf.mxu0
      %v4846 = vadd.f32 0.0, %v4845
      %v4847 = vpop.f32.mrf.mxu0
      %v4848 = vadd.f32 0.0, %v4847
      %4849 = vdwg.mxu0
      %4858 = vrot.lane.b32.xlu0 %v4387, 16
      %v4859 = vpop.permute.xlu0 %4858
      %4860 = vrot.lane.b32.xlu0 %v4389, 16
      %v4861 = vpop.permute.xlu0 %4860
      %4862 = vrot.lane.b32.xlu0 %v4392, 16
      %v4863 = vpop.permute.xlu0 %4862
      %4864 = vrot.lane.b32.xlu0 %v4394, 16
      %v4865 = vpop.permute.xlu0 %4864
      %4866 = vrot.lane.b32.xlu0 %v4397, 16
      %v4867 = vpop.permute.xlu0 %4866
      %4868 = vrot.lane.b32.xlu0 %v4399, 16
      %v4869 = vpop.permute.xlu0 %4868
      %4870 = vrot.lane.b32.xlu0 %v4402, 16
      %v4871 = vpop.permute.xlu0 %4870
      %4872 = vrot.lane.b32.xlu0 %v4404, 16
      %v4873 = vpop.permute.xlu0 %4872
      %4890 = vrot.lane.b32.xlu0 %v4609, 32
      %v4891 = vpop.permute.xlu0 %4890
      %4892 = vrot.lane.b32.xlu0 %v4611, 32
      %v4893 = vpop.permute.xlu0 %4892
      %4894 = vrot.lane.b32.xlu0 %v4614, 32
      %v4895 = vpop.permute.xlu0 %4894
      %4896 = vrot.lane.b32.xlu0 %v4616, 32
      %v4897 = vpop.permute.xlu0 %4896
      %4898 = vrot.lane.b32.xlu0 %v4619, 32
      %v4899 = vpop.permute.xlu0 %4898
      %4900 = vrot.lane.b32.xlu0 %v4621, 32
      %v4901 = vpop.permute.xlu0 %4900
      %4902 = vrot.lane.b32.xlu0 %v4624, 32
      %v4903 = vpop.permute.xlu0 %4902
      %4904 = vrot.lane.b32.xlu0 %v4626, 32
      %v4905 = vpop.permute.xlu0 %4904
      %4922 = vrot.lane.b32.xlu0 %v4831, 48
      %v4923 = vpop.permute.xlu0 %4922
      %4924 = vrot.lane.b32.xlu0 %v4833, 48
      %v4925 = vpop.permute.xlu0 %4924
      %4926 = vrot.lane.b32.xlu0 %v4836, 48
      %v4927 = vpop.permute.xlu0 %4926
      %4928 = vrot.lane.b32.xlu0 %v4838, 48
      %v4929 = vpop.permute.xlu0 %4928
      %4930 = vrot.lane.b32.xlu0 %v4841, 48
      %v4931 = vpop.permute.xlu0 %4930
      %4932 = vrot.lane.b32.xlu0 %v4843, 48
      %v4933 = vpop.permute.xlu0 %4932
      %4934 = vrot.lane.b32.xlu0 %v4846, 48
      %v4935 = vpop.permute.xlu0 %4934
      %4936 = vrot.lane.b32.xlu0 %v4848, 48
      %v4937 = vpop.permute.xlu0 %4936
      %v4946 = vsel %vm1674, %v4161, %v4859
      %v4947 = vsel %vm1674, %v4163, %v4861
      %v4948 = vsel %vm1674, %v4166, %v4863
      %v4949 = vsel %vm1674, %v4168, %v4865
      %v4950 = vsel %vm1674, %v4171, %v4867
      %v4951 = vsel %vm1674, %v4173, %v4869
      %v4952 = vsel %vm1674, %v4176, %v4871
      %v4953 = vsel %vm1674, %v4178, %v4873
      %v4954 = vsel %vm2643, %v4946, %v4891
      %v4955 = vsel %vm2643, %v4947, %v4893
      %v4956 = vsel %vm2643, %v4948, %v4895
      %v4957 = vsel %vm2643, %v4949, %v4897
      %v4958 = vsel %vm2643, %v4950, %v4899
      %v4959 = vsel %vm2643, %v4951, %v4901
      %v4960 = vsel %vm2643, %v4952, %v4903
      %v4961 = vsel %vm2643, %v4953, %v4905
      %v4962 = vsel %vm2652, %v4954, %v4923
      %v4963 = vsel %vm2652, %v4955, %v4925
      %v4964 = vsel %vm2652, %v4956, %v4927
      %v4965 = vsel %vm2652, %v4957, %v4929
      %v4966 = vsel %vm2652, %v4958, %v4931
      %v4967 = vsel %vm2652, %v4959, %v4933
      %v4968 = vsel %vm2652, %v4960, %v4935
      %v4969 = vsel %vm2652, %v4961, %v4937
      %v4970 = vpack.c.bf16 %v4963, %v4962
      %v4971 = vpack.c.bf16 %v4965, %v4964
      %v4972 = vpack.c.bf16 %v4967, %v4966
      %v4973 = vpack.c.bf16 %v4969, %v4968
      %s4974 = scalar_lea.vmem %s14, 32
      %v4975 = vld [vmem:[%s4974] sm:$0xf]
      %v4976 = vld [vmem:[%s4974 + $0x4] sm:$0xf]
      %v4977 = vld [vmem:[%s4974 + $0x8] sm:$0xf]
      %v4978 = vld [vmem:[%s4974 + $0xc] sm:$0xf]
      %v4979 = vld [vmem:[%s4974 + $0x10] sm:$0xf]
      %v4980 = vld [vmem:[%s4974 + $0x14] sm:$0xf]
      %v4981 = vld [vmem:[%s4974 + $0x18] sm:$0xf]
      %v4982 = vld [vmem:[%s4974 + $0x1c] sm:$0xf]
      %s4983 = scalar_lea.vmem %s15, 1
      %v4984 = vld [vmem:[%s4983] sm:$0x1]
      %v4986 = vperm.slane %v4984, 0
      %v4996 = vunpack.c.l.b16 %v4975
      %v4997 = vunpack.c.l.b16 %v4976
      %v4998 = vunpack.c.l.b16 %v4977
      %v4999 = vunpack.c.l.b16 %v4978
      %v5000 = vunpack.c.l.b16 %v4979
      %v5001 = vunpack.c.l.b16 %v4980
      %v5002 = vunpack.c.l.b16 %v4981
      %v5003 = vunpack.c.l.b16 %v4982
      %v5004 = vpack.c.b16 %v4997, %v4996
      %v5005 = vpack.c.b16 %v4999, %v4998
      %v5006 = vpack.c.b16 %v5001, %v5000
      %v5007 = vpack.c.b16 %v5003, %v5002
      %v5013 = vsel %vm1159, %v4970, 0
      %v5016 = vsel %vm1159, %v4971, 0
      %v5019 = vsel %vm1159, %v4972, 0
      %v5022 = vsel %vm1159, %v4973, 0
      %5024 = vmatpush.bf16.msra.mxu0 0
      %5025 = vmatpush.bf16.msra.mxu0 0
      %5026 = vmatpush.bf16.msra.mxu0 0
      %5027 = vmatpush.bf16.msra.mxu0 0
      %5028 = vmatpush.bf16.msra.mxu0 %v5007
      %5029 = vmatpush.bf16.msra.mxu0 %v5006
      %5030 = vmatpush.bf16.msra.mxu0 %v5005
      %5031 = vmatpush.bf16.msra.mxu0 %v5004
      %5032 = vmatmul.bf16.gmra.mxu0 %v5013
      %v5033 = vpop.f32.mrf.mxu0
      %v5034 = vadd.f32 %v4986, %v5033
      %v5035 = vpop.f32.mrf.mxu0
      %v5036 = vadd.f32 %v4986, %v5035
      %5037 = vmatmul.bf16.gmra.mxu0 %v5016
      %v5038 = vpop.f32.mrf.mxu0
      %v5039 = vadd.f32 %v4986, %v5038
      %v5040 = vpop.f32.mrf.mxu0
      %v5041 = vadd.f32 %v4986, %v5040
      %5042 = vmatmul.bf16.gmra.mxu0 %v5019
      %v5043 = vpop.f32.mrf.mxu0
      %v5044 = vadd.f32 %v4986, %v5043
      %v5045 = vpop.f32.mrf.mxu0
      %v5046 = vadd.f32 %v4986, %v5045
      %5047 = vmatmul.bf16.gmra.mxu0 %v5022
      %v5048 = vpop.f32.mrf.mxu0
      %v5049 = vadd.f32 %v4986, %v5048
      %v5050 = vpop.f32.mrf.mxu0
      %v5051 = vadd.f32 %v4986, %v5050
      %5052 = vdwg.mxu0
      %v5053 = vperm.slane %v3621, 0
      %v5054 = vmul.f32 %v5053, %v5034
      %v5055 = vmul.f32 %v5053, %v5036
      %v5056 = vmul.f32 %v5053, %v5039
      %v5057 = vmul.f32 %v5053, %v5041
      %v5058 = vmul.f32 %v5053, %v5044
      %v5059 = vmul.f32 %v5053, %v5046
      %v5060 = vmul.f32 %v5053, %v5049
      %v5061 = vmul.f32 %v5053, %v5051
      %v5062 = vadd.f32 %v3500, %v5054
      %v5063 = vadd.f32 %v3501, %v5055
      %v5064 = vadd.f32 %v3502, %v5056
      %v5065 = vadd.f32 %v3503, %v5057
      %v5066 = vadd.f32 %v3504, %v5058
      %v5067 = vadd.f32 %v3505, %v5059
      %v5068 = vadd.f32 %v3506, %v5060
      %v5069 = vadd.f32 %v3507, %v5061
      %v5070 = vsel %vm1159, %v5062, 0.0
      %5071 = vadd.xlane.f32.xlu0 %v5070
      %v5072 = vpop.xlane.xlu0 %5071
      %v5073 = vsel %vm1159, %v5063, 0.0
      %5074 = vadd.xlane.f32.xlu0 %v5073
      %v5075 = vpop.xlane.xlu0 %5074
      %v5076 = vsel %vm1159, %v5064, 0.0
      %5077 = vadd.xlane.f32.xlu0 %v5076
      %v5078 = vpop.xlane.xlu0 %5077
      %v5079 = vsel %vm1159, %v5065, 0.0
      %5080 = vadd.xlane.f32.xlu0 %v5079
      %v5081 = vpop.xlane.xlu0 %5080
      %v5082 = vsel %vm1159, %v5066, 0.0
      %5083 = vadd.xlane.f32.xlu0 %v5082
      %v5084 = vpop.xlane.xlu0 %5083
      %v5085 = vsel %vm1159, %v5067, 0.0
      %5086 = vadd.xlane.f32.xlu0 %v5085
      %v5087 = vpop.xlane.xlu0 %5086
      %v5088 = vsel %vm1159, %v5068, 0.0
      %5089 = vadd.xlane.f32.xlu0 %v5088
      %v5090 = vpop.xlane.xlu0 %5089
      %v5091 = vsel %vm1159, %v5069, 0.0
      %5092 = vadd.xlane.f32.xlu0 %v5091
      %v5093 = vpop.xlane.xlu0 %5092
      %v5094 = vmul.f32 %v5072, %v818
      %v5095 = vmul.f32 %v5075, %v818
      %v5096 = vmul.f32 %v5078, %v818
      %v5097 = vmul.f32 %v5081, %v818
      %v5098 = vmul.f32 %v5084, %v818
      %v5099 = vmul.f32 %v5087, %v818
      %v5100 = vmul.f32 %v5090, %v818
      %v5101 = vmul.f32 %v5093, %v818
      %v5102 = vsub.f32 %v5062, %v5094
      %v5103 = vsub.f32 %v5063, %v5095
      %v5104 = vsub.f32 %v5064, %v5096
      %v5105 = vsub.f32 %v5065, %v5097
      %v5106 = vsub.f32 %v5066, %v5098
      %v5107 = vsub.f32 %v5067, %v5099
      %v5108 = vsub.f32 %v5068, %v5100
      %v5109 = vsub.f32 %v5069, %v5101
      %v5110 = vmul.f32 %v5102, %v5102
      %v5111 = vmul.f32 %v5103, %v5103
      %v5112 = vmul.f32 %v5104, %v5104
      %v5113 = vmul.f32 %v5105, %v5105
      %v5114 = vmul.f32 %v5106, %v5106
      %v5115 = vmul.f32 %v5107, %v5107
      %v5116 = vmul.f32 %v5108, %v5108
      %v5117 = vmul.f32 %v5109, %v5109
      %v5118 = vsel %vm1159, %v5110, 0.0
      %5119 = vadd.xlane.f32.xlu0 %v5118
      %v5120 = vpop.xlane.xlu0 %5119
      %v5121 = vsel %vm1159, %v5111, 0.0
      %5122 = vadd.xlane.f32.xlu0 %v5121
      %v5123 = vpop.xlane.xlu0 %5122
      %v5124 = vsel %vm1159, %v5112, 0.0
      %5125 = vadd.xlane.f32.xlu0 %v5124
      %v5126 = vpop.xlane.xlu0 %5125
      %v5127 = vsel %vm1159, %v5113, 0.0
      %5128 = vadd.xlane.f32.xlu0 %v5127
      %v5129 = vpop.xlane.xlu0 %5128
      %v5130 = vsel %vm1159, %v5114, 0.0
      %5131 = vadd.xlane.f32.xlu0 %v5130
      %v5132 = vpop.xlane.xlu0 %5131
      %v5133 = vsel %vm1159, %v5115, 0.0
      %5134 = vadd.xlane.f32.xlu0 %v5133
      %v5135 = vpop.xlane.xlu0 %5134
      %v5136 = vsel %vm1159, %v5116, 0.0
      %5137 = vadd.xlane.f32.xlu0 %v5136
      %v5138 = vpop.xlane.xlu0 %5137
      %v5139 = vsel %vm1159, %v5117, 0.0
      %5140 = vadd.xlane.f32.xlu0 %v5139
      %v5141 = vpop.xlane.xlu0 %5140
      %v5142 = vmul.f32 %v5120, %v818
      %v5143 = vmul.f32 %v5123, %v818
      %v5144 = vmul.f32 %v5126, %v818
      %v5145 = vmul.f32 %v5129, %v818
      %v5146 = vmul.f32 %v5132, %v818
      %v5147 = vmul.f32 %v5135, %v818
      %v5148 = vmul.f32 %v5138, %v818
      %v5149 = vmul.f32 %v5141, %v818
      %v5150 = vadd.f32 %v5142, 1e-06
      %v5151 = vadd.f32 %v5143, 1e-06
      %v5152 = vadd.f32 %v5144, 1e-06
      %v5153 = vadd.f32 %v5145, 1e-06
      %v5154 = vadd.f32 %v5146, 1e-06
      %v5155 = vadd.f32 %v5147, 1e-06
      %v5156 = vadd.f32 %v5148, 1e-06
      %v5157 = vadd.f32 %v5149, 1e-06
      %v5158 = vrsqrt.pop %v5150
      %v5159 = vmul.f32 %v5158, %v5150
      %v5160 = vmul.f32 %v5159, %v5158
      %v5161 = vmul.f32 0.5, %v5160
      %v5162 = vsub.f32 1.5, %v5161
      %v5163 = vmul.f32 %v5158, %v5162
      %vm5164 = vweird.f32 %v5150
      %vm5165 = vweird.f32 %v5158
      %vm5166 = vmor %vm5164, %vm5165
      %v5167 = vsel %vm5166, %v5158, %v5163
      %v5168 = vrsqrt.pop %v5151
      %v5169 = vmul.f32 %v5168, %v5151
      %v5170 = vmul.f32 %v5169, %v5168
      %v5171 = vmul.f32 0.5, %v5170
      %v5172 = vsub.f32 1.5, %v5171
      %v5173 = vmul.f32 %v5168, %v5172
      %vm5174 = vweird.f32 %v5151
      %vm5175 = vweird.f32 %v5168
      %vm5176 = vmor %vm5174, %vm5175
      %v5177 = vsel %vm5176, %v5168, %v5173
      %v5178 = vrsqrt.pop %v5152
      %v5179 = vmul.f32 %v5178, %v5152
      %v5180 = vmul.f32 %v5179, %v5178
      %v5181 = vmul.f32 0.5, %v5180
      %v5182 = vsub.f32 1.5, %v5181
      %v5183 = vmul.f32 %v5178, %v5182
      %vm5184 = vweird.f32 %v5152
      %vm5185 = vweird.f32 %v5178
      %vm5186 = vmor %vm5184, %vm5185
      %v5187 = vsel %vm5186, %v5178, %v5183
      %v5188 = vrsqrt.pop %v5153
      %v5189 = vmul.f32 %v5188, %v5153
      %v5190 = vmul.f32 %v5189, %v5188
      %v5191 = vmul.f32 0.5, %v5190
      %v5192 = vsub.f32 1.5, %v5191
      %v5193 = vmul.f32 %v5188, %v5192
      %vm5194 = vweird.f32 %v5153
      %vm5195 = vweird.f32 %v5188
      %vm5196 = vmor %vm5194, %vm5195
      %v5197 = vsel %vm5196, %v5188, %v5193
      %v5198 = vrsqrt.pop %v5154
      %v5199 = vmul.f32 %v5198, %v5154
      %v5200 = vmul.f32 %v5199, %v5198
      %v5201 = vmul.f32 0.5, %v5200
      %v5202 = vsub.f32 1.5, %v5201
      %v5203 = vmul.f32 %v5198, %v5202
      %vm5204 = vweird.f32 %v5154
      %vm5205 = vweird.f32 %v5198
      %vm5206 = vmor %vm5204, %vm5205
      %v5207 = vsel %vm5206, %v5198, %v5203
      %v5208 = vrsqrt.pop %v5155
      %v5209 = vmul.f32 %v5208, %v5155
      %v5210 = vmul.f32 %v5209, %v5208
      %v5211 = vmul.f32 0.5, %v5210
      %v5212 = vsub.f32 1.5, %v5211
      %v5213 = vmul.f32 %v5208, %v5212
      %vm5214 = vweird.f32 %v5155
      %vm5215 = vweird.f32 %v5208
      %vm5216 = vmor %vm5214, %vm5215
      %v5217 = vsel %vm5216, %v5208, %v5213
      %v5218 = vrsqrt.pop %v5156
      %v5219 = vmul.f32 %v5218, %v5156
      %v5220 = vmul.f32 %v5219, %v5218
      %v5221 = vmul.f32 0.5, %v5220
      %v5222 = vsub.f32 1.5, %v5221
      %v5223 = vmul.f32 %v5218, %v5222
      %vm5224 = vweird.f32 %v5156
      %vm5225 = vweird.f32 %v5218
      %vm5226 = vmor %vm5224, %vm5225
      %v5227 = vsel %vm5226, %v5218, %v5223
      %v5228 = vrsqrt.pop %v5157
      %v5229 = vmul.f32 %v5228, %v5157
      %v5230 = vmul.f32 %v5229, %v5228
      %v5231 = vmul.f32 0.5, %v5230
      %v5232 = vsub.f32 1.5, %v5231
      %v5233 = vmul.f32 %v5228, %v5232
      %vm5234 = vweird.f32 %v5157
      %vm5235 = vweird.f32 %v5228
      %vm5236 = vmor %vm5234, %vm5235
      %v5237 = vsel %vm5236, %v5228, %v5233
      %v5238 = vmul.f32 %v5102, %v5167
      %v5239 = vmul.f32 %v5103, %v5177
      %v5240 = vmul.f32 %v5104, %v5187
      %v5241 = vmul.f32 %v5105, %v5197
      %v5242 = vmul.f32 %v5106, %v5207
      %v5243 = vmul.f32 %v5107, %v5217
      %v5244 = vmul.f32 %v5108, %v5227
      %v5245 = vmul.f32 %v5109, %v5237
      %v5246 = vadd.f32 %v3634, 1.0
      %v5247 = vperm.slane %v5246, 0
      %v5248 = vmul.f32 %v5238, %v5247
      %v5249 = vmul.f32 %v5239, %v5247
      %v5250 = vmul.f32 %v5240, %v5247
      %v5251 = vmul.f32 %v5241, %v5247
      %v5252 = vmul.f32 %v5242, %v5247
      %v5253 = vmul.f32 %v5243, %v5247
      %v5254 = vmul.f32 %v5244, %v5247
      %v5255 = vmul.f32 %v5245, %v5247
      %5257 = vrot.lane.b32.xlu0 %v5053, 64
      %v5258 = vpop.permute.xlu0 %5257
      %v5260 = vadd.f32 %v5248, %v5258
      %v5261 = vadd.f32 %v5249, %v5258
      %v5262 = vadd.f32 %v5250, %v5258
      %v5263 = vadd.f32 %v5251, %v5258
      %v5264 = vadd.f32 %v5252, %v5258
      %v5265 = vadd.f32 %v5253, %v5258
      %v5266 = vadd.f32 %v5254, %v5258
      %v5267 = vadd.f32 %v5255, %v5258
      %v5268 = vpack.c.bf16 %v5261, %v5260
      %v5269 = vpack.c.bf16 %v5263, %v5262
      %v5270 = vpack.c.bf16 %v5265, %v5264
      %v5271 = vpack.c.bf16 %v5267, %v5266
      %s5272 = scalar_lea.vmem %s16, 64
      %v5273 = vld [vmem:[%s5272] sm:$0xff]
      %v5274 = vld [vmem:[%s5272 + $0x8] sm:$0xff]
      %v5275 = vld [vmem:[%s5272 + $0x10] sm:$0xff]
      %v5276 = vld [vmem:[%s5272 + $0x18] sm:$0xff]
      %v5277 = vld [vmem:[%s5272 + $0x20] sm:$0xff]
      %v5278 = vld [vmem:[%s5272 + $0x28] sm:$0xff]
      %v5279 = vld [vmem:[%s5272 + $0x30] sm:$0xff]
      %v5280 = vld [vmem:[%s5272 + $0x38] sm:$0xff]
      %s5281 = scalar_lea.vmem %s17, 2
      %v5282 = vld [vmem:[%s5281] sm:$0x3]
      %v5284 = vperm.slane %v5282, 0
      %v5285 = vperm.slane %v5282, 1
      %v5296 = vunpack.c.l.b16 %v5273
      %v5297 = vunpack.c.h.b16 %v5273
      %v5298 = vunpack.c.l.b16 %v5274
      %v5299 = vunpack.c.h.b16 %v5274
      %v5300 = vunpack.c.l.b16 %v5275
      %v5301 = vunpack.c.h.b16 %v5275
      %v5302 = vunpack.c.l.b16 %v5276
      %v5303 = vunpack.c.h.b16 %v5276
      %v5304 = vunpack.c.l.b16 %v5277
      %v5305 = vunpack.c.h.b16 %v5277
      %v5306 = vunpack.c.l.b16 %v5278
      %v5307 = vunpack.c.h.b16 %v5278
      %v5308 = vunpack.c.l.b16 %v5279
      %v5309 = vunpack.c.h.b16 %v5279
      %v5310 = vunpack.c.l.b16 %v5280
      %v5311 = vunpack.c.h.b16 %v5280
      %v5312 = vpack.c.b16 %v5298, %v5296
      %v5313 = vpack.c.b16 %v5299, %v5297
      %v5314 = vpack.c.b16 %v5302, %v5300
      %v5315 = vpack.c.b16 %v5303, %v5301
      %v5316 = vpack.c.b16 %v5306, %v5304
      %v5317 = vpack.c.b16 %v5307, %v5305
      %v5318 = vpack.c.b16 %v5310, %v5308
      %v5319 = vpack.c.b16 %v5311, %v5309
      %v5329 = vsel %vm1159, %v5268, 0
      %v5332 = vsel %vm1159, %v5269, 0
      %v5335 = vsel %vm1159, %v5270, 0
      %v5338 = vsel %vm1159, %v5271, 0
      %5340 = vmatpush.bf16.msra.mxu0 0
      %5341 = vmatpush.bf16.msra.mxu0 0
      %5342 = vmatpush.bf16.msra.mxu0 0
      %5343 = vmatpush.bf16.msra.mxu0 0
      %5344 = vmatpush.bf16.msra.mxu0 %v5318
      %5345 = vmatpush.bf16.msra.mxu0 %v5316
      %5346 = vmatpush.bf16.msra.mxu0 %v5314
      %5347 = vmatpush.bf16.msra.mxu0 %v5312
      %5348 = vmatmul.bf16.gmra.mxu0 %v5329
      %v5349 = vpop.f32.mrf.mxu0
      %v5350 = vadd.f32 %v5284, %v5349
      %v5351 = vpop.f32.mrf.mxu0
      %v5352 = vadd.f32 %v5284, %v5351
      %5353 = vmatmul.bf16.gmra.mxu0 %v5332
      %v5354 = vpop.f32.mrf.mxu0
      %v5355 = vadd.f32 %v5284, %v5354
      %v5356 = vpop.f32.mrf.mxu0
      %v5357 = vadd.f32 %v5284, %v5356
      %5358 = vmatmul.bf16.gmra.mxu0 %v5335
      %v5359 = vpop.f32.mrf.mxu0
      %v5360 = vadd.f32 %v5284, %v5359
      %v5361 = vpop.f32.mrf.mxu0
      %v5362 = vadd.f32 %v5284, %v5361
      %5363 = vmatmul.bf16.gmra.mxu0 %v5338
      %v5364 = vpop.f32.mrf.mxu0
      %v5365 = vadd.f32 %v5284, %v5364
      %v5366 = vpop.f32.mrf.mxu0
      %v5367 = vadd.f32 %v5284, %v5366
      %5368 = vdwg.mxu0
      %5369 = vmatpush.bf16.msra.mxu0 0
      %5370 = vmatpush.bf16.msra.mxu0 0
      %5371 = vmatpush.bf16.msra.mxu0 0
      %5372 = vmatpush.bf16.msra.mxu0 0
      %5373 = vmatpush.bf16.msra.mxu0 %v5319
      %5374 = vmatpush.bf16.msra.mxu0 %v5317
      %5375 = vmatpush.bf16.msra.mxu0 %v5315
      %5376 = vmatpush.bf16.msra.mxu0 %v5313
      %5377 = vmatmul.bf16.gmra.mxu0 %v5329
      %v5378 = vpop.f32.mrf.mxu0
      %v5379 = vadd.f32 %v5285, %v5378
      %v5380 = vpop.f32.mrf.mxu0
      %v5381 = vadd.f32 %v5285, %v5380
      %5382 = vmatmul.bf16.gmra.mxu0 %v5332
      %v5383 = vpop.f32.mrf.mxu0
      %v5384 = vadd.f32 %v5285, %v5383
      %v5385 = vpop.f32.mrf.mxu0
      %v5386 = vadd.f32 %v5285, %v5385
      %5387 = vmatmul.bf16.gmra.mxu0 %v5335
      %v5388 = vpop.f32.mrf.mxu0
      %v5389 = vadd.f32 %v5285, %v5388
      %v5390 = vpop.f32.mrf.mxu0
      %v5391 = vadd.f32 %v5285, %v5390
      %5392 = vmatmul.bf16.gmra.mxu0 %v5338
      %v5393 = vpop.f32.mrf.mxu0
      %v5394 = vadd.f32 %v5285, %v5393
      %v5395 = vpop.f32.mrf.mxu0
      %v5396 = vadd.f32 %v5285, %v5395
      %5397 = vdwg.mxu0
      %v5398 = vmul.f32 %v5350, %v5350
      %v5399 = vmul.f32 %v5379, %v5379
      %v5400 = vmul.f32 %v5352, %v5352
      %v5401 = vmul.f32 %v5381, %v5381
      %v5402 = vmul.f32 %v5355, %v5355
      %v5403 = vmul.f32 %v5384, %v5384
      %v5404 = vmul.f32 %v5357, %v5357
      %v5405 = vmul.f32 %v5386, %v5386
      %v5406 = vmul.f32 %v5360, %v5360
      %v5407 = vmul.f32 %v5389, %v5389
      %v5408 = vmul.f32 %v5362, %v5362
      %v5409 = vmul.f32 %v5391, %v5391
      %v5410 = vmul.f32 %v5365, %v5365
      %v5411 = vmul.f32 %v5394, %v5394
      %v5412 = vmul.f32 %v5367, %v5367
      %v5413 = vmul.f32 %v5396, %v5396
      %v5414 = vmul.f32 %v5350, %v5398
      %v5415 = vmul.f32 %v5379, %v5399
      %v5416 = vmul.f32 %v5352, %v5400
      %v5417 = vmul.f32 %v5381, %v5401
      %v5418 = vmul.f32 %v5355, %v5402
      %v5419 = vmul.f32 %v5384, %v5403
      %v5420 = vmul.f32 %v5357, %v5404
      %v5421 = vmul.f32 %v5386, %v5405
      %v5422 = vmul.f32 %v5360, %v5406
      %v5423 = vmul.f32 %v5389, %v5407
      %v5424 = vmul.f32 %v5362, %v5408
      %v5425 = vmul.f32 %v5391, %v5409
      %v5426 = vmul.f32 %v5365, %v5410
      %v5427 = vmul.f32 %v5394, %v5411
      %v5428 = vmul.f32 %v5367, %v5412
      %v5429 = vmul.f32 %v5396, %v5413
      %v5430 = vmul.f32 %v5414, 0.044715
      %v5431 = vmul.f32 %v5415, 0.044715
      %v5432 = vmul.f32 %v5416, 0.044715
      %v5433 = vmul.f32 %v5417, 0.044715
      %v5434 = vmul.f32 %v5418, 0.044715
      %v5435 = vmul.f32 %v5419, 0.044715
      %v5436 = vmul.f32 %v5420, 0.044715
      %v5437 = vmul.f32 %v5421, 0.044715
      %v5438 = vmul.f32 %v5422, 0.044715
      %v5439 = vmul.f32 %v5423, 0.044715
      %v5440 = vmul.f32 %v5424, 0.044715
      %v5441 = vmul.f32 %v5425, 0.044715
      %v5442 = vmul.f32 %v5426, 0.044715
      %v5443 = vmul.f32 %v5427, 0.044715
      %v5444 = vmul.f32 %v5428, 0.044715
      %v5445 = vmul.f32 %v5429, 0.044715
      %v5446 = vadd.f32 %v5350, %v5430
      %v5447 = vadd.f32 %v5379, %v5431
      %v5448 = vadd.f32 %v5352, %v5432
      %v5449 = vadd.f32 %v5381, %v5433
      %v5450 = vadd.f32 %v5355, %v5434
      %v5451 = vadd.f32 %v5384, %v5435
      %v5452 = vadd.f32 %v5357, %v5436
      %v5453 = vadd.f32 %v5386, %v5437
      %v5454 = vadd.f32 %v5360, %v5438
      %v5455 = vadd.f32 %v5389, %v5439
      %v5456 = vadd.f32 %v5362, %v5440
      %v5457 = vadd.f32 %v5391, %v5441
      %v5458 = vadd.f32 %v5365, %v5442
      %v5459 = vadd.f32 %v5394, %v5443
      %v5460 = vadd.f32 %v5367, %v5444
      %v5461 = vadd.f32 %v5396, %v5445
      %v5462 = vmul.f32 %v5446, 0.7978846
      %v5463 = vmul.f32 %v5447, 0.7978846
      %v5464 = vmul.f32 %v5448, 0.7978846
      %v5465 = vmul.f32 %v5449, 0.7978846
      %v5466 = vmul.f32 %v5450, 0.7978846
      %v5467 = vmul.f32 %v5451, 0.7978846
      %v5468 = vmul.f32 %v5452, 0.7978846
      %v5469 = vmul.f32 %v5453, 0.7978846
      %v5470 = vmul.f32 %v5454, 0.7978846
      %v5471 = vmul.f32 %v5455, 0.7978846
      %v5472 = vmul.f32 %v5456, 0.7978846
      %v5473 = vmul.f32 %v5457, 0.7978846
      %v5474 = vmul.f32 %v5458, 0.7978846
      %v5475 = vmul.f32 %v5459, 0.7978846
      %v5476 = vmul.f32 %v5460, 0.7978846
      %v5477 = vmul.f32 %v5461, 0.7978846
      %v5478 = vtanh.pop %v5462
      %v5479 = vtanh.pop %v5463
      %v5480 = vtanh.pop %v5464
      %v5481 = vtanh.pop %v5465
      %v5482 = vtanh.pop %v5466
      %v5483 = vtanh.pop %v5467
      %v5484 = vtanh.pop %v5468
      %v5485 = vtanh.pop %v5469
      %v5486 = vtanh.pop %v5470
      %v5487 = vtanh.pop %v5471
      %v5488 = vtanh.pop %v5472
      %v5489 = vtanh.pop %v5473
      %v5490 = vtanh.pop %v5474
      %v5491 = vtanh.pop %v5475
      %v5492 = vtanh.pop %v5476
      %v5493 = vtanh.pop %v5477
      %v5494 = vadd.f32 %v5478, 1.0
      %v5495 = vadd.f32 %v5479, 1.0
      %v5496 = vadd.f32 %v5480, 1.0
      %v5497 = vadd.f32 %v5481, 1.0
      %v5498 = vadd.f32 %v5482, 1.0
      %v5499 = vadd.f32 %v5483, 1.0
      %v5500 = vadd.f32 %v5484, 1.0
      %v5501 = vadd.f32 %v5485, 1.0
      %v5502 = vadd.f32 %v5486, 1.0
      %v5503 = vadd.f32 %v5487, 1.0
      %v5504 = vadd.f32 %v5488, 1.0
      %v5505 = vadd.f32 %v5489, 1.0
      %v5506 = vadd.f32 %v5490, 1.0
      %v5507 = vadd.f32 %v5491, 1.0
      %v5508 = vadd.f32 %v5492, 1.0
      %v5509 = vadd.f32 %v5493, 1.0
      %v5510 = vmul.f32 %v5494, 0.5
      %v5511 = vmul.f32 %v5495, 0.5
      %v5512 = vmul.f32 %v5496, 0.5
      %v5513 = vmul.f32 %v5497, 0.5
      %v5514 = vmul.f32 %v5498, 0.5
      %v5515 = vmul.f32 %v5499, 0.5
      %v5516 = vmul.f32 %v5500, 0.5
      %v5517 = vmul.f32 %v5501, 0.5
      %v5518 = vmul.f32 %v5502, 0.5
      %v5519 = vmul.f32 %v5503, 0.5
      %v5520 = vmul.f32 %v5504, 0.5
      %v5521 = vmul.f32 %v5505, 0.5
      %v5522 = vmul.f32 %v5506, 0.5
      %v5523 = vmul.f32 %v5507, 0.5
      %v5524 = vmul.f32 %v5508, 0.5
      %v5525 = vmul.f32 %v5509, 0.5
      %v5526 = vmul.f32 %v5350, %v5510
      %v5527 = vmul.f32 %v5379, %v5511
      %v5528 = vmul.f32 %v5352, %v5512
      %v5529 = vmul.f32 %v5381, %v5513
      %v5530 = vmul.f32 %v5355, %v5514
      %v5531 = vmul.f32 %v5384, %v5515
      %v5532 = vmul.f32 %v5357, %v5516
      %v5533 = vmul.f32 %v5386, %v5517
      %v5534 = vmul.f32 %v5360, %v5518
      %v5535 = vmul.f32 %v5389, %v5519
      %v5536 = vmul.f32 %v5362, %v5520
      %v5537 = vmul.f32 %v5391, %v5521
      %v5538 = vmul.f32 %v5365, %v5522
      %v5539 = vmul.f32 %v5394, %v5523
      %v5540 = vmul.f32 %v5367, %v5524
      %v5541 = vmul.f32 %v5396, %v5525
      %v5542 = vpack.c.bf16 %v5528, %v5526
      %v5543 = vpack.c.bf16 %v5529, %v5527
      %v5544 = vpack.c.bf16 %v5532, %v5530
      %v5545 = vpack.c.bf16 %v5533, %v5531
      %v5546 = vpack.c.bf16 %v5536, %v5534
      %v5547 = vpack.c.bf16 %v5537, %v5535
      %v5548 = vpack.c.bf16 %v5540, %v5538
      %v5549 = vpack.c.bf16 %v5541, %v5539
      %s5550 = scalar_lea.vmem %s18, 128
      %v5551 = vld [vmem:[%s5550] sm:$0xf]
      %v5552 = vld [vmem:[%s5550 + $0x4] sm:$0xf]
      %v5553 = vld [vmem:[%s5550 + $0x8] sm:$0xf]
      %v5554 = vld [vmem:[%s5550 + $0xc] sm:$0xf]
      %v5555 = vld [vmem:[%s5550 + $0x10] sm:$0xf]
      %v5556 = vld [vmem:[%s5550 + $0x14] sm:$0xf]
      %v5557 = vld [vmem:[%s5550 + $0x18] sm:$0xf]
      %v5558 = vld [vmem:[%s5550 + $0x1c] sm:$0xf]
      %v5559 = vld [vmem:[%s5550 + $0x20] sm:$0xf]
      %v5560 = vld [vmem:[%s5550 + $0x24] sm:$0xf]
      %v5561 = vld [vmem:[%s5550 + $0x28] sm:$0xf]
      %v5562 = vld [vmem:[%s5550 + $0x2c] sm:$0xf]
      %v5563 = vld [vmem:[%s5550 + $0x30] sm:$0xf]
      %v5564 = vld [vmem:[%s5550 + $0x34] sm:$0xf]
      %v5565 = vld [vmem:[%s5550 + $0x38] sm:$0xf]
      %v5566 = vld [vmem:[%s5550 + $0x3c] sm:$0xf]
      %v5567 = vld [vmem:[%s5550 + $0x40] sm:$0xf]
      %v5568 = vld [vmem:[%s5550 + $0x44] sm:$0xf]
      %v5569 = vld [vmem:[%s5550 + $0x48] sm:$0xf]
      %v5570 = vld [vmem:[%s5550 + $0x4c] sm:$0xf]
      %v5571 = vld [vmem:[%s5550 + $0x50] sm:$0xf]
      %v5572 = vld [vmem:[%s5550 + $0x54] sm:$0xf]
      %v5573 = vld [vmem:[%s5550 + $0x58] sm:$0xf]
      %v5574 = vld [vmem:[%s5550 + $0x5c] sm:$0xf]
      %v5575 = vld [vmem:[%s5550 + $0x60] sm:$0xf]
      %v5576 = vld [vmem:[%s5550 + $0x64] sm:$0xf]
      %v5577 = vld [vmem:[%s5550 + $0x68] sm:$0xf]
      %v5578 = vld [vmem:[%s5550 + $0x6c] sm:$0xf]
      %v5579 = vld [vmem:[%s5550 + $0x70] sm:$0xf]
      %v5580 = vld [vmem:[%s5550 + $0x74] sm:$0xf]
      %v5581 = vld [vmem:[%s5550 + $0x78] sm:$0xf]
      %v5582 = vld [vmem:[%s5550 + $0x7c] sm:$0xf]
      %s5583 = scalar_lea.vmem %s19, 1
      %v5584 = vld [vmem:[%s5583] sm:$0x1]
      %v5586 = vperm.slane %v5584, 0
      %v5620 = vunpack.c.l.b16 %v5551
      %v5621 = vunpack.c.l.b16 %v5552
      %v5622 = vunpack.c.l.b16 %v5553
      %v5623 = vunpack.c.l.b16 %v5554
      %v5624 = vunpack.c.l.b16 %v5555
      %v5625 = vunpack.c.l.b16 %v5556
      %v5626 = vunpack.c.l.b16 %v5557
      %v5627 = vunpack.c.l.b16 %v5558
      %v5628 = vunpack.c.l.b16 %v5559
      %v5629 = vunpack.c.l.b16 %v5560
      %v5630 = vunpack.c.l.b16 %v5561
      %v5631 = vunpack.c.l.b16 %v5562
      %v5632 = vunpack.c.l.b16 %v5563
      %v5633 = vunpack.c.l.b16 %v5564
      %v5634 = vunpack.c.l.b16 %v5565
      %v5635 = vunpack.c.l.b16 %v5566
      %v5636 = vunpack.c.l.b16 %v5567
      %v5637 = vunpack.c.l.b16 %v5568
      %v5638 = vunpack.c.l.b16 %v5569
      %v5639 = vunpack.c.l.b16 %v5570
      %v5640 = vunpack.c.l.b16 %v5571
      %v5641 = vunpack.c.l.b16 %v5572
      %v5642 = vunpack.c.l.b16 %v5573
      %v5643 = vunpack.c.l.b16 %v5574
      %v5644 = vunpack.c.l.b16 %v5575
      %v5645 = vunpack.c.l.b16 %v5576
      %v5646 = vunpack.c.l.b16 %v5577
      %v5647 = vunpack.c.l.b16 %v5578
      %v5648 = vunpack.c.l.b16 %v5579
      %v5649 = vunpack.c.l.b16 %v5580
      %v5650 = vunpack.c.l.b16 %v5581
      %v5651 = vunpack.c.l.b16 %v5582
      %v5652 = vpack.c.b16 %v5621, %v5620
      %v5653 = vpack.c.b16 %v5623, %v5622
      %v5654 = vpack.c.b16 %v5625, %v5624
      %v5655 = vpack.c.b16 %v5627, %v5626
      %v5656 = vpack.c.b16 %v5629, %v5628
      %v5657 = vpack.c.b16 %v5631, %v5630
      %v5658 = vpack.c.b16 %v5633, %v5632
      %v5659 = vpack.c.b16 %v5635, %v5634
      %v5660 = vpack.c.b16 %v5637, %v5636
      %v5661 = vpack.c.b16 %v5639, %v5638
      %v5662 = vpack.c.b16 %v5641, %v5640
      %v5663 = vpack.c.b16 %v5643, %v5642
      %v5664 = vpack.c.b16 %v5645, %v5644
      %v5665 = vpack.c.b16 %v5647, %v5646
      %v5666 = vpack.c.b16 %v5649, %v5648
      %v5667 = vpack.c.b16 %v5651, %v5650
      %5684 = vmatpush.bf16.msra.mxu0 %v5659
      %5685 = vmatpush.bf16.msra.mxu0 %v5658
      %5686 = vmatpush.bf16.msra.mxu0 %v5657
      %5687 = vmatpush.bf16.msra.mxu0 %v5656
      %5688 = vmatpush.bf16.msra.mxu0 %v5655
      %5689 = vmatpush.bf16.msra.mxu0 %v5654
      %5690 = vmatpush.bf16.msra.mxu0 %v5653
      %5691 = vmatpush.bf16.msra.mxu0 %v5652
      %5692 = vmatmul.bf16.gmra.mxu0 %v5542
      %v5693 = vpop.f32.mrf.mxu0
      %v5694 = vadd.f32 %v5586, %v5693
      %v5695 = vpop.f32.mrf.mxu0
      %v5696 = vadd.f32 %v5586, %v5695
      %5697 = vmatmul.bf16.gmra.mxu0 %v5544
      %v5698 = vpop.f32.mrf.mxu0
      %v5699 = vadd.f32 %v5586, %v5698
      %v5700 = vpop.f32.mrf.mxu0
      %v5701 = vadd.f32 %v5586, %v5700
      %5702 = vmatmul.bf16.gmra.mxu0 %v5546
      %v5703 = vpop.f32.mrf.mxu0
      %v5704 = vadd.f32 %v5586, %v5703
      %v5705 = vpop.f32.mrf.mxu0
      %v5706 = vadd.f32 %v5586, %v5705
      %5707 = vmatmul.bf16.gmra.mxu0 %v5548
      %v5708 = vpop.f32.mrf.mxu0
      %v5709 = vadd.f32 %v5586, %v5708
      %v5710 = vpop.f32.mrf.mxu0
      %v5711 = vadd.f32 %v5586, %v5710
      %5712 = vdwg.mxu0
      %5713 = vmatpush.bf16.msra.mxu0 %v5667
      %5714 = vmatpush.bf16.msra.mxu0 %v5666
      %5715 = vmatpush.bf16.msra.mxu0 %v5665
      %5716 = vmatpush.bf16.msra.mxu0 %v5664
      %5717 = vmatpush.bf16.msra.mxu0 %v5663
      %5718 = vmatpush.bf16.msra.mxu0 %v5662
      %5719 = vmatpush.bf16.msra.mxu0 %v5661
      %5720 = vmatpush.bf16.msra.mxu0 %v5660
      %5721 = vmatmul.bf16.gmra.mxu0 %v5543
      %v5722 = vpop.f32.mrf.mxu0
      %v5723 = vadd.f32 %v5694, %v5722
      %v5724 = vpop.f32.mrf.mxu0
      %v5725 = vadd.f32 %v5696, %v5724
      %5726 = vmatmul.bf16.gmra.mxu0 %v5545
      %v5727 = vpop.f32.mrf.mxu0
      %v5728 = vadd.f32 %v5699, %v5727
      %v5729 = vpop.f32.mrf.mxu0
      %v5730 = vadd.f32 %v5701, %v5729
      %5731 = vmatmul.bf16.gmra.mxu0 %v5547
      %v5732 = vpop.f32.mrf.mxu0
      %v5733 = vadd.f32 %v5704, %v5732
      %v5734 = vpop.f32.mrf.mxu0
      %v5735 = vadd.f32 %v5706, %v5734
      %5736 = vmatmul.bf16.gmra.mxu0 %v5549
      %v5737 = vpop.f32.mrf.mxu0
      %v5738 = vadd.f32 %v5709, %v5737
      %v5739 = vpop.f32.mrf.mxu0
      %v5740 = vadd.f32 %v5711, %v5739
      %5741 = vdwg.mxu0
      %v5742 = vperm.slane %v3634, 0
      %5751 = vrot.lane.b32.xlu0 %v5723, 64
      %v5752 = vpop.permute.xlu0 %5751
      %5753 = vrot.lane.b32.xlu0 %v5725, 64
      %v5754 = vpop.permute.xlu0 %5753
      %5755 = vrot.lane.b32.xlu0 %v5728, 64
      %v5756 = vpop.permute.xlu0 %5755
      %5757 = vrot.lane.b32.xlu0 %v5730, 64
      %v5758 = vpop.permute.xlu0 %5757
      %5759 = vrot.lane.b32.xlu0 %v5733, 64
      %v5760 = vpop.permute.xlu0 %5759
      %5761 = vrot.lane.b32.xlu0 %v5735, 64
      %v5762 = vpop.permute.xlu0 %5761
      %5763 = vrot.lane.b32.xlu0 %v5738, 64
      %v5764 = vpop.permute.xlu0 %5763
      %5765 = vrot.lane.b32.xlu0 %v5740, 64
      %v5766 = vpop.permute.xlu0 %5765
      %v5775 = vmul.f32 %v5742, %v5752
      %v5776 = vmul.f32 %v5742, %v5754
      %v5777 = vmul.f32 %v5742, %v5756
      %v5778 = vmul.f32 %v5742, %v5758
      %v5779 = vmul.f32 %v5742, %v5760
      %v5780 = vmul.f32 %v5742, %v5762
      %v5781 = vmul.f32 %v5742, %v5764
      %v5782 = vmul.f32 %v5742, %v5766
      %5791 = vrot.lane.b32.xlu0 %v5775, 64
      %v5792 = vpop.permute.xlu0 %5791
      %5793 = vrot.lane.b32.xlu0 %v5776, 64
      %v5794 = vpop.permute.xlu0 %5793
      %5795 = vrot.lane.b32.xlu0 %v5777, 64
      %v5796 = vpop.permute.xlu0 %5795
      %5797 = vrot.lane.b32.xlu0 %v5778, 64
      %v5798 = vpop.permute.xlu0 %5797
      %5799 = vrot.lane.b32.xlu0 %v5779, 64
      %v5800 = vpop.permute.xlu0 %5799
      %5801 = vrot.lane.b32.xlu0 %v5780, 64
      %v5802 = vpop.permute.xlu0 %5801
      %5803 = vrot.lane.b32.xlu0 %v5781, 64
      %v5804 = vpop.permute.xlu0 %5803
      %5805 = vrot.lane.b32.xlu0 %v5782, 64
      %v5806 = vpop.permute.xlu0 %5805
      %v5815 = vadd.f32 %v5062, %v5792
      %v5816 = vadd.f32 %v5063, %v5794
      %v5817 = vadd.f32 %v5064, %v5796
      %v5818 = vadd.f32 %v5065, %v5798
      %v5819 = vadd.f32 %v5066, %v5800
      %v5820 = vadd.f32 %v5067, %v5802
      %v5821 = vadd.f32 %v5068, %v5804
      %v5822 = vadd.f32 %v5069, %v5806
      %v5823 = vld [vmem:[%s20] sm:$0xf]
      %v5824 = vld [vmem:[%s20 + $0x4] sm:$0xf]
      %v5825 = vld [vmem:[%s20 + $0x8] sm:$0xf]
      %v5826 = vld [vmem:[%s20 + $0xc] sm:$0xf]
      %v5827 = vld [vmem:[%s20 + $0x10] sm:$0xf]
      %v5828 = vld [vmem:[%s20 + $0x14] sm:$0xf]
      %v5829 = vld [vmem:[%s20 + $0x18] sm:$0xf]
      %v5830 = vld [vmem:[%s20 + $0x1c] sm:$0xf]
      %v5831 = vld [vmem:[%s21] sm:$0x1]
      %v5840 = vunpack.c.l.b16 %v5823
      %v5841 = vunpack.c.l.b16 %v5824
      %v5842 = vunpack.c.l.b16 %v5825
      %v5843 = vunpack.c.l.b16 %v5826
      %v5844 = vunpack.c.l.b16 %v5827
      %v5845 = vunpack.c.l.b16 %v5828
      %v5846 = vunpack.c.l.b16 %v5829
      %v5847 = vunpack.c.l.b16 %v5830
      %v5848 = vpack.c.b16 %v5841, %v5840
      %v5849 = vpack.c.b16 %v5843, %v5842
      %v5850 = vpack.c.b16 %v5845, %v5844
      %v5851 = vpack.c.b16 %v5847, %v5846
      %5856 = vmatpush.bf16.msra.mxu0 0
      %5857 = vmatpush.bf16.msra.mxu0 0
      %5858 = vmatpush.bf16.msra.mxu0 0
      %5859 = vmatpush.bf16.msra.mxu0 0
      %5860 = vmatpush.bf16.msra.mxu0 %v5851
      %5861 = vmatpush.bf16.msra.mxu0 %v5850
      %5862 = vmatpush.bf16.msra.mxu0 %v5849
      %5863 = vmatpush.bf16.msra.mxu0 %v5848
      %5864 = vmatmul.bf16.gmra.mxu0 %v1286
      %v5865 = vpop.f32.mrf.mxu0
      %v5866 = vadd.f32 %v5831, %v5865
      %v5867 = vpop.f32.mrf.mxu0
      %5868 = vdwg.mxu0
      %v5869 = vsel %vm1159, %v5815, 0.0
      %5870 = vadd.xlane.f32.xlu0 %v5869
      %v5871 = vpop.xlane.xlu0 %5870
      %v5872 = vsel %vm1159, %v5816, 0.0
      %5873 = vadd.xlane.f32.xlu0 %v5872
      %v5874 = vpop.xlane.xlu0 %5873
      %v5875 = vsel %vm1159, %v5817, 0.0
      %5876 = vadd.xlane.f32.xlu0 %v5875
      %v5877 = vpop.xlane.xlu0 %5876
      %v5878 = vsel %vm1159, %v5818, 0.0
      %5879 = vadd.xlane.f32.xlu0 %v5878
      %v5880 = vpop.xlane.xlu0 %5879
      %v5881 = vsel %vm1159, %v5819, 0.0
      %5882 = vadd.xlane.f32.xlu0 %v5881
      %v5883 = vpop.xlane.xlu0 %5882
      %v5884 = vsel %vm1159, %v5820, 0.0
      %5885 = vadd.xlane.f32.xlu0 %v5884
      %v5886 = vpop.xlane.xlu0 %5885
      %v5887 = vsel %vm1159, %v5821, 0.0
      %5888 = vadd.xlane.f32.xlu0 %v5887
      %v5889 = vpop.xlane.xlu0 %5888
      %v5890 = vsel %vm1159, %v5822, 0.0
      %5891 = vadd.xlane.f32.xlu0 %v5890
      %v5892 = vpop.xlane.xlu0 %5891
      %v5893 = vmul.f32 %v5871, %v818
      %v5894 = vmul.f32 %v5874, %v818
      %v5895 = vmul.f32 %v5877, %v818
      %v5896 = vmul.f32 %v5880, %v818
      %v5897 = vmul.f32 %v5883, %v818
      %v5898 = vmul.f32 %v5886, %v818
      %v5899 = vmul.f32 %v5889, %v818
      %v5900 = vmul.f32 %v5892, %v818
      %v5901 = vsub.f32 %v5815, %v5893
      %v5902 = vsub.f32 %v5816, %v5894
      %v5903 = vsub.f32 %v5817, %v5895
      %v5904 = vsub.f32 %v5818, %v5896
      %v5905 = vsub.f32 %v5819, %v5897
      %v5906 = vsub.f32 %v5820, %v5898
      %v5907 = vsub.f32 %v5821, %v5899
      %v5908 = vsub.f32 %v5822, %v5900
      %v5909 = vmul.f32 %v5901, %v5901
      %v5910 = vmul.f32 %v5902, %v5902
      %v5911 = vmul.f32 %v5903, %v5903
      %v5912 = vmul.f32 %v5904, %v5904
      %v5913 = vmul.f32 %v5905, %v5905
      %v5914 = vmul.f32 %v5906, %v5906
      %v5915 = vmul.f32 %v5907, %v5907
      %v5916 = vmul.f32 %v5908, %v5908
      %v5917 = vsel %vm1159, %v5909, 0.0
      %5918 = vadd.xlane.f32.xlu0 %v5917
      %v5919 = vpop.xlane.xlu0 %5918
      %v5920 = vsel %vm1159, %v5910, 0.0
      %5921 = vadd.xlane.f32.xlu0 %v5920
      %v5922 = vpop.xlane.xlu0 %5921
      %v5923 = vsel %vm1159, %v5911, 0.0
      %5924 = vadd.xlane.f32.xlu0 %v5923
      %v5925 = vpop.xlane.xlu0 %5924
      %v5926 = vsel %vm1159, %v5912, 0.0
      %5927 = vadd.xlane.f32.xlu0 %v5926
      %v5928 = vpop.xlane.xlu0 %5927
      %v5929 = vsel %vm1159, %v5913, 0.0
      %5930 = vadd.xlane.f32.xlu0 %v5929
      %v5931 = vpop.xlane.xlu0 %5930
      %v5932 = vsel %vm1159, %v5914, 0.0
      %5933 = vadd.xlane.f32.xlu0 %v5932
      %v5934 = vpop.xlane.xlu0 %5933
      %v5935 = vsel %vm1159, %v5915, 0.0
      %5936 = vadd.xlane.f32.xlu0 %v5935
      %v5937 = vpop.xlane.xlu0 %5936
      %v5938 = vsel %vm1159, %v5916, 0.0
      %5939 = vadd.xlane.f32.xlu0 %v5938
      %v5940 = vpop.xlane.xlu0 %5939
      %v5941 = vmul.f32 %v5919, %v818
      %v5942 = vmul.f32 %v5922, %v818
      %v5943 = vmul.f32 %v5925, %v818
      %v5944 = vmul.f32 %v5928, %v818
      %v5945 = vmul.f32 %v5931, %v818
      %v5946 = vmul.f32 %v5934, %v818
      %v5947 = vmul.f32 %v5937, %v818
      %v5948 = vmul.f32 %v5940, %v818
      %v5949 = vadd.f32 %v5941, 1e-06
      %v5950 = vadd.f32 %v5942, 1e-06
      %v5951 = vadd.f32 %v5943, 1e-06
      %v5952 = vadd.f32 %v5944, 1e-06
      %v5953 = vadd.f32 %v5945, 1e-06
      %v5954 = vadd.f32 %v5946, 1e-06
      %v5955 = vadd.f32 %v5947, 1e-06
      %v5956 = vadd.f32 %v5948, 1e-06
      %v5957 = vrsqrt.pop %v5949
      %v5958 = vmul.f32 %v5957, %v5949
      %v5959 = vmul.f32 %v5958, %v5957
      %v5960 = vmul.f32 0.5, %v5959
      %v5961 = vsub.f32 1.5, %v5960
      %v5962 = vmul.f32 %v5957, %v5961
      %vm5963 = vweird.f32 %v5949
      %vm5964 = vweird.f32 %v5957
      %vm5965 = vmor %vm5963, %vm5964
      %v5966 = vsel %vm5965, %v5957, %v5962
      %v5967 = vrsqrt.pop %v5950
      %v5968 = vmul.f32 %v5967, %v5950
      %v5969 = vmul.f32 %v5968, %v5967
      %v5970 = vmul.f32 0.5, %v5969
      %v5971 = vsub.f32 1.5, %v5970
      %v5972 = vmul.f32 %v5967, %v5971
      %vm5973 = vweird.f32 %v5950
      %vm5974 = vweird.f32 %v5967
      %vm5975 = vmor %vm5973, %vm5974
      %v5976 = vsel %vm5975, %v5967, %v5972
      %v5977 = vrsqrt.pop %v5951
      %v5978 = vmul.f32 %v5977, %v5951
      %v5979 = vmul.f32 %v5978, %v5977
      %v5980 = vmul.f32 0.5, %v5979
      %v5981 = vsub.f32 1.5, %v5980
      %v5982 = vmul.f32 %v5977, %v5981
      %vm5983 = vweird.f32 %v5951
      %vm5984 = vweird.f32 %v5977
      %vm5985 = vmor %vm5983, %vm5984
      %v5986 = vsel %vm5985, %v5977, %v5982
      %v5987 = vrsqrt.pop %v5952
      %v5988 = vmul.f32 %v5987, %v5952
      %v5989 = vmul.f32 %v5988, %v5987
      %v5990 = vmul.f32 0.5, %v5989
      %v5991 = vsub.f32 1.5, %v5990
      %v5992 = vmul.f32 %v5987, %v5991
      %vm5993 = vweird.f32 %v5952
      %vm5994 = vweird.f32 %v5987
      %vm5995 = vmor %vm5993, %vm5994
      %v5996 = vsel %vm5995, %v5987, %v5992
      %v5997 = vrsqrt.pop %v5953
      %v5998 = vmul.f32 %v5997, %v5953
      %v5999 = vmul.f32 %v5998, %v5997
      %v6000 = vmul.f32 0.5, %v5999
      %v6001 = vsub.f32 1.5, %v6000
      %v6002 = vmul.f32 %v5997, %v6001
      %vm6003 = vweird.f32 %v5953
      %vm6004 = vweird.f32 %v5997
      %vm6005 = vmor %vm6003, %vm6004
      %v6006 = vsel %vm6005, %v5997, %v6002
      %v6007 = vrsqrt.pop %v5954
      %v6008 = vmul.f32 %v6007, %v5954
      %v6009 = vmul.f32 %v6008, %v6007
      %v6010 = vmul.f32 0.5, %v6009
      %v6011 = vsub.f32 1.5, %v6010
      %v6012 = vmul.f32 %v6007, %v6011
      %vm6013 = vweird.f32 %v5954
      %vm6014 = vweird.f32 %v6007
      %vm6015 = vmor %vm6013, %vm6014
      %v6016 = vsel %vm6015, %v6007, %v6012
      %v6017 = vrsqrt.pop %v5955
      %v6018 = vmul.f32 %v6017, %v5955
      %v6019 = vmul.f32 %v6018, %v6017
      %v6020 = vmul.f32 0.5, %v6019
      %v6021 = vsub.f32 1.5, %v6020
      %v6022 = vmul.f32 %v6017, %v6021
      %vm6023 = vweird.f32 %v5955
      %vm6024 = vweird.f32 %v6017
      %vm6025 = vmor %vm6023, %vm6024
      %v6026 = vsel %vm6025, %v6017, %v6022
      %v6027 = vrsqrt.pop %v5956
      %v6028 = vmul.f32 %v6027, %v5956
      %v6029 = vmul.f32 %v6028, %v6027
      %v6030 = vmul.f32 0.5, %v6029
      %v6031 = vsub.f32 1.5, %v6030
      %v6032 = vmul.f32 %v6027, %v6031
      %vm6033 = vweird.f32 %v5956
      %vm6034 = vweird.f32 %v6027
      %vm6035 = vmor %vm6033, %vm6034
      %v6036 = vsel %vm6035, %v6027, %v6032
      %v6037 = vmul.f32 %v5901, %v5966
      %v6038 = vmul.f32 %v5902, %v5976
      %v6039 = vmul.f32 %v5903, %v5986
      %v6040 = vmul.f32 %v5904, %v5996
      %v6041 = vmul.f32 %v5905, %v6006
      %v6042 = vmul.f32 %v5906, %v6016
      %v6043 = vmul.f32 %v5907, %v6026
      %v6044 = vmul.f32 %v5908, %v6036
      %v6045 = vadd.f32 %v5866, 1.0
      %v6046 = vperm.slane %v6045, 0
      %6048 = vrot.lane.b32.xlu0 %v6046, 64
      %v6049 = vpop.permute.xlu0 %6048
      %v6051 = vmul.f32 %v6037, %v6049
      %v6052 = vmul.f32 %v6038, %v6049
      %v6053 = vmul.f32 %v6039, %v6049
      %v6054 = vmul.f32 %v6040, %v6049
      %v6055 = vmul.f32 %v6041, %v6049
      %v6056 = vmul.f32 %v6042, %v6049
      %v6057 = vmul.f32 %v6043, %v6049
      %v6058 = vmul.f32 %v6044, %v6049
      %v6059 = vperm.slane %v5866, 0
      %v6060 = vadd.f32 %v6051, %v6059
      %v6061 = vadd.f32 %v6052, %v6059
      %v6062 = vadd.f32 %v6053, %v6059
      %v6063 = vadd.f32 %v6054, %v6059
      %v6064 = vadd.f32 %v6055, %v6059
      %v6065 = vadd.f32 %v6056, %v6059
      %v6066 = vadd.f32 %v6057, %v6059
      %v6067 = vadd.f32 %v6058, %v6059
      %v6068 = vpack.c.bf16 %v6061, %v6060
      %v6069 = vpack.c.bf16 %v6063, %v6062
      %v6070 = vpack.c.bf16 %v6065, %v6064
      %v6071 = vpack.c.bf16 %v6067, %v6066
      %v6072 = vld [vmem:[%s22] sm:$0xf]
      %v6073 = vld [vmem:[%s22 + $0x4] sm:$0xf]
      %v6074 = vld [vmem:[%s22 + $0x8] sm:$0xf]
      %v6075 = vld [vmem:[%s22 + $0xc] sm:$0xf]
      %v6076 = vld [vmem:[%s22 + $0x10] sm:$0xf]
      %v6077 = vld [vmem:[%s22 + $0x14] sm:$0xf]
      %v6078 = vld [vmem:[%s22 + $0x18] sm:$0xf]
      %v6079 = vld [vmem:[%s22 + $0x1c] sm:$0xf]
      %v6080 = vld [vmem:[%s23] sm:$0x3f]
      %6082 = vset.pattern.permute.xlu0 0
      %6083 = vperm.xlu0 %6082, %v6080
      %v6084 = vpop.permute.xlu0 %6083
      %v6094 = vunpack.c.l.b16 %v6072
      %v6095 = vunpack.c.l.b16 %v6073
      %v6096 = vunpack.c.l.b16 %v6074
      %v6097 = vunpack.c.l.b16 %v6075
      %v6098 = vunpack.c.l.b16 %v6076
      %v6099 = vunpack.c.l.b16 %v6077
      %v6100 = vunpack.c.l.b16 %v6078
      %v6101 = vunpack.c.l.b16 %v6079
      %v6102 = vpack.c.b16 %v6095, %v6094
      %v6103 = vpack.c.b16 %v6097, %v6096
      %v6104 = vpack.c.b16 %v6099, %v6098
      %v6105 = vpack.c.b16 %v6101, %v6100
      %6110 = vxpose.xlu0.c.b16.start [1/8] %v6102, 128
      %6111 = vxpose.xlu0.c.b16.cont [2/8] %v6103, 128
      %6112 = vxpose.xlu0.c.b16.cont [3/8] %v6104, 128
      %6113 = vxpose.xlu0.c.b16.cont [4/8] %v6105, 128
      %6114 = vxpose.xlu0.c.b16.cont [5/8] 0, 128
      %6115 = vxpose.xlu0.c.b16.cont [6/8] 0, 128
      %6116 = vxpose.xlu0.c.b16.cont [7/8] 0, 128
      %6117 = vxpose.xlu0.c.b16.end [8/8] 0, 128
      %v6118 = vpop.trf.xlu0
      %v6119 = vpop.trf.xlu0
      %v6120 = vpop.trf.xlu0
      %v6121 = vpop.trf.xlu0
      %v6122 = vpop.trf.xlu0
      %v6123 = vpop.trf.xlu0
      %v6124 = vpop.trf.xlu0
      %v6125 = vpop.trf.xlu0
      %v6127 = vsel %vm1159, %v6118, 0
      %v6130 = vsel %vm1159, %v6068, 0
      %v6133 = vsel %vm1159, %v6069, 0
      %v6136 = vsel %vm1159, %v6070, 0
      %v6139 = vsel %vm1159, %v6071, 0
      %6141 = vmatpush.bf16.xpose.msra.mxu0 0
      %6142 = vmatpush.bf16.xpose.msra.mxu0 0
      %6143 = vmatpush.bf16.xpose.msra.mxu0 0
      %6144 = vmatpush.bf16.xpose.msra.mxu0 0
      %6145 = vmatpush.bf16.xpose.msra.mxu0 %v6139
      %6146 = vmatpush.bf16.xpose.msra.mxu0 %v6136
      %6147 = vmatpush.bf16.xpose.msra.mxu0 %v6133
      %6148 = vmatpush.bf16.xpose.msra.mxu0 %v6130
      %6149 = vmatmul.bf16.gmra.mxu0 %v6127
      %v6150 = vpop.f32.mrf.mxu0
      %v6151 = vadd.f32 %v6084, %v6150
      %v6152 = vpop.f32.mrf.mxu0
      %6153 = vdwg.mxu0
      %vm6154 = vcmask 521216
      %6155 = vst.msk [vmem:[%s772] sm:$0x3f] %vm6154, %v6151
      %p6156 = scmp.lt.s32.totalorder %s35, 1
      %s6157 = scalar_select %p6156, %s35, 1
      %s6158 = smul.addr %s6157, 8
      %s6159 = scalar_lea.vmem %s24, %s6158
      // Predicated region
      $region117: #{scene_flow_dit_forward.1} parent=115 // pred_check
        %p6160 = pneg %p572
      $region118: #{scene_flow_dit_forward.1} parent=115 // pred_check_branch
        %6162 = sbr.rel (%p6160) target = $region120
      $region119: #{scene_flow_dit_forward.1} parent=115 // pred_region
        _
      $region120: #{scene_flow_dit_forward.1} parent=115 // pred_fallthru
        _
    $region116: #{scene_flow_dit_forward.1} parent=5 // pred_fallthru
      _
    %p6163 = scmp.le.s32.totalorder 2, %s30
    // Predicated region
    $region121: #{scene_flow_dit_forward.1} parent=5 // pred_check
      %p6164 = pneg %p6163
    $region122: #{scene_flow_dit_forward.1} parent=5 // pred_check_branch
      %6166 = sbr.rel (%p6164) target = $region124
    $region123: #{scene_flow_dit_forward.1} parent=5 // pred_region
      %s6167 = ssub.s32 %s30, 2
      // Predicated region
      $region125: #{scene_flow_dit_forward.1} parent=123 // pred_check
        %p6168 = pneg %p578
      $region126: #{scene_flow_dit_forward.1} parent=123 // pred_check_branch
        %6170 = sbr.rel (%p6168) target = $region128
      $region127: #{scene_flow_dit_forward.1} parent=123 // pred_region
        %p6171 = scmp.lt.s32.totalorder %s36, 1
        %s6172 = scalar_select %p6171, %s36, 1
        %s6173 = smul.addr %s6172, 8
        %s6174 = scalar_lea.vmem %s24, %s6173
      $region128: #{scene_flow_dit_forward.1} parent=123 // pred_fallthru
        _
    $region124: #{scene_flow_dit_forward.1} parent=5 // pred_fallthru
      _
  $region6: #{scene_flow_dit_forward.1} parent=0 // loop_footer
    %s34 = sadd.s32 1, %s30
  $region7: #{scene_flow_dit_forward.1} parent=0 // loop_footer_branch
    %29 = sbr.rel target = $region3
  $region8: #{scene_flow_dit_forward.1} parent=0 // loop_exit
    _

</llo_original>
